<compile_context>
chip_gen: v5e
topology: v5e:2x2
jax: 0.10.0
libtpu: 0.0.40
codegen_flags: <defaults>
</compile_context>

<pallas_src>
import functools

import jax
import jax.numpy as jnp
from jax.experimental import pallas as pl
from jax.experimental.pallas import tpu as pltpu

BN_EPS = 1e-3   # nn.BatchNorm2d(..., eps=0.001)
TN = 128        # ROI-row tile (MXU rows); "parallel" axis -> megacore sharding on v7x
TK = 256        # K reduction tile (256-aligned for the v6e/v7x 256-wide MXU)
LANE = 128      # lane-dense output padding
NEG_BIG = -1.0e30   # finite "minus infinity" for the softmax column mask


def _round_up(x, m):
    return (x + m - 1) // m * m


# ----------------------------------------------------------------------------
# Pallas kernel: fc1(+folded BN1)+ReLU -> fc2(+folded BN2)+ReLU -> fused heads
#                + masked softmax, all on bf16 MXU inputs with f32 accumulation.
# ----------------------------------------------------------------------------
def classifier_head_kernel(num_classes,
                           x_ref, w1_ref, b1_ref, w2_ref, b2_ref, wh_ref, bh_ref,
                           head_ref, probs_ref, acc_ref):
    k = pl.program_id(1)

    @pl.when(k == 0)
    def _():
        acc_ref[...] = jnp.zeros_like(acc_ref)

    # fc1 partial product over the streamed K tile (conv1 with kernel==pool_size
    # is exactly this dense matmul).  bf16 inputs, f32 accumulation.
    acc_ref[...] += jnp.dot(x_ref[...], w1_ref[...],
                            preferred_element_type=jnp.float32)

    @pl.when(k == pl.num_programs(1) - 1)
    def _():
        # BN1 folded into (w1, b1): just bias + ReLU.
        h1 = jnp.maximum(acc_ref[...] + b1_ref[...], 0.0).astype(jnp.bfloat16)

        # conv2 (1x1) + folded BN2 + ReLU.
        h2 = jnp.dot(h1, w2_ref[...], preferred_element_type=jnp.float32) + b2_ref[...]
        h2 = jnp.maximum(h2, 0.0).astype(jnp.bfloat16)

        # fused class+bbox head, lane-dense (last dim padded to multiple of 128).
        head = jnp.dot(h2, wh_ref[...], preferred_element_type=jnp.float32) + bh_ref[...]
        head_ref[...] = head

        # softmax(dim=1) over the first `num_classes` columns only.
        col = jax.lax.broadcasted_iota(jnp.int32, head.shape, 1)
        cls_mask = col < num_classes
        logits_m = jnp.where(cls_mask, head, NEG_BIG)
        mx = jnp.max(logits_m, axis=1, keepdims=True)
        e = jnp.exp(logits_m - mx)                   # padded cols -> exp(-1e30) == 0
        denom = jnp.sum(e, axis=1, keepdims=True)
        probs_ref[...] = e * pl.reciprocal(denom, approx=True)


# ----------------------------------------------------------------------------
# Parameter prep: fold BN, fuse heads, pad, cast matmul operands to bf16.
# ----------------------------------------------------------------------------
def prepare_params(raw, num_classes):
    # conv1: (1024, depth, P, P) -> (K, 1024) matmul weight, BN1 folded in.
    w1 = raw["w1"].reshape(1024, -1)                        # (out=1024, K)
    s1 = raw["g1"] * jax.lax.rsqrt(raw["v1"] + BN_EPS)      # (1024,)
    w1 = (w1 * s1[:, None]).T                               # (K, 1024)
    b1 = (raw["b1"] - raw["m1"]) * s1 + raw["beta1"]        # (1024,)
    k_in = w1.shape[0]
    k_pad = _round_up(k_in, TK)
    w1 = jnp.pad(w1, ((0, k_pad - k_in), (0, 0)))

    # conv2 (1x1): (1024, 1024, 1, 1) -> (1024, 1024), BN2 folded in.
    w2 = raw["w2"].reshape(1024, 1024)
    s2 = raw["g2"] * jax.lax.rsqrt(raw["v2"] + BN_EPS)
    w2 = (w2 * s2[:, None]).T
    b2 = (raw["b2"] - raw["m2"]) * s2 + raw["beta2"]

    # fused class+bbox head, padded to a lane-dense width.
    w_head = jnp.concatenate([raw["wc"], raw["wb"]], axis=0).T   # (1024, 5C)
    b_head = jnp.concatenate([raw["bc"], raw["bb"]])             # (5C,)
    head_pad = _round_up(5 * num_classes, LANE)
    w_head = jnp.pad(w_head, ((0, 0), (0, head_pad - 5 * num_classes)))
    b_head = jnp.pad(b_head, (0, head_pad - 5 * num_classes))

    return dict(
        w1=w1.astype(jnp.bfloat16),
        b1=b1.reshape(1, 1024).astype(jnp.float32),
        w2=w2.astype(jnp.bfloat16),
        b2=b2.reshape(1, 1024).astype(jnp.float32),
        w_head=w_head.astype(jnp.bfloat16),
        b_head=b_head.reshape(1, head_pad).astype(jnp.float32),
    )


def classifier_forward(pooled_flat, params, num_classes):
    """pooled_flat: (N, K=depth*P*P) float32. Returns [logits, probs, bbox]."""
    n, k_in = pooled_flat.shape
    k_pad = params["w1"].shape[0]
    head_pad = params["w_head"].shape[1]
    n_pad = _round_up(n, TN)

    # pad rows (ROIs) to a full MXU tile and K to the reduction-tile multiple.
    x = jnp.pad(pooled_flat.astype(jnp.bfloat16),
                ((0, n_pad - n), (0, k_pad - k_in)))

    grid = (n_pad // TN, k_pad // TK)
    kernel = functools.partial(classifier_head_kernel, num_classes)

    head_out, probs_out = pl.pallas_call(
        kernel,
        out_shape=(
            jax.ShapeDtypeStruct((n_pad, head_pad), jnp.float32),
            jax.ShapeDtypeStruct((n_pad, head_pad), jnp.float32),
        ),
        grid_spec=pltpu.PrefetchScalarGridSpec(
            num_scalar_prefetch=0,
            grid=grid,
            in_specs=[
                pl.BlockSpec((TN, TK), lambda i, k: (i, k)),            # x tile
                pl.BlockSpec((TK, 1024), lambda i, k: (k, 0)),          # w1, streamed over K
                pl.BlockSpec((1, 1024), lambda i, k: (0, 0)),           # b1 (BN1 folded)
                pl.BlockSpec((1024, 1024), lambda i, k: (0, 0)),        # w2 (BN2 folded)
                pl.BlockSpec((1, 1024), lambda i, k: (0, 0)),           # b2
                pl.BlockSpec((1024, head_pad), lambda i, k: (0, 0)),    # fused head W
                pl.BlockSpec((1, head_pad), lambda i, k: (0, 0)),       # fused head b
            ],
            out_specs=(
                pl.BlockSpec((TN, head_pad), lambda i, k: (i, 0)),      # logits+bbox slab
                pl.BlockSpec((TN, head_pad), lambda i, k: (i, 0)),      # probs slab
            ),
            scratch_shapes=[pltpu.VMEM((TN, 1024), jnp.float32)],       # fc1 accumulator
        ),
        compiler_params=pltpu.CompilerParams(
            dimension_semantics=("parallel", "arbitrary"),
            vmem_limit_bytes=48 << 20,   # safe on v7x (64 MiB/TC), fine on v5e/v6e
        ),
    )(x, params["w1"], params["b1"], params["w2"], params["b2"],
      params["w_head"], params["b_head"])

    logits = head_out[:n, :num_classes]
    probs = probs_out[:n, :num_classes]
    bbox = head_out[:n, num_classes:5 * num_classes].reshape(n, num_classes, 4)
    return [logits, probs, bbox]


# ----------------------------------------------------------------------------
# pyramid_roi_align (glue, plain JAX): bilinear crop-and-resize of normalized
# boxes from a feature map to (pool_size, pool_size).
# ----------------------------------------------------------------------------
def _crop_and_resize(feat_chw, rois, pool_size):
    """feat_chw: (C,H,W); rois: (N,4) normalized [y1,x1,y2,x2] -> (N,C,P,P)."""
    c, h, w = feat_chw.shape
    t = jnp.arange(pool_size, dtype=jnp.float32) / float(pool_size - 1)

    def one(box):
        y1, x1, y2, x2 = box[0], box[1], box[2], box[3]
        ys = (y1 + (y2 - y1) * t) * (h - 1)
        xs = (x1 + (x2 - x1) * t) * (w - 1)
        y0 = jnp.clip(jnp.floor(ys), 0, h - 1)
        x0 = jnp.clip(jnp.floor(xs), 0, w - 1)
        wy = (ys - y0)[None, :, None]
        wx = (xs - x0)[None, None, :]
        y0i = y0.astype(jnp.int32)
        x0i = x0.astype(jnp.int32)
        y1i = jnp.clip(y0i + 1, 0, h - 1)
        x1i = jnp.clip(x0i + 1, 0, w - 1)
        f00 = feat_chw[:, y0i][:, :, x0i]
        f01 = feat_chw[:, y0i][:, :, x1i]
        f10 = feat_chw[:, y1i][:, :, x0i]
        f11 = feat_chw[:, y1i][:, :, x1i]
        return (f00 * (1 - wy) * (1 - wx) + f01 * (1 - wy) * wx
                + f10 * wy * (1 - wx) + f11 * wy * wx)

    return jax.vmap(one)(rois)


def pyramid_roi_align(inputs, pool_size, image_shape):
    # TODO(synk): FPN multi-level routing (level from roi area) is omitted;
    # a single-level bilinear crop-and-resize is used for this demo.
    del image_shape
    rois = inputs[0]            # (N, 4) normalized [y1, x1, y2, x2]
    feat = inputs[1]            # (1, C, H, W) NCHW
    return _crop_and_resize(feat[0], rois, pool_size)   # (N, C, P, P)


# ----------------------------------------------------------------------------
# Raw parameters in PyTorch shapes + f32 reference forward (for validation)
# ----------------------------------------------------------------------------
def init_params(key, depth, pool_size, num_classes):
    k = jax.random.split(key, 16)
    w1 = 0.05 * jax.random.normal(k[0], (1024, depth, pool_size, pool_size), jnp.float32)
    b1 = 0.01 * jax.random.normal(k[1], (1024,), jnp.float32)
    g1 = 1.0 + 0.1 * jax.random.normal(k[2], (1024,), jnp.float32)
    beta1 = 0.1 * jax.random.normal(k[3], (1024,), jnp.float32)
    m1 = 0.1 * jax.random.normal(k[4], (1024,), jnp.float32)
    v1 = 1.0 + 0.5 * jax.random.uniform(k[5], (1024,), jnp.float32)

    w2 = 0.05 * jax.random.normal(k[6], (1024, 1024, 1, 1), jnp.float32)
    b2 = 0.01 * jax.random.normal(k[7], (1024,), jnp.float32)
    g2 = 1.0 + 0.1 * jax.random.normal(k[8], (1024,), jnp.float32)
    beta2 = 0.1 * jax.random.normal(k[9], (1024,), jnp.float32)
    m2 = 0.1 * jax.random.normal(k[10], (1024,), jnp.float32)
    v2 = 1.0 + 0.5 * jax.random.uniform(k[11], (1024,), jnp.float32)

    wc = 0.05 * jax.random.normal(k[12], (num_classes, 1024), jnp.float32)
    bc = 0.01 * jax.random.normal(k[13], (num_classes,), jnp.float32)
    wb = 0.05 * jax.random.normal(k[14], (4 * num_classes, 1024), jnp.float32)
    bb = 0.01 * jax.random.normal(k[15], (4 * num_classes,), jnp.float32)

    return dict(w1=w1, b1=b1, g1=g1, beta1=beta1, m1=m1, v1=v1,
                w2=w2, b2=b2, g2=g2, beta2=beta2, m2=m2, v2=v2,
                wc=wc, bc=bc, wb=wb, bb=bb)


def reference_forward(pooled, raw, num_classes):
    """Pure-JAX f32 reference matching the PyTorch module (inference BN)."""
    n = pooled.shape[0]
    x = pooled.reshape(n, -1)
    h = x @ raw["w1"].reshape(1024, -1).T + raw["b1"]
    h = raw["g1"] * (h - raw["m1"]) * jax.lax.rsqrt(raw["v1"] + BN_EPS) + raw["beta1"]
    h = jnp.maximum(h, 0.0)
    h = h @ raw["w2"].reshape(1024, 1024).T + raw["b2"]
    h = raw["g2"] * (h - raw["m2"]) * jax.lax.rsqrt(raw["v2"] + BN_EPS) + raw["beta2"]
    h = jnp.maximum(h, 0.0)
    logits = h @ raw["wc"].T + raw["bc"]
    probs = jax.nn.softmax(logits, axis=1)
    bbox = (h @ raw["wb"].T + raw["bb"]).reshape(n, num_classes, 4)
    return logits, probs, bbox


if __name__ == "__main__":
    depth, pool_size, num_classes = 4, 7, 8
    image_shape = (64, 64, 3)
    feat_h = feat_w = 16
    num_rois = 8

    key = jax.random.PRNGKey(0)
    kf, kr, kp = jax.random.split(key, 3)

    # layout: feature map is NCHW
    feature_map = jax.random.normal(kf, (1, depth, feat_h, feat_w), jnp.float32)

    # normalized boxes [y1, x1, y2, x2]
    u = jax.random.uniform(kr, (num_rois, 4), jnp.float32)
    y1 = 0.5 * u[:, 0]
    x1 = 0.5 * u[:, 1]
    y2 = jnp.minimum(y1 + 0.2 + 0.3 * u[:, 2], 1.0)
    x2 = jnp.minimum(x1 + 0.2 + 0.3 * u[:, 3], 1.0)
    rois = jnp.stack([y1, x1, y2, x2], axis=1)

    raw = init_params(kp, depth, pool_size, num_classes)
    params = prepare_params(raw, num_classes)

    # forward: pyramid_roi_align -> flatten -> Pallas classifier head
    pooled = pyramid_roi_align([rois, feature_map], pool_size, image_shape)   # (N, C, P, P)
    pooled_flat = pooled.reshape(num_rois, -1)                                # (N, depth*P*P)

    logits, probs, bbox = classifier_forward(pooled_flat, params, num_classes)
    jax.block_until_ready((logits, probs, bbox))

    assert logits.shape == (num_rois, num_classes)
    assert probs.shape == (num_rois, num_classes)
    assert bbox.shape == (num_rois, num_classes, 4)

    # numerical check vs f32 reference (loose: bf16 MXU inputs + approx reciprocal)
    ref_logits, ref_probs, ref_bbox = reference_forward(pooled, raw, num_classes)
    assert float(jnp.max(jnp.abs(logits - ref_logits))) < 0.25
    assert float(jnp.max(jnp.abs(probs - ref_probs))) < 0.06
    assert float(jnp.max(jnp.abs(bbox - ref_bbox))) < 0.25

    print("KERNEL_OK")
</pallas_src>

<mosaic_0001>
module attributes {stable_mosaic.version = 11 : i64} {
  func.func @classifier_head_kernel(%arg0: i32, %arg1: i32, %arg2: memref<128x256xbf16, #tpu.memory_space<vmem>>, %arg3: memref<256x1024xbf16, #tpu.memory_space<vmem>>, %arg4: memref<1x1024xf32, #tpu.memory_space<vmem>>, %arg5: memref<1024x1024xbf16, #tpu.memory_space<vmem>>, %arg6: memref<1x1024xf32, #tpu.memory_space<vmem>>, %arg7: memref<1024x128xbf16, #tpu.memory_space<vmem>>, %arg8: memref<1x128xf32, #tpu.memory_space<vmem>>, %arg9: memref<128x128xf32, #tpu.memory_space<vmem>>, %arg10: memref<128x128xf32, #tpu.memory_space<vmem>>, %arg11: memref<128x1024xf32, #tpu.memory_space<vmem>>) attributes {dimension_semantics = [#tpu.dimension_semantics<parallel>, #tpu.dimension_semantics<arbitrary>], iteration_bounds = array<i64: 1, 1>, scalar_prefetch = 0 : i64, scratch_operands = 1 : i64, tpu.core_type = #tpu.core_type<tc>, window_params = [{transform_indices = @transform_0, window_bounds = array<i64: 128, 256>}, {transform_indices = @transform_1, window_bounds = array<i64: 256, 1024>}, {pipeline_mode = #tpu.pipeline_mode<synchronous>, transform_indices = @transform_2, window_bounds = array<i64: 1, 1024>}, {pipeline_mode = #tpu.pipeline_mode<synchronous>, transform_indices = @transform_3, window_bounds = array<i64: 1024, 1024>}, {pipeline_mode = #tpu.pipeline_mode<synchronous>, transform_indices = @transform_4, window_bounds = array<i64: 1, 1024>}, {pipeline_mode = #tpu.pipeline_mode<synchronous>, transform_indices = @transform_5, window_bounds = array<i64: 1024, 128>}, {pipeline_mode = #tpu.pipeline_mode<synchronous>, transform_indices = @transform_6, window_bounds = array<i64: 1, 128>}, {transform_indices = @transform_7, window_bounds = array<i64: 128, 128>}, {transform_indices = @transform_8, window_bounds = array<i64: 128, 128>}]} {
    %c0_i32 = arith.constant 0 : i32
    %0 = arith.cmpi eq, %arg1, %c0_i32 : i32
    %1 = arith.extui %0 : i1 to i32
    %c0_i32_0 = arith.constant 0 : i32
    %2 = arith.cmpi ne, %1, %c0_i32_0 : i32
    scf.if %2 {
      %cst_10 = arith.constant 0.000000e+00 : f32
      %12 = vector.broadcast %cst_10 : f32 to vector<128x1024xf32>
      %c0_11 = arith.constant 0 : index
      %c0_12 = arith.constant 0 : index
      %13 = vector.load %arg11[%c0_11, %c0_12] : memref<128x1024xf32, #tpu.memory_space<vmem>>, vector<128x1024xf32>
      tpu.vector_store %arg11[%c0_11, %c0_12], %12 {strides = array<i32>} : memref<128x1024xf32, #tpu.memory_space<vmem>>, vector<128x1024xf32>,
    } else {
    }
    %c0 = arith.constant 0 : index
    %c0_1 = arith.constant 0 : index
    %3 = vector.load %arg11[%c0, %c0_1] : memref<128x1024xf32, #tpu.memory_space<vmem>>, vector<128x1024xf32>
    %c0_2 = arith.constant 0 : index
    %c0_3 = arith.constant 0 : index
    %4 = vector.load %arg2[%c0_2, %c0_3] : memref<128x256xbf16, #tpu.memory_space<vmem>>, vector<128x256xbf16>
    %c0_4 = arith.constant 0 : index
    %c0_5 = arith.constant 0 : index
    %5 = vector.load %arg3[%c0_4, %c0_5] : memref<256x1024xbf16, #tpu.memory_space<vmem>>, vector<256x1024xbf16>
    %cst = arith.constant dense<0.000000e+00> : vector<128x1024xf32>
    %6 = tpu.matmul %4, %5, %cst {dimension_numbers = #tpu.dot_dimension_numbers<[1], [0], [0], [1], [0, 0, 1, 1], [], []>} : vector<128x256xbf16>, vector<256x1024xbf16>, vector<128x1024xf32> -> vector<128x1024xf32>
    %7 = arith.addf %3, %6 : vector<128x1024xf32>
    %c0_6 = arith.constant 0 : index
    %c0_7 = arith.constant 0 : index
    %8 = vector.load %arg11[%c0_6, %c0_7] : memref<128x1024xf32, #tpu.memory_space<vmem>>, vector<128x1024xf32>
    tpu.vector_store %arg11[%c0_6, %c0_7], %7 {strides = array<i32>} : memref<128x1024xf32, #tpu.memory_space<vmem>>, vector<128x1024xf32>,
    %c0_i32_8 = arith.constant 0 : i32
    %9 = arith.cmpi eq, %arg1, %c0_i32_8 : i32
    %10 = arith.extui %9 : i1 to i32
    %c0_i32_9 = arith.constant 0 : i32
    %11 = arith.cmpi ne, %10, %c0_i32_9 : i32
    scf.if %11 {
      %c0_10 = arith.constant 0 : index
      %c0_11 = arith.constant 0 : index
      %12 = vector.load %arg11[%c0_10, %c0_11] : memref<128x1024xf32, #tpu.memory_space<vmem>>, vector<128x1024xf32>
      %c0_12 = arith.constant 0 : index
      %c0_13 = arith.constant 0 : index
      %13 = vector.load %arg4[%c0_12, %c0_13] : memref<1x1024xf32, #tpu.memory_space<vmem>>, vector<1x1024xf32>
      %14 = vector.broadcast %13 : vector<1x1024xf32> to vector<128x1024xf32>
      %15 = arith.addf %12, %14 : vector<128x1024xf32>
      %cst_14 = arith.constant 0.000000e+00 : f32
      %16 = vector.broadcast %cst_14 : f32 to vector<128x1024xf32>
      %17 = arith.maximumf %15, %16 : vector<128x1024xf32>
      %18 = arith.truncf %17 : vector<128x1024xf32> to vector<128x1024xbf16>
      %c0_15 = arith.constant 0 : index
      %c0_16 = arith.constant 0 : index
      %19 = vector.load %arg5[%c0_15, %c0_16] : memref<1024x1024xbf16, #tpu.memory_space<vmem>>, vector<1024x1024xbf16>
      %cst_17 = arith.constant dense<0.000000e+00> : vector<128x1024xf32>
      %20 = tpu.matmul %18, %19, %cst_17 {dimension_numbers = #tpu.dot_dimension_numbers<[1], [0], [0], [1], [0, 0, 1, 1], [], []>} : vector<128x1024xbf16>, vector<1024x1024xbf16>, vector<128x1024xf32> -> vector<128x1024xf32>
      %c0_18 = arith.constant 0 : index
      %c0_19 = arith.constant 0 : index
      %21 = vector.load %arg6[%c0_18, %c0_19] : memref<1x1024xf32, #tpu.memory_space<vmem>>, vector<1x1024xf32>
      %22 = vector.broadcast %21 : vector<1x1024xf32> to vector<128x1024xf32>
      %23 = arith.addf %20, %22 : vector<128x1024xf32>
      %cst_20 = arith.constant 0.000000e+00 : f32
      %24 = vector.broadcast %cst_20 : f32 to vector<128x1024xf32>
      %25 = arith.maximumf %23, %24 : vector<128x1024xf32>
      %26 = arith.truncf %25 : vector<128x1024xf32> to vector<128x1024xbf16>
      %c0_21 = arith.constant 0 : index
      %c0_22 = arith.constant 0 : index
      %27 = vector.load %arg7[%c0_21, %c0_22] : memref<1024x128xbf16, #tpu.memory_space<vmem>>, vector<1024x128xbf16>
      %cst_23 = arith.constant dense<0.000000e+00> : vector<128x128xf32>
      %28 = tpu.matmul %26, %27, %cst_23 {dimension_numbers = #tpu.dot_dimension_numbers<[1], [0], [0], [1], [0, 0, 1, 1], [], []>} : vector<128x1024xbf16>, vector<1024x128xbf16>, vector<128x128xf32> -> vector<128x128xf32>
      %c0_24 = arith.constant 0 : index
      %c0_25 = arith.constant 0 : index
      %29 = vector.load %arg8[%c0_24, %c0_25] : memref<1x128xf32, #tpu.memory_space<vmem>>, vector<1x128xf32>
      %30 = vector.broadcast %29 : vector<1x128xf32> to vector<128x128xf32>
      %31 = arith.addf %28, %30 : vector<128x128xf32>
      %c0_26 = arith.constant 0 : index
      %c0_27 = arith.constant 0 : index
      %32 = vector.load %arg9[%c0_26, %c0_27] : memref<128x128xf32, #tpu.memory_space<vmem>>, vector<128x128xf32>
      tpu.vector_store %arg9[%c0_26, %c0_27], %31 {strides = array<i32>} : memref<128x128xf32, #tpu.memory_space<vmem>>, vector<128x128xf32>,
      %33 = tpu.iota {dimensions = array<i32: 1>} : vector<128x128xi32>
      %c8_i32 = arith.constant 8 : i32
      %34 = vector.broadcast %c8_i32 : i32 to vector<128x128xi32>
      %35 = arith.cmpi slt, %33, %34 : vector<128x128xi32>
      %cst_28 = arith.constant -1.000000e+30 : f32
      %36 = vector.broadcast %cst_28 : f32 to vector<128x128xf32>
      %37 = arith.select %35, %31, %36 : vector<128x128xi1>, vector<128x128xf32>
      %cst_29 = arith.constant dense<0xFF800000> : vector<128xf32>
      %38 = vector.multi_reduction <maximumf>, %37, %cst_29 [1] : vector<128x128xf32> to vector<128xf32>
      %39 = vector.shape_cast %38 : vector<128xf32> to vector<128x1xf32>
      %40 = vector.broadcast %39 : vector<128x1xf32> to vector<128x128xf32>
      %41 = arith.subf %37, %40 : vector<128x128xf32>
      %42 = math.exp %41 : vector<128x128xf32>
      %cst_30 = arith.constant dense<0.000000e+00> : vector<128xf32>
      %43 = vector.multi_reduction <add>, %42, %cst_30 [1] : vector<128x128xf32> to vector<128xf32>
      %44 = vector.shape_cast %43 : vector<128xf32> to vector<128x1xf32>
      %45 = tpu.reciprocal %44 {approx = true} : vector<128x1xf32> -> vector<128x1xf32>
      %46 = vector.broadcast %45 : vector<128x1xf32> to vector<128x128xf32>
      %47 = arith.mulf %42, %46 : vector<128x128xf32>
      %c0_31 = arith.constant 0 : index
      %c0_32 = arith.constant 0 : index
      %48 = vector.load %arg10[%c0_31, %c0_32] : memref<128x128xf32, #tpu.memory_space<vmem>>, vector<128x128xf32>
      tpu.vector_store %arg10[%c0_31, %c0_32], %47 {strides = array<i32>} : memref<128x128xf32, #tpu.memory_space<vmem>>, vector<128x128xf32>,
    } else {
    }
    return
  }
  func.func @transform_0(%arg0: i32, %arg1: i32) -> (i32, i32) {
    %c0_i32 = arith.constant 0 : i32
    return %arg0, %arg1 : i32, i32
  }
  func.func @transform_1(%arg0: i32, %arg1: i32) -> (i32, i32) {
    %c0_i32 = arith.constant 0 : i32
    %c0_i32_0 = arith.constant 0 : i32
    return %arg1, %c0_i32 : i32, i32
  }
  func.func @transform_2(%arg0: i32, %arg1: i32) -> (i32, i32) {
    %c0_i32 = arith.constant 0 : i32
    %c0_i32_0 = arith.constant 0 : i32
    %c0_i32_1 = arith.constant 0 : i32
    return %c0_i32, %c0_i32_0 : i32, i32
  }
  func.func @transform_3(%arg0: i32, %arg1: i32) -> (i32, i32) {
    %c0_i32 = arith.constant 0 : i32
    %c0_i32_0 = arith.constant 0 : i32
    %c0_i32_1 = arith.constant 0 : i32
    return %c0_i32, %c0_i32_0 : i32, i32
  }
  func.func @transform_4(%arg0: i32, %arg1: i32) -> (i32, i32) {
    %c0_i32 = arith.constant 0 : i32
    %c0_i32_0 = arith.constant 0 : i32
    %c0_i32_1 = arith.constant 0 : i32
    return %c0_i32, %c0_i32_0 : i32, i32
  }
  func.func @transform_5(%arg0: i32, %arg1: i32) -> (i32, i32) {
    %c0_i32 = arith.constant 0 : i32
    %c0_i32_0 = arith.constant 0 : i32
    %c0_i32_1 = arith.constant 0 : i32
    return %c0_i32, %c0_i32_0 : i32, i32
  }
  func.func @transform_6(%arg0: i32, %arg1: i32) -> (i32, i32) {
    %c0_i32 = arith.constant 0 : i32
    %c0_i32_0 = arith.constant 0 : i32
    %c0_i32_1 = arith.constant 0 : i32
    return %c0_i32, %c0_i32_0 : i32, i32
  }
  func.func @transform_7(%arg0: i32, %arg1: i32) -> (i32, i32) {
    %c0_i32 = arith.constant 0 : i32
    %c0_i32_0 = arith.constant 0 : i32
    return %arg0, %c0_i32 : i32, i32
  }
  func.func @transform_8(%arg0: i32, %arg1: i32) -> (i32, i32) {
    %c0_i32 = arith.constant 0 : i32
    %c0_i32_0 = arith.constant 0 : i32
    return %arg0, %c0_i32 : i32, i32
  }
}

</mosaic_0001>

<llo_original>
// kernel: tpu_custom_call.1
$region0: #{tpu_custom_call.1}
  #allocation0 [shape = 'u32[]', space=smem, size = 0x4, offset = 0x4, fixed_abs, tag = 'smem constant byte address 0x4 - core index']
  #allocation1 [shape = 'u32[72,128]{1,0:T(1,128)}', space=vmem, size = 0x9000, scoped, tag = 'internal scratch']
  #allocation2 [shape = 'f32[128,1024]{1,0:T(8,128)}', space=vmem, size = 0x80000, scoped, tag = 'scratch operand']
  %s0 = inlined_call_operand.hbm [shape: bf16[128,256], index: 0, kind: input, shape index: {}]
  %s1 = inlined_call_operand.hbm [shape: bf16[256,1024], index: 1, kind: input, shape index: {}]
  %s2 = inlined_call_operand.hbm [shape: f32[1,1024], index: 2, kind: input, shape index: {}]
  %s3 = inlined_call_operand.hbm [shape: bf16[1024,1024], index: 3, kind: input, shape index: {}]
  %s4 = inlined_call_operand.hbm [shape: f32[1,1024], index: 4, kind: input, shape index: {}]
  %s5 = inlined_call_operand.hbm [shape: bf16[1024,128], index: 5, kind: input, shape index: {}]
  %s6 = inlined_call_operand.hbm [shape: f32[1,128], index: 6, kind: input, shape index: {}]
  %s7 = inlined_call_operand.hbm [shape: f32[128,128], index: 7, kind: output, shape index: {0}]
  %s8 = inlined_call_operand.hbm [shape: f32[128,128], index: 8, kind: output, shape index: {1}]
  %9 = xla_tuple %s7, %s8
  %s10 = sld [smem:[#allocation0]]
  $region82: #{tpu_custom_call.1} parent=0
    _
  %s12 = ssub.s32 1, %s10
  %s13 = scalar_select 0, %s12, %s10
  $region1: #{tpu_custom_call.1} parent=0
    #allocation3 [shape = 'u8[65536]{0}', space=vmem, size = 0x10000, scoped, tag = 'input window, operand 0, single buffered']
    #allocation4 [shape = 's32[1]{0}', space=sflag, size = 0x4, scoped, tag = 'scoped memory for tpu_custom_call.1']
    #allocation5 [shape = 's32[1]{0}', space=sflag, size = 0x4, scoped, tag = 'scoped memory for tpu_custom_call.1']
    #allocation6 [shape = 'u8[524288]{0}', space=vmem, size = 0x80000, scoped, tag = 'input window, operand 1, single buffered']
    #allocation7 [shape = 's32[1]{0}', space=sflag, size = 0x4, scoped, tag = 'scoped memory for tpu_custom_call.1']
    #allocation8 [shape = 'u8[4096]{0}', space=vmem, size = 0x1000, scoped, tag = 'input window, operand 2, single buffered']
    #allocation9 [shape = 'u8[2097152]{0}', space=vmem, size = 0x200000, scoped, tag = 'input window, operand 3, single buffered']
    #allocation10 [shape = 's32[1]{0}', space=sflag, size = 0x4, scoped, tag = 'scoped memory for tpu_custom_call.1']
    #allocation11 [shape = 'u8[4096]{0}', space=vmem, size = 0x1000, scoped, tag = 'input window, operand 4, single buffered']
    #allocation12 [shape = 'u8[262144]{0}', space=vmem, size = 0x40000, scoped, tag = 'input window, operand 5, single buffered']
    #allocation13 [shape = 's32[1]{0}', space=sflag, size = 0x4, scoped, tag = 'scoped memory for tpu_custom_call.1']
    #allocation14 [shape = 'u8[512]{0}', space=vmem, size = 0x400, scoped, tag = 'input window, operand 6, single buffered']
    #allocation15 [shape = 'u8[65536]{0}', space=vmem, size = 0x10000, scoped, tag = 'output window, operand 0, single buffered']
    #allocation16 [shape = 'u8[65536]{0}', space=vmem, size = 0x10000, scoped, tag = 'output window, operand 1, single buffered']
    #allocation17 [shape = 's32[1]{0}', space=sflag, size = 0x4, scoped, tag = 'scoped memory for tpu_custom_call.1']
    %14 = vsyncpa [#allocation4], 0
    %15 = vsyncpa [#allocation7], 0
    %16 = vsyncpa [#allocation10], 0
    %17 = vsyncpa [#allocation13], 0
    %18 = vsyncpa [#allocation5], 0
    %19 = vsyncpa [#allocation17], 0
    // Predicated region
    $region2: #{tpu_custom_call.1} parent=1 // pred_check
      _
    $region3: #{tpu_custom_call.1} parent=1 // pred_check_branch
      %21 = sbr.rel (0) target = $region5
    $region4: #{tpu_custom_call.1} parent=1 // pred_region
      %23 = vsyncadd [#allocation4], 0
      %s24 = sshll.u32 %s0, 4
      %s25 = int_to_ptr.hbm [resolvable:$true] %s24
      %s26 = sshll.u32 [#allocation3], 4
      %s27 = int_to_ptr.vmem [resolvable:$true] %s26
      %32 = dma.hbm_to_vmem [thread:$0]  %s25, 2048, %s27, [#allocation4], 128, 128, 8
    $region5: #{tpu_custom_call.1} parent=1 // pred_fallthru
      _
    // Predicated region
    $region6: #{tpu_custom_call.1} parent=1 // pred_check
      _
    $region7: #{tpu_custom_call.1} parent=1 // pred_check_branch
      %34 = sbr.rel (0) target = $region9
    $region8: #{tpu_custom_call.1} parent=1 // pred_region
      %36 = vsyncadd [#allocation7], 0
      %s37 = sshll.u32 %s1, 4
      %s38 = int_to_ptr.hbm [resolvable:$true] %s37
      %s39 = sshll.u32 [#allocation6], 4
      %s40 = int_to_ptr.vmem [resolvable:$true] %s39
      %45 = dma.hbm_to_vmem [thread:$0]  %s38, 16384, %s40, [#allocation7], 512, 512, 32
    $region9: #{tpu_custom_call.1} parent=1 // pred_fallthru
      _
    // Predicated region
    $region10: #{tpu_custom_call.1} parent=1 // pred_check
      _
    $region11: #{tpu_custom_call.1} parent=1 // pred_check_branch
      %47 = sbr.rel (0) target = $region13
    $region12: #{tpu_custom_call.1} parent=1 // pred_region
      %49 = vsyncadd [#allocation7], 0
      %s51 = sshll.u32 %s2, 4
      %s52 = int_to_ptr.hbm [resolvable:$true] %s51
      %s53 = sshll.u32 [#allocation8], 4
      %s54 = int_to_ptr.vmem [resolvable:$true] %s53
      %56 = dma.hbm_to_vmem [thread:$0]  %s52, 128, %s54, [#allocation7]
    $region13: #{tpu_custom_call.1} parent=1 // pred_fallthru
      _
    // Predicated region
    $region14: #{tpu_custom_call.1} parent=1 // pred_check
      _
    $region15: #{tpu_custom_call.1} parent=1 // pred_check_branch
      %58 = sbr.rel (0) target = $region17
    $region16: #{tpu_custom_call.1} parent=1 // pred_region
      %60 = vsyncadd [#allocation10], 0
      %s61 = sshll.u32 %s3, 4
      %s62 = int_to_ptr.hbm [resolvable:$true] %s61
      %s63 = sshll.u32 [#allocation9], 4
      %s64 = int_to_ptr.vmem [resolvable:$true] %s63
      %69 = dma.hbm_to_vmem [thread:$0]  %s62, 65536, %s64, [#allocation10], 512, 512, 32
    $region17: #{tpu_custom_call.1} parent=1 // pred_fallthru
      _
    // Predicated region
    $region18: #{tpu_custom_call.1} parent=1 // pred_check
      _
    $region19: #{tpu_custom_call.1} parent=1 // pred_check_branch
      %71 = sbr.rel (0) target = $region21
    $region20: #{tpu_custom_call.1} parent=1 // pred_region
      %73 = vsyncadd [#allocation10], 0
      %s75 = sshll.u32 %s4, 4
      %s76 = int_to_ptr.hbm [resolvable:$true] %s75
      %s77 = sshll.u32 [#allocation11], 4
      %s78 = int_to_ptr.vmem [resolvable:$true] %s77
      %80 = dma.hbm_to_vmem [thread:$0]  %s76, 128, %s78, [#allocation10]
    $region21: #{tpu_custom_call.1} parent=1 // pred_fallthru
      _
    // Predicated region
    $region22: #{tpu_custom_call.1} parent=1 // pred_check
      _
    $region23: #{tpu_custom_call.1} parent=1 // pred_check_branch
      %82 = sbr.rel (0) target = $region25
    $region24: #{tpu_custom_call.1} parent=1 // pred_region
      %84 = vsyncadd [#allocation13], 0
      %s85 = sshll.u32 %s5, 4
      %s86 = int_to_ptr.hbm [resolvable:$true] %s85
      %s87 = sshll.u32 [#allocation12], 4
      %s88 = int_to_ptr.vmem [resolvable:$true] %s87
      %93 = dma.hbm_to_vmem [thread:$0]  %s86, 8192, %s88, [#allocation13], 64, 64, 4
    $region25: #{tpu_custom_call.1} parent=1 // pred_fallthru
      _
    // Predicated region
    $region26: #{tpu_custom_call.1} parent=1 // pred_check
      _
    $region27: #{tpu_custom_call.1} parent=1 // pred_check_branch
      %95 = sbr.rel (0) target = $region29
    $region28: #{tpu_custom_call.1} parent=1 // pred_region
      %97 = vsyncadd [#allocation13], 0
      %s99 = sshll.u32 %s6, 4
      %s100 = int_to_ptr.hbm [resolvable:$true] %s99
      %s101 = sshll.u32 [#allocation14], 4
      %s102 = int_to_ptr.vmem [resolvable:$true] %s101
      %104 = dma.hbm_to_vmem [thread:$0]  %s100, 16, %s102, [#allocation13]
    $region29: #{tpu_custom_call.1} parent=1 // pred_fallthru
      _
    // Predicated region
    $region30: #{tpu_custom_call.1} parent=1 // pred_check
      _
    $region31: #{tpu_custom_call.1} parent=1 // pred_check_branch
      %106 = sbr.rel (0) target = $region33
    $region32: #{tpu_custom_call.1} parent=1 // pred_region
      %108 = dma.done [#allocation4], 2048
    $region33: #{tpu_custom_call.1} parent=1 // pred_fallthru
      _
    // Predicated region
    $region34: #{tpu_custom_call.1} parent=1 // pred_check
      _
    $region35: #{tpu_custom_call.1} parent=1 // pred_check_branch
      %110 = sbr.rel (0) target = $region37
    $region36: #{tpu_custom_call.1} parent=1 // pred_region
      %112 = dma.done [#allocation7], 16384
    $region37: #{tpu_custom_call.1} parent=1 // pred_fallthru
      _
    // Predicated region
    $region38: #{tpu_custom_call.1} parent=1 // pred_check
      _
    $region39: #{tpu_custom_call.1} parent=1 // pred_check_branch
      %114 = sbr.rel (0) target = $region41
    $region40: #{tpu_custom_call.1} parent=1 // pred_region
      %116 = dma.done [#allocation7], 128
    $region41: #{tpu_custom_call.1} parent=1 // pred_fallthru
      _
    // Predicated region
    $region42: #{tpu_custom_call.1} parent=1 // pred_check
      _
    $region43: #{tpu_custom_call.1} parent=1 // pred_check_branch
      %118 = sbr.rel (0) target = $region45
    $region44: #{tpu_custom_call.1} parent=1 // pred_region
      %120 = dma.done [#allocation10], 65536
    $region45: #{tpu_custom_call.1} parent=1 // pred_fallthru
      _
    // Predicated region
    $region46: #{tpu_custom_call.1} parent=1 // pred_check
      _
    $region47: #{tpu_custom_call.1} parent=1 // pred_check_branch
      %122 = sbr.rel (0) target = $region49
    $region48: #{tpu_custom_call.1} parent=1 // pred_region
      %124 = dma.done [#allocation10], 128
    $region49: #{tpu_custom_call.1} parent=1 // pred_fallthru
      _
    // Predicated region
    $region50: #{tpu_custom_call.1} parent=1 // pred_check
      _
    $region51: #{tpu_custom_call.1} parent=1 // pred_check_branch
      %126 = sbr.rel (0) target = $region53
    $region52: #{tpu_custom_call.1} parent=1 // pred_region
      %128 = dma.done [#allocation13], 8192
    $region53: #{tpu_custom_call.1} parent=1 // pred_fallthru
      _
    // Predicated region
    $region54: #{tpu_custom_call.1} parent=1 // pred_check
      _
    $region55: #{tpu_custom_call.1} parent=1 // pred_check_branch
      %130 = sbr.rel (0) target = $region57
    $region56: #{tpu_custom_call.1} parent=1 // pred_region
      %132 = dma.done [#allocation13], 16
    $region57: #{tpu_custom_call.1} parent=1 // pred_fallthru
      _
    %p133 = scmp.eq.s32.totalorder 0, 0
    // Predicated region
    $region58: #{tpu_custom_call.1} parent=1 // pred_check
      %p134 = pneg %p133
    $region59: #{tpu_custom_call.1} parent=1 // pred_check_branch
      %136 = sbr.rel (%p134) target = $region61
    $region60: #{tpu_custom_call.1} parent=1 // pred_region
      %137 = vst [vmem:[#allocation2] sm:$0xff] 0.0
      %138 = vst [vmem:[#allocation2 + $0x8] sm:$0xff] 0.0
      %139 = vst [vmem:[#allocation2 + $0x10] sm:$0xff] 0.0
      %140 = vst [vmem:[#allocation2 + $0x18] sm:$0xff] 0.0
      %141 = vst [vmem:[#allocation2 + $0x20] sm:$0xff] 0.0
      %142 = vst [vmem:[#allocation2 + $0x28] sm:$0xff] 0.0
      %143 = vst [vmem:[#allocation2 + $0x30] sm:$0xff] 0.0
      %144 = vst [vmem:[#allocation2 + $0x38] sm:$0xff] 0.0
      %145 = vst [vmem:[#allocation2 + $0x40] sm:$0xff] 0.0
      %146 = vst [vmem:[#allocation2 + $0x48] sm:$0xff] 0.0
      %147 = vst [vmem:[#allocation2 + $0x50] sm:$0xff] 0.0
      %148 = vst [vmem:[#allocation2 + $0x58] sm:$0xff] 0.0
      %149 = vst [vmem:[#allocation2 + $0x60] sm:$0xff] 0.0
      %150 = vst [vmem:[#allocation2 + $0x68] sm:$0xff] 0.0
      %151 = vst [vmem:[#allocation2 + $0x70] sm:$0xff] 0.0
      %152 = vst [vmem:[#allocation2 + $0x78] sm:$0xff] 0.0
      %153 = vst [vmem:[#allocation2 + $0x80] sm:$0xff] 0.0
      %154 = vst [vmem:[#allocation2 + $0x88] sm:$0xff] 0.0
      %155 = vst [vmem:[#allocation2 + $0x90] sm:$0xff] 0.0
      %156 = vst [vmem:[#allocation2 + $0x98] sm:$0xff] 0.0
      %157 = vst [vmem:[#allocation2 + $0xa0] sm:$0xff] 0.0
      %158 = vst [vmem:[#allocation2 + $0xa8] sm:$0xff] 0.0
      %159 = vst [vmem:[#allocation2 + $0xb0] sm:$0xff] 0.0
      %160 = vst [vmem:[#allocation2 + $0xb8] sm:$0xff] 0.0
      %161 = vst [vmem:[#allocation2 + $0xc0] sm:$0xff] 0.0
      %162 = vst [vmem:[#allocation2 + $0xc8] sm:$0xff] 0.0
      %163 = vst [vmem:[#allocation2 + $0xd0] sm:$0xff] 0.0
      %164 = vst [vmem:[#allocation2 + $0xd8] sm:$0xff] 0.0
      %165 = vst [vmem:[#allocation2 + $0xe0] sm:$0xff] 0.0
      %166 = vst [vmem:[#allocation2 + $0xe8] sm:$0xff] 0.0
      %167 = vst [vmem:[#allocation2 + $0xf0] sm:$0xff] 0.0
      %168 = vst [vmem:[#allocation2 + $0xf8] sm:$0xff] 0.0
      %169 = vst [vmem:[#allocation2 + $0x100] sm:$0xff] 0.0
      %170 = vst [vmem:[#allocation2 + $0x108] sm:$0xff] 0.0
      %171 = vst [vmem:[#allocation2 + $0x110] sm:$0xff] 0.0
      %172 = vst [vmem:[#allocation2 + $0x118] sm:$0xff] 0.0
      %173 = vst [vmem:[#allocation2 + $0x120] sm:$0xff] 0.0
      %174 = vst [vmem:[#allocation2 + $0x128] sm:$0xff] 0.0
      %175 = vst [vmem:[#allocation2 + $0x130] sm:$0xff] 0.0
      %176 = vst [vmem:[#allocation2 + $0x138] sm:$0xff] 0.0
      %177 = vst [vmem:[#allocation2 + $0x140] sm:$0xff] 0.0
      %178 = vst [vmem:[#allocation2 + $0x148] sm:$0xff] 0.0
      %179 = vst [vmem:[#allocation2 + $0x150] sm:$0xff] 0.0
      %180 = vst [vmem:[#allocation2 + $0x158] sm:$0xff] 0.0
      %181 = vst [vmem:[#allocation2 + $0x160] sm:$0xff] 0.0
      %182 = vst [vmem:[#allocation2 + $0x168] sm:$0xff] 0.0
      %183 = vst [vmem:[#allocation2 + $0x170] sm:$0xff] 0.0
      %184 = vst [vmem:[#allocation2 + $0x178] sm:$0xff] 0.0
      %185 = vst [vmem:[#allocation2 + $0x180] sm:$0xff] 0.0
      %186 = vst [vmem:[#allocation2 + $0x188] sm:$0xff] 0.0
      %187 = vst [vmem:[#allocation2 + $0x190] sm:$0xff] 0.0
      %188 = vst [vmem:[#allocation2 + $0x198] sm:$0xff] 0.0
      %189 = vst [vmem:[#allocation2 + $0x1a0] sm:$0xff] 0.0
      %190 = vst [vmem:[#allocation2 + $0x1a8] sm:$0xff] 0.0
      %191 = vst [vmem:[#allocation2 + $0x1b0] sm:$0xff] 0.0
      %192 = vst [vmem:[#allocation2 + $0x1b8] sm:$0xff] 0.0
      %193 = vst [vmem:[#allocation2 + $0x1c0] sm:$0xff] 0.0
      %194 = vst [vmem:[#allocation2 + $0x1c8] sm:$0xff] 0.0
      %195 = vst [vmem:[#allocation2 + $0x1d0] sm:$0xff] 0.0
      %196 = vst [vmem:[#allocation2 + $0x1d8] sm:$0xff] 0.0
      %197 = vst [vmem:[#allocation2 + $0x1e0] sm:$0xff] 0.0
      %198 = vst [vmem:[#allocation2 + $0x1e8] sm:$0xff] 0.0
      %199 = vst [vmem:[#allocation2 + $0x1f0] sm:$0xff] 0.0
      %200 = vst [vmem:[#allocation2 + $0x1f8] sm:$0xff] 0.0
      %201 = vst [vmem:[#allocation2 + $0x200] sm:$0xff] 0.0
      %202 = vst [vmem:[#allocation2 + $0x208] sm:$0xff] 0.0
      %203 = vst [vmem:[#allocation2 + $0x210] sm:$0xff] 0.0
      %204 = vst [vmem:[#allocation2 + $0x218] sm:$0xff] 0.0
      %205 = vst [vmem:[#allocation2 + $0x220] sm:$0xff] 0.0
      %206 = vst [vmem:[#allocation2 + $0x228] sm:$0xff] 0.0
      %207 = vst [vmem:[#allocation2 + $0x230] sm:$0xff] 0.0
      %208 = vst [vmem:[#allocation2 + $0x238] sm:$0xff] 0.0
      %209 = vst [vmem:[#allocation2 + $0x240] sm:$0xff] 0.0
      %210 = vst [vmem:[#allocation2 + $0x248] sm:$0xff] 0.0
      %211 = vst [vmem:[#allocation2 + $0x250] sm:$0xff] 0.0
      %212 = vst [vmem:[#allocation2 + $0x258] sm:$0xff] 0.0
      %213 = vst [vmem:[#allocation2 + $0x260] sm:$0xff] 0.0
      %214 = vst [vmem:[#allocation2 + $0x268] sm:$0xff] 0.0
      %215 = vst [vmem:[#allocation2 + $0x270] sm:$0xff] 0.0
      %216 = vst [vmem:[#allocation2 + $0x278] sm:$0xff] 0.0
      %217 = vst [vmem:[#allocation2 + $0x280] sm:$0xff] 0.0
      %218 = vst [vmem:[#allocation2 + $0x288] sm:$0xff] 0.0
      %219 = vst [vmem:[#allocation2 + $0x290] sm:$0xff] 0.0
      %220 = vst [vmem:[#allocation2 + $0x298] sm:$0xff] 0.0
      %221 = vst [vmem:[#allocation2 + $0x2a0] sm:$0xff] 0.0
      %222 = vst [vmem:[#allocation2 + $0x2a8] sm:$0xff] 0.0
      %223 = vst [vmem:[#allocation2 + $0x2b0] sm:$0xff] 0.0
      %224 = vst [vmem:[#allocation2 + $0x2b8] sm:$0xff] 0.0
      %225 = vst [vmem:[#allocation2 + $0x2c0] sm:$0xff] 0.0
      %226 = vst [vmem:[#allocation2 + $0x2c8] sm:$0xff] 0.0
      %227 = vst [vmem:[#allocation2 + $0x2d0] sm:$0xff] 0.0
      %228 = vst [vmem:[#allocation2 + $0x2d8] sm:$0xff] 0.0
      %229 = vst [vmem:[#allocation2 + $0x2e0] sm:$0xff] 0.0
      %230 = vst [vmem:[#allocation2 + $0x2e8] sm:$0xff] 0.0
      %231 = vst [vmem:[#allocation2 + $0x2f0] sm:$0xff] 0.0
      %232 = vst [vmem:[#allocation2 + $0x2f8] sm:$0xff] 0.0
      %233 = vst [vmem:[#allocation2 + $0x300] sm:$0xff] 0.0
      %234 = vst [vmem:[#allocation2 + $0x308] sm:$0xff] 0.0
      %235 = vst [vmem:[#allocation2 + $0x310] sm:$0xff] 0.0
      %236 = vst [vmem:[#allocation2 + $0x318] sm:$0xff] 0.0
      %237 = vst [vmem:[#allocation2 + $0x320] sm:$0xff] 0.0
      %238 = vst [vmem:[#allocation2 + $0x328] sm:$0xff] 0.0
      %239 = vst [vmem:[#allocation2 + $0x330] sm:$0xff] 0.0
      %240 = vst [vmem:[#allocation2 + $0x338] sm:$0xff] 0.0
      %241 = vst [vmem:[#allocation2 + $0x340] sm:$0xff] 0.0
      %242 = vst [vmem:[#allocation2 + $0x348] sm:$0xff] 0.0
      %243 = vst [vmem:[#allocation2 + $0x350] sm:$0xff] 0.0
      %244 = vst [vmem:[#allocation2 + $0x358] sm:$0xff] 0.0
      %245 = vst [vmem:[#allocation2 + $0x360] sm:$0xff] 0.0
      %246 = vst [vmem:[#allocation2 + $0x368] sm:$0xff] 0.0
      %247 = vst [vmem:[#allocation2 + $0x370] sm:$0xff] 0.0
      %248 = vst [vmem:[#allocation2 + $0x378] sm:$0xff] 0.0
      %249 = vst [vmem:[#allocation2 + $0x380] sm:$0xff] 0.0
      %250 = vst [vmem:[#allocation2 + $0x388] sm:$0xff] 0.0
      %251 = vst [vmem:[#allocation2 + $0x390] sm:$0xff] 0.0
      %252 = vst [vmem:[#allocation2 + $0x398] sm:$0xff] 0.0
      %253 = vst [vmem:[#allocation2 + $0x3a0] sm:$0xff] 0.0
      %254 = vst [vmem:[#allocation2 + $0x3a8] sm:$0xff] 0.0
      %255 = vst [vmem:[#allocation2 + $0x3b0] sm:$0xff] 0.0
      %256 = vst [vmem:[#allocation2 + $0x3b8] sm:$0xff] 0.0
      %257 = vst [vmem:[#allocation2 + $0x3c0] sm:$0xff] 0.0
      %258 = vst [vmem:[#allocation2 + $0x3c8] sm:$0xff] 0.0
      %259 = vst [vmem:[#allocation2 + $0x3d0] sm:$0xff] 0.0
      %260 = vst [vmem:[#allocation2 + $0x3d8] sm:$0xff] 0.0
      %261 = vst [vmem:[#allocation2 + $0x3e0] sm:$0xff] 0.0
      %262 = vst [vmem:[#allocation2 + $0x3e8] sm:$0xff] 0.0
      %263 = vst [vmem:[#allocation2 + $0x3f0] sm:$0xff] 0.0
      %264 = vst [vmem:[#allocation2 + $0x3f8] sm:$0xff] 0.0
    $region61: #{tpu_custom_call.1} parent=1 // pred_fallthru
      _
    %v265 = vld [vmem:[#allocation2] sm:$0xff]
    %v266 = vld [vmem:[#allocation2 + $0x8] sm:$0xff]
    %v267 = vld [vmem:[#allocation2 + $0x10] sm:$0xff]
    %v268 = vld [vmem:[#allocation2 + $0x18] sm:$0xff]
    %v269 = vld [vmem:[#allocation2 + $0x20] sm:$0xff]
    %v270 = vld [vmem:[#allocation2 + $0x28] sm:$0xff]
    %v271 = vld [vmem:[#allocation2 + $0x30] sm:$0xff]
    %v272 = vld [vmem:[#allocation2 + $0x38] sm:$0xff]
    %v273 = vld [vmem:[#allocation2 + $0x40] sm:$0xff]
    %v274 = vld [vmem:[#allocation2 + $0x48] sm:$0xff]
    %v275 = vld [vmem:[#allocation2 + $0x50] sm:$0xff]
    %v276 = vld [vmem:[#allocation2 + $0x58] sm:$0xff]
    %v277 = vld [vmem:[#allocation2 + $0x60] sm:$0xff]
    %v278 = vld [vmem:[#allocation2 + $0x68] sm:$0xff]
    %v279 = vld [vmem:[#allocation2 + $0x70] sm:$0xff]
    %v280 = vld [vmem:[#allocation2 + $0x78] sm:$0xff]
    %v281 = vld [vmem:[#allocation2 + $0x80] sm:$0xff]
    %v282 = vld [vmem:[#allocation2 + $0x88] sm:$0xff]
    %v283 = vld [vmem:[#allocation2 + $0x90] sm:$0xff]
    %v284 = vld [vmem:[#allocation2 + $0x98] sm:$0xff]
    %v285 = vld [vmem:[#allocation2 + $0xa0] sm:$0xff]
    %v286 = vld [vmem:[#allocation2 + $0xa8] sm:$0xff]
    %v287 = vld [vmem:[#allocation2 + $0xb0] sm:$0xff]
    %v288 = vld [vmem:[#allocation2 + $0xb8] sm:$0xff]
    %v289 = vld [vmem:[#allocation2 + $0xc0] sm:$0xff]
    %v290 = vld [vmem:[#allocation2 + $0xc8] sm:$0xff]
    %v291 = vld [vmem:[#allocation2 + $0xd0] sm:$0xff]
    %v292 = vld [vmem:[#allocation2 + $0xd8] sm:$0xff]
    %v293 = vld [vmem:[#allocation2 + $0xe0] sm:$0xff]
    %v294 = vld [vmem:[#allocation2 + $0xe8] sm:$0xff]
    %v295 = vld [vmem:[#allocation2 + $0xf0] sm:$0xff]
    %v296 = vld [vmem:[#allocation2 + $0xf8] sm:$0xff]
    %v297 = vld [vmem:[#allocation2 + $0x100] sm:$0xff]
    %v298 = vld [vmem:[#allocation2 + $0x108] sm:$0xff]
    %v299 = vld [vmem:[#allocation2 + $0x110] sm:$0xff]
    %v300 = vld [vmem:[#allocation2 + $0x118] sm:$0xff]
    %v301 = vld [vmem:[#allocation2 + $0x120] sm:$0xff]
    %v302 = vld [vmem:[#allocation2 + $0x128] sm:$0xff]
    %v303 = vld [vmem:[#allocation2 + $0x130] sm:$0xff]
    %v304 = vld [vmem:[#allocation2 + $0x138] sm:$0xff]
    %v305 = vld [vmem:[#allocation2 + $0x140] sm:$0xff]
    %v306 = vld [vmem:[#allocation2 + $0x148] sm:$0xff]
    %v307 = vld [vmem:[#allocation2 + $0x150] sm:$0xff]
    %v308 = vld [vmem:[#allocation2 + $0x158] sm:$0xff]
    %v309 = vld [vmem:[#allocation2 + $0x160] sm:$0xff]
    %v310 = vld [vmem:[#allocation2 + $0x168] sm:$0xff]
    %v311 = vld [vmem:[#allocation2 + $0x170] sm:$0xff]
    %v312 = vld [vmem:[#allocation2 + $0x178] sm:$0xff]
    %v313 = vld [vmem:[#allocation2 + $0x180] sm:$0xff]
    %v314 = vld [vmem:[#allocation2 + $0x188] sm:$0xff]
    %v315 = vld [vmem:[#allocation2 + $0x190] sm:$0xff]
    %v316 = vld [vmem:[#allocation2 + $0x198] sm:$0xff]
    %v317 = vld [vmem:[#allocation2 + $0x1a0] sm:$0xff]
    %v318 = vld [vmem:[#allocation2 + $0x1a8] sm:$0xff]
    %v319 = vld [vmem:[#allocation2 + $0x1b0] sm:$0xff]
    %v320 = vld [vmem:[#allocation2 + $0x1b8] sm:$0xff]
    %v321 = vld [vmem:[#allocation2 + $0x1c0] sm:$0xff]
    %v322 = vld [vmem:[#allocation2 + $0x1c8] sm:$0xff]
    %v323 = vld [vmem:[#allocation2 + $0x1d0] sm:$0xff]
    %v324 = vld [vmem:[#allocation2 + $0x1d8] sm:$0xff]
    %v325 = vld [vmem:[#allocation2 + $0x1e0] sm:$0xff]
    %v326 = vld [vmem:[#allocation2 + $0x1e8] sm:$0xff]
    %v327 = vld [vmem:[#allocation2 + $0x1f0] sm:$0xff]
    %v328 = vld [vmem:[#allocation2 + $0x1f8] sm:$0xff]
    %v329 = vld [vmem:[#allocation2 + $0x200] sm:$0xff]
    %v330 = vld [vmem:[#allocation2 + $0x208] sm:$0xff]
    %v331 = vld [vmem:[#allocation2 + $0x210] sm:$0xff]
    %v332 = vld [vmem:[#allocation2 + $0x218] sm:$0xff]
    %v333 = vld [vmem:[#allocation2 + $0x220] sm:$0xff]
    %v334 = vld [vmem:[#allocation2 + $0x228] sm:$0xff]
    %v335 = vld [vmem:[#allocation2 + $0x230] sm:$0xff]
    %v336 = vld [vmem:[#allocation2 + $0x238] sm:$0xff]
    %v337 = vld [vmem:[#allocation2 + $0x240] sm:$0xff]
    %v338 = vld [vmem:[#allocation2 + $0x248] sm:$0xff]
    %v339 = vld [vmem:[#allocation2 + $0x250] sm:$0xff]
    %v340 = vld [vmem:[#allocation2 + $0x258] sm:$0xff]
    %v341 = vld [vmem:[#allocation2 + $0x260] sm:$0xff]
    %v342 = vld [vmem:[#allocation2 + $0x268] sm:$0xff]
    %v343 = vld [vmem:[#allocation2 + $0x270] sm:$0xff]
    %v344 = vld [vmem:[#allocation2 + $0x278] sm:$0xff]
    %v345 = vld [vmem:[#allocation2 + $0x280] sm:$0xff]
    %v346 = vld [vmem:[#allocation2 + $0x288] sm:$0xff]
    %v347 = vld [vmem:[#allocation2 + $0x290] sm:$0xff]
    %v348 = vld [vmem:[#allocation2 + $0x298] sm:$0xff]
    %v349 = vld [vmem:[#allocation2 + $0x2a0] sm:$0xff]
    %v350 = vld [vmem:[#allocation2 + $0x2a8] sm:$0xff]
    %v351 = vld [vmem:[#allocation2 + $0x2b0] sm:$0xff]
    %v352 = vld [vmem:[#allocation2 + $0x2b8] sm:$0xff]
    %v353 = vld [vmem:[#allocation2 + $0x2c0] sm:$0xff]
    %v354 = vld [vmem:[#allocation2 + $0x2c8] sm:$0xff]
    %v355 = vld [vmem:[#allocation2 + $0x2d0] sm:$0xff]
    %v356 = vld [vmem:[#allocation2 + $0x2d8] sm:$0xff]
    %v357 = vld [vmem:[#allocation2 + $0x2e0] sm:$0xff]
    %v358 = vld [vmem:[#allocation2 + $0x2e8] sm:$0xff]
    %v359 = vld [vmem:[#allocation2 + $0x2f0] sm:$0xff]
    %v360 = vld [vmem:[#allocation2 + $0x2f8] sm:$0xff]
    %v361 = vld [vmem:[#allocation2 + $0x300] sm:$0xff]
    %v362 = vld [vmem:[#allocation2 + $0x308] sm:$0xff]
    %v363 = vld [vmem:[#allocation2 + $0x310] sm:$0xff]
    %v364 = vld [vmem:[#allocation2 + $0x318] sm:$0xff]
    %v365 = vld [vmem:[#allocation2 + $0x320] sm:$0xff]
    %v366 = vld [vmem:[#allocation2 + $0x328] sm:$0xff]
    %v367 = vld [vmem:[#allocation2 + $0x330] sm:$0xff]
    %v368 = vld [vmem:[#allocation2 + $0x338] sm:$0xff]
    %v369 = vld [vmem:[#allocation2 + $0x340] sm:$0xff]
    %v370 = vld [vmem:[#allocation2 + $0x348] sm:$0xff]
    %v371 = vld [vmem:[#allocation2 + $0x350] sm:$0xff]
    %v372 = vld [vmem:[#allocation2 + $0x358] sm:$0xff]
    %v373 = vld [vmem:[#allocation2 + $0x360] sm:$0xff]
    %v374 = vld [vmem:[#allocation2 + $0x368] sm:$0xff]
    %v375 = vld [vmem:[#allocation2 + $0x370] sm:$0xff]
    %v376 = vld [vmem:[#allocation2 + $0x378] sm:$0xff]
    %v377 = vld [vmem:[#allocation2 + $0x380] sm:$0xff]
    %v378 = vld [vmem:[#allocation2 + $0x388] sm:$0xff]
    %v379 = vld [vmem:[#allocation2 + $0x390] sm:$0xff]
    %v380 = vld [vmem:[#allocation2 + $0x398] sm:$0xff]
    %v381 = vld [vmem:[#allocation2 + $0x3a0] sm:$0xff]
    %v382 = vld [vmem:[#allocation2 + $0x3a8] sm:$0xff]
    %v383 = vld [vmem:[#allocation2 + $0x3b0] sm:$0xff]
    %v384 = vld [vmem:[#allocation2 + $0x3b8] sm:$0xff]
    %v385 = vld [vmem:[#allocation2 + $0x3c0] sm:$0xff]
    %v386 = vld [vmem:[#allocation2 + $0x3c8] sm:$0xff]
    %v387 = vld [vmem:[#allocation2 + $0x3d0] sm:$0xff]
    %v388 = vld [vmem:[#allocation2 + $0x3d8] sm:$0xff]
    %v389 = vld [vmem:[#allocation2 + $0x3e0] sm:$0xff]
    %v390 = vld [vmem:[#allocation2 + $0x3e8] sm:$0xff]
    %v391 = vld [vmem:[#allocation2 + $0x3f0] sm:$0xff]
    %v392 = vld [vmem:[#allocation2 + $0x3f8] sm:$0xff]
    %v393 = vld [vmem:[#allocation3] sm:$0xff]
    %v394 = vld [vmem:[#allocation3 + $0x8] sm:$0xff]
    %v395 = vld [vmem:[#allocation3 + $0x10] sm:$0xff]
    %v396 = vld [vmem:[#allocation3 + $0x18] sm:$0xff]
    %v397 = vld [vmem:[#allocation3 + $0x20] sm:$0xff]
    %v398 = vld [vmem:[#allocation3 + $0x28] sm:$0xff]
    %v399 = vld [vmem:[#allocation3 + $0x30] sm:$0xff]
    %v400 = vld [vmem:[#allocation3 + $0x38] sm:$0xff]
    %v401 = vld [vmem:[#allocation3 + $0x40] sm:$0xff]
    %v402 = vld [vmem:[#allocation3 + $0x48] sm:$0xff]
    %v403 = vld [vmem:[#allocation3 + $0x50] sm:$0xff]
    %v404 = vld [vmem:[#allocation3 + $0x58] sm:$0xff]
    %v405 = vld [vmem:[#allocation3 + $0x60] sm:$0xff]
    %v406 = vld [vmem:[#allocation3 + $0x68] sm:$0xff]
    %v407 = vld [vmem:[#allocation3 + $0x70] sm:$0xff]
    %v408 = vld [vmem:[#allocation3 + $0x78] sm:$0xff]
    %v409 = vld [vmem:[#allocation6] sm:$0xff]
    %v410 = vld [vmem:[#allocation6 + $0x8] sm:$0xff]
    %v411 = vld [vmem:[#allocation6 + $0x10] sm:$0xff]
    %v412 = vld [vmem:[#allocation6 + $0x18] sm:$0xff]
    %v413 = vld [vmem:[#allocation6 + $0x20] sm:$0xff]
    %v414 = vld [vmem:[#allocation6 + $0x28] sm:$0xff]
    %v415 = vld [vmem:[#allocation6 + $0x30] sm:$0xff]
    %v416 = vld [vmem:[#allocation6 + $0x38] sm:$0xff]
    %v417 = vld [vmem:[#allocation6 + $0x40] sm:$0xff]
    %v418 = vld [vmem:[#allocation6 + $0x48] sm:$0xff]
    %v419 = vld [vmem:[#allocation6 + $0x50] sm:$0xff]
    %v420 = vld [vmem:[#allocation6 + $0x58] sm:$0xff]
    %v421 = vld [vmem:[#allocation6 + $0x60] sm:$0xff]
    %v422 = vld [vmem:[#allocation6 + $0x68] sm:$0xff]
    %v423 = vld [vmem:[#allocation6 + $0x70] sm:$0xff]
    %v424 = vld [vmem:[#allocation6 + $0x78] sm:$0xff]
    %v425 = vld [vmem:[#allocation6 + $0x80] sm:$0xff]
    %v426 = vld [vmem:[#allocation6 + $0x88] sm:$0xff]
    %v427 = vld [vmem:[#allocation6 + $0x90] sm:$0xff]
    %v428 = vld [vmem:[#allocation6 + $0x98] sm:$0xff]
    %v429 = vld [vmem:[#allocation6 + $0xa0] sm:$0xff]
    %v430 = vld [vmem:[#allocation6 + $0xa8] sm:$0xff]
    %v431 = vld [vmem:[#allocation6 + $0xb0] sm:$0xff]
    %v432 = vld [vmem:[#allocation6 + $0xb8] sm:$0xff]
    %v433 = vld [vmem:[#allocation6 + $0xc0] sm:$0xff]
    %v434 = vld [vmem:[#allocation6 + $0xc8] sm:$0xff]
    %v435 = vld [vmem:[#allocation6 + $0xd0] sm:$0xff]
    %v436 = vld [vmem:[#allocation6 + $0xd8] sm:$0xff]
    %v437 = vld [vmem:[#allocation6 + $0xe0] sm:$0xff]
    %v438 = vld [vmem:[#allocation6 + $0xe8] sm:$0xff]
    %v439 = vld [vmem:[#allocation6 + $0xf0] sm:$0xff]
    %v440 = vld [vmem:[#allocation6 + $0xf8] sm:$0xff]
    %v441 = vld [vmem:[#allocation6 + $0x100] sm:$0xff]
    %v442 = vld [vmem:[#allocation6 + $0x108] sm:$0xff]
    %v443 = vld [vmem:[#allocation6 + $0x110] sm:$0xff]
    %v444 = vld [vmem:[#allocation6 + $0x118] sm:$0xff]
    %v445 = vld [vmem:[#allocation6 + $0x120] sm:$0xff]
    %v446 = vld [vmem:[#allocation6 + $0x128] sm:$0xff]
    %v447 = vld [vmem:[#allocation6 + $0x130] sm:$0xff]
    %v448 = vld [vmem:[#allocation6 + $0x138] sm:$0xff]
    %v449 = vld [vmem:[#allocation6 + $0x140] sm:$0xff]
    %v450 = vld [vmem:[#allocation6 + $0x148] sm:$0xff]
    %v451 = vld [vmem:[#allocation6 + $0x150] sm:$0xff]
    %v452 = vld [vmem:[#allocation6 + $0x158] sm:$0xff]
    %v453 = vld [vmem:[#allocation6 + $0x160] sm:$0xff]
    %v454 = vld [vmem:[#allocation6 + $0x168] sm:$0xff]
    %v455 = vld [vmem:[#allocation6 + $0x170] sm:$0xff]
    %v456 = vld [vmem:[#allocation6 + $0x178] sm:$0xff]
    %v457 = vld [vmem:[#allocation6 + $0x180] sm:$0xff]
    %v458 = vld [vmem:[#allocation6 + $0x188] sm:$0xff]
    %v459 = vld [vmem:[#allocation6 + $0x190] sm:$0xff]
    %v460 = vld [vmem:[#allocation6 + $0x198] sm:$0xff]
    %v461 = vld [vmem:[#allocation6 + $0x1a0] sm:$0xff]
    %v462 = vld [vmem:[#allocation6 + $0x1a8] sm:$0xff]
    %v463 = vld [vmem:[#allocation6 + $0x1b0] sm:$0xff]
    %v464 = vld [vmem:[#allocation6 + $0x1b8] sm:$0xff]
    %v465 = vld [vmem:[#allocation6 + $0x1c0] sm:$0xff]
    %v466 = vld [vmem:[#allocation6 + $0x1c8] sm:$0xff]
    %v467 = vld [vmem:[#allocation6 + $0x1d0] sm:$0xff]
    %v468 = vld [vmem:[#allocation6 + $0x1d8] sm:$0xff]
    %v469 = vld [vmem:[#allocation6 + $0x1e0] sm:$0xff]
    %v470 = vld [vmem:[#allocation6 + $0x1e8] sm:$0xff]
    %v471 = vld [vmem:[#allocation6 + $0x1f0] sm:$0xff]
    %v472 = vld [vmem:[#allocation6 + $0x1f8] sm:$0xff]
    %v473 = vld [vmem:[#allocation6 + $0x200] sm:$0xff]
    %v474 = vld [vmem:[#allocation6 + $0x208] sm:$0xff]
    %v475 = vld [vmem:[#allocation6 + $0x210] sm:$0xff]
    %v476 = vld [vmem:[#allocation6 + $0x218] sm:$0xff]
    %v477 = vld [vmem:[#allocation6 + $0x220] sm:$0xff]
    %v478 = vld [vmem:[#allocation6 + $0x228] sm:$0xff]
    %v479 = vld [vmem:[#allocation6 + $0x230] sm:$0xff]
    %v480 = vld [vmem:[#allocation6 + $0x238] sm:$0xff]
    %v481 = vld [vmem:[#allocation6 + $0x240] sm:$0xff]
    %v482 = vld [vmem:[#allocation6 + $0x248] sm:$0xff]
    %v483 = vld [vmem:[#allocation6 + $0x250] sm:$0xff]
    %v484 = vld [vmem:[#allocation6 + $0x258] sm:$0xff]
    %v485 = vld [vmem:[#allocation6 + $0x260] sm:$0xff]
    %v486 = vld [vmem:[#allocation6 + $0x268] sm:$0xff]
    %v487 = vld [vmem:[#allocation6 + $0x270] sm:$0xff]
    %v488 = vld [vmem:[#allocation6 + $0x278] sm:$0xff]
    %v489 = vld [vmem:[#allocation6 + $0x280] sm:$0xff]
    %v490 = vld [vmem:[#allocation6 + $0x288] sm:$0xff]
    %v491 = vld [vmem:[#allocation6 + $0x290] sm:$0xff]
    %v492 = vld [vmem:[#allocation6 + $0x298] sm:$0xff]
    %v493 = vld [vmem:[#allocation6 + $0x2a0] sm:$0xff]
    %v494 = vld [vmem:[#allocation6 + $0x2a8] sm:$0xff]
    %v495 = vld [vmem:[#allocation6 + $0x2b0] sm:$0xff]
    %v496 = vld [vmem:[#allocation6 + $0x2b8] sm:$0xff]
    %v497 = vld [vmem:[#allocation6 + $0x2c0] sm:$0xff]
    %v498 = vld [vmem:[#allocation6 + $0x2c8] sm:$0xff]
    %v499 = vld [vmem:[#allocation6 + $0x2d0] sm:$0xff]
    %v500 = vld [vmem:[#allocation6 + $0x2d8] sm:$0xff]
    %v501 = vld [vmem:[#allocation6 + $0x2e0] sm:$0xff]
    %v502 = vld [vmem:[#allocation6 + $0x2e8] sm:$0xff]
    %v503 = vld [vmem:[#allocation6 + $0x2f0] sm:$0xff]
    %v504 = vld [vmem:[#allocation6 + $0x2f8] sm:$0xff]
    %v505 = vld [vmem:[#allocation6 + $0x300] sm:$0xff]
    %v506 = vld [vmem:[#allocation6 + $0x308] sm:$0xff]
    %v507 = vld [vmem:[#allocation6 + $0x310] sm:$0xff]
    %v508 = vld [vmem:[#allocation6 + $0x318] sm:$0xff]
    %v509 = vld [vmem:[#allocation6 + $0x320] sm:$0xff]
    %v510 = vld [vmem:[#allocation6 + $0x328] sm:$0xff]
    %v511 = vld [vmem:[#allocation6 + $0x330] sm:$0xff]
    %v512 = vld [vmem:[#allocation6 + $0x338] sm:$0xff]
    %v513 = vld [vmem:[#allocation6 + $0x340] sm:$0xff]
    %v514 = vld [vmem:[#allocation6 + $0x348] sm:$0xff]
    %v515 = vld [vmem:[#allocation6 + $0x350] sm:$0xff]
    %v516 = vld [vmem:[#allocation6 + $0x358] sm:$0xff]
    %v517 = vld [vmem:[#allocation6 + $0x360] sm:$0xff]
    %v518 = vld [vmem:[#allocation6 + $0x368] sm:$0xff]
    %v519 = vld [vmem:[#allocation6 + $0x370] sm:$0xff]
    %v520 = vld [vmem:[#allocation6 + $0x378] sm:$0xff]
    %v521 = vld [vmem:[#allocation6 + $0x380] sm:$0xff]
    %v522 = vld [vmem:[#allocation6 + $0x388] sm:$0xff]
    %v523 = vld [vmem:[#allocation6 + $0x390] sm:$0xff]
    %v524 = vld [vmem:[#allocation6 + $0x398] sm:$0xff]
    %v525 = vld [vmem:[#allocation6 + $0x3a0] sm:$0xff]
    %v526 = vld [vmem:[#allocation6 + $0x3a8] sm:$0xff]
    %v527 = vld [vmem:[#allocation6 + $0x3b0] sm:$0xff]
    %v528 = vld [vmem:[#allocation6 + $0x3b8] sm:$0xff]
    %v529 = vld [vmem:[#allocation6 + $0x3c0] sm:$0xff]
    %v530 = vld [vmem:[#allocation6 + $0x3c8] sm:$0xff]
    %v531 = vld [vmem:[#allocation6 + $0x3d0] sm:$0xff]
    %v532 = vld [vmem:[#allocation6 + $0x3d8] sm:$0xff]
    %v533 = vld [vmem:[#allocation6 + $0x3e0] sm:$0xff]
    %v534 = vld [vmem:[#allocation6 + $0x3e8] sm:$0xff]
    %v535 = vld [vmem:[#allocation6 + $0x3f0] sm:$0xff]
    %v536 = vld [vmem:[#allocation6 + $0x3f8] sm:$0xff]
    %v553 = vunpack.c.l.b16 %v393
    %v554 = vunpack.c.h.b16 %v393
    %v555 = vunpack.c.l.b16 %v394
    %v556 = vunpack.c.h.b16 %v394
    %v557 = vunpack.c.l.b16 %v395
    %v558 = vunpack.c.h.b16 %v395
    %v559 = vunpack.c.l.b16 %v396
    %v560 = vunpack.c.h.b16 %v396
    %v561 = vunpack.c.l.b16 %v397
    %v562 = vunpack.c.h.b16 %v397
    %v563 = vunpack.c.l.b16 %v398
    %v564 = vunpack.c.h.b16 %v398
    %v565 = vunpack.c.l.b16 %v399
    %v566 = vunpack.c.h.b16 %v399
    %v567 = vunpack.c.l.b16 %v400
    %v568 = vunpack.c.h.b16 %v400
    %v569 = vunpack.c.l.b16 %v401
    %v570 = vunpack.c.h.b16 %v401
    %v571 = vunpack.c.l.b16 %v402
    %v572 = vunpack.c.h.b16 %v402
    %v573 = vunpack.c.l.b16 %v403
    %v574 = vunpack.c.h.b16 %v403
    %v575 = vunpack.c.l.b16 %v404
    %v576 = vunpack.c.h.b16 %v404
    %v577 = vunpack.c.l.b16 %v405
    %v578 = vunpack.c.h.b16 %v405
    %v579 = vunpack.c.l.b16 %v406
    %v580 = vunpack.c.h.b16 %v406
    %v581 = vunpack.c.l.b16 %v407
    %v582 = vunpack.c.h.b16 %v407
    %v583 = vunpack.c.l.b16 %v408
    %v584 = vunpack.c.h.b16 %v408
    %v585 = vpack.c.b16 %v555, %v553
    %v586 = vpack.c.b16 %v556, %v554
    %v587 = vpack.c.b16 %v559, %v557
    %v588 = vpack.c.b16 %v560, %v558
    %v589 = vpack.c.b16 %v563, %v561
    %v590 = vpack.c.b16 %v564, %v562
    %v591 = vpack.c.b16 %v567, %v565
    %v592 = vpack.c.b16 %v568, %v566
    %v593 = vpack.c.b16 %v571, %v569
    %v594 = vpack.c.b16 %v572, %v570
    %v595 = vpack.c.b16 %v575, %v573
    %v596 = vpack.c.b16 %v576, %v574
    %v597 = vpack.c.b16 %v579, %v577
    %v598 = vpack.c.b16 %v580, %v578
    %v599 = vpack.c.b16 %v583, %v581
    %v600 = vpack.c.b16 %v584, %v582
    %v745 = vunpack.c.l.b16 %v409
    %v746 = vunpack.c.h.b16 %v409
    %v747 = vunpack.c.l.b16 %v410
    %v748 = vunpack.c.h.b16 %v410
    %v749 = vunpack.c.l.b16 %v411
    %v750 = vunpack.c.h.b16 %v411
    %v751 = vunpack.c.l.b16 %v412
    %v752 = vunpack.c.h.b16 %v412
    %v753 = vunpack.c.l.b16 %v413
    %v754 = vunpack.c.h.b16 %v413
    %v755 = vunpack.c.l.b16 %v414
    %v756 = vunpack.c.h.b16 %v414
    %v757 = vunpack.c.l.b16 %v415
    %v758 = vunpack.c.h.b16 %v415
    %v759 = vunpack.c.l.b16 %v416
    %v760 = vunpack.c.h.b16 %v416
    %v761 = vunpack.c.l.b16 %v417
    %v762 = vunpack.c.h.b16 %v417
    %v763 = vunpack.c.l.b16 %v418
    %v764 = vunpack.c.h.b16 %v418
    %v765 = vunpack.c.l.b16 %v419
    %v766 = vunpack.c.h.b16 %v419
    %v767 = vunpack.c.l.b16 %v420
    %v768 = vunpack.c.h.b16 %v420
    %v769 = vunpack.c.l.b16 %v421
    %v770 = vunpack.c.h.b16 %v421
    %v771 = vunpack.c.l.b16 %v422
    %v772 = vunpack.c.h.b16 %v422
    %v773 = vunpack.c.l.b16 %v423
    %v774 = vunpack.c.h.b16 %v423
    %v775 = vunpack.c.l.b16 %v424
    %v776 = vunpack.c.h.b16 %v424
    %v777 = vunpack.c.l.b16 %v425
    %v778 = vunpack.c.h.b16 %v425
    %v779 = vunpack.c.l.b16 %v426
    %v780 = vunpack.c.h.b16 %v426
    %v781 = vunpack.c.l.b16 %v427
    %v782 = vunpack.c.h.b16 %v427
    %v783 = vunpack.c.l.b16 %v428
    %v784 = vunpack.c.h.b16 %v428
    %v785 = vunpack.c.l.b16 %v429
    %v786 = vunpack.c.h.b16 %v429
    %v787 = vunpack.c.l.b16 %v430
    %v788 = vunpack.c.h.b16 %v430
    %v789 = vunpack.c.l.b16 %v431
    %v790 = vunpack.c.h.b16 %v431
    %v791 = vunpack.c.l.b16 %v432
    %v792 = vunpack.c.h.b16 %v432
    %v793 = vunpack.c.l.b16 %v433
    %v794 = vunpack.c.h.b16 %v433
    %v795 = vunpack.c.l.b16 %v434
    %v796 = vunpack.c.h.b16 %v434
    %v797 = vunpack.c.l.b16 %v435
    %v798 = vunpack.c.h.b16 %v435
    %v799 = vunpack.c.l.b16 %v436
    %v800 = vunpack.c.h.b16 %v436
    %v801 = vunpack.c.l.b16 %v437
    %v802 = vunpack.c.h.b16 %v437
    %v803 = vunpack.c.l.b16 %v438
    %v804 = vunpack.c.h.b16 %v438
    %v805 = vunpack.c.l.b16 %v439
    %v806 = vunpack.c.h.b16 %v439
    %v807 = vunpack.c.l.b16 %v440
    %v808 = vunpack.c.h.b16 %v440
    %v809 = vunpack.c.l.b16 %v441
    %v810 = vunpack.c.h.b16 %v441
    %v811 = vunpack.c.l.b16 %v442
    %v812 = vunpack.c.h.b16 %v442
    %v813 = vunpack.c.l.b16 %v443
    %v814 = vunpack.c.h.b16 %v443
    %v815 = vunpack.c.l.b16 %v444
    %v816 = vunpack.c.h.b16 %v444
    %v817 = vunpack.c.l.b16 %v445
    %v818 = vunpack.c.h.b16 %v445
    %v819 = vunpack.c.l.b16 %v446
    %v820 = vunpack.c.h.b16 %v446
    %v821 = vunpack.c.l.b16 %v447
    %v822 = vunpack.c.h.b16 %v447
    %v823 = vunpack.c.l.b16 %v448
    %v824 = vunpack.c.h.b16 %v448
    %v825 = vunpack.c.l.b16 %v449
    %v826 = vunpack.c.h.b16 %v449
    %v827 = vunpack.c.l.b16 %v450
    %v828 = vunpack.c.h.b16 %v450
    %v829 = vunpack.c.l.b16 %v451
    %v830 = vunpack.c.h.b16 %v451
    %v831 = vunpack.c.l.b16 %v452
    %v832 = vunpack.c.h.b16 %v452
    %v833 = vunpack.c.l.b16 %v453
    %v834 = vunpack.c.h.b16 %v453
    %v835 = vunpack.c.l.b16 %v454
    %v836 = vunpack.c.h.b16 %v454
    %v837 = vunpack.c.l.b16 %v455
    %v838 = vunpack.c.h.b16 %v455
    %v839 = vunpack.c.l.b16 %v456
    %v840 = vunpack.c.h.b16 %v456
    %v841 = vunpack.c.l.b16 %v457
    %v842 = vunpack.c.h.b16 %v457
    %v843 = vunpack.c.l.b16 %v458
    %v844 = vunpack.c.h.b16 %v458
    %v845 = vunpack.c.l.b16 %v459
    %v846 = vunpack.c.h.b16 %v459
    %v847 = vunpack.c.l.b16 %v460
    %v848 = vunpack.c.h.b16 %v460
    %v849 = vunpack.c.l.b16 %v461
    %v850 = vunpack.c.h.b16 %v461
    %v851 = vunpack.c.l.b16 %v462
    %v852 = vunpack.c.h.b16 %v462
    %v853 = vunpack.c.l.b16 %v463
    %v854 = vunpack.c.h.b16 %v463
    %v855 = vunpack.c.l.b16 %v464
    %v856 = vunpack.c.h.b16 %v464
    %v857 = vunpack.c.l.b16 %v465
    %v858 = vunpack.c.h.b16 %v465
    %v859 = vunpack.c.l.b16 %v466
    %v860 = vunpack.c.h.b16 %v466
    %v861 = vunpack.c.l.b16 %v467
    %v862 = vunpack.c.h.b16 %v467
    %v863 = vunpack.c.l.b16 %v468
    %v864 = vunpack.c.h.b16 %v468
    %v865 = vunpack.c.l.b16 %v469
    %v866 = vunpack.c.h.b16 %v469
    %v867 = vunpack.c.l.b16 %v470
    %v868 = vunpack.c.h.b16 %v470
    %v869 = vunpack.c.l.b16 %v471
    %v870 = vunpack.c.h.b16 %v471
    %v871 = vunpack.c.l.b16 %v472
    %v872 = vunpack.c.h.b16 %v472
    %v873 = vunpack.c.l.b16 %v473
    %v874 = vunpack.c.h.b16 %v473
    %v875 = vunpack.c.l.b16 %v474
    %v876 = vunpack.c.h.b16 %v474
    %v877 = vunpack.c.l.b16 %v475
    %v878 = vunpack.c.h.b16 %v475
    %v879 = vunpack.c.l.b16 %v476
    %v880 = vunpack.c.h.b16 %v476
    %v881 = vunpack.c.l.b16 %v477
    %v882 = vunpack.c.h.b16 %v477
    %v883 = vunpack.c.l.b16 %v478
    %v884 = vunpack.c.h.b16 %v478
    %v885 = vunpack.c.l.b16 %v479
    %v886 = vunpack.c.h.b16 %v479
    %v887 = vunpack.c.l.b16 %v480
    %v888 = vunpack.c.h.b16 %v480
    %v889 = vunpack.c.l.b16 %v481
    %v890 = vunpack.c.h.b16 %v481
    %v891 = vunpack.c.l.b16 %v482
    %v892 = vunpack.c.h.b16 %v482
    %v893 = vunpack.c.l.b16 %v483
    %v894 = vunpack.c.h.b16 %v483
    %v895 = vunpack.c.l.b16 %v484
    %v896 = vunpack.c.h.b16 %v484
    %v897 = vunpack.c.l.b16 %v485
    %v898 = vunpack.c.h.b16 %v485
    %v899 = vunpack.c.l.b16 %v486
    %v900 = vunpack.c.h.b16 %v486
    %v901 = vunpack.c.l.b16 %v487
    %v902 = vunpack.c.h.b16 %v487
    %v903 = vunpack.c.l.b16 %v488
    %v904 = vunpack.c.h.b16 %v488
    %v905 = vunpack.c.l.b16 %v489
    %v906 = vunpack.c.h.b16 %v489
    %v907 = vunpack.c.l.b16 %v490
    %v908 = vunpack.c.h.b16 %v490
    %v909 = vunpack.c.l.b16 %v491
    %v910 = vunpack.c.h.b16 %v491
    %v911 = vunpack.c.l.b16 %v492
    %v912 = vunpack.c.h.b16 %v492
    %v913 = vunpack.c.l.b16 %v493
    %v914 = vunpack.c.h.b16 %v493
    %v915 = vunpack.c.l.b16 %v494
    %v916 = vunpack.c.h.b16 %v494
    %v917 = vunpack.c.l.b16 %v495
    %v918 = vunpack.c.h.b16 %v495
    %v919 = vunpack.c.l.b16 %v496
    %v920 = vunpack.c.h.b16 %v496
    %v921 = vunpack.c.l.b16 %v497
    %v922 = vunpack.c.h.b16 %v497
    %v923 = vunpack.c.l.b16 %v498
    %v924 = vunpack.c.h.b16 %v498
    %v925 = vunpack.c.l.b16 %v499
    %v926 = vunpack.c.h.b16 %v499
    %v927 = vunpack.c.l.b16 %v500
    %v928 = vunpack.c.h.b16 %v500
    %v929 = vunpack.c.l.b16 %v501
    %v930 = vunpack.c.h.b16 %v501
    %v931 = vunpack.c.l.b16 %v502
    %v932 = vunpack.c.h.b16 %v502
    %v933 = vunpack.c.l.b16 %v503
    %v934 = vunpack.c.h.b16 %v503
    %v935 = vunpack.c.l.b16 %v504
    %v936 = vunpack.c.h.b16 %v504
    %v937 = vunpack.c.l.b16 %v505
    %v938 = vunpack.c.h.b16 %v505
    %v939 = vunpack.c.l.b16 %v506
    %v940 = vunpack.c.h.b16 %v506
    %v941 = vunpack.c.l.b16 %v507
    %v942 = vunpack.c.h.b16 %v507
    %v943 = vunpack.c.l.b16 %v508
    %v944 = vunpack.c.h.b16 %v508
    %v945 = vunpack.c.l.b16 %v509
    %v946 = vunpack.c.h.b16 %v509
    %v947 = vunpack.c.l.b16 %v510
    %v948 = vunpack.c.h.b16 %v510
    %v949 = vunpack.c.l.b16 %v511
    %v950 = vunpack.c.h.b16 %v511
    %v951 = vunpack.c.l.b16 %v512
    %v952 = vunpack.c.h.b16 %v512
    %v953 = vunpack.c.l.b16 %v513
    %v954 = vunpack.c.h.b16 %v513
    %v955 = vunpack.c.l.b16 %v514
    %v956 = vunpack.c.h.b16 %v514
    %v957 = vunpack.c.l.b16 %v515
    %v958 = vunpack.c.h.b16 %v515
    %v959 = vunpack.c.l.b16 %v516
    %v960 = vunpack.c.h.b16 %v516
    %v961 = vunpack.c.l.b16 %v517
    %v962 = vunpack.c.h.b16 %v517
    %v963 = vunpack.c.l.b16 %v518
    %v964 = vunpack.c.h.b16 %v518
    %v965 = vunpack.c.l.b16 %v519
    %v966 = vunpack.c.h.b16 %v519
    %v967 = vunpack.c.l.b16 %v520
    %v968 = vunpack.c.h.b16 %v520
    %v969 = vunpack.c.l.b16 %v521
    %v970 = vunpack.c.h.b16 %v521
    %v971 = vunpack.c.l.b16 %v522
    %v972 = vunpack.c.h.b16 %v522
    %v973 = vunpack.c.l.b16 %v523
    %v974 = vunpack.c.h.b16 %v523
    %v975 = vunpack.c.l.b16 %v524
    %v976 = vunpack.c.h.b16 %v524
    %v977 = vunpack.c.l.b16 %v525
    %v978 = vunpack.c.h.b16 %v525
    %v979 = vunpack.c.l.b16 %v526
    %v980 = vunpack.c.h.b16 %v526
    %v981 = vunpack.c.l.b16 %v527
    %v982 = vunpack.c.h.b16 %v527
    %v983 = vunpack.c.l.b16 %v528
    %v984 = vunpack.c.h.b16 %v528
    %v985 = vunpack.c.l.b16 %v529
    %v986 = vunpack.c.h.b16 %v529
    %v987 = vunpack.c.l.b16 %v530
    %v988 = vunpack.c.h.b16 %v530
    %v989 = vunpack.c.l.b16 %v531
    %v990 = vunpack.c.h.b16 %v531
    %v991 = vunpack.c.l.b16 %v532
    %v992 = vunpack.c.h.b16 %v532
    %v993 = vunpack.c.l.b16 %v533
    %v994 = vunpack.c.h.b16 %v533
    %v995 = vunpack.c.l.b16 %v534
    %v996 = vunpack.c.h.b16 %v534
    %v997 = vunpack.c.l.b16 %v535
    %v998 = vunpack.c.h.b16 %v535
    %v999 = vunpack.c.l.b16 %v536
    %v1000 = vunpack.c.h.b16 %v536
    %v1001 = vpack.c.b16 %v753, %v745
    %v1002 = vpack.c.b16 %v754, %v746
    %v1003 = vpack.c.b16 %v755, %v747
    %v1004 = vpack.c.b16 %v756, %v748
    %v1005 = vpack.c.b16 %v757, %v749
    %v1006 = vpack.c.b16 %v758, %v750
    %v1007 = vpack.c.b16 %v759, %v751
    %v1008 = vpack.c.b16 %v760, %v752
    %v1009 = vpack.c.b16 %v769, %v761
    %v1010 = vpack.c.b16 %v770, %v762
    %v1011 = vpack.c.b16 %v771, %v763
    %v1012 = vpack.c.b16 %v772, %v764
    %v1013 = vpack.c.b16 %v773, %v765
    %v1014 = vpack.c.b16 %v774, %v766
    %v1015 = vpack.c.b16 %v775, %v767
    %v1016 = vpack.c.b16 %v776, %v768
    %v1017 = vpack.c.b16 %v785, %v777
    %v1018 = vpack.c.b16 %v786, %v778
    %v1019 = vpack.c.b16 %v787, %v779
    %v1020 = vpack.c.b16 %v788, %v780
    %v1021 = vpack.c.b16 %v789, %v781
    %v1022 = vpack.c.b16 %v790, %v782
    %v1023 = vpack.c.b16 %v791, %v783
    %v1024 = vpack.c.b16 %v792, %v784
    %v1025 = vpack.c.b16 %v801, %v793
    %v1026 = vpack.c.b16 %v802, %v794
    %v1027 = vpack.c.b16 %v803, %v795
    %v1028 = vpack.c.b16 %v804, %v796
    %v1029 = vpack.c.b16 %v805, %v797
    %v1030 = vpack.c.b16 %v806, %v798
    %v1031 = vpack.c.b16 %v807, %v799
    %v1032 = vpack.c.b16 %v808, %v800
    %v1033 = vpack.c.b16 %v817, %v809
    %v1034 = vpack.c.b16 %v818, %v810
    %v1035 = vpack.c.b16 %v819, %v811
    %v1036 = vpack.c.b16 %v820, %v812
    %v1037 = vpack.c.b16 %v821, %v813
    %v1038 = vpack.c.b16 %v822, %v814
    %v1039 = vpack.c.b16 %v823, %v815
    %v1040 = vpack.c.b16 %v824, %v816
    %v1041 = vpack.c.b16 %v833, %v825
    %v1042 = vpack.c.b16 %v834, %v826
    %v1043 = vpack.c.b16 %v835, %v827
    %v1044 = vpack.c.b16 %v836, %v828
    %v1045 = vpack.c.b16 %v837, %v829
    %v1046 = vpack.c.b16 %v838, %v830
    %v1047 = vpack.c.b16 %v839, %v831
    %v1048 = vpack.c.b16 %v840, %v832
    %v1049 = vpack.c.b16 %v849, %v841
    %v1050 = vpack.c.b16 %v850, %v842
    %v1051 = vpack.c.b16 %v851, %v843
    %v1052 = vpack.c.b16 %v852, %v844
    %v1053 = vpack.c.b16 %v853, %v845
    %v1054 = vpack.c.b16 %v854, %v846
    %v1055 = vpack.c.b16 %v855, %v847
    %v1056 = vpack.c.b16 %v856, %v848
    %v1057 = vpack.c.b16 %v865, %v857
    %v1058 = vpack.c.b16 %v866, %v858
    %v1059 = vpack.c.b16 %v867, %v859
    %v1060 = vpack.c.b16 %v868, %v860
    %v1061 = vpack.c.b16 %v869, %v861
    %v1062 = vpack.c.b16 %v870, %v862
    %v1063 = vpack.c.b16 %v871, %v863
    %v1064 = vpack.c.b16 %v872, %v864
    %v1065 = vpack.c.b16 %v881, %v873
    %v1066 = vpack.c.b16 %v882, %v874
    %v1067 = vpack.c.b16 %v883, %v875
    %v1068 = vpack.c.b16 %v884, %v876
    %v1069 = vpack.c.b16 %v885, %v877
    %v1070 = vpack.c.b16 %v886, %v878
    %v1071 = vpack.c.b16 %v887, %v879
    %v1072 = vpack.c.b16 %v888, %v880
    %v1073 = vpack.c.b16 %v897, %v889
    %v1074 = vpack.c.b16 %v898, %v890
    %v1075 = vpack.c.b16 %v899, %v891
    %v1076 = vpack.c.b16 %v900, %v892
    %v1077 = vpack.c.b16 %v901, %v893
    %v1078 = vpack.c.b16 %v902, %v894
    %v1079 = vpack.c.b16 %v903, %v895
    %v1080 = vpack.c.b16 %v904, %v896
    %v1081 = vpack.c.b16 %v913, %v905
    %v1082 = vpack.c.b16 %v914, %v906
    %v1083 = vpack.c.b16 %v915, %v907
    %v1084 = vpack.c.b16 %v916, %v908
    %v1085 = vpack.c.b16 %v917, %v909
    %v1086 = vpack.c.b16 %v918, %v910
    %v1087 = vpack.c.b16 %v919, %v911
    %v1088 = vpack.c.b16 %v920, %v912
    %v1089 = vpack.c.b16 %v929, %v921
    %v1090 = vpack.c.b16 %v930, %v922
    %v1091 = vpack.c.b16 %v931, %v923
    %v1092 = vpack.c.b16 %v932, %v924
    %v1093 = vpack.c.b16 %v933, %v925
    %v1094 = vpack.c.b16 %v934, %v926
    %v1095 = vpack.c.b16 %v935, %v927
    %v1096 = vpack.c.b16 %v936, %v928
    %v1097 = vpack.c.b16 %v945, %v937
    %v1098 = vpack.c.b16 %v946, %v938
    %v1099 = vpack.c.b16 %v947, %v939
    %v1100 = vpack.c.b16 %v948, %v940
    %v1101 = vpack.c.b16 %v949, %v941
    %v1102 = vpack.c.b16 %v950, %v942
    %v1103 = vpack.c.b16 %v951, %v943
    %v1104 = vpack.c.b16 %v952, %v944
    %v1105 = vpack.c.b16 %v961, %v953
    %v1106 = vpack.c.b16 %v962, %v954
    %v1107 = vpack.c.b16 %v963, %v955
    %v1108 = vpack.c.b16 %v964, %v956
    %v1109 = vpack.c.b16 %v965, %v957
    %v1110 = vpack.c.b16 %v966, %v958
    %v1111 = vpack.c.b16 %v967, %v959
    %v1112 = vpack.c.b16 %v968, %v960
    %v1113 = vpack.c.b16 %v977, %v969
    %v1114 = vpack.c.b16 %v978, %v970
    %v1115 = vpack.c.b16 %v979, %v971
    %v1116 = vpack.c.b16 %v980, %v972
    %v1117 = vpack.c.b16 %v981, %v973
    %v1118 = vpack.c.b16 %v982, %v974
    %v1119 = vpack.c.b16 %v983, %v975
    %v1120 = vpack.c.b16 %v984, %v976
    %v1121 = vpack.c.b16 %v993, %v985
    %v1122 = vpack.c.b16 %v994, %v986
    %v1123 = vpack.c.b16 %v995, %v987
    %v1124 = vpack.c.b16 %v996, %v988
    %v1125 = vpack.c.b16 %v997, %v989
    %v1126 = vpack.c.b16 %v998, %v990
    %v1127 = vpack.c.b16 %v999, %v991
    %v1128 = vpack.c.b16 %v1000, %v992
    %1257 = vmatpush.bf16.msra.mxu0 %v1057
    %1258 = vmatpush.bf16.msra.mxu0 %v1049
    %1259 = vmatpush.bf16.msra.mxu0 %v1041
    %1260 = vmatpush.bf16.msra.mxu0 %v1033
    %1261 = vmatpush.bf16.msra.mxu0 %v1025
    %1262 = vmatpush.bf16.msra.mxu0 %v1017
    %1263 = vmatpush.bf16.msra.mxu0 %v1009
    %1264 = vmatpush.bf16.msra.mxu0 %v1001
    %1265 = vmatmul.bf16.gmra.mxu0 %v585
    %v1266 = vpop.f32.mrf.mxu0
    %v1267 = vadd.f32 0.0, %v1266
    %v1268 = vpop.f32.mrf.mxu0
    %v1269 = vadd.f32 0.0, %v1268
    %1270 = vmatmul.bf16.gmra.mxu0 %v587
    %v1271 = vpop.f32.mrf.mxu0
    %v1272 = vadd.f32 0.0, %v1271
    %v1273 = vpop.f32.mrf.mxu0
    %v1274 = vadd.f32 0.0, %v1273
    %1275 = vmatmul.bf16.gmra.mxu0 %v589
    %v1276 = vpop.f32.mrf.mxu0
    %v1277 = vadd.f32 0.0, %v1276
    %v1278 = vpop.f32.mrf.mxu0
    %v1279 = vadd.f32 0.0, %v1278
    %1280 = vmatmul.bf16.gmra.mxu0 %v591
    %v1281 = vpop.f32.mrf.mxu0
    %v1282 = vadd.f32 0.0, %v1281
    %v1283 = vpop.f32.mrf.mxu0
    %v1284 = vadd.f32 0.0, %v1283
    %1285 = vmatmul.bf16.gmra.mxu0 %v593
    %v1286 = vpop.f32.mrf.mxu0
    %v1287 = vadd.f32 0.0, %v1286
    %v1288 = vpop.f32.mrf.mxu0
    %v1289 = vadd.f32 0.0, %v1288
    %1290 = vmatmul.bf16.gmra.mxu0 %v595
    %v1291 = vpop.f32.mrf.mxu0
    %v1292 = vadd.f32 0.0, %v1291
    %v1293 = vpop.f32.mrf.mxu0
    %v1294 = vadd.f32 0.0, %v1293
    %1295 = vmatmul.bf16.gmra.mxu0 %v597
    %v1296 = vpop.f32.mrf.mxu0
    %v1297 = vadd.f32 0.0, %v1296
    %v1298 = vpop.f32.mrf.mxu0
    %v1299 = vadd.f32 0.0, %v1298
    %1300 = vmatmul.bf16.gmra.mxu0 %v599
    %v1301 = vpop.f32.mrf.mxu0
    %v1302 = vadd.f32 0.0, %v1301
    %v1303 = vpop.f32.mrf.mxu0
    %v1304 = vadd.f32 0.0, %v1303
    %1305 = vdwg.mxu0
    %1306 = vmatpush.bf16.msra.mxu0 %v1121
    %1307 = vmatpush.bf16.msra.mxu0 %v1113
    %1308 = vmatpush.bf16.msra.mxu0 %v1105
    %1309 = vmatpush.bf16.msra.mxu0 %v1097
    %1310 = vmatpush.bf16.msra.mxu0 %v1089
    %1311 = vmatpush.bf16.msra.mxu0 %v1081
    %1312 = vmatpush.bf16.msra.mxu0 %v1073
    %1313 = vmatpush.bf16.msra.mxu0 %v1065
    %1314 = vmatmul.bf16.gmra.mxu0 %v586
    %v1315 = vpop.f32.mrf.mxu0
    %v1316 = vadd.f32 %v1267, %v1315
    %v1317 = vpop.f32.mrf.mxu0
    %v1318 = vadd.f32 %v1269, %v1317
    %1319 = vmatmul.bf16.gmra.mxu0 %v588
    %v1320 = vpop.f32.mrf.mxu0
    %v1321 = vadd.f32 %v1272, %v1320
    %v1322 = vpop.f32.mrf.mxu0
    %v1323 = vadd.f32 %v1274, %v1322
    %1324 = vmatmul.bf16.gmra.mxu0 %v590
    %v1325 = vpop.f32.mrf.mxu0
    %v1326 = vadd.f32 %v1277, %v1325
    %v1327 = vpop.f32.mrf.mxu0
    %v1328 = vadd.f32 %v1279, %v1327
    %1329 = vmatmul.bf16.gmra.mxu0 %v592
    %v1330 = vpop.f32.mrf.mxu0
    %v1331 = vadd.f32 %v1282, %v1330
    %v1332 = vpop.f32.mrf.mxu0
    %v1333 = vadd.f32 %v1284, %v1332
    %1334 = vmatmul.bf16.gmra.mxu0 %v594
    %v1335 = vpop.f32.mrf.mxu0
    %v1336 = vadd.f32 %v1287, %v1335
    %v1337 = vpop.f32.mrf.mxu0
    %v1338 = vadd.f32 %v1289, %v1337
    %1339 = vmatmul.bf16.gmra.mxu0 %v596
    %v1340 = vpop.f32.mrf.mxu0
    %v1341 = vadd.f32 %v1292, %v1340
    %v1342 = vpop.f32.mrf.mxu0
    %v1343 = vadd.f32 %v1294, %v1342
    %1344 = vmatmul.bf16.gmra.mxu0 %v598
    %v1345 = vpop.f32.mrf.mxu0
    %v1346 = vadd.f32 %v1297, %v1345
    %v1347 = vpop.f32.mrf.mxu0
    %v1348 = vadd.f32 %v1299, %v1347
    %1349 = vmatmul.bf16.gmra.mxu0 %v600
    %v1350 = vpop.f32.mrf.mxu0
    %v1351 = vadd.f32 %v1302, %v1350
    %v1352 = vpop.f32.mrf.mxu0
    %v1353 = vadd.f32 %v1304, %v1352
    %1354 = vdwg.mxu0
    %1355 = vmatpush.bf16.msra.mxu0 %v1058
    %1356 = vmatpush.bf16.msra.mxu0 %v1050
    %1357 = vmatpush.bf16.msra.mxu0 %v1042
    %1358 = vmatpush.bf16.msra.mxu0 %v1034
    %1359 = vmatpush.bf16.msra.mxu0 %v1026
    %1360 = vmatpush.bf16.msra.mxu0 %v1018
    %1361 = vmatpush.bf16.msra.mxu0 %v1010
    %1362 = vmatpush.bf16.msra.mxu0 %v1002
    %1363 = vmatmul.bf16.gmra.mxu0 %v585
    %v1364 = vpop.f32.mrf.mxu0
    %v1365 = vadd.f32 0.0, %v1364
    %v1366 = vpop.f32.mrf.mxu0
    %v1367 = vadd.f32 0.0, %v1366
    %1368 = vmatmul.bf16.gmra.mxu0 %v587
    %v1369 = vpop.f32.mrf.mxu0
    %v1370 = vadd.f32 0.0, %v1369
    %v1371 = vpop.f32.mrf.mxu0
    %v1372 = vadd.f32 0.0, %v1371
    %1373 = vmatmul.bf16.gmra.mxu0 %v589
    %v1374 = vpop.f32.mrf.mxu0
    %v1375 = vadd.f32 0.0, %v1374
    %v1376 = vpop.f32.mrf.mxu0
    %v1377 = vadd.f32 0.0, %v1376
    %1378 = vmatmul.bf16.gmra.mxu0 %v591
    %v1379 = vpop.f32.mrf.mxu0
    %v1380 = vadd.f32 0.0, %v1379
    %v1381 = vpop.f32.mrf.mxu0
    %v1382 = vadd.f32 0.0, %v1381
    %1383 = vmatmul.bf16.gmra.mxu0 %v593
    %v1384 = vpop.f32.mrf.mxu0
    %v1385 = vadd.f32 0.0, %v1384
    %v1386 = vpop.f32.mrf.mxu0
    %v1387 = vadd.f32 0.0, %v1386
    %1388 = vmatmul.bf16.gmra.mxu0 %v595
    %v1389 = vpop.f32.mrf.mxu0
    %v1390 = vadd.f32 0.0, %v1389
    %v1391 = vpop.f32.mrf.mxu0
    %v1392 = vadd.f32 0.0, %v1391
    %1393 = vmatmul.bf16.gmra.mxu0 %v597
    %v1394 = vpop.f32.mrf.mxu0
    %v1395 = vadd.f32 0.0, %v1394
    %v1396 = vpop.f32.mrf.mxu0
    %v1397 = vadd.f32 0.0, %v1396
    %1398 = vmatmul.bf16.gmra.mxu0 %v599
    %v1399 = vpop.f32.mrf.mxu0
    %v1400 = vadd.f32 0.0, %v1399
    %v1401 = vpop.f32.mrf.mxu0
    %v1402 = vadd.f32 0.0, %v1401
    %1403 = vdwg.mxu0
    %1404 = vmatpush.bf16.msra.mxu0 %v1122
    %1405 = vmatpush.bf16.msra.mxu0 %v1114
    %1406 = vmatpush.bf16.msra.mxu0 %v1106
    %1407 = vmatpush.bf16.msra.mxu0 %v1098
    %1408 = vmatpush.bf16.msra.mxu0 %v1090
    %1409 = vmatpush.bf16.msra.mxu0 %v1082
    %1410 = vmatpush.bf16.msra.mxu0 %v1074
    %1411 = vmatpush.bf16.msra.mxu0 %v1066
    %1412 = vmatmul.bf16.gmra.mxu0 %v586
    %v1413 = vpop.f32.mrf.mxu0
    %v1414 = vadd.f32 %v1365, %v1413
    %v1415 = vpop.f32.mrf.mxu0
    %v1416 = vadd.f32 %v1367, %v1415
    %1417 = vmatmul.bf16.gmra.mxu0 %v588
    %v1418 = vpop.f32.mrf.mxu0
    %v1419 = vadd.f32 %v1370, %v1418
    %v1420 = vpop.f32.mrf.mxu0
    %v1421 = vadd.f32 %v1372, %v1420
    %1422 = vmatmul.bf16.gmra.mxu0 %v590
    %v1423 = vpop.f32.mrf.mxu0
    %v1424 = vadd.f32 %v1375, %v1423
    %v1425 = vpop.f32.mrf.mxu0
    %v1426 = vadd.f32 %v1377, %v1425
    %1427 = vmatmul.bf16.gmra.mxu0 %v592
    %v1428 = vpop.f32.mrf.mxu0
    %v1429 = vadd.f32 %v1380, %v1428
    %v1430 = vpop.f32.mrf.mxu0
    %v1431 = vadd.f32 %v1382, %v1430
    %1432 = vmatmul.bf16.gmra.mxu0 %v594
    %v1433 = vpop.f32.mrf.mxu0
    %v1434 = vadd.f32 %v1385, %v1433
    %v1435 = vpop.f32.mrf.mxu0
    %v1436 = vadd.f32 %v1387, %v1435
    %1437 = vmatmul.bf16.gmra.mxu0 %v596
    %v1438 = vpop.f32.mrf.mxu0
    %v1439 = vadd.f32 %v1390, %v1438
    %v1440 = vpop.f32.mrf.mxu0
    %v1441 = vadd.f32 %v1392, %v1440
    %1442 = vmatmul.bf16.gmra.mxu0 %v598
    %v1443 = vpop.f32.mrf.mxu0
    %v1444 = vadd.f32 %v1395, %v1443
    %v1445 = vpop.f32.mrf.mxu0
    %v1446 = vadd.f32 %v1397, %v1445
    %1447 = vmatmul.bf16.gmra.mxu0 %v600
    %v1448 = vpop.f32.mrf.mxu0
    %v1449 = vadd.f32 %v1400, %v1448
    %v1450 = vpop.f32.mrf.mxu0
    %v1451 = vadd.f32 %v1402, %v1450
    %1452 = vdwg.mxu0
    %1453 = vmatpush.bf16.msra.mxu0 %v1059
    %1454 = vmatpush.bf16.msra.mxu0 %v1051
    %1455 = vmatpush.bf16.msra.mxu0 %v1043
    %1456 = vmatpush.bf16.msra.mxu0 %v1035
    %1457 = vmatpush.bf16.msra.mxu0 %v1027
    %1458 = vmatpush.bf16.msra.mxu0 %v1019
    %1459 = vmatpush.bf16.msra.mxu0 %v1011
    %1460 = vmatpush.bf16.msra.mxu0 %v1003
    %1461 = vmatmul.bf16.gmra.mxu0 %v585
    %v1462 = vpop.f32.mrf.mxu0
    %v1463 = vadd.f32 0.0, %v1462
    %v1464 = vpop.f32.mrf.mxu0
    %v1465 = vadd.f32 0.0, %v1464
    %1466 = vmatmul.bf16.gmra.mxu0 %v587
    %v1467 = vpop.f32.mrf.mxu0
    %v1468 = vadd.f32 0.0, %v1467
    %v1469 = vpop.f32.mrf.mxu0
    %v1470 = vadd.f32 0.0, %v1469
    %1471 = vmatmul.bf16.gmra.mxu0 %v589
    %v1472 = vpop.f32.mrf.mxu0
    %v1473 = vadd.f32 0.0, %v1472
    %v1474 = vpop.f32.mrf.mxu0
    %v1475 = vadd.f32 0.0, %v1474
    %1476 = vmatmul.bf16.gmra.mxu0 %v591
    %v1477 = vpop.f32.mrf.mxu0
    %v1478 = vadd.f32 0.0, %v1477
    %v1479 = vpop.f32.mrf.mxu0
    %v1480 = vadd.f32 0.0, %v1479
    %1481 = vmatmul.bf16.gmra.mxu0 %v593
    %v1482 = vpop.f32.mrf.mxu0
    %v1483 = vadd.f32 0.0, %v1482
    %v1484 = vpop.f32.mrf.mxu0
    %v1485 = vadd.f32 0.0, %v1484
    %1486 = vmatmul.bf16.gmra.mxu0 %v595
    %v1487 = vpop.f32.mrf.mxu0
    %v1488 = vadd.f32 0.0, %v1487
    %v1489 = vpop.f32.mrf.mxu0
    %v1490 = vadd.f32 0.0, %v1489
    %1491 = vmatmul.bf16.gmra.mxu0 %v597
    %v1492 = vpop.f32.mrf.mxu0
    %v1493 = vadd.f32 0.0, %v1492
    %v1494 = vpop.f32.mrf.mxu0
    %v1495 = vadd.f32 0.0, %v1494
    %1496 = vmatmul.bf16.gmra.mxu0 %v599
    %v1497 = vpop.f32.mrf.mxu0
    %v1498 = vadd.f32 0.0, %v1497
    %v1499 = vpop.f32.mrf.mxu0
    %v1500 = vadd.f32 0.0, %v1499
    %1501 = vdwg.mxu0
    %1502 = vmatpush.bf16.msra.mxu0 %v1123
    %1503 = vmatpush.bf16.msra.mxu0 %v1115
    %1504 = vmatpush.bf16.msra.mxu0 %v1107
    %1505 = vmatpush.bf16.msra.mxu0 %v1099
    %1506 = vmatpush.bf16.msra.mxu0 %v1091
    %1507 = vmatpush.bf16.msra.mxu0 %v1083
    %1508 = vmatpush.bf16.msra.mxu0 %v1075
    %1509 = vmatpush.bf16.msra.mxu0 %v1067
    %1510 = vmatmul.bf16.gmra.mxu0 %v586
    %v1511 = vpop.f32.mrf.mxu0
    %v1512 = vadd.f32 %v1463, %v1511
    %v1513 = vpop.f32.mrf.mxu0
    %v1514 = vadd.f32 %v1465, %v1513
    %1515 = vmatmul.bf16.gmra.mxu0 %v588
    %v1516 = vpop.f32.mrf.mxu0
    %v1517 = vadd.f32 %v1468, %v1516
    %v1518 = vpop.f32.mrf.mxu0
    %v1519 = vadd.f32 %v1470, %v1518
    %1520 = vmatmul.bf16.gmra.mxu0 %v590
    %v1521 = vpop.f32.mrf.mxu0
    %v1522 = vadd.f32 %v1473, %v1521
    %v1523 = vpop.f32.mrf.mxu0
    %v1524 = vadd.f32 %v1475, %v1523
    %1525 = vmatmul.bf16.gmra.mxu0 %v592
    %v1526 = vpop.f32.mrf.mxu0
    %v1527 = vadd.f32 %v1478, %v1526
    %v1528 = vpop.f32.mrf.mxu0
    %v1529 = vadd.f32 %v1480, %v1528
    %1530 = vmatmul.bf16.gmra.mxu0 %v594
    %v1531 = vpop.f32.mrf.mxu0
    %v1532 = vadd.f32 %v1483, %v1531
    %v1533 = vpop.f32.mrf.mxu0
    %v1534 = vadd.f32 %v1485, %v1533
    %1535 = vmatmul.bf16.gmra.mxu0 %v596
    %v1536 = vpop.f32.mrf.mxu0
    %v1537 = vadd.f32 %v1488, %v1536
    %v1538 = vpop.f32.mrf.mxu0
    %v1539 = vadd.f32 %v1490, %v1538
    %1540 = vmatmul.bf16.gmra.mxu0 %v598
    %v1541 = vpop.f32.mrf.mxu0
    %v1542 = vadd.f32 %v1493, %v1541
    %v1543 = vpop.f32.mrf.mxu0
    %v1544 = vadd.f32 %v1495, %v1543
    %1545 = vmatmul.bf16.gmra.mxu0 %v600
    %v1546 = vpop.f32.mrf.mxu0
    %v1547 = vadd.f32 %v1498, %v1546
    %v1548 = vpop.f32.mrf.mxu0
    %v1549 = vadd.f32 %v1500, %v1548
    %1550 = vdwg.mxu0
    %1551 = vmatpush.bf16.msra.mxu0 %v1060
    %1552 = vmatpush.bf16.msra.mxu0 %v1052
    %1553 = vmatpush.bf16.msra.mxu0 %v1044
    %1554 = vmatpush.bf16.msra.mxu0 %v1036
    %1555 = vmatpush.bf16.msra.mxu0 %v1028
    %1556 = vmatpush.bf16.msra.mxu0 %v1020
    %1557 = vmatpush.bf16.msra.mxu0 %v1012
    %1558 = vmatpush.bf16.msra.mxu0 %v1004
    %1559 = vmatmul.bf16.gmra.mxu0 %v585
    %v1560 = vpop.f32.mrf.mxu0
    %v1561 = vadd.f32 0.0, %v1560
    %v1562 = vpop.f32.mrf.mxu0
    %v1563 = vadd.f32 0.0, %v1562
    %1564 = vmatmul.bf16.gmra.mxu0 %v587
    %v1565 = vpop.f32.mrf.mxu0
    %v1566 = vadd.f32 0.0, %v1565
    %v1567 = vpop.f32.mrf.mxu0
    %v1568 = vadd.f32 0.0, %v1567
    %1569 = vmatmul.bf16.gmra.mxu0 %v589
    %v1570 = vpop.f32.mrf.mxu0
    %v1571 = vadd.f32 0.0, %v1570
    %v1572 = vpop.f32.mrf.mxu0
    %v1573 = vadd.f32 0.0, %v1572
    %1574 = vmatmul.bf16.gmra.mxu0 %v591
    %v1575 = vpop.f32.mrf.mxu0
    %v1576 = vadd.f32 0.0, %v1575
    %v1577 = vpop.f32.mrf.mxu0
    %v1578 = vadd.f32 0.0, %v1577
    %1579 = vmatmul.bf16.gmra.mxu0 %v593
    %v1580 = vpop.f32.mrf.mxu0
    %v1581 = vadd.f32 0.0, %v1580
    %v1582 = vpop.f32.mrf.mxu0
    %v1583 = vadd.f32 0.0, %v1582
    %1584 = vmatmul.bf16.gmra.mxu0 %v595
    %v1585 = vpop.f32.mrf.mxu0
    %v1586 = vadd.f32 0.0, %v1585
    %v1587 = vpop.f32.mrf.mxu0
    %v1588 = vadd.f32 0.0, %v1587
    %1589 = vmatmul.bf16.gmra.mxu0 %v597
    %v1590 = vpop.f32.mrf.mxu0
    %v1591 = vadd.f32 0.0, %v1590
    %v1592 = vpop.f32.mrf.mxu0
    %v1593 = vadd.f32 0.0, %v1592
    %1594 = vmatmul.bf16.gmra.mxu0 %v599
    %v1595 = vpop.f32.mrf.mxu0
    %v1596 = vadd.f32 0.0, %v1595
    %v1597 = vpop.f32.mrf.mxu0
    %v1598 = vadd.f32 0.0, %v1597
    %1599 = vdwg.mxu0
    %1600 = vmatpush.bf16.msra.mxu0 %v1124
    %1601 = vmatpush.bf16.msra.mxu0 %v1116
    %1602 = vmatpush.bf16.msra.mxu0 %v1108
    %1603 = vmatpush.bf16.msra.mxu0 %v1100
    %1604 = vmatpush.bf16.msra.mxu0 %v1092
    %1605 = vmatpush.bf16.msra.mxu0 %v1084
    %1606 = vmatpush.bf16.msra.mxu0 %v1076
    %1607 = vmatpush.bf16.msra.mxu0 %v1068
    %1608 = vmatmul.bf16.gmra.mxu0 %v586
    %v1609 = vpop.f32.mrf.mxu0
    %v1610 = vadd.f32 %v1561, %v1609
    %v1611 = vpop.f32.mrf.mxu0
    %v1612 = vadd.f32 %v1563, %v1611
    %1613 = vmatmul.bf16.gmra.mxu0 %v588
    %v1614 = vpop.f32.mrf.mxu0
    %v1615 = vadd.f32 %v1566, %v1614
    %v1616 = vpop.f32.mrf.mxu0
    %v1617 = vadd.f32 %v1568, %v1616
    %1618 = vmatmul.bf16.gmra.mxu0 %v590
    %v1619 = vpop.f32.mrf.mxu0
    %v1620 = vadd.f32 %v1571, %v1619
    %v1621 = vpop.f32.mrf.mxu0
    %v1622 = vadd.f32 %v1573, %v1621
    %1623 = vmatmul.bf16.gmra.mxu0 %v592
    %v1624 = vpop.f32.mrf.mxu0
    %v1625 = vadd.f32 %v1576, %v1624
    %v1626 = vpop.f32.mrf.mxu0
    %v1627 = vadd.f32 %v1578, %v1626
    %1628 = vmatmul.bf16.gmra.mxu0 %v594
    %v1629 = vpop.f32.mrf.mxu0
    %v1630 = vadd.f32 %v1581, %v1629
    %v1631 = vpop.f32.mrf.mxu0
    %v1632 = vadd.f32 %v1583, %v1631
    %1633 = vmatmul.bf16.gmra.mxu0 %v596
    %v1634 = vpop.f32.mrf.mxu0
    %v1635 = vadd.f32 %v1586, %v1634
    %v1636 = vpop.f32.mrf.mxu0
    %v1637 = vadd.f32 %v1588, %v1636
    %1638 = vmatmul.bf16.gmra.mxu0 %v598
    %v1639 = vpop.f32.mrf.mxu0
    %v1640 = vadd.f32 %v1591, %v1639
    %v1641 = vpop.f32.mrf.mxu0
    %v1642 = vadd.f32 %v1593, %v1641
    %1643 = vmatmul.bf16.gmra.mxu0 %v600
    %v1644 = vpop.f32.mrf.mxu0
    %v1645 = vadd.f32 %v1596, %v1644
    %v1646 = vpop.f32.mrf.mxu0
    %v1647 = vadd.f32 %v1598, %v1646
    %1648 = vdwg.mxu0
    %1649 = vmatpush.bf16.msra.mxu0 %v1061
    %1650 = vmatpush.bf16.msra.mxu0 %v1053
    %1651 = vmatpush.bf16.msra.mxu0 %v1045
    %1652 = vmatpush.bf16.msra.mxu0 %v1037
    %1653 = vmatpush.bf16.msra.mxu0 %v1029
    %1654 = vmatpush.bf16.msra.mxu0 %v1021
    %1655 = vmatpush.bf16.msra.mxu0 %v1013
    %1656 = vmatpush.bf16.msra.mxu0 %v1005
    %1657 = vmatmul.bf16.gmra.mxu0 %v585
    %v1658 = vpop.f32.mrf.mxu0
    %v1659 = vadd.f32 0.0, %v1658
    %v1660 = vpop.f32.mrf.mxu0
    %v1661 = vadd.f32 0.0, %v1660
    %1662 = vmatmul.bf16.gmra.mxu0 %v587
    %v1663 = vpop.f32.mrf.mxu0
    %v1664 = vadd.f32 0.0, %v1663
    %v1665 = vpop.f32.mrf.mxu0
    %v1666 = vadd.f32 0.0, %v1665
    %1667 = vmatmul.bf16.gmra.mxu0 %v589
    %v1668 = vpop.f32.mrf.mxu0
    %v1669 = vadd.f32 0.0, %v1668
    %v1670 = vpop.f32.mrf.mxu0
    %v1671 = vadd.f32 0.0, %v1670
    %1672 = vmatmul.bf16.gmra.mxu0 %v591
    %v1673 = vpop.f32.mrf.mxu0
    %v1674 = vadd.f32 0.0, %v1673
    %v1675 = vpop.f32.mrf.mxu0
    %v1676 = vadd.f32 0.0, %v1675
    %1677 = vmatmul.bf16.gmra.mxu0 %v593
    %v1678 = vpop.f32.mrf.mxu0
    %v1679 = vadd.f32 0.0, %v1678
    %v1680 = vpop.f32.mrf.mxu0
    %v1681 = vadd.f32 0.0, %v1680
    %1682 = vmatmul.bf16.gmra.mxu0 %v595
    %v1683 = vpop.f32.mrf.mxu0
    %v1684 = vadd.f32 0.0, %v1683
    %v1685 = vpop.f32.mrf.mxu0
    %v1686 = vadd.f32 0.0, %v1685
    %1687 = vmatmul.bf16.gmra.mxu0 %v597
    %v1688 = vpop.f32.mrf.mxu0
    %v1689 = vadd.f32 0.0, %v1688
    %v1690 = vpop.f32.mrf.mxu0
    %v1691 = vadd.f32 0.0, %v1690
    %1692 = vmatmul.bf16.gmra.mxu0 %v599
    %v1693 = vpop.f32.mrf.mxu0
    %v1694 = vadd.f32 0.0, %v1693
    %v1695 = vpop.f32.mrf.mxu0
    %v1696 = vadd.f32 0.0, %v1695
    %1697 = vdwg.mxu0
    %1698 = vmatpush.bf16.msra.mxu0 %v1125
    %1699 = vmatpush.bf16.msra.mxu0 %v1117
    %1700 = vmatpush.bf16.msra.mxu0 %v1109
    %1701 = vmatpush.bf16.msra.mxu0 %v1101
    %1702 = vmatpush.bf16.msra.mxu0 %v1093
    %1703 = vmatpush.bf16.msra.mxu0 %v1085
    %1704 = vmatpush.bf16.msra.mxu0 %v1077
    %1705 = vmatpush.bf16.msra.mxu0 %v1069
    %1706 = vmatmul.bf16.gmra.mxu0 %v586
    %v1707 = vpop.f32.mrf.mxu0
    %v1708 = vadd.f32 %v1659, %v1707
    %v1709 = vpop.f32.mrf.mxu0
    %v1710 = vadd.f32 %v1661, %v1709
    %1711 = vmatmul.bf16.gmra.mxu0 %v588
    %v1712 = vpop.f32.mrf.mxu0
    %v1713 = vadd.f32 %v1664, %v1712
    %v1714 = vpop.f32.mrf.mxu0
    %v1715 = vadd.f32 %v1666, %v1714
    %1716 = vmatmul.bf16.gmra.mxu0 %v590
    %v1717 = vpop.f32.mrf.mxu0
    %v1718 = vadd.f32 %v1669, %v1717
    %v1719 = vpop.f32.mrf.mxu0
    %v1720 = vadd.f32 %v1671, %v1719
    %1721 = vmatmul.bf16.gmra.mxu0 %v592
    %v1722 = vpop.f32.mrf.mxu0
    %v1723 = vadd.f32 %v1674, %v1722
    %v1724 = vpop.f32.mrf.mxu0
    %v1725 = vadd.f32 %v1676, %v1724
    %1726 = vmatmul.bf16.gmra.mxu0 %v594
    %v1727 = vpop.f32.mrf.mxu0
    %v1728 = vadd.f32 %v1679, %v1727
    %v1729 = vpop.f32.mrf.mxu0
    %v1730 = vadd.f32 %v1681, %v1729
    %1731 = vmatmul.bf16.gmra.mxu0 %v596
    %v1732 = vpop.f32.mrf.mxu0
    %v1733 = vadd.f32 %v1684, %v1732
    %v1734 = vpop.f32.mrf.mxu0
    %v1735 = vadd.f32 %v1686, %v1734
    %1736 = vmatmul.bf16.gmra.mxu0 %v598
    %v1737 = vpop.f32.mrf.mxu0
    %v1738 = vadd.f32 %v1689, %v1737
    %v1739 = vpop.f32.mrf.mxu0
    %v1740 = vadd.f32 %v1691, %v1739
    %1741 = vmatmul.bf16.gmra.mxu0 %v600
    %v1742 = vpop.f32.mrf.mxu0
    %v1743 = vadd.f32 %v1694, %v1742
    %v1744 = vpop.f32.mrf.mxu0
    %v1745 = vadd.f32 %v1696, %v1744
    %1746 = vdwg.mxu0
    %1747 = vmatpush.bf16.msra.mxu0 %v1062
    %1748 = vmatpush.bf16.msra.mxu0 %v1054
    %1749 = vmatpush.bf16.msra.mxu0 %v1046
    %1750 = vmatpush.bf16.msra.mxu0 %v1038
    %1751 = vmatpush.bf16.msra.mxu0 %v1030
    %1752 = vmatpush.bf16.msra.mxu0 %v1022
    %1753 = vmatpush.bf16.msra.mxu0 %v1014
    %1754 = vmatpush.bf16.msra.mxu0 %v1006
    %1755 = vmatmul.bf16.gmra.mxu0 %v585
    %v1756 = vpop.f32.mrf.mxu0
    %v1757 = vadd.f32 0.0, %v1756
    %v1758 = vpop.f32.mrf.mxu0
    %v1759 = vadd.f32 0.0, %v1758
    %1760 = vmatmul.bf16.gmra.mxu0 %v587
    %v1761 = vpop.f32.mrf.mxu0
    %v1762 = vadd.f32 0.0, %v1761
    %v1763 = vpop.f32.mrf.mxu0
    %v1764 = vadd.f32 0.0, %v1763
    %1765 = vmatmul.bf16.gmra.mxu0 %v589
    %v1766 = vpop.f32.mrf.mxu0
    %v1767 = vadd.f32 0.0, %v1766
    %v1768 = vpop.f32.mrf.mxu0
    %v1769 = vadd.f32 0.0, %v1768
    %1770 = vmatmul.bf16.gmra.mxu0 %v591
    %v1771 = vpop.f32.mrf.mxu0
    %v1772 = vadd.f32 0.0, %v1771
    %v1773 = vpop.f32.mrf.mxu0
    %v1774 = vadd.f32 0.0, %v1773
    %1775 = vmatmul.bf16.gmra.mxu0 %v593
    %v1776 = vpop.f32.mrf.mxu0
    %v1777 = vadd.f32 0.0, %v1776
    %v1778 = vpop.f32.mrf.mxu0
    %v1779 = vadd.f32 0.0, %v1778
    %1780 = vmatmul.bf16.gmra.mxu0 %v595
    %v1781 = vpop.f32.mrf.mxu0
    %v1782 = vadd.f32 0.0, %v1781
    %v1783 = vpop.f32.mrf.mxu0
    %v1784 = vadd.f32 0.0, %v1783
    %1785 = vmatmul.bf16.gmra.mxu0 %v597
    %v1786 = vpop.f32.mrf.mxu0
    %v1787 = vadd.f32 0.0, %v1786
    %v1788 = vpop.f32.mrf.mxu0
    %v1789 = vadd.f32 0.0, %v1788
    %1790 = vmatmul.bf16.gmra.mxu0 %v599
    %v1791 = vpop.f32.mrf.mxu0
    %v1792 = vadd.f32 0.0, %v1791
    %v1793 = vpop.f32.mrf.mxu0
    %v1794 = vadd.f32 0.0, %v1793
    %1795 = vdwg.mxu0
    %1796 = vmatpush.bf16.msra.mxu0 %v1126
    %1797 = vmatpush.bf16.msra.mxu0 %v1118
    %1798 = vmatpush.bf16.msra.mxu0 %v1110
    %1799 = vmatpush.bf16.msra.mxu0 %v1102
    %1800 = vmatpush.bf16.msra.mxu0 %v1094
    %1801 = vmatpush.bf16.msra.mxu0 %v1086
    %1802 = vmatpush.bf16.msra.mxu0 %v1078
    %1803 = vmatpush.bf16.msra.mxu0 %v1070
    %1804 = vmatmul.bf16.gmra.mxu0 %v586
    %v1805 = vpop.f32.mrf.mxu0
    %v1806 = vadd.f32 %v1757, %v1805
    %v1807 = vpop.f32.mrf.mxu0
    %v1808 = vadd.f32 %v1759, %v1807
    %1809 = vmatmul.bf16.gmra.mxu0 %v588
    %v1810 = vpop.f32.mrf.mxu0
    %v1811 = vadd.f32 %v1762, %v1810
    %v1812 = vpop.f32.mrf.mxu0
    %v1813 = vadd.f32 %v1764, %v1812
    %1814 = vmatmul.bf16.gmra.mxu0 %v590
    %v1815 = vpop.f32.mrf.mxu0
    %v1816 = vadd.f32 %v1767, %v1815
    %v1817 = vpop.f32.mrf.mxu0
    %v1818 = vadd.f32 %v1769, %v1817
    %1819 = vmatmul.bf16.gmra.mxu0 %v592
    %v1820 = vpop.f32.mrf.mxu0
    %v1821 = vadd.f32 %v1772, %v1820
    %v1822 = vpop.f32.mrf.mxu0
    %v1823 = vadd.f32 %v1774, %v1822
    %1824 = vmatmul.bf16.gmra.mxu0 %v594
    %v1825 = vpop.f32.mrf.mxu0
    %v1826 = vadd.f32 %v1777, %v1825
    %v1827 = vpop.f32.mrf.mxu0
    %v1828 = vadd.f32 %v1779, %v1827
    %1829 = vmatmul.bf16.gmra.mxu0 %v596
    %v1830 = vpop.f32.mrf.mxu0
    %v1831 = vadd.f32 %v1782, %v1830
    %v1832 = vpop.f32.mrf.mxu0
    %v1833 = vadd.f32 %v1784, %v1832
    %1834 = vmatmul.bf16.gmra.mxu0 %v598
    %v1835 = vpop.f32.mrf.mxu0
    %v1836 = vadd.f32 %v1787, %v1835
    %v1837 = vpop.f32.mrf.mxu0
    %v1838 = vadd.f32 %v1789, %v1837
    %1839 = vmatmul.bf16.gmra.mxu0 %v600
    %v1840 = vpop.f32.mrf.mxu0
    %v1841 = vadd.f32 %v1792, %v1840
    %v1842 = vpop.f32.mrf.mxu0
    %v1843 = vadd.f32 %v1794, %v1842
    %1844 = vdwg.mxu0
    %1845 = vmatpush.bf16.msra.mxu0 %v1063
    %1846 = vmatpush.bf16.msra.mxu0 %v1055
    %1847 = vmatpush.bf16.msra.mxu0 %v1047
    %1848 = vmatpush.bf16.msra.mxu0 %v1039
    %1849 = vmatpush.bf16.msra.mxu0 %v1031
    %1850 = vmatpush.bf16.msra.mxu0 %v1023
    %1851 = vmatpush.bf16.msra.mxu0 %v1015
    %1852 = vmatpush.bf16.msra.mxu0 %v1007
    %1853 = vmatmul.bf16.gmra.mxu0 %v585
    %v1854 = vpop.f32.mrf.mxu0
    %v1855 = vadd.f32 0.0, %v1854
    %v1856 = vpop.f32.mrf.mxu0
    %v1857 = vadd.f32 0.0, %v1856
    %1858 = vmatmul.bf16.gmra.mxu0 %v587
    %v1859 = vpop.f32.mrf.mxu0
    %v1860 = vadd.f32 0.0, %v1859
    %v1861 = vpop.f32.mrf.mxu0
    %v1862 = vadd.f32 0.0, %v1861
    %1863 = vmatmul.bf16.gmra.mxu0 %v589
    %v1864 = vpop.f32.mrf.mxu0
    %v1865 = vadd.f32 0.0, %v1864
    %v1866 = vpop.f32.mrf.mxu0
    %v1867 = vadd.f32 0.0, %v1866
    %1868 = vmatmul.bf16.gmra.mxu0 %v591
    %v1869 = vpop.f32.mrf.mxu0
    %v1870 = vadd.f32 0.0, %v1869
    %v1871 = vpop.f32.mrf.mxu0
    %v1872 = vadd.f32 0.0, %v1871
    %1873 = vmatmul.bf16.gmra.mxu0 %v593
    %v1874 = vpop.f32.mrf.mxu0
    %v1875 = vadd.f32 0.0, %v1874
    %v1876 = vpop.f32.mrf.mxu0
    %v1877 = vadd.f32 0.0, %v1876
    %1878 = vmatmul.bf16.gmra.mxu0 %v595
    %v1879 = vpop.f32.mrf.mxu0
    %v1880 = vadd.f32 0.0, %v1879
    %v1881 = vpop.f32.mrf.mxu0
    %v1882 = vadd.f32 0.0, %v1881
    %1883 = vmatmul.bf16.gmra.mxu0 %v597
    %v1884 = vpop.f32.mrf.mxu0
    %v1885 = vadd.f32 0.0, %v1884
    %v1886 = vpop.f32.mrf.mxu0
    %v1887 = vadd.f32 0.0, %v1886
    %1888 = vmatmul.bf16.gmra.mxu0 %v599
    %v1889 = vpop.f32.mrf.mxu0
    %v1890 = vadd.f32 0.0, %v1889
    %v1891 = vpop.f32.mrf.mxu0
    %v1892 = vadd.f32 0.0, %v1891
    %1893 = vdwg.mxu0
    %1894 = vmatpush.bf16.msra.mxu0 %v1127
    %1895 = vmatpush.bf16.msra.mxu0 %v1119
    %1896 = vmatpush.bf16.msra.mxu0 %v1111
    %1897 = vmatpush.bf16.msra.mxu0 %v1103
    %1898 = vmatpush.bf16.msra.mxu0 %v1095
    %1899 = vmatpush.bf16.msra.mxu0 %v1087
    %1900 = vmatpush.bf16.msra.mxu0 %v1079
    %1901 = vmatpush.bf16.msra.mxu0 %v1071
    %1902 = vmatmul.bf16.gmra.mxu0 %v586
    %v1903 = vpop.f32.mrf.mxu0
    %v1904 = vadd.f32 %v1855, %v1903
    %v1905 = vpop.f32.mrf.mxu0
    %v1906 = vadd.f32 %v1857, %v1905
    %1907 = vmatmul.bf16.gmra.mxu0 %v588
    %v1908 = vpop.f32.mrf.mxu0
    %v1909 = vadd.f32 %v1860, %v1908
    %v1910 = vpop.f32.mrf.mxu0
    %v1911 = vadd.f32 %v1862, %v1910
    %1912 = vmatmul.bf16.gmra.mxu0 %v590
    %v1913 = vpop.f32.mrf.mxu0
    %v1914 = vadd.f32 %v1865, %v1913
    %v1915 = vpop.f32.mrf.mxu0
    %v1916 = vadd.f32 %v1867, %v1915
    %1917 = vmatmul.bf16.gmra.mxu0 %v592
    %v1918 = vpop.f32.mrf.mxu0
    %v1919 = vadd.f32 %v1870, %v1918
    %v1920 = vpop.f32.mrf.mxu0
    %v1921 = vadd.f32 %v1872, %v1920
    %1922 = vmatmul.bf16.gmra.mxu0 %v594
    %v1923 = vpop.f32.mrf.mxu0
    %v1924 = vadd.f32 %v1875, %v1923
    %v1925 = vpop.f32.mrf.mxu0
    %v1926 = vadd.f32 %v1877, %v1925
    %1927 = vmatmul.bf16.gmra.mxu0 %v596
    %v1928 = vpop.f32.mrf.mxu0
    %v1929 = vadd.f32 %v1880, %v1928
    %v1930 = vpop.f32.mrf.mxu0
    %v1931 = vadd.f32 %v1882, %v1930
    %1932 = vmatmul.bf16.gmra.mxu0 %v598
    %v1933 = vpop.f32.mrf.mxu0
    %v1934 = vadd.f32 %v1885, %v1933
    %v1935 = vpop.f32.mrf.mxu0
    %v1936 = vadd.f32 %v1887, %v1935
    %1937 = vmatmul.bf16.gmra.mxu0 %v600
    %v1938 = vpop.f32.mrf.mxu0
    %v1939 = vadd.f32 %v1890, %v1938
    %v1940 = vpop.f32.mrf.mxu0
    %v1941 = vadd.f32 %v1892, %v1940
    %1942 = vdwg.mxu0
    %1943 = vmatpush.bf16.msra.mxu0 %v1064
    %1944 = vmatpush.bf16.msra.mxu0 %v1056
    %1945 = vmatpush.bf16.msra.mxu0 %v1048
    %1946 = vmatpush.bf16.msra.mxu0 %v1040
    %1947 = vmatpush.bf16.msra.mxu0 %v1032
    %1948 = vmatpush.bf16.msra.mxu0 %v1024
    %1949 = vmatpush.bf16.msra.mxu0 %v1016
    %1950 = vmatpush.bf16.msra.mxu0 %v1008
    %1951 = vmatmul.bf16.gmra.mxu0 %v585
    %v1952 = vpop.f32.mrf.mxu0
    %v1953 = vadd.f32 0.0, %v1952
    %v1954 = vpop.f32.mrf.mxu0
    %v1955 = vadd.f32 0.0, %v1954
    %1956 = vmatmul.bf16.gmra.mxu0 %v587
    %v1957 = vpop.f32.mrf.mxu0
    %v1958 = vadd.f32 0.0, %v1957
    %v1959 = vpop.f32.mrf.mxu0
    %v1960 = vadd.f32 0.0, %v1959
    %1961 = vmatmul.bf16.gmra.mxu0 %v589
    %v1962 = vpop.f32.mrf.mxu0
    %v1963 = vadd.f32 0.0, %v1962
    %v1964 = vpop.f32.mrf.mxu0
    %v1965 = vadd.f32 0.0, %v1964
    %1966 = vmatmul.bf16.gmra.mxu0 %v591
    %v1967 = vpop.f32.mrf.mxu0
    %v1968 = vadd.f32 0.0, %v1967
    %v1969 = vpop.f32.mrf.mxu0
    %v1970 = vadd.f32 0.0, %v1969
    %1971 = vmatmul.bf16.gmra.mxu0 %v593
    %v1972 = vpop.f32.mrf.mxu0
    %v1973 = vadd.f32 0.0, %v1972
    %v1974 = vpop.f32.mrf.mxu0
    %v1975 = vadd.f32 0.0, %v1974
    %1976 = vmatmul.bf16.gmra.mxu0 %v595
    %v1977 = vpop.f32.mrf.mxu0
    %v1978 = vadd.f32 0.0, %v1977
    %v1979 = vpop.f32.mrf.mxu0
    %v1980 = vadd.f32 0.0, %v1979
    %1981 = vmatmul.bf16.gmra.mxu0 %v597
    %v1982 = vpop.f32.mrf.mxu0
    %v1983 = vadd.f32 0.0, %v1982
    %v1984 = vpop.f32.mrf.mxu0
    %v1985 = vadd.f32 0.0, %v1984
    %1986 = vmatmul.bf16.gmra.mxu0 %v599
    %v1987 = vpop.f32.mrf.mxu0
    %v1988 = vadd.f32 0.0, %v1987
    %v1989 = vpop.f32.mrf.mxu0
    %v1990 = vadd.f32 0.0, %v1989
    %1991 = vdwg.mxu0
    %1992 = vmatpush.bf16.msra.mxu0 %v1128
    %1993 = vmatpush.bf16.msra.mxu0 %v1120
    %1994 = vmatpush.bf16.msra.mxu0 %v1112
    %1995 = vmatpush.bf16.msra.mxu0 %v1104
    %1996 = vmatpush.bf16.msra.mxu0 %v1096
    %1997 = vmatpush.bf16.msra.mxu0 %v1088
    %1998 = vmatpush.bf16.msra.mxu0 %v1080
    %1999 = vmatpush.bf16.msra.mxu0 %v1072
    %2000 = vmatmul.bf16.gmra.mxu0 %v586
    %v2001 = vpop.f32.mrf.mxu0
    %v2002 = vadd.f32 %v1953, %v2001
    %v2003 = vpop.f32.mrf.mxu0
    %v2004 = vadd.f32 %v1955, %v2003
    %2005 = vmatmul.bf16.gmra.mxu0 %v588
    %v2006 = vpop.f32.mrf.mxu0
    %v2007 = vadd.f32 %v1958, %v2006
    %v2008 = vpop.f32.mrf.mxu0
    %v2009 = vadd.f32 %v1960, %v2008
    %2010 = vmatmul.bf16.gmra.mxu0 %v590
    %v2011 = vpop.f32.mrf.mxu0
    %v2012 = vadd.f32 %v1963, %v2011
    %v2013 = vpop.f32.mrf.mxu0
    %v2014 = vadd.f32 %v1965, %v2013
    %2015 = vmatmul.bf16.gmra.mxu0 %v592
    %v2016 = vpop.f32.mrf.mxu0
    %v2017 = vadd.f32 %v1968, %v2016
    %v2018 = vpop.f32.mrf.mxu0
    %v2019 = vadd.f32 %v1970, %v2018
    %2020 = vmatmul.bf16.gmra.mxu0 %v594
    %v2021 = vpop.f32.mrf.mxu0
    %v2022 = vadd.f32 %v1973, %v2021
    %v2023 = vpop.f32.mrf.mxu0
    %v2024 = vadd.f32 %v1975, %v2023
    %2025 = vmatmul.bf16.gmra.mxu0 %v596
    %v2026 = vpop.f32.mrf.mxu0
    %v2027 = vadd.f32 %v1978, %v2026
    %v2028 = vpop.f32.mrf.mxu0
    %v2029 = vadd.f32 %v1980, %v2028
    %2030 = vmatmul.bf16.gmra.mxu0 %v598
    %v2031 = vpop.f32.mrf.mxu0
    %v2032 = vadd.f32 %v1983, %v2031
    %v2033 = vpop.f32.mrf.mxu0
    %v2034 = vadd.f32 %v1985, %v2033
    %2035 = vmatmul.bf16.gmra.mxu0 %v600
    %v2036 = vpop.f32.mrf.mxu0
    %v2037 = vadd.f32 %v1988, %v2036
    %v2038 = vpop.f32.mrf.mxu0
    %v2039 = vadd.f32 %v1990, %v2038
    %2040 = vdwg.mxu0
    %v2041 = vadd.f32 %v265, %v1316
    %v2042 = vadd.f32 %v266, %v1414
    %v2043 = vadd.f32 %v267, %v1512
    %v2044 = vadd.f32 %v268, %v1610
    %v2045 = vadd.f32 %v269, %v1708
    %v2046 = vadd.f32 %v270, %v1806
    %v2047 = vadd.f32 %v271, %v1904
    %v2048 = vadd.f32 %v272, %v2002
    %v2049 = vadd.f32 %v273, %v1318
    %v2050 = vadd.f32 %v274, %v1416
    %v2051 = vadd.f32 %v275, %v1514
    %v2052 = vadd.f32 %v276, %v1612
    %v2053 = vadd.f32 %v277, %v1710
    %v2054 = vadd.f32 %v278, %v1808
    %v2055 = vadd.f32 %v279, %v1906
    %v2056 = vadd.f32 %v280, %v2004
    %v2057 = vadd.f32 %v281, %v1321
    %v2058 = vadd.f32 %v282, %v1419
    %v2059 = vadd.f32 %v283, %v1517
    %v2060 = vadd.f32 %v284, %v1615
    %v2061 = vadd.f32 %v285, %v1713
    %v2062 = vadd.f32 %v286, %v1811
    %v2063 = vadd.f32 %v287, %v1909
    %v2064 = vadd.f32 %v288, %v2007
    %v2065 = vadd.f32 %v289, %v1323
    %v2066 = vadd.f32 %v290, %v1421
    %v2067 = vadd.f32 %v291, %v1519
    %v2068 = vadd.f32 %v292, %v1617
    %v2069 = vadd.f32 %v293, %v1715
    %v2070 = vadd.f32 %v294, %v1813
    %v2071 = vadd.f32 %v295, %v1911
    %v2072 = vadd.f32 %v296, %v2009
    %v2073 = vadd.f32 %v297, %v1326
    %v2074 = vadd.f32 %v298, %v1424
    %v2075 = vadd.f32 %v299, %v1522
    %v2076 = vadd.f32 %v300, %v1620
    %v2077 = vadd.f32 %v301, %v1718
    %v2078 = vadd.f32 %v302, %v1816
    %v2079 = vadd.f32 %v303, %v1914
    %v2080 = vadd.f32 %v304, %v2012
    %v2081 = vadd.f32 %v305, %v1328
    %v2082 = vadd.f32 %v306, %v1426
    %v2083 = vadd.f32 %v307, %v1524
    %v2084 = vadd.f32 %v308, %v1622
    %v2085 = vadd.f32 %v309, %v1720
    %v2086 = vadd.f32 %v310, %v1818
    %v2087 = vadd.f32 %v311, %v1916
    %v2088 = vadd.f32 %v312, %v2014
    %v2089 = vadd.f32 %v313, %v1331
    %v2090 = vadd.f32 %v314, %v1429
    %v2091 = vadd.f32 %v315, %v1527
    %v2092 = vadd.f32 %v316, %v1625
    %v2093 = vadd.f32 %v317, %v1723
    %v2094 = vadd.f32 %v318, %v1821
    %v2095 = vadd.f32 %v319, %v1919
    %v2096 = vadd.f32 %v320, %v2017
    %v2097 = vadd.f32 %v321, %v1333
    %v2098 = vadd.f32 %v322, %v1431
    %v2099 = vadd.f32 %v323, %v1529
    %v2100 = vadd.f32 %v324, %v1627
    %v2101 = vadd.f32 %v325, %v1725
    %v2102 = vadd.f32 %v326, %v1823
    %v2103 = vadd.f32 %v327, %v1921
    %v2104 = vadd.f32 %v328, %v2019
    %v2105 = vadd.f32 %v329, %v1336
    %v2106 = vadd.f32 %v330, %v1434
    %v2107 = vadd.f32 %v331, %v1532
    %v2108 = vadd.f32 %v332, %v1630
    %v2109 = vadd.f32 %v333, %v1728
    %v2110 = vadd.f32 %v334, %v1826
    %v2111 = vadd.f32 %v335, %v1924
    %v2112 = vadd.f32 %v336, %v2022
    %v2113 = vadd.f32 %v337, %v1338
    %v2114 = vadd.f32 %v338, %v1436
    %v2115 = vadd.f32 %v339, %v1534
    %v2116 = vadd.f32 %v340, %v1632
    %v2117 = vadd.f32 %v341, %v1730
    %v2118 = vadd.f32 %v342, %v1828
    %v2119 = vadd.f32 %v343, %v1926
    %v2120 = vadd.f32 %v344, %v2024
    %v2121 = vadd.f32 %v345, %v1341
    %v2122 = vadd.f32 %v346, %v1439
    %v2123 = vadd.f32 %v347, %v1537
    %v2124 = vadd.f32 %v348, %v1635
    %v2125 = vadd.f32 %v349, %v1733
    %v2126 = vadd.f32 %v350, %v1831
    %v2127 = vadd.f32 %v351, %v1929
    %v2128 = vadd.f32 %v352, %v2027
    %v2129 = vadd.f32 %v353, %v1343
    %v2130 = vadd.f32 %v354, %v1441
    %v2131 = vadd.f32 %v355, %v1539
    %v2132 = vadd.f32 %v356, %v1637
    %v2133 = vadd.f32 %v357, %v1735
    %v2134 = vadd.f32 %v358, %v1833
    %v2135 = vadd.f32 %v359, %v1931
    %v2136 = vadd.f32 %v360, %v2029
    %v2137 = vadd.f32 %v361, %v1346
    %v2138 = vadd.f32 %v362, %v1444
    %v2139 = vadd.f32 %v363, %v1542
    %v2140 = vadd.f32 %v364, %v1640
    %v2141 = vadd.f32 %v365, %v1738
    %v2142 = vadd.f32 %v366, %v1836
    %v2143 = vadd.f32 %v367, %v1934
    %v2144 = vadd.f32 %v368, %v2032
    %v2145 = vadd.f32 %v369, %v1348
    %v2146 = vadd.f32 %v370, %v1446
    %v2147 = vadd.f32 %v371, %v1544
    %v2148 = vadd.f32 %v372, %v1642
    %v2149 = vadd.f32 %v373, %v1740
    %v2150 = vadd.f32 %v374, %v1838
    %v2151 = vadd.f32 %v375, %v1936
    %v2152 = vadd.f32 %v376, %v2034
    %v2153 = vadd.f32 %v377, %v1351
    %v2154 = vadd.f32 %v378, %v1449
    %v2155 = vadd.f32 %v379, %v1547
    %v2156 = vadd.f32 %v380, %v1645
    %v2157 = vadd.f32 %v381, %v1743
    %v2158 = vadd.f32 %v382, %v1841
    %v2159 = vadd.f32 %v383, %v1939
    %v2160 = vadd.f32 %v384, %v2037
    %v2161 = vadd.f32 %v385, %v1353
    %v2162 = vadd.f32 %v386, %v1451
    %v2163 = vadd.f32 %v387, %v1549
    %v2164 = vadd.f32 %v388, %v1647
    %v2165 = vadd.f32 %v389, %v1745
    %v2166 = vadd.f32 %v390, %v1843
    %v2167 = vadd.f32 %v391, %v1941
    %v2168 = vadd.f32 %v392, %v2039
    %2169 = vst [vmem:[#allocation2] sm:$0xff] %v2041
    %2170 = vst [vmem:[#allocation2 + $0x8] sm:$0xff] %v2042
    %2171 = vst [vmem:[#allocation2 + $0x10] sm:$0xff] %v2043
    %2172 = vst [vmem:[#allocation2 + $0x18] sm:$0xff] %v2044
    %2173 = vst [vmem:[#allocation2 + $0x20] sm:$0xff] %v2045
    %2174 = vst [vmem:[#allocation2 + $0x28] sm:$0xff] %v2046
    %2175 = vst [vmem:[#allocation2 + $0x30] sm:$0xff] %v2047
    %2176 = vst [vmem:[#allocation2 + $0x38] sm:$0xff] %v2048
    %2177 = vst [vmem:[#allocation2 + $0x40] sm:$0xff] %v2049
    %2178 = vst [vmem:[#allocation2 + $0x48] sm:$0xff] %v2050
    %2179 = vst [vmem:[#allocation2 + $0x50] sm:$0xff] %v2051
    %2180 = vst [vmem:[#allocation2 + $0x58] sm:$0xff] %v2052
    %2181 = vst [vmem:[#allocation2 + $0x60] sm:$0xff] %v2053
    %2182 = vst [vmem:[#allocation2 + $0x68] sm:$0xff] %v2054
    %2183 = vst [vmem:[#allocation2 + $0x70] sm:$0xff] %v2055
    %2184 = vst [vmem:[#allocation2 + $0x78] sm:$0xff] %v2056
    %2185 = vst [vmem:[#allocation2 + $0x80] sm:$0xff] %v2057
    %2186 = vst [vmem:[#allocation2 + $0x88] sm:$0xff] %v2058
    %2187 = vst [vmem:[#allocation2 + $0x90] sm:$0xff] %v2059
    %2188 = vst [vmem:[#allocation2 + $0x98] sm:$0xff] %v2060
    %2189 = vst [vmem:[#allocation2 + $0xa0] sm:$0xff] %v2061
    %2190 = vst [vmem:[#allocation2 + $0xa8] sm:$0xff] %v2062
    %2191 = vst [vmem:[#allocation2 + $0xb0] sm:$0xff] %v2063
    %2192 = vst [vmem:[#allocation2 + $0xb8] sm:$0xff] %v2064
    %2193 = vst [vmem:[#allocation2 + $0xc0] sm:$0xff] %v2065
    %2194 = vst [vmem:[#allocation2 + $0xc8] sm:$0xff] %v2066
    %2195 = vst [vmem:[#allocation2 + $0xd0] sm:$0xff] %v2067
    %2196 = vst [vmem:[#allocation2 + $0xd8] sm:$0xff] %v2068
    %2197 = vst [vmem:[#allocation2 + $0xe0] sm:$0xff] %v2069
    %2198 = vst [vmem:[#allocation2 + $0xe8] sm:$0xff] %v2070
    %2199 = vst [vmem:[#allocation2 + $0xf0] sm:$0xff] %v2071
    %2200 = vst [vmem:[#allocation2 + $0xf8] sm:$0xff] %v2072
    %2201 = vst [vmem:[#allocation2 + $0x100] sm:$0xff] %v2073
    %2202 = vst [vmem:[#allocation2 + $0x108] sm:$0xff] %v2074
    %2203 = vst [vmem:[#allocation2 + $0x110] sm:$0xff] %v2075
    %2204 = vst [vmem:[#allocation2 + $0x118] sm:$0xff] %v2076
    %2205 = vst [vmem:[#allocation2 + $0x120] sm:$0xff] %v2077
    %2206 = vst [vmem:[#allocation2 + $0x128] sm:$0xff] %v2078
    %2207 = vst [vmem:[#allocation2 + $0x130] sm:$0xff] %v2079
    %2208 = vst [vmem:[#allocation2 + $0x138] sm:$0xff] %v2080
    %2209 = vst [vmem:[#allocation2 + $0x140] sm:$0xff] %v2081
    %2210 = vst [vmem:[#allocation2 + $0x148] sm:$0xff] %v2082
    %2211 = vst [vmem:[#allocation2 + $0x150] sm:$0xff] %v2083
    %2212 = vst [vmem:[#allocation2 + $0x158] sm:$0xff] %v2084
    %2213 = vst [vmem:[#allocation2 + $0x160] sm:$0xff] %v2085
    %2214 = vst [vmem:[#allocation2 + $0x168] sm:$0xff] %v2086
    %2215 = vst [vmem:[#allocation2 + $0x170] sm:$0xff] %v2087
    %2216 = vst [vmem:[#allocation2 + $0x178] sm:$0xff] %v2088
    %2217 = vst [vmem:[#allocation2 + $0x180] sm:$0xff] %v2089
    %2218 = vst [vmem:[#allocation2 + $0x188] sm:$0xff] %v2090
    %2219 = vst [vmem:[#allocation2 + $0x190] sm:$0xff] %v2091
    %2220 = vst [vmem:[#allocation2 + $0x198] sm:$0xff] %v2092
    %2221 = vst [vmem:[#allocation2 + $0x1a0] sm:$0xff] %v2093
    %2222 = vst [vmem:[#allocation2 + $0x1a8] sm:$0xff] %v2094
    %2223 = vst [vmem:[#allocation2 + $0x1b0] sm:$0xff] %v2095
    %2224 = vst [vmem:[#allocation2 + $0x1b8] sm:$0xff] %v2096
    %2225 = vst [vmem:[#allocation2 + $0x1c0] sm:$0xff] %v2097
    %2226 = vst [vmem:[#allocation2 + $0x1c8] sm:$0xff] %v2098
    %2227 = vst [vmem:[#allocation2 + $0x1d0] sm:$0xff] %v2099
    %2228 = vst [vmem:[#allocation2 + $0x1d8] sm:$0xff] %v2100
    %2229 = vst [vmem:[#allocation2 + $0x1e0] sm:$0xff] %v2101
    %2230 = vst [vmem:[#allocation2 + $0x1e8] sm:$0xff] %v2102
    %2231 = vst [vmem:[#allocation2 + $0x1f0] sm:$0xff] %v2103
    %2232 = vst [vmem:[#allocation2 + $0x1f8] sm:$0xff] %v2104
    %2233 = vst [vmem:[#allocation2 + $0x200] sm:$0xff] %v2105
    %2234 = vst [vmem:[#allocation2 + $0x208] sm:$0xff] %v2106
    %2235 = vst [vmem:[#allocation2 + $0x210] sm:$0xff] %v2107
    %2236 = vst [vmem:[#allocation2 + $0x218] sm:$0xff] %v2108
    %2237 = vst [vmem:[#allocation2 + $0x220] sm:$0xff] %v2109
    %2238 = vst [vmem:[#allocation2 + $0x228] sm:$0xff] %v2110
    %2239 = vst [vmem:[#allocation2 + $0x230] sm:$0xff] %v2111
    %2240 = vst [vmem:[#allocation2 + $0x238] sm:$0xff] %v2112
    %2241 = vst [vmem:[#allocation2 + $0x240] sm:$0xff] %v2113
    %2242 = vst [vmem:[#allocation2 + $0x248] sm:$0xff] %v2114
    %2243 = vst [vmem:[#allocation2 + $0x250] sm:$0xff] %v2115
    %2244 = vst [vmem:[#allocation2 + $0x258] sm:$0xff] %v2116
    %2245 = vst [vmem:[#allocation2 + $0x260] sm:$0xff] %v2117
    %2246 = vst [vmem:[#allocation2 + $0x268] sm:$0xff] %v2118
    %2247 = vst [vmem:[#allocation2 + $0x270] sm:$0xff] %v2119
    %2248 = vst [vmem:[#allocation2 + $0x278] sm:$0xff] %v2120
    %2249 = vst [vmem:[#allocation2 + $0x280] sm:$0xff] %v2121
    %2250 = vst [vmem:[#allocation2 + $0x288] sm:$0xff] %v2122
    %2251 = vst [vmem:[#allocation2 + $0x290] sm:$0xff] %v2123
    %2252 = vst [vmem:[#allocation2 + $0x298] sm:$0xff] %v2124
    %2253 = vst [vmem:[#allocation2 + $0x2a0] sm:$0xff] %v2125
    %2254 = vst [vmem:[#allocation2 + $0x2a8] sm:$0xff] %v2126
    %2255 = vst [vmem:[#allocation2 + $0x2b0] sm:$0xff] %v2127
    %2256 = vst [vmem:[#allocation2 + $0x2b8] sm:$0xff] %v2128
    %2257 = vst [vmem:[#allocation2 + $0x2c0] sm:$0xff] %v2129
    %2258 = vst [vmem:[#allocation2 + $0x2c8] sm:$0xff] %v2130
    %2259 = vst [vmem:[#allocation2 + $0x2d0] sm:$0xff] %v2131
    %2260 = vst [vmem:[#allocation2 + $0x2d8] sm:$0xff] %v2132
    %2261 = vst [vmem:[#allocation2 + $0x2e0] sm:$0xff] %v2133
    %2262 = vst [vmem:[#allocation2 + $0x2e8] sm:$0xff] %v2134
    %2263 = vst [vmem:[#allocation2 + $0x2f0] sm:$0xff] %v2135
    %2264 = vst [vmem:[#allocation2 + $0x2f8] sm:$0xff] %v2136
    %2265 = vst [vmem:[#allocation2 + $0x300] sm:$0xff] %v2137
    %2266 = vst [vmem:[#allocation2 + $0x308] sm:$0xff] %v2138
    %2267 = vst [vmem:[#allocation2 + $0x310] sm:$0xff] %v2139
    %2268 = vst [vmem:[#allocation2 + $0x318] sm:$0xff] %v2140
    %2269 = vst [vmem:[#allocation2 + $0x320] sm:$0xff] %v2141
    %2270 = vst [vmem:[#allocation2 + $0x328] sm:$0xff] %v2142
    %2271 = vst [vmem:[#allocation2 + $0x330] sm:$0xff] %v2143
    %2272 = vst [vmem:[#allocation2 + $0x338] sm:$0xff] %v2144
    %2273 = vst [vmem:[#allocation2 + $0x340] sm:$0xff] %v2145
    %2274 = vst [vmem:[#allocation2 + $0x348] sm:$0xff] %v2146
    %2275 = vst [vmem:[#allocation2 + $0x350] sm:$0xff] %v2147
    %2276 = vst [vmem:[#allocation2 + $0x358] sm:$0xff] %v2148
    %2277 = vst [vmem:[#allocation2 + $0x360] sm:$0xff] %v2149
    %2278 = vst [vmem:[#allocation2 + $0x368] sm:$0xff] %v2150
    %2279 = vst [vmem:[#allocation2 + $0x370] sm:$0xff] %v2151
    %2280 = vst [vmem:[#allocation2 + $0x378] sm:$0xff] %v2152
    %2281 = vst [vmem:[#allocation2 + $0x380] sm:$0xff] %v2153
    %2282 = vst [vmem:[#allocation2 + $0x388] sm:$0xff] %v2154
    %2283 = vst [vmem:[#allocation2 + $0x390] sm:$0xff] %v2155
    %2284 = vst [vmem:[#allocation2 + $0x398] sm:$0xff] %v2156
    %2285 = vst [vmem:[#allocation2 + $0x3a0] sm:$0xff] %v2157
    %2286 = vst [vmem:[#allocation2 + $0x3a8] sm:$0xff] %v2158
    %2287 = vst [vmem:[#allocation2 + $0x3b0] sm:$0xff] %v2159
    %2288 = vst [vmem:[#allocation2 + $0x3b8] sm:$0xff] %v2160
    %2289 = vst [vmem:[#allocation2 + $0x3c0] sm:$0xff] %v2161
    %2290 = vst [vmem:[#allocation2 + $0x3c8] sm:$0xff] %v2162
    %2291 = vst [vmem:[#allocation2 + $0x3d0] sm:$0xff] %v2163
    %2292 = vst [vmem:[#allocation2 + $0x3d8] sm:$0xff] %v2164
    %2293 = vst [vmem:[#allocation2 + $0x3e0] sm:$0xff] %v2165
    %2294 = vst [vmem:[#allocation2 + $0x3e8] sm:$0xff] %v2166
    %2295 = vst [vmem:[#allocation2 + $0x3f0] sm:$0xff] %v2167
    %2296 = vst [vmem:[#allocation2 + $0x3f8] sm:$0xff] %v2168
    // Predicated region
    $region62: #{tpu_custom_call.1} parent=1 // pred_check
      %p2297 = pneg %p133
    $region63: #{tpu_custom_call.1} parent=1 // pred_check_branch
      %2299 = sbr.rel (%p2297) target = $region65
    $region64: #{tpu_custom_call.1} parent=1 // pred_region
      %v2300 = vld [vmem:[#allocation2] sm:$0xff]
      %v2301 = vld [vmem:[#allocation2 + $0x8] sm:$0xff]
      %v2302 = vld [vmem:[#allocation2 + $0x10] sm:$0xff]
      %v2303 = vld [vmem:[#allocation2 + $0x18] sm:$0xff]
      %v2304 = vld [vmem:[#allocation2 + $0x20] sm:$0xff]
      %v2305 = vld [vmem:[#allocation2 + $0x28] sm:$0xff]
      %v2306 = vld [vmem:[#allocation2 + $0x30] sm:$0xff]
      %v2307 = vld [vmem:[#allocation2 + $0x38] sm:$0xff]
      %v2308 = vld [vmem:[#allocation2 + $0x40] sm:$0xff]
      %v2309 = vld [vmem:[#allocation2 + $0x48] sm:$0xff]
      %v2310 = vld [vmem:[#allocation2 + $0x50] sm:$0xff]
      %v2311 = vld [vmem:[#allocation2 + $0x58] sm:$0xff]
      %v2312 = vld [vmem:[#allocation2 + $0x60] sm:$0xff]
      %v2313 = vld [vmem:[#allocation2 + $0x68] sm:$0xff]
      %v2314 = vld [vmem:[#allocation2 + $0x70] sm:$0xff]
      %v2315 = vld [vmem:[#allocation2 + $0x78] sm:$0xff]
      %v2316 = vld [vmem:[#allocation2 + $0x80] sm:$0xff]
      %v2317 = vld [vmem:[#allocation2 + $0x88] sm:$0xff]
      %v2318 = vld [vmem:[#allocation2 + $0x90] sm:$0xff]
      %v2319 = vld [vmem:[#allocation2 + $0x98] sm:$0xff]
      %v2320 = vld [vmem:[#allocation2 + $0xa0] sm:$0xff]
      %v2321 = vld [vmem:[#allocation2 + $0xa8] sm:$0xff]
      %v2322 = vld [vmem:[#allocation2 + $0xb0] sm:$0xff]
      %v2323 = vld [vmem:[#allocation2 + $0xb8] sm:$0xff]
      %v2324 = vld [vmem:[#allocation2 + $0xc0] sm:$0xff]
      %v2325 = vld [vmem:[#allocation2 + $0xc8] sm:$0xff]
      %v2326 = vld [vmem:[#allocation2 + $0xd0] sm:$0xff]
      %v2327 = vld [vmem:[#allocation2 + $0xd8] sm:$0xff]
      %v2328 = vld [vmem:[#allocation2 + $0xe0] sm:$0xff]
      %v2329 = vld [vmem:[#allocation2 + $0xe8] sm:$0xff]
      %v2330 = vld [vmem:[#allocation2 + $0xf0] sm:$0xff]
      %v2331 = vld [vmem:[#allocation2 + $0xf8] sm:$0xff]
      %v2332 = vld [vmem:[#allocation2 + $0x100] sm:$0xff]
      %v2333 = vld [vmem:[#allocation2 + $0x108] sm:$0xff]
      %v2334 = vld [vmem:[#allocation2 + $0x110] sm:$0xff]
      %v2335 = vld [vmem:[#allocation2 + $0x118] sm:$0xff]
      %v2336 = vld [vmem:[#allocation2 + $0x120] sm:$0xff]
      %v2337 = vld [vmem:[#allocation2 + $0x128] sm:$0xff]
      %v2338 = vld [vmem:[#allocation2 + $0x130] sm:$0xff]
      %v2339 = vld [vmem:[#allocation2 + $0x138] sm:$0xff]
      %v2340 = vld [vmem:[#allocation2 + $0x140] sm:$0xff]
      %v2341 = vld [vmem:[#allocation2 + $0x148] sm:$0xff]
      %v2342 = vld [vmem:[#allocation2 + $0x150] sm:$0xff]
      %v2343 = vld [vmem:[#allocation2 + $0x158] sm:$0xff]
      %v2344 = vld [vmem:[#allocation2 + $0x160] sm:$0xff]
      %v2345 = vld [vmem:[#allocation2 + $0x168] sm:$0xff]
      %v2346 = vld [vmem:[#allocation2 + $0x170] sm:$0xff]
      %v2347 = vld [vmem:[#allocation2 + $0x178] sm:$0xff]
      %v2348 = vld [vmem:[#allocation2 + $0x180] sm:$0xff]
      %v2349 = vld [vmem:[#allocation2 + $0x188] sm:$0xff]
      %v2350 = vld [vmem:[#allocation2 + $0x190] sm:$0xff]
      %v2351 = vld [vmem:[#allocation2 + $0x198] sm:$0xff]
      %v2352 = vld [vmem:[#allocation2 + $0x1a0] sm:$0xff]
      %v2353 = vld [vmem:[#allocation2 + $0x1a8] sm:$0xff]
      %v2354 = vld [vmem:[#allocation2 + $0x1b0] sm:$0xff]
      %v2355 = vld [vmem:[#allocation2 + $0x1b8] sm:$0xff]
      %v2356 = vld [vmem:[#allocation2 + $0x1c0] sm:$0xff]
      %v2357 = vld [vmem:[#allocation2 + $0x1c8] sm:$0xff]
      %v2358 = vld [vmem:[#allocation2 + $0x1d0] sm:$0xff]
      %v2359 = vld [vmem:[#allocation2 + $0x1d8] sm:$0xff]
      %v2360 = vld [vmem:[#allocation2 + $0x1e0] sm:$0xff]
      %v2361 = vld [vmem:[#allocation2 + $0x1e8] sm:$0xff]
      %v2362 = vld [vmem:[#allocation2 + $0x1f0] sm:$0xff]
      %v2363 = vld [vmem:[#allocation2 + $0x1f8] sm:$0xff]
      %v2364 = vld [vmem:[#allocation2 + $0x200] sm:$0xff]
      %v2365 = vld [vmem:[#allocation2 + $0x208] sm:$0xff]
      %v2366 = vld [vmem:[#allocation2 + $0x210] sm:$0xff]
      %v2367 = vld [vmem:[#allocation2 + $0x218] sm:$0xff]
      %v2368 = vld [vmem:[#allocation2 + $0x220] sm:$0xff]
      %v2369 = vld [vmem:[#allocation2 + $0x228] sm:$0xff]
      %v2370 = vld [vmem:[#allocation2 + $0x230] sm:$0xff]
      %v2371 = vld [vmem:[#allocation2 + $0x238] sm:$0xff]
      %v2372 = vld [vmem:[#allocation2 + $0x240] sm:$0xff]
      %v2373 = vld [vmem:[#allocation2 + $0x248] sm:$0xff]
      %v2374 = vld [vmem:[#allocation2 + $0x250] sm:$0xff]
      %v2375 = vld [vmem:[#allocation2 + $0x258] sm:$0xff]
      %v2376 = vld [vmem:[#allocation2 + $0x260] sm:$0xff]
      %v2377 = vld [vmem:[#allocation2 + $0x268] sm:$0xff]
      %v2378 = vld [vmem:[#allocation2 + $0x270] sm:$0xff]
      %v2379 = vld [vmem:[#allocation2 + $0x278] sm:$0xff]
      %v2380 = vld [vmem:[#allocation2 + $0x280] sm:$0xff]
      %v2381 = vld [vmem:[#allocation2 + $0x288] sm:$0xff]
      %v2382 = vld [vmem:[#allocation2 + $0x290] sm:$0xff]
      %v2383 = vld [vmem:[#allocation2 + $0x298] sm:$0xff]
      %v2384 = vld [vmem:[#allocation2 + $0x2a0] sm:$0xff]
      %v2385 = vld [vmem:[#allocation2 + $0x2a8] sm:$0xff]
      %v2386 = vld [vmem:[#allocation2 + $0x2b0] sm:$0xff]
      %v2387 = vld [vmem:[#allocation2 + $0x2b8] sm:$0xff]
      %v2388 = vld [vmem:[#allocation2 + $0x2c0] sm:$0xff]
      %v2389 = vld [vmem:[#allocation2 + $0x2c8] sm:$0xff]
      %v2390 = vld [vmem:[#allocation2 + $0x2d0] sm:$0xff]
      %v2391 = vld [vmem:[#allocation2 + $0x2d8] sm:$0xff]
      %v2392 = vld [vmem:[#allocation2 + $0x2e0] sm:$0xff]
      %v2393 = vld [vmem:[#allocation2 + $0x2e8] sm:$0xff]
      %v2394 = vld [vmem:[#allocation2 + $0x2f0] sm:$0xff]
      %v2395 = vld [vmem:[#allocation2 + $0x2f8] sm:$0xff]
      %v2396 = vld [vmem:[#allocation2 + $0x300] sm:$0xff]
      %v2397 = vld [vmem:[#allocation2 + $0x308] sm:$0xff]
      %v2398 = vld [vmem:[#allocation2 + $0x310] sm:$0xff]
      %v2399 = vld [vmem:[#allocation2 + $0x318] sm:$0xff]
      %v2400 = vld [vmem:[#allocation2 + $0x320] sm:$0xff]
      %v2401 = vld [vmem:[#allocation2 + $0x328] sm:$0xff]
      %v2402 = vld [vmem:[#allocation2 + $0x330] sm:$0xff]
      %v2403 = vld [vmem:[#allocation2 + $0x338] sm:$0xff]
      %v2404 = vld [vmem:[#allocation2 + $0x340] sm:$0xff]
      %v2405 = vld [vmem:[#allocation2 + $0x348] sm:$0xff]
      %v2406 = vld [vmem:[#allocation2 + $0x350] sm:$0xff]
      %v2407 = vld [vmem:[#allocation2 + $0x358] sm:$0xff]
      %v2408 = vld [vmem:[#allocation2 + $0x360] sm:$0xff]
      %v2409 = vld [vmem:[#allocation2 + $0x368] sm:$0xff]
      %v2410 = vld [vmem:[#allocation2 + $0x370] sm:$0xff]
      %v2411 = vld [vmem:[#allocation2 + $0x378] sm:$0xff]
      %v2412 = vld [vmem:[#allocation2 + $0x380] sm:$0xff]
      %v2413 = vld [vmem:[#allocation2 + $0x388] sm:$0xff]
      %v2414 = vld [vmem:[#allocation2 + $0x390] sm:$0xff]
      %v2415 = vld [vmem:[#allocation2 + $0x398] sm:$0xff]
      %v2416 = vld [vmem:[#allocation2 + $0x3a0] sm:$0xff]
      %v2417 = vld [vmem:[#allocation2 + $0x3a8] sm:$0xff]
      %v2418 = vld [vmem:[#allocation2 + $0x3b0] sm:$0xff]
      %v2419 = vld [vmem:[#allocation2 + $0x3b8] sm:$0xff]
      %v2420 = vld [vmem:[#allocation2 + $0x3c0] sm:$0xff]
      %v2421 = vld [vmem:[#allocation2 + $0x3c8] sm:$0xff]
      %v2422 = vld [vmem:[#allocation2 + $0x3d0] sm:$0xff]
      %v2423 = vld [vmem:[#allocation2 + $0x3d8] sm:$0xff]
      %v2424 = vld [vmem:[#allocation2 + $0x3e0] sm:$0xff]
      %v2425 = vld [vmem:[#allocation2 + $0x3e8] sm:$0xff]
      %v2426 = vld [vmem:[#allocation2 + $0x3f0] sm:$0xff]
      %v2427 = vld [vmem:[#allocation2 + $0x3f8] sm:$0xff]
      %v2428 = vld [vmem:[#allocation8] sm:$0xff]
      %v2430 = vperm.slane %v2428, 0
      %v2431 = vperm.slane %v2428, 1
      %v2432 = vperm.slane %v2428, 2
      %v2433 = vperm.slane %v2428, 3
      %v2434 = vperm.slane %v2428, 4
      %v2435 = vperm.slane %v2428, 5
      %v2436 = vperm.slane %v2428, 6
      %v2437 = vperm.slane %v2428, 7
      %v2446 = vadd.f32 %v2300, %v2430
      %v2447 = vadd.f32 %v2301, %v2431
      %v2448 = vadd.f32 %v2302, %v2432
      %v2449 = vadd.f32 %v2303, %v2433
      %v2450 = vadd.f32 %v2304, %v2434
      %v2451 = vadd.f32 %v2305, %v2435
      %v2452 = vadd.f32 %v2306, %v2436
      %v2453 = vadd.f32 %v2307, %v2437
      %v2454 = vadd.f32 %v2308, %v2430
      %v2455 = vadd.f32 %v2309, %v2431
      %v2456 = vadd.f32 %v2310, %v2432
      %v2457 = vadd.f32 %v2311, %v2433
      %v2458 = vadd.f32 %v2312, %v2434
      %v2459 = vadd.f32 %v2313, %v2435
      %v2460 = vadd.f32 %v2314, %v2436
      %v2461 = vadd.f32 %v2315, %v2437
      %v2462 = vadd.f32 %v2316, %v2430
      %v2463 = vadd.f32 %v2317, %v2431
      %v2464 = vadd.f32 %v2318, %v2432
      %v2465 = vadd.f32 %v2319, %v2433
      %v2466 = vadd.f32 %v2320, %v2434
      %v2467 = vadd.f32 %v2321, %v2435
      %v2468 = vadd.f32 %v2322, %v2436
      %v2469 = vadd.f32 %v2323, %v2437
      %v2470 = vadd.f32 %v2324, %v2430
      %v2471 = vadd.f32 %v2325, %v2431
      %v2472 = vadd.f32 %v2326, %v2432
      %v2473 = vadd.f32 %v2327, %v2433
      %v2474 = vadd.f32 %v2328, %v2434
      %v2475 = vadd.f32 %v2329, %v2435
      %v2476 = vadd.f32 %v2330, %v2436
      %v2477 = vadd.f32 %v2331, %v2437
      %v2478 = vadd.f32 %v2332, %v2430
      %v2479 = vadd.f32 %v2333, %v2431
      %v2480 = vadd.f32 %v2334, %v2432
      %v2481 = vadd.f32 %v2335, %v2433
      %v2482 = vadd.f32 %v2336, %v2434
      %v2483 = vadd.f32 %v2337, %v2435
      %v2484 = vadd.f32 %v2338, %v2436
      %v2485 = vadd.f32 %v2339, %v2437
      %v2486 = vadd.f32 %v2340, %v2430
      %v2487 = vadd.f32 %v2341, %v2431
      %v2488 = vadd.f32 %v2342, %v2432
      %v2489 = vadd.f32 %v2343, %v2433
      %v2490 = vadd.f32 %v2344, %v2434
      %v2491 = vadd.f32 %v2345, %v2435
      %v2492 = vadd.f32 %v2346, %v2436
      %v2493 = vadd.f32 %v2347, %v2437
      %v2494 = vadd.f32 %v2348, %v2430
      %v2495 = vadd.f32 %v2349, %v2431
      %v2496 = vadd.f32 %v2350, %v2432
      %v2497 = vadd.f32 %v2351, %v2433
      %v2498 = vadd.f32 %v2352, %v2434
      %v2499 = vadd.f32 %v2353, %v2435
      %v2500 = vadd.f32 %v2354, %v2436
      %v2501 = vadd.f32 %v2355, %v2437
      %v2502 = vadd.f32 %v2356, %v2430
      %v2503 = vadd.f32 %v2357, %v2431
      %v2504 = vadd.f32 %v2358, %v2432
      %v2505 = vadd.f32 %v2359, %v2433
      %v2506 = vadd.f32 %v2360, %v2434
      %v2507 = vadd.f32 %v2361, %v2435
      %v2508 = vadd.f32 %v2362, %v2436
      %v2509 = vadd.f32 %v2363, %v2437
      %v2510 = vadd.f32 %v2364, %v2430
      %v2511 = vadd.f32 %v2365, %v2431
      %v2512 = vadd.f32 %v2366, %v2432
      %v2513 = vadd.f32 %v2367, %v2433
      %v2514 = vadd.f32 %v2368, %v2434
      %v2515 = vadd.f32 %v2369, %v2435
      %v2516 = vadd.f32 %v2370, %v2436
      %v2517 = vadd.f32 %v2371, %v2437
      %v2518 = vadd.f32 %v2372, %v2430
      %v2519 = vadd.f32 %v2373, %v2431
      %v2520 = vadd.f32 %v2374, %v2432
      %v2521 = vadd.f32 %v2375, %v2433
      %v2522 = vadd.f32 %v2376, %v2434
      %v2523 = vadd.f32 %v2377, %v2435
      %v2524 = vadd.f32 %v2378, %v2436
      %v2525 = vadd.f32 %v2379, %v2437
      %v2526 = vadd.f32 %v2380, %v2430
      %v2527 = vadd.f32 %v2381, %v2431
      %v2528 = vadd.f32 %v2382, %v2432
      %v2529 = vadd.f32 %v2383, %v2433
      %v2530 = vadd.f32 %v2384, %v2434
      %v2531 = vadd.f32 %v2385, %v2435
      %v2532 = vadd.f32 %v2386, %v2436
      %v2533 = vadd.f32 %v2387, %v2437
      %v2534 = vadd.f32 %v2388, %v2430
      %v2535 = vadd.f32 %v2389, %v2431
      %v2536 = vadd.f32 %v2390, %v2432
      %v2537 = vadd.f32 %v2391, %v2433
      %v2538 = vadd.f32 %v2392, %v2434
      %v2539 = vadd.f32 %v2393, %v2435
      %v2540 = vadd.f32 %v2394, %v2436
      %v2541 = vadd.f32 %v2395, %v2437
      %v2542 = vadd.f32 %v2396, %v2430
      %v2543 = vadd.f32 %v2397, %v2431
      %v2544 = vadd.f32 %v2398, %v2432
      %v2545 = vadd.f32 %v2399, %v2433
      %v2546 = vadd.f32 %v2400, %v2434
      %v2547 = vadd.f32 %v2401, %v2435
      %v2548 = vadd.f32 %v2402, %v2436
      %v2549 = vadd.f32 %v2403, %v2437
      %v2550 = vadd.f32 %v2404, %v2430
      %v2551 = vadd.f32 %v2405, %v2431
      %v2552 = vadd.f32 %v2406, %v2432
      %v2553 = vadd.f32 %v2407, %v2433
      %v2554 = vadd.f32 %v2408, %v2434
      %v2555 = vadd.f32 %v2409, %v2435
      %v2556 = vadd.f32 %v2410, %v2436
      %v2557 = vadd.f32 %v2411, %v2437
      %v2558 = vadd.f32 %v2412, %v2430
      %v2559 = vadd.f32 %v2413, %v2431
      %v2560 = vadd.f32 %v2414, %v2432
      %v2561 = vadd.f32 %v2415, %v2433
      %v2562 = vadd.f32 %v2416, %v2434
      %v2563 = vadd.f32 %v2417, %v2435
      %v2564 = vadd.f32 %v2418, %v2436
      %v2565 = vadd.f32 %v2419, %v2437
      %v2566 = vadd.f32 %v2420, %v2430
      %v2567 = vadd.f32 %v2421, %v2431
      %v2568 = vadd.f32 %v2422, %v2432
      %v2569 = vadd.f32 %v2423, %v2433
      %v2570 = vadd.f32 %v2424, %v2434
      %v2571 = vadd.f32 %v2425, %v2435
      %v2572 = vadd.f32 %v2426, %v2436
      %v2573 = vadd.f32 %v2427, %v2437
      %v2574 = vmax.f32 %v2446, 0.0
      %v2575 = vmax.f32 %v2447, 0.0
      %v2576 = vmax.f32 %v2448, 0.0
      %v2577 = vmax.f32 %v2449, 0.0
      %v2578 = vmax.f32 %v2450, 0.0
      %v2579 = vmax.f32 %v2451, 0.0
      %v2580 = vmax.f32 %v2452, 0.0
      %v2581 = vmax.f32 %v2453, 0.0
      %v2582 = vmax.f32 %v2454, 0.0
      %v2583 = vmax.f32 %v2455, 0.0
      %v2584 = vmax.f32 %v2456, 0.0
      %v2585 = vmax.f32 %v2457, 0.0
      %v2586 = vmax.f32 %v2458, 0.0
      %v2587 = vmax.f32 %v2459, 0.0
      %v2588 = vmax.f32 %v2460, 0.0
      %v2589 = vmax.f32 %v2461, 0.0
      %v2590 = vmax.f32 %v2462, 0.0
      %v2591 = vmax.f32 %v2463, 0.0
      %v2592 = vmax.f32 %v2464, 0.0
      %v2593 = vmax.f32 %v2465, 0.0
      %v2594 = vmax.f32 %v2466, 0.0
      %v2595 = vmax.f32 %v2467, 0.0
      %v2596 = vmax.f32 %v2468, 0.0
      %v2597 = vmax.f32 %v2469, 0.0
      %v2598 = vmax.f32 %v2470, 0.0
      %v2599 = vmax.f32 %v2471, 0.0
      %v2600 = vmax.f32 %v2472, 0.0
      %v2601 = vmax.f32 %v2473, 0.0
      %v2602 = vmax.f32 %v2474, 0.0
      %v2603 = vmax.f32 %v2475, 0.0
      %v2604 = vmax.f32 %v2476, 0.0
      %v2605 = vmax.f32 %v2477, 0.0
      %v2606 = vmax.f32 %v2478, 0.0
      %v2607 = vmax.f32 %v2479, 0.0
      %v2608 = vmax.f32 %v2480, 0.0
      %v2609 = vmax.f32 %v2481, 0.0
      %v2610 = vmax.f32 %v2482, 0.0
      %v2611 = vmax.f32 %v2483, 0.0
      %v2612 = vmax.f32 %v2484, 0.0
      %v2613 = vmax.f32 %v2485, 0.0
      %v2614 = vmax.f32 %v2486, 0.0
      %v2615 = vmax.f32 %v2487, 0.0
      %v2616 = vmax.f32 %v2488, 0.0
      %v2617 = vmax.f32 %v2489, 0.0
      %v2618 = vmax.f32 %v2490, 0.0
      %v2619 = vmax.f32 %v2491, 0.0
      %v2620 = vmax.f32 %v2492, 0.0
      %v2621 = vmax.f32 %v2493, 0.0
      %v2622 = vmax.f32 %v2494, 0.0
      %v2623 = vmax.f32 %v2495, 0.0
      %v2624 = vmax.f32 %v2496, 0.0
      %v2625 = vmax.f32 %v2497, 0.0
      %v2626 = vmax.f32 %v2498, 0.0
      %v2627 = vmax.f32 %v2499, 0.0
      %v2628 = vmax.f32 %v2500, 0.0
      %v2629 = vmax.f32 %v2501, 0.0
      %v2630 = vmax.f32 %v2502, 0.0
      %v2631 = vmax.f32 %v2503, 0.0
      %v2632 = vmax.f32 %v2504, 0.0
      %v2633 = vmax.f32 %v2505, 0.0
      %v2634 = vmax.f32 %v2506, 0.0
      %v2635 = vmax.f32 %v2507, 0.0
      %v2636 = vmax.f32 %v2508, 0.0
      %v2637 = vmax.f32 %v2509, 0.0
      %v2638 = vmax.f32 %v2510, 0.0
      %v2639 = vmax.f32 %v2511, 0.0
      %v2640 = vmax.f32 %v2512, 0.0
      %v2641 = vmax.f32 %v2513, 0.0
      %v2642 = vmax.f32 %v2514, 0.0
      %v2643 = vmax.f32 %v2515, 0.0
      %v2644 = vmax.f32 %v2516, 0.0
      %v2645 = vmax.f32 %v2517, 0.0
      %v2646 = vmax.f32 %v2518, 0.0
      %v2647 = vmax.f32 %v2519, 0.0
      %v2648 = vmax.f32 %v2520, 0.0
      %v2649 = vmax.f32 %v2521, 0.0
      %v2650 = vmax.f32 %v2522, 0.0
      %v2651 = vmax.f32 %v2523, 0.0
      %v2652 = vmax.f32 %v2524, 0.0
      %v2653 = vmax.f32 %v2525, 0.0
      %v2654 = vmax.f32 %v2526, 0.0
      %v2655 = vmax.f32 %v2527, 0.0
      %v2656 = vmax.f32 %v2528, 0.0
      %v2657 = vmax.f32 %v2529, 0.0
      %v2658 = vmax.f32 %v2530, 0.0
      %v2659 = vmax.f32 %v2531, 0.0
      %v2660 = vmax.f32 %v2532, 0.0
      %v2661 = vmax.f32 %v2533, 0.0
      %v2662 = vmax.f32 %v2534, 0.0
      %v2663 = vmax.f32 %v2535, 0.0
      %v2664 = vmax.f32 %v2536, 0.0
      %v2665 = vmax.f32 %v2537, 0.0
      %v2666 = vmax.f32 %v2538, 0.0
      %v2667 = vmax.f32 %v2539, 0.0
      %v2668 = vmax.f32 %v2540, 0.0
      %v2669 = vmax.f32 %v2541, 0.0
      %v2670 = vmax.f32 %v2542, 0.0
      %v2671 = vmax.f32 %v2543, 0.0
      %v2672 = vmax.f32 %v2544, 0.0
      %v2673 = vmax.f32 %v2545, 0.0
      %v2674 = vmax.f32 %v2546, 0.0
      %v2675 = vmax.f32 %v2547, 0.0
      %v2676 = vmax.f32 %v2548, 0.0
      %v2677 = vmax.f32 %v2549, 0.0
      %v2678 = vmax.f32 %v2550, 0.0
      %v2679 = vmax.f32 %v2551, 0.0
      %v2680 = vmax.f32 %v2552, 0.0
      %v2681 = vmax.f32 %v2553, 0.0
      %v2682 = vmax.f32 %v2554, 0.0
      %v2683 = vmax.f32 %v2555, 0.0
      %v2684 = vmax.f32 %v2556, 0.0
      %v2685 = vmax.f32 %v2557, 0.0
      %v2686 = vmax.f32 %v2558, 0.0
      %v2687 = vmax.f32 %v2559, 0.0
      %v2688 = vmax.f32 %v2560, 0.0
      %v2689 = vmax.f32 %v2561, 0.0
      %v2690 = vmax.f32 %v2562, 0.0
      %v2691 = vmax.f32 %v2563, 0.0
      %v2692 = vmax.f32 %v2564, 0.0
      %v2693 = vmax.f32 %v2565, 0.0
      %v2694 = vmax.f32 %v2566, 0.0
      %v2695 = vmax.f32 %v2567, 0.0
      %v2696 = vmax.f32 %v2568, 0.0
      %v2697 = vmax.f32 %v2569, 0.0
      %v2698 = vmax.f32 %v2570, 0.0
      %v2699 = vmax.f32 %v2571, 0.0
      %v2700 = vmax.f32 %v2572, 0.0
      %v2701 = vmax.f32 %v2573, 0.0
      %v2702 = vpack.c.bf16 %v2582, %v2574
      %v2703 = vpack.c.bf16 %v2583, %v2575
      %v2704 = vpack.c.bf16 %v2584, %v2576
      %v2705 = vpack.c.bf16 %v2585, %v2577
      %v2706 = vpack.c.bf16 %v2586, %v2578
      %v2707 = vpack.c.bf16 %v2587, %v2579
      %v2708 = vpack.c.bf16 %v2588, %v2580
      %v2709 = vpack.c.bf16 %v2589, %v2581
      %v2710 = vpack.c.bf16 %v2598, %v2590
      %v2711 = vpack.c.bf16 %v2599, %v2591
      %v2712 = vpack.c.bf16 %v2600, %v2592
      %v2713 = vpack.c.bf16 %v2601, %v2593
      %v2714 = vpack.c.bf16 %v2602, %v2594
      %v2715 = vpack.c.bf16 %v2603, %v2595
      %v2716 = vpack.c.bf16 %v2604, %v2596
      %v2717 = vpack.c.bf16 %v2605, %v2597
      %v2718 = vpack.c.bf16 %v2614, %v2606
      %v2719 = vpack.c.bf16 %v2615, %v2607
      %v2720 = vpack.c.bf16 %v2616, %v2608
      %v2721 = vpack.c.bf16 %v2617, %v2609
      %v2722 = vpack.c.bf16 %v2618, %v2610
      %v2723 = vpack.c.bf16 %v2619, %v2611
      %v2724 = vpack.c.bf16 %v2620, %v2612
      %v2725 = vpack.c.bf16 %v2621, %v2613
      %v2726 = vpack.c.bf16 %v2630, %v2622
      %v2727 = vpack.c.bf16 %v2631, %v2623
      %v2728 = vpack.c.bf16 %v2632, %v2624
      %v2729 = vpack.c.bf16 %v2633, %v2625
      %v2730 = vpack.c.bf16 %v2634, %v2626
      %v2731 = vpack.c.bf16 %v2635, %v2627
      %v2732 = vpack.c.bf16 %v2636, %v2628
      %v2733 = vpack.c.bf16 %v2637, %v2629
      %v2734 = vpack.c.bf16 %v2646, %v2638
      %v2735 = vpack.c.bf16 %v2647, %v2639
      %v2736 = vpack.c.bf16 %v2648, %v2640
      %v2737 = vpack.c.bf16 %v2649, %v2641
      %v2738 = vpack.c.bf16 %v2650, %v2642
      %v2739 = vpack.c.bf16 %v2651, %v2643
      %v2740 = vpack.c.bf16 %v2652, %v2644
      %v2741 = vpack.c.bf16 %v2653, %v2645
      %v2742 = vpack.c.bf16 %v2662, %v2654
      %v2743 = vpack.c.bf16 %v2663, %v2655
      %v2744 = vpack.c.bf16 %v2664, %v2656
      %v2745 = vpack.c.bf16 %v2665, %v2657
      %v2746 = vpack.c.bf16 %v2666, %v2658
      %v2747 = vpack.c.bf16 %v2667, %v2659
      %v2748 = vpack.c.bf16 %v2668, %v2660
      %v2749 = vpack.c.bf16 %v2669, %v2661
      %v2750 = vpack.c.bf16 %v2678, %v2670
      %v2751 = vpack.c.bf16 %v2679, %v2671
      %v2752 = vpack.c.bf16 %v2680, %v2672
      %v2753 = vpack.c.bf16 %v2681, %v2673
      %v2754 = vpack.c.bf16 %v2682, %v2674
      %v2755 = vpack.c.bf16 %v2683, %v2675
      %v2756 = vpack.c.bf16 %v2684, %v2676
      %v2757 = vpack.c.bf16 %v2685, %v2677
      %v2758 = vpack.c.bf16 %v2694, %v2686
      %v2759 = vpack.c.bf16 %v2695, %v2687
      %v2760 = vpack.c.bf16 %v2696, %v2688
      %v2761 = vpack.c.bf16 %v2697, %v2689
      %v2762 = vpack.c.bf16 %v2698, %v2690
      %v2763 = vpack.c.bf16 %v2699, %v2691
      %v2764 = vpack.c.bf16 %v2700, %v2692
      %v2765 = vpack.c.bf16 %v2701, %v2693
      %v2766 = vld [vmem:[#allocation9] sm:$0xff]
      %v2767 = vld [vmem:[#allocation9 + $0x8] sm:$0xff]
      %v2768 = vld [vmem:[#allocation9 + $0x10] sm:$0xff]
      %v2769 = vld [vmem:[#allocation9 + $0x18] sm:$0xff]
      %v2770 = vld [vmem:[#allocation9 + $0x20] sm:$0xff]
      %v2771 = vld [vmem:[#allocation9 + $0x28] sm:$0xff]
      %v2772 = vld [vmem:[#allocation9 + $0x30] sm:$0xff]
      %v2773 = vld [vmem:[#allocation9 + $0x38] sm:$0xff]
      %v2774 = vld [vmem:[#allocation9 + $0x40] sm:$0xff]
      %v2775 = vld [vmem:[#allocation9 + $0x48] sm:$0xff]
      %v2776 = vld [vmem:[#allocation9 + $0x50] sm:$0xff]
      %v2777 = vld [vmem:[#allocation9 + $0x58] sm:$0xff]
      %v2778 = vld [vmem:[#allocation9 + $0x60] sm:$0xff]
      %v2779 = vld [vmem:[#allocation9 + $0x68] sm:$0xff]
      %v2780 = vld [vmem:[#allocation9 + $0x70] sm:$0xff]
      %v2781 = vld [vmem:[#allocation9 + $0x78] sm:$0xff]
      %v2782 = vld [vmem:[#allocation9 + $0x80] sm:$0xff]
      %v2783 = vld [vmem:[#allocation9 + $0x88] sm:$0xff]
      %v2784 = vld [vmem:[#allocation9 + $0x90] sm:$0xff]
      %v2785 = vld [vmem:[#allocation9 + $0x98] sm:$0xff]
      %v2786 = vld [vmem:[#allocation9 + $0xa0] sm:$0xff]
      %v2787 = vld [vmem:[#allocation9 + $0xa8] sm:$0xff]
      %v2788 = vld [vmem:[#allocation9 + $0xb0] sm:$0xff]
      %v2789 = vld [vmem:[#allocation9 + $0xb8] sm:$0xff]
      %v2790 = vld [vmem:[#allocation9 + $0xc0] sm:$0xff]
      %v2791 = vld [vmem:[#allocation9 + $0xc8] sm:$0xff]
      %v2792 = vld [vmem:[#allocation9 + $0xd0] sm:$0xff]
      %v2793 = vld [vmem:[#allocation9 + $0xd8] sm:$0xff]
      %v2794 = vld [vmem:[#allocation9 + $0xe0] sm:$0xff]
      %v2795 = vld [vmem:[#allocation9 + $0xe8] sm:$0xff]
      %v2796 = vld [vmem:[#allocation9 + $0xf0] sm:$0xff]
      %v2797 = vld [vmem:[#allocation9 + $0xf8] sm:$0xff]
      %v2798 = vld [vmem:[#allocation9 + $0x100] sm:$0xff]
      %v2799 = vld [vmem:[#allocation9 + $0x108] sm:$0xff]
      %v2800 = vld [vmem:[#allocation9 + $0x110] sm:$0xff]
      %v2801 = vld [vmem:[#allocation9 + $0x118] sm:$0xff]
      %v2802 = vld [vmem:[#allocation9 + $0x120] sm:$0xff]
      %v2803 = vld [vmem:[#allocation9 + $0x128] sm:$0xff]
      %v2804 = vld [vmem:[#allocation9 + $0x130] sm:$0xff]
      %v2805 = vld [vmem:[#allocation9 + $0x138] sm:$0xff]
      %v2806 = vld [vmem:[#allocation9 + $0x140] sm:$0xff]
      %v2807 = vld [vmem:[#allocation9 + $0x148] sm:$0xff]
      %v2808 = vld [vmem:[#allocation9 + $0x150] sm:$0xff]
      %v2809 = vld [vmem:[#allocation9 + $0x158] sm:$0xff]
      %v2810 = vld [vmem:[#allocation9 + $0x160] sm:$0xff]
      %v2811 = vld [vmem:[#allocation9 + $0x168] sm:$0xff]
      %v2812 = vld [vmem:[#allocation9 + $0x170] sm:$0xff]
      %v2813 = vld [vmem:[#allocation9 + $0x178] sm:$0xff]
      %v2814 = vld [vmem:[#allocation9 + $0x180] sm:$0xff]
      %v2815 = vld [vmem:[#allocation9 + $0x188] sm:$0xff]
      %v2816 = vld [vmem:[#allocation9 + $0x190] sm:$0xff]
      %v2817 = vld [vmem:[#allocation9 + $0x198] sm:$0xff]
      %v2818 = vld [vmem:[#allocation9 + $0x1a0] sm:$0xff]
      %v2819 = vld [vmem:[#allocation9 + $0x1a8] sm:$0xff]
      %v2820 = vld [vmem:[#allocation9 + $0x1b0] sm:$0xff]
      %v2821 = vld [vmem:[#allocation9 + $0x1b8] sm:$0xff]
      %v2822 = vld [vmem:[#allocation9 + $0x1c0] sm:$0xff]
      %v2823 = vld [vmem:[#allocation9 + $0x1c8] sm:$0xff]
      %v2824 = vld [vmem:[#allocation9 + $0x1d0] sm:$0xff]
      %v2825 = vld [vmem:[#allocation9 + $0x1d8] sm:$0xff]
      %v2826 = vld [vmem:[#allocation9 + $0x1e0] sm:$0xff]
      %v2827 = vld [vmem:[#allocation9 + $0x1e8] sm:$0xff]
      %v2828 = vld [vmem:[#allocation9 + $0x1f0] sm:$0xff]
      %v2829 = vld [vmem:[#allocation9 + $0x1f8] sm:$0xff]
      %v2830 = vld [vmem:[#allocation9 + $0x200] sm:$0xff]
      %v2831 = vld [vmem:[#allocation9 + $0x208] sm:$0xff]
      %v2832 = vld [vmem:[#allocation9 + $0x210] sm:$0xff]
      %v2833 = vld [vmem:[#allocation9 + $0x218] sm:$0xff]
      %v2834 = vld [vmem:[#allocation9 + $0x220] sm:$0xff]
      %v2835 = vld [vmem:[#allocation9 + $0x228] sm:$0xff]
      %v2836 = vld [vmem:[#allocation9 + $0x230] sm:$0xff]
      %v2837 = vld [vmem:[#allocation9 + $0x238] sm:$0xff]
      %v2838 = vld [vmem:[#allocation9 + $0x240] sm:$0xff]
      %v2839 = vld [vmem:[#allocation9 + $0x248] sm:$0xff]
      %v2840 = vld [vmem:[#allocation9 + $0x250] sm:$0xff]
      %v2841 = vld [vmem:[#allocation9 + $0x258] sm:$0xff]
      %v2842 = vld [vmem:[#allocation9 + $0x260] sm:$0xff]
      %v2843 = vld [vmem:[#allocation9 + $0x268] sm:$0xff]
      %v2844 = vld [vmem:[#allocation9 + $0x270] sm:$0xff]
      %v2845 = vld [vmem:[#allocation9 + $0x278] sm:$0xff]
      %v2846 = vld [vmem:[#allocation9 + $0x280] sm:$0xff]
      %v2847 = vld [vmem:[#allocation9 + $0x288] sm:$0xff]
      %v2848 = vld [vmem:[#allocation9 + $0x290] sm:$0xff]
      %v2849 = vld [vmem:[#allocation9 + $0x298] sm:$0xff]
      %v2850 = vld [vmem:[#allocation9 + $0x2a0] sm:$0xff]
      %v2851 = vld [vmem:[#allocation9 + $0x2a8] sm:$0xff]
      %v2852 = vld [vmem:[#allocation9 + $0x2b0] sm:$0xff]
      %v2853 = vld [vmem:[#allocation9 + $0x2b8] sm:$0xff]
      %v2854 = vld [vmem:[#allocation9 + $0x2c0] sm:$0xff]
      %v2855 = vld [vmem:[#allocation9 + $0x2c8] sm:$0xff]
      %v2856 = vld [vmem:[#allocation9 + $0x2d0] sm:$0xff]
      %v2857 = vld [vmem:[#allocation9 + $0x2d8] sm:$0xff]
      %v2858 = vld [vmem:[#allocation9 + $0x2e0] sm:$0xff]
      %v2859 = vld [vmem:[#allocation9 + $0x2e8] sm:$0xff]
      %v2860 = vld [vmem:[#allocation9 + $0x2f0] sm:$0xff]
      %v2861 = vld [vmem:[#allocation9 + $0x2f8] sm:$0xff]
      %v2862 = vld [vmem:[#allocation9 + $0x300] sm:$0xff]
      %v2863 = vld [vmem:[#allocation9 + $0x308] sm:$0xff]
      %v2864 = vld [vmem:[#allocation9 + $0x310] sm:$0xff]
      %v2865 = vld [vmem:[#allocation9 + $0x318] sm:$0xff]
      %v2866 = vld [vmem:[#allocation9 + $0x320] sm:$0xff]
      %v2867 = vld [vmem:[#allocation9 + $0x328] sm:$0xff]
      %v2868 = vld [vmem:[#allocation9 + $0x330] sm:$0xff]
      %v2869 = vld [vmem:[#allocation9 + $0x338] sm:$0xff]
      %v2870 = vld [vmem:[#allocation9 + $0x340] sm:$0xff]
      %v2871 = vld [vmem:[#allocation9 + $0x348] sm:$0xff]
      %v2872 = vld [vmem:[#allocation9 + $0x350] sm:$0xff]
      %v2873 = vld [vmem:[#allocation9 + $0x358] sm:$0xff]
      %v2874 = vld [vmem:[#allocation9 + $0x360] sm:$0xff]
      %v2875 = vld [vmem:[#allocation9 + $0x368] sm:$0xff]
      %v2876 = vld [vmem:[#allocation9 + $0x370] sm:$0xff]
      %v2877 = vld [vmem:[#allocation9 + $0x378] sm:$0xff]
      %v2878 = vld [vmem:[#allocation9 + $0x380] sm:$0xff]
      %v2879 = vld [vmem:[#allocation9 + $0x388] sm:$0xff]
      %v2880 = vld [vmem:[#allocation9 + $0x390] sm:$0xff]
      %v2881 = vld [vmem:[#allocation9 + $0x398] sm:$0xff]
      %v2882 = vld [vmem:[#allocation9 + $0x3a0] sm:$0xff]
      %v2883 = vld [vmem:[#allocation9 + $0x3a8] sm:$0xff]
      %v2884 = vld [vmem:[#allocation9 + $0x3b0] sm:$0xff]
      %v2885 = vld [vmem:[#allocation9 + $0x3b8] sm:$0xff]
      %v2886 = vld [vmem:[#allocation9 + $0x3c0] sm:$0xff]
      %v2887 = vld [vmem:[#allocation9 + $0x3c8] sm:$0xff]
      %v2888 = vld [vmem:[#allocation9 + $0x3d0] sm:$0xff]
      %v2889 = vld [vmem:[#allocation9 + $0x3d8] sm:$0xff]
      %v2890 = vld [vmem:[#allocation9 + $0x3e0] sm:$0xff]
      %v2891 = vld [vmem:[#allocation9 + $0x3e8] sm:$0xff]
      %v2892 = vld [vmem:[#allocation9 + $0x3f0] sm:$0xff]
      %v2893 = vld [vmem:[#allocation9 + $0x3f8] sm:$0xff]
      %v2894 = vld [vmem:[#allocation9 + $0x400] sm:$0xff]
      %v2895 = vld [vmem:[#allocation9 + $0x408] sm:$0xff]
      %v2896 = vld [vmem:[#allocation9 + $0x410] sm:$0xff]
      %v2897 = vld [vmem:[#allocation9 + $0x418] sm:$0xff]
      %v2898 = vld [vmem:[#allocation9 + $0x420] sm:$0xff]
      %v2899 = vld [vmem:[#allocation9 + $0x428] sm:$0xff]
      %v2900 = vld [vmem:[#allocation9 + $0x430] sm:$0xff]
      %v2901 = vld [vmem:[#allocation9 + $0x438] sm:$0xff]
      %v2902 = vld [vmem:[#allocation9 + $0x440] sm:$0xff]
      %v2903 = vld [vmem:[#allocation9 + $0x448] sm:$0xff]
      %v2904 = vld [vmem:[#allocation9 + $0x450] sm:$0xff]
      %v2905 = vld [vmem:[#allocation9 + $0x458] sm:$0xff]
      %v2906 = vld [vmem:[#allocation9 + $0x460] sm:$0xff]
      %v2907 = vld [vmem:[#allocation9 + $0x468] sm:$0xff]
      %v2908 = vld [vmem:[#allocation9 + $0x470] sm:$0xff]
      %v2909 = vld [vmem:[#allocation9 + $0x478] sm:$0xff]
      %v2910 = vld [vmem:[#allocation9 + $0x480] sm:$0xff]
      %v2911 = vld [vmem:[#allocation9 + $0x488] sm:$0xff]
      %v2912 = vld [vmem:[#allocation9 + $0x490] sm:$0xff]
      %v2913 = vld [vmem:[#allocation9 + $0x498] sm:$0xff]
      %v2914 = vld [vmem:[#allocation9 + $0x4a0] sm:$0xff]
      %v2915 = vld [vmem:[#allocation9 + $0x4a8] sm:$0xff]
      %v2916 = vld [vmem:[#allocation9 + $0x4b0] sm:$0xff]
      %v2917 = vld [vmem:[#allocation9 + $0x4b8] sm:$0xff]
      %v2918 = vld [vmem:[#allocation9 + $0x4c0] sm:$0xff]
      %v2919 = vld [vmem:[#allocation9 + $0x4c8] sm:$0xff]
      %v2920 = vld [vmem:[#allocation9 + $0x4d0] sm:$0xff]
      %v2921 = vld [vmem:[#allocation9 + $0x4d8] sm:$0xff]
      %v2922 = vld [vmem:[#allocation9 + $0x4e0] sm:$0xff]
      %v2923 = vld [vmem:[#allocation9 + $0x4e8] sm:$0xff]
      %v2924 = vld [vmem:[#allocation9 + $0x4f0] sm:$0xff]
      %v2925 = vld [vmem:[#allocation9 + $0x4f8] sm:$0xff]
      %v2926 = vld [vmem:[#allocation9 + $0x500] sm:$0xff]
      %v2927 = vld [vmem:[#allocation9 + $0x508] sm:$0xff]
      %v2928 = vld [vmem:[#allocation9 + $0x510] sm:$0xff]
      %v2929 = vld [vmem:[#allocation9 + $0x518] sm:$0xff]
      %v2930 = vld [vmem:[#allocation9 + $0x520] sm:$0xff]
      %v2931 = vld [vmem:[#allocation9 + $0x528] sm:$0xff]
      %v2932 = vld [vmem:[#allocation9 + $0x530] sm:$0xff]
      %v2933 = vld [vmem:[#allocation9 + $0x538] sm:$0xff]
      %v2934 = vld [vmem:[#allocation9 + $0x540] sm:$0xff]
      %v2935 = vld [vmem:[#allocation9 + $0x548] sm:$0xff]
      %v2936 = vld [vmem:[#allocation9 + $0x550] sm:$0xff]
      %v2937 = vld [vmem:[#allocation9 + $0x558] sm:$0xff]
      %v2938 = vld [vmem:[#allocation9 + $0x560] sm:$0xff]
      %v2939 = vld [vmem:[#allocation9 + $0x568] sm:$0xff]
      %v2940 = vld [vmem:[#allocation9 + $0x570] sm:$0xff]
      %v2941 = vld [vmem:[#allocation9 + $0x578] sm:$0xff]
      %v2942 = vld [vmem:[#allocation9 + $0x580] sm:$0xff]
      %v2943 = vld [vmem:[#allocation9 + $0x588] sm:$0xff]
      %v2944 = vld [vmem:[#allocation9 + $0x590] sm:$0xff]
      %v2945 = vld [vmem:[#allocation9 + $0x598] sm:$0xff]
      %v2946 = vld [vmem:[#allocation9 + $0x5a0] sm:$0xff]
      %v2947 = vld [vmem:[#allocation9 + $0x5a8] sm:$0xff]
      %v2948 = vld [vmem:[#allocation9 + $0x5b0] sm:$0xff]
      %v2949 = vld [vmem:[#allocation9 + $0x5b8] sm:$0xff]
      %v2950 = vld [vmem:[#allocation9 + $0x5c0] sm:$0xff]
      %v2951 = vld [vmem:[#allocation9 + $0x5c8] sm:$0xff]
      %v2952 = vld [vmem:[#allocation9 + $0x5d0] sm:$0xff]
      %v2953 = vld [vmem:[#allocation9 + $0x5d8] sm:$0xff]
      %v2954 = vld [vmem:[#allocation9 + $0x5e0] sm:$0xff]
      %v2955 = vld [vmem:[#allocation9 + $0x5e8] sm:$0xff]
      %v2956 = vld [vmem:[#allocation9 + $0x5f0] sm:$0xff]
      %v2957 = vld [vmem:[#allocation9 + $0x5f8] sm:$0xff]
      %v2958 = vld [vmem:[#allocation9 + $0x600] sm:$0xff]
      %v2959 = vld [vmem:[#allocation9 + $0x608] sm:$0xff]
      %v2960 = vld [vmem:[#allocation9 + $0x610] sm:$0xff]
      %v2961 = vld [vmem:[#allocation9 + $0x618] sm:$0xff]
      %v2962 = vld [vmem:[#allocation9 + $0x620] sm:$0xff]
      %v2963 = vld [vmem:[#allocation9 + $0x628] sm:$0xff]
      %v2964 = vld [vmem:[#allocation9 + $0x630] sm:$0xff]
      %v2965 = vld [vmem:[#allocation9 + $0x638] sm:$0xff]
      %v2966 = vld [vmem:[#allocation9 + $0x640] sm:$0xff]
      %v2967 = vld [vmem:[#allocation9 + $0x648] sm:$0xff]
      %v2968 = vld [vmem:[#allocation9 + $0x650] sm:$0xff]
      %v2969 = vld [vmem:[#allocation9 + $0x658] sm:$0xff]
      %v2970 = vld [vmem:[#allocation9 + $0x660] sm:$0xff]
      %v2971 = vld [vmem:[#allocation9 + $0x668] sm:$0xff]
      %v2972 = vld [vmem:[#allocation9 + $0x670] sm:$0xff]
      %v2973 = vld [vmem:[#allocation9 + $0x678] sm:$0xff]
      %v2974 = vld [vmem:[#allocation9 + $0x680] sm:$0xff]
      %v2975 = vld [vmem:[#allocation9 + $0x688] sm:$0xff]
      %v2976 = vld [vmem:[#allocation9 + $0x690] sm:$0xff]
      %v2977 = vld [vmem:[#allocation9 + $0x698] sm:$0xff]
      %v2978 = vld [vmem:[#allocation9 + $0x6a0] sm:$0xff]
      %v2979 = vld [vmem:[#allocation9 + $0x6a8] sm:$0xff]
      %v2980 = vld [vmem:[#allocation9 + $0x6b0] sm:$0xff]
      %v2981 = vld [vmem:[#allocation9 + $0x6b8] sm:$0xff]
      %v2982 = vld [vmem:[#allocation9 + $0x6c0] sm:$0xff]
      %v2983 = vld [vmem:[#allocation9 + $0x6c8] sm:$0xff]
      %v2984 = vld [vmem:[#allocation9 + $0x6d0] sm:$0xff]
      %v2985 = vld [vmem:[#allocation9 + $0x6d8] sm:$0xff]
      %v2986 = vld [vmem:[#allocation9 + $0x6e0] sm:$0xff]
      %v2987 = vld [vmem:[#allocation9 + $0x6e8] sm:$0xff]
      %v2988 = vld [vmem:[#allocation9 + $0x6f0] sm:$0xff]
      %v2989 = vld [vmem:[#allocation9 + $0x6f8] sm:$0xff]
      %v2990 = vld [vmem:[#allocation9 + $0x700] sm:$0xff]
      %v2991 = vld [vmem:[#allocation9 + $0x708] sm:$0xff]
      %v2992 = vld [vmem:[#allocation9 + $0x710] sm:$0xff]
      %v2993 = vld [vmem:[#allocation9 + $0x718] sm:$0xff]
      %v2994 = vld [vmem:[#allocation9 + $0x720] sm:$0xff]
      %v2995 = vld [vmem:[#allocation9 + $0x728] sm:$0xff]
      %v2996 = vld [vmem:[#allocation9 + $0x730] sm:$0xff]
      %v2997 = vld [vmem:[#allocation9 + $0x738] sm:$0xff]
      %v2998 = vld [vmem:[#allocation9 + $0x740] sm:$0xff]
      %v2999 = vld [vmem:[#allocation9 + $0x748] sm:$0xff]
      %v3000 = vld [vmem:[#allocation9 + $0x750] sm:$0xff]
      %v3001 = vld [vmem:[#allocation9 + $0x758] sm:$0xff]
      %v3002 = vld [vmem:[#allocation9 + $0x760] sm:$0xff]
      %v3003 = vld [vmem:[#allocation9 + $0x768] sm:$0xff]
      %v3004 = vld [vmem:[#allocation9 + $0x770] sm:$0xff]
      %v3005 = vld [vmem:[#allocation9 + $0x778] sm:$0xff]
      %v3006 = vld [vmem:[#allocation9 + $0x780] sm:$0xff]
      %v3007 = vld [vmem:[#allocation9 + $0x788] sm:$0xff]
      %v3008 = vld [vmem:[#allocation9 + $0x790] sm:$0xff]
      %v3009 = vld [vmem:[#allocation9 + $0x798] sm:$0xff]
      %v3010 = vld [vmem:[#allocation9 + $0x7a0] sm:$0xff]
      %v3011 = vld [vmem:[#allocation9 + $0x7a8] sm:$0xff]
      %v3012 = vld [vmem:[#allocation9 + $0x7b0] sm:$0xff]
      %v3013 = vld [vmem:[#allocation9 + $0x7b8] sm:$0xff]
      %v3014 = vld [vmem:[#allocation9 + $0x7c0] sm:$0xff]
      %v3015 = vld [vmem:[#allocation9 + $0x7c8] sm:$0xff]
      %v3016 = vld [vmem:[#allocation9 + $0x7d0] sm:$0xff]
      %v3017 = vld [vmem:[#allocation9 + $0x7d8] sm:$0xff]
      %v3018 = vld [vmem:[#allocation9 + $0x7e0] sm:$0xff]
      %v3019 = vld [vmem:[#allocation9 + $0x7e8] sm:$0xff]
      %v3020 = vld [vmem:[#allocation9 + $0x7f0] sm:$0xff]
      %v3021 = vld [vmem:[#allocation9 + $0x7f8] sm:$0xff]
      %v3022 = vld [vmem:[#allocation9 + $0x800] sm:$0xff]
      %v3023 = vld [vmem:[#allocation9 + $0x808] sm:$0xff]
      %v3024 = vld [vmem:[#allocation9 + $0x810] sm:$0xff]
      %v3025 = vld [vmem:[#allocation9 + $0x818] sm:$0xff]
      %v3026 = vld [vmem:[#allocation9 + $0x820] sm:$0xff]
      %v3027 = vld [vmem:[#allocation9 + $0x828] sm:$0xff]
      %v3028 = vld [vmem:[#allocation9 + $0x830] sm:$0xff]
      %v3029 = vld [vmem:[#allocation9 + $0x838] sm:$0xff]
      %v3030 = vld [vmem:[#allocation9 + $0x840] sm:$0xff]
      %v3031 = vld [vmem:[#allocation9 + $0x848] sm:$0xff]
      %v3032 = vld [vmem:[#allocation9 + $0x850] sm:$0xff]
      %v3033 = vld [vmem:[#allocation9 + $0x858] sm:$0xff]
      %v3034 = vld [vmem:[#allocation9 + $0x860] sm:$0xff]
      %v3035 = vld [vmem:[#allocation9 + $0x868] sm:$0xff]
      %v3036 = vld [vmem:[#allocation9 + $0x870] sm:$0xff]
      %v3037 = vld [vmem:[#allocation9 + $0x878] sm:$0xff]
      %v3038 = vld [vmem:[#allocation9 + $0x880] sm:$0xff]
      %v3039 = vld [vmem:[#allocation9 + $0x888] sm:$0xff]
      %v3040 = vld [vmem:[#allocation9 + $0x890] sm:$0xff]
      %v3041 = vld [vmem:[#allocation9 + $0x898] sm:$0xff]
      %v3042 = vld [vmem:[#allocation9 + $0x8a0] sm:$0xff]
      %v3043 = vld [vmem:[#allocation9 + $0x8a8] sm:$0xff]
      %v3044 = vld [vmem:[#allocation9 + $0x8b0] sm:$0xff]
      %v3045 = vld [vmem:[#allocation9 + $0x8b8] sm:$0xff]
      %v3046 = vld [vmem:[#allocation9 + $0x8c0] sm:$0xff]
      %v3047 = vld [vmem:[#allocation9 + $0x8c8] sm:$0xff]
      %v3048 = vld [vmem:[#allocation9 + $0x8d0] sm:$0xff]
      %v3049 = vld [vmem:[#allocation9 + $0x8d8] sm:$0xff]
      %v3050 = vld [vmem:[#allocation9 + $0x8e0] sm:$0xff]
      %v3051 = vld [vmem:[#allocation9 + $0x8e8] sm:$0xff]
      %v3052 = vld [vmem:[#allocation9 + $0x8f0] sm:$0xff]
      %v3053 = vld [vmem:[#allocation9 + $0x8f8] sm:$0xff]
      %v3054 = vld [vmem:[#allocation9 + $0x900] sm:$0xff]
      %v3055 = vld [vmem:[#allocation9 + $0x908] sm:$0xff]
      %v3056 = vld [vmem:[#allocation9 + $0x910] sm:$0xff]
      %v3057 = vld [vmem:[#allocation9 + $0x918] sm:$0xff]
      %v3058 = vld [vmem:[#allocation9 + $0x920] sm:$0xff]
      %v3059 = vld [vmem:[#allocation9 + $0x928] sm:$0xff]
      %v3060 = vld [vmem:[#allocation9 + $0x930] sm:$0xff]
      %v3061 = vld [vmem:[#allocation9 + $0x938] sm:$0xff]
      %v3062 = vld [vmem:[#allocation9 + $0x940] sm:$0xff]
      %v3063 = vld [vmem:[#allocation9 + $0x948] sm:$0xff]
      %v3064 = vld [vmem:[#allocation9 + $0x950] sm:$0xff]
      %v3065 = vld [vmem:[#allocation9 + $0x958] sm:$0xff]
      %v3066 = vld [vmem:[#allocation9 + $0x960] sm:$0xff]
      %v3067 = vld [vmem:[#allocation9 + $0x968] sm:$0xff]
      %v3068 = vld [vmem:[#allocation9 + $0x970] sm:$0xff]
      %v3069 = vld [vmem:[#allocation9 + $0x978] sm:$0xff]
      %v3070 = vld [vmem:[#allocation9 + $0x980] sm:$0xff]
      %v3071 = vld [vmem:[#allocation9 + $0x988] sm:$0xff]
      %v3072 = vld [vmem:[#allocation9 + $0x990] sm:$0xff]
      %v3073 = vld [vmem:[#allocation9 + $0x998] sm:$0xff]
      %v3074 = vld [vmem:[#allocation9 + $0x9a0] sm:$0xff]
      %v3075 = vld [vmem:[#allocation9 + $0x9a8] sm:$0xff]
      %v3076 = vld [vmem:[#allocation9 + $0x9b0] sm:$0xff]
      %v3077 = vld [vmem:[#allocation9 + $0x9b8] sm:$0xff]
      %v3078 = vld [vmem:[#allocation9 + $0x9c0] sm:$0xff]
      %v3079 = vld [vmem:[#allocation9 + $0x9c8] sm:$0xff]
      %v3080 = vld [vmem:[#allocation9 + $0x9d0] sm:$0xff]
      %v3081 = vld [vmem:[#allocation9 + $0x9d8] sm:$0xff]
      %v3082 = vld [vmem:[#allocation9 + $0x9e0] sm:$0xff]
      %v3083 = vld [vmem:[#allocation9 + $0x9e8] sm:$0xff]
      %v3084 = vld [vmem:[#allocation9 + $0x9f0] sm:$0xff]
      %v3085 = vld [vmem:[#allocation9 + $0x9f8] sm:$0xff]
      %v3086 = vld [vmem:[#allocation9 + $0xa00] sm:$0xff]
      %v3087 = vld [vmem:[#allocation9 + $0xa08] sm:$0xff]
      %v3088 = vld [vmem:[#allocation9 + $0xa10] sm:$0xff]
      %v3089 = vld [vmem:[#allocation9 + $0xa18] sm:$0xff]
      %v3090 = vld [vmem:[#allocation9 + $0xa20] sm:$0xff]
      %v3091 = vld [vmem:[#allocation9 + $0xa28] sm:$0xff]
      %v3092 = vld [vmem:[#allocation9 + $0xa30] sm:$0xff]
      %v3093 = vld [vmem:[#allocation9 + $0xa38] sm:$0xff]
      %v3094 = vld [vmem:[#allocation9 + $0xa40] sm:$0xff]
      %v3095 = vld [vmem:[#allocation9 + $0xa48] sm:$0xff]
      %v3096 = vld [vmem:[#allocation9 + $0xa50] sm:$0xff]
      %v3097 = vld [vmem:[#allocation9 + $0xa58] sm:$0xff]
      %v3098 = vld [vmem:[#allocation9 + $0xa60] sm:$0xff]
      %v3099 = vld [vmem:[#allocation9 + $0xa68] sm:$0xff]
      %v3100 = vld [vmem:[#allocation9 + $0xa70] sm:$0xff]
      %v3101 = vld [vmem:[#allocation9 + $0xa78] sm:$0xff]
      %v3102 = vld [vmem:[#allocation9 + $0xa80] sm:$0xff]
      %v3103 = vld [vmem:[#allocation9 + $0xa88] sm:$0xff]
      %v3104 = vld [vmem:[#allocation9 + $0xa90] sm:$0xff]
      %v3105 = vld [vmem:[#allocation9 + $0xa98] sm:$0xff]
      %v3106 = vld [vmem:[#allocation9 + $0xaa0] sm:$0xff]
      %v3107 = vld [vmem:[#allocation9 + $0xaa8] sm:$0xff]
      %v3108 = vld [vmem:[#allocation9 + $0xab0] sm:$0xff]
      %v3109 = vld [vmem:[#allocation9 + $0xab8] sm:$0xff]
      %v3110 = vld [vmem:[#allocation9 + $0xac0] sm:$0xff]
      %v3111 = vld [vmem:[#allocation9 + $0xac8] sm:$0xff]
      %v3112 = vld [vmem:[#allocation9 + $0xad0] sm:$0xff]
      %v3113 = vld [vmem:[#allocation9 + $0xad8] sm:$0xff]
      %v3114 = vld [vmem:[#allocation9 + $0xae0] sm:$0xff]
      %v3115 = vld [vmem:[#allocation9 + $0xae8] sm:$0xff]
      %v3116 = vld [vmem:[#allocation9 + $0xaf0] sm:$0xff]
      %v3117 = vld [vmem:[#allocation9 + $0xaf8] sm:$0xff]
      %v3118 = vld [vmem:[#allocation9 + $0xb00] sm:$0xff]
      %v3119 = vld [vmem:[#allocation9 + $0xb08] sm:$0xff]
      %v3120 = vld [vmem:[#allocation9 + $0xb10] sm:$0xff]
      %v3121 = vld [vmem:[#allocation9 + $0xb18] sm:$0xff]
      %v3122 = vld [vmem:[#allocation9 + $0xb20] sm:$0xff]
      %v3123 = vld [vmem:[#allocation9 + $0xb28] sm:$0xff]
      %v3124 = vld [vmem:[#allocation9 + $0xb30] sm:$0xff]
      %v3125 = vld [vmem:[#allocation9 + $0xb38] sm:$0xff]
      %v3126 = vld [vmem:[#allocation9 + $0xb40] sm:$0xff]
      %v3127 = vld [vmem:[#allocation9 + $0xb48] sm:$0xff]
      %v3128 = vld [vmem:[#allocation9 + $0xb50] sm:$0xff]
      %v3129 = vld [vmem:[#allocation9 + $0xb58] sm:$0xff]
      %v3130 = vld [vmem:[#allocation9 + $0xb60] sm:$0xff]
      %v3131 = vld [vmem:[#allocation9 + $0xb68] sm:$0xff]
      %v3132 = vld [vmem:[#allocation9 + $0xb70] sm:$0xff]
      %v3133 = vld [vmem:[#allocation9 + $0xb78] sm:$0xff]
      %v3134 = vld [vmem:[#allocation9 + $0xb80] sm:$0xff]
      %v3135 = vld [vmem:[#allocation9 + $0xb88] sm:$0xff]
      %v3136 = vld [vmem:[#allocation9 + $0xb90] sm:$0xff]
      %v3137 = vld [vmem:[#allocation9 + $0xb98] sm:$0xff]
      %v3138 = vld [vmem:[#allocation9 + $0xba0] sm:$0xff]
      %v3139 = vld [vmem:[#allocation9 + $0xba8] sm:$0xff]
      %v3140 = vld [vmem:[#allocation9 + $0xbb0] sm:$0xff]
      %v3141 = vld [vmem:[#allocation9 + $0xbb8] sm:$0xff]
      %v3142 = vld [vmem:[#allocation9 + $0xbc0] sm:$0xff]
      %v3143 = vld [vmem:[#allocation9 + $0xbc8] sm:$0xff]
      %v3144 = vld [vmem:[#allocation9 + $0xbd0] sm:$0xff]
      %v3145 = vld [vmem:[#allocation9 + $0xbd8] sm:$0xff]
      %v3146 = vld [vmem:[#allocation9 + $0xbe0] sm:$0xff]
      %v3147 = vld [vmem:[#allocation9 + $0xbe8] sm:$0xff]
      %v3148 = vld [vmem:[#allocation9 + $0xbf0] sm:$0xff]
      %v3149 = vld [vmem:[#allocation9 + $0xbf8] sm:$0xff]
      %v3150 = vld [vmem:[#allocation9 + $0xc00] sm:$0xff]
      %v3151 = vld [vmem:[#allocation9 + $0xc08] sm:$0xff]
      %v3152 = vld [vmem:[#allocation9 + $0xc10] sm:$0xff]
      %v3153 = vld [vmem:[#allocation9 + $0xc18] sm:$0xff]
      %v3154 = vld [vmem:[#allocation9 + $0xc20] sm:$0xff]
      %v3155 = vld [vmem:[#allocation9 + $0xc28] sm:$0xff]
      %v3156 = vld [vmem:[#allocation9 + $0xc30] sm:$0xff]
      %v3157 = vld [vmem:[#allocation9 + $0xc38] sm:$0xff]
      %v3158 = vld [vmem:[#allocation9 + $0xc40] sm:$0xff]
      %v3159 = vld [vmem:[#allocation9 + $0xc48] sm:$0xff]
      %v3160 = vld [vmem:[#allocation9 + $0xc50] sm:$0xff]
      %v3161 = vld [vmem:[#allocation9 + $0xc58] sm:$0xff]
      %v3162 = vld [vmem:[#allocation9 + $0xc60] sm:$0xff]
      %v3163 = vld [vmem:[#allocation9 + $0xc68] sm:$0xff]
      %v3164 = vld [vmem:[#allocation9 + $0xc70] sm:$0xff]
      %v3165 = vld [vmem:[#allocation9 + $0xc78] sm:$0xff]
      %v3166 = vld [vmem:[#allocation9 + $0xc80] sm:$0xff]
      %v3167 = vld [vmem:[#allocation9 + $0xc88] sm:$0xff]
      %v3168 = vld [vmem:[#allocation9 + $0xc90] sm:$0xff]
      %v3169 = vld [vmem:[#allocation9 + $0xc98] sm:$0xff]
      %v3170 = vld [vmem:[#allocation9 + $0xca0] sm:$0xff]
      %v3171 = vld [vmem:[#allocation9 + $0xca8] sm:$0xff]
      %v3172 = vld [vmem:[#allocation9 + $0xcb0] sm:$0xff]
      %v3173 = vld [vmem:[#allocation9 + $0xcb8] sm:$0xff]
      %v3174 = vld [vmem:[#allocation9 + $0xcc0] sm:$0xff]
      %v3175 = vld [vmem:[#allocation9 + $0xcc8] sm:$0xff]
      %v3176 = vld [vmem:[#allocation9 + $0xcd0] sm:$0xff]
      %v3177 = vld [vmem:[#allocation9 + $0xcd8] sm:$0xff]
      %v3178 = vld [vmem:[#allocation9 + $0xce0] sm:$0xff]
      %v3179 = vld [vmem:[#allocation9 + $0xce8] sm:$0xff]
      %v3180 = vld [vmem:[#allocation9 + $0xcf0] sm:$0xff]
      %v3181 = vld [vmem:[#allocation9 + $0xcf8] sm:$0xff]
      %v3182 = vld [vmem:[#allocation9 + $0xd00] sm:$0xff]
      %v3183 = vld [vmem:[#allocation9 + $0xd08] sm:$0xff]
      %v3184 = vld [vmem:[#allocation9 + $0xd10] sm:$0xff]
      %v3185 = vld [vmem:[#allocation9 + $0xd18] sm:$0xff]
      %v3186 = vld [vmem:[#allocation9 + $0xd20] sm:$0xff]
      %v3187 = vld [vmem:[#allocation9 + $0xd28] sm:$0xff]
      %v3188 = vld [vmem:[#allocation9 + $0xd30] sm:$0xff]
      %v3189 = vld [vmem:[#allocation9 + $0xd38] sm:$0xff]
      %v3190 = vld [vmem:[#allocation9 + $0xd40] sm:$0xff]
      %v3191 = vld [vmem:[#allocation9 + $0xd48] sm:$0xff]
      %v3192 = vld [vmem:[#allocation9 + $0xd50] sm:$0xff]
      %v3193 = vld [vmem:[#allocation9 + $0xd58] sm:$0xff]
      %v3194 = vld [vmem:[#allocation9 + $0xd60] sm:$0xff]
      %v3195 = vld [vmem:[#allocation9 + $0xd68] sm:$0xff]
      %v3196 = vld [vmem:[#allocation9 + $0xd70] sm:$0xff]
      %v3197 = vld [vmem:[#allocation9 + $0xd78] sm:$0xff]
      %v3198 = vld [vmem:[#allocation9 + $0xd80] sm:$0xff]
      %v3199 = vld [vmem:[#allocation9 + $0xd88] sm:$0xff]
      %v3200 = vld [vmem:[#allocation9 + $0xd90] sm:$0xff]
      %v3201 = vld [vmem:[#allocation9 + $0xd98] sm:$0xff]
      %v3202 = vld [vmem:[#allocation9 + $0xda0] sm:$0xff]
      %v3203 = vld [vmem:[#allocation9 + $0xda8] sm:$0xff]
      %v3204 = vld [vmem:[#allocation9 + $0xdb0] sm:$0xff]
      %v3205 = vld [vmem:[#allocation9 + $0xdb8] sm:$0xff]
      %v3206 = vld [vmem:[#allocation9 + $0xdc0] sm:$0xff]
      %v3207 = vld [vmem:[#allocation9 + $0xdc8] sm:$0xff]
      %v3208 = vld [vmem:[#allocation9 + $0xdd0] sm:$0xff]
      %v3209 = vld [vmem:[#allocation9 + $0xdd8] sm:$0xff]
      %v3210 = vld [vmem:[#allocation9 + $0xde0] sm:$0xff]
      %v3211 = vld [vmem:[#allocation9 + $0xde8] sm:$0xff]
      %v3212 = vld [vmem:[#allocation9 + $0xdf0] sm:$0xff]
      %v3213 = vld [vmem:[#allocation9 + $0xdf8] sm:$0xff]
      %v3214 = vld [vmem:[#allocation9 + $0xe00] sm:$0xff]
      %v3215 = vld [vmem:[#allocation9 + $0xe08] sm:$0xff]
      %v3216 = vld [vmem:[#allocation9 + $0xe10] sm:$0xff]
      %v3217 = vld [vmem:[#allocation9 + $0xe18] sm:$0xff]
      %v3218 = vld [vmem:[#allocation9 + $0xe20] sm:$0xff]
      %v3219 = vld [vmem:[#allocation9 + $0xe28] sm:$0xff]
      %v3220 = vld [vmem:[#allocation9 + $0xe30] sm:$0xff]
      %v3221 = vld [vmem:[#allocation9 + $0xe38] sm:$0xff]
      %v3222 = vld [vmem:[#allocation9 + $0xe40] sm:$0xff]
      %v3223 = vld [vmem:[#allocation9 + $0xe48] sm:$0xff]
      %v3224 = vld [vmem:[#allocation9 + $0xe50] sm:$0xff]
      %v3225 = vld [vmem:[#allocation9 + $0xe58] sm:$0xff]
      %v3226 = vld [vmem:[#allocation9 + $0xe60] sm:$0xff]
      %v3227 = vld [vmem:[#allocation9 + $0xe68] sm:$0xff]
      %v3228 = vld [vmem:[#allocation9 + $0xe70] sm:$0xff]
      %v3229 = vld [vmem:[#allocation9 + $0xe78] sm:$0xff]
      %v3230 = vld [vmem:[#allocation9 + $0xe80] sm:$0xff]
      %v3231 = vld [vmem:[#allocation9 + $0xe88] sm:$0xff]
      %v3232 = vld [vmem:[#allocation9 + $0xe90] sm:$0xff]
      %v3233 = vld [vmem:[#allocation9 + $0xe98] sm:$0xff]
      %v3234 = vld [vmem:[#allocation9 + $0xea0] sm:$0xff]
      %v3235 = vld [vmem:[#allocation9 + $0xea8] sm:$0xff]
      %v3236 = vld [vmem:[#allocation9 + $0xeb0] sm:$0xff]
      %v3237 = vld [vmem:[#allocation9 + $0xeb8] sm:$0xff]
      %v3238 = vld [vmem:[#allocation9 + $0xec0] sm:$0xff]
      %v3239 = vld [vmem:[#allocation9 + $0xec8] sm:$0xff]
      %v3240 = vld [vmem:[#allocation9 + $0xed0] sm:$0xff]
      %v3241 = vld [vmem:[#allocation9 + $0xed8] sm:$0xff]
      %v3242 = vld [vmem:[#allocation9 + $0xee0] sm:$0xff]
      %v3243 = vld [vmem:[#allocation9 + $0xee8] sm:$0xff]
      %v3244 = vld [vmem:[#allocation9 + $0xef0] sm:$0xff]
      %v3245 = vld [vmem:[#allocation9 + $0xef8] sm:$0xff]
      %v3246 = vld [vmem:[#allocation9 + $0xf00] sm:$0xff]
      %v3247 = vld [vmem:[#allocation9 + $0xf08] sm:$0xff]
      %v3248 = vld [vmem:[#allocation9 + $0xf10] sm:$0xff]
      %v3249 = vld [vmem:[#allocation9 + $0xf18] sm:$0xff]
      %v3250 = vld [vmem:[#allocation9 + $0xf20] sm:$0xff]
      %v3251 = vld [vmem:[#allocation9 + $0xf28] sm:$0xff]
      %v3252 = vld [vmem:[#allocation9 + $0xf30] sm:$0xff]
      %v3253 = vld [vmem:[#allocation9 + $0xf38] sm:$0xff]
      %v3254 = vld [vmem:[#allocation9 + $0xf40] sm:$0xff]
      %v3255 = vld [vmem:[#allocation9 + $0xf48] sm:$0xff]
      %v3256 = vld [vmem:[#allocation9 + $0xf50] sm:$0xff]
      %v3257 = vld [vmem:[#allocation9 + $0xf58] sm:$0xff]
      %v3258 = vld [vmem:[#allocation9 + $0xf60] sm:$0xff]
      %v3259 = vld [vmem:[#allocation9 + $0xf68] sm:$0xff]
      %v3260 = vld [vmem:[#allocation9 + $0xf70] sm:$0xff]
      %v3261 = vld [vmem:[#allocation9 + $0xf78] sm:$0xff]
      %v3262 = vld [vmem:[#allocation9 + $0xf80] sm:$0xff]
      %v3263 = vld [vmem:[#allocation9 + $0xf88] sm:$0xff]
      %v3264 = vld [vmem:[#allocation9 + $0xf90] sm:$0xff]
      %v3265 = vld [vmem:[#allocation9 + $0xf98] sm:$0xff]
      %v3266 = vld [vmem:[#allocation9 + $0xfa0] sm:$0xff]
      %v3267 = vld [vmem:[#allocation9 + $0xfa8] sm:$0xff]
      %v3268 = vld [vmem:[#allocation9 + $0xfb0] sm:$0xff]
      %v3269 = vld [vmem:[#allocation9 + $0xfb8] sm:$0xff]
      %v3270 = vld [vmem:[#allocation9 + $0xfc0] sm:$0xff]
      %v3271 = vld [vmem:[#allocation9 + $0xfc8] sm:$0xff]
      %v3272 = vld [vmem:[#allocation9 + $0xfd0] sm:$0xff]
      %v3273 = vld [vmem:[#allocation9 + $0xfd8] sm:$0xff]
      %v3274 = vld [vmem:[#allocation9 + $0xfe0] sm:$0xff]
      %v3275 = vld [vmem:[#allocation9 + $0xfe8] sm:$0xff]
      %v3276 = vld [vmem:[#allocation9 + $0xff0] sm:$0xff]
      %v3277 = vld [vmem:[#allocation9 + $0xff8] sm:$0xff]
      %v3278 = vld [vmem:[#allocation11] sm:$0xff]
      %v3280 = vperm.slane %v3278, 0
      %v3281 = vperm.slane %v3278, 1
      %v3282 = vperm.slane %v3278, 2
      %v3283 = vperm.slane %v3278, 3
      %v3284 = vperm.slane %v3278, 4
      %v3285 = vperm.slane %v3278, 5
      %v3286 = vperm.slane %v3278, 6
      %v3287 = vperm.slane %v3278, 7
      %v3808 = vunpack.c.l.b16 %v2766
      %v3809 = vunpack.c.h.b16 %v2766
      %v3810 = vunpack.c.l.b16 %v2767
      %v3811 = vunpack.c.h.b16 %v2767
      %v3812 = vunpack.c.l.b16 %v2768
      %v3813 = vunpack.c.h.b16 %v2768
      %v3814 = vunpack.c.l.b16 %v2769
      %v3815 = vunpack.c.h.b16 %v2769
      %v3816 = vunpack.c.l.b16 %v2770
      %v3817 = vunpack.c.h.b16 %v2770
      %v3818 = vunpack.c.l.b16 %v2771
      %v3819 = vunpack.c.h.b16 %v2771
      %v3820 = vunpack.c.l.b16 %v2772
      %v3821 = vunpack.c.h.b16 %v2772
      %v3822 = vunpack.c.l.b16 %v2773
      %v3823 = vunpack.c.h.b16 %v2773
      %v3824 = vunpack.c.l.b16 %v2774
      %v3825 = vunpack.c.h.b16 %v2774
      %v3826 = vunpack.c.l.b16 %v2775
      %v3827 = vunpack.c.h.b16 %v2775
      %v3828 = vunpack.c.l.b16 %v2776
      %v3829 = vunpack.c.h.b16 %v2776
      %v3830 = vunpack.c.l.b16 %v2777
      %v3831 = vunpack.c.h.b16 %v2777
      %v3832 = vunpack.c.l.b16 %v2778
      %v3833 = vunpack.c.h.b16 %v2778
      %v3834 = vunpack.c.l.b16 %v2779
      %v3835 = vunpack.c.h.b16 %v2779
      %v3836 = vunpack.c.l.b16 %v2780
      %v3837 = vunpack.c.h.b16 %v2780
      %v3838 = vunpack.c.l.b16 %v2781
      %v3839 = vunpack.c.h.b16 %v2781
      %v3840 = vunpack.c.l.b16 %v2782
      %v3841 = vunpack.c.h.b16 %v2782
      %v3842 = vunpack.c.l.b16 %v2783
      %v3843 = vunpack.c.h.b16 %v2783
      %v3844 = vunpack.c.l.b16 %v2784
      %v3845 = vunpack.c.h.b16 %v2784
      %v3846 = vunpack.c.l.b16 %v2785
      %v3847 = vunpack.c.h.b16 %v2785
      %v3848 = vunpack.c.l.b16 %v2786
      %v3849 = vunpack.c.h.b16 %v2786
      %v3850 = vunpack.c.l.b16 %v2787
      %v3851 = vunpack.c.h.b16 %v2787
      %v3852 = vunpack.c.l.b16 %v2788
      %v3853 = vunpack.c.h.b16 %v2788
      %v3854 = vunpack.c.l.b16 %v2789
      %v3855 = vunpack.c.h.b16 %v2789
      %v3856 = vunpack.c.l.b16 %v2790
      %v3857 = vunpack.c.h.b16 %v2790
      %v3858 = vunpack.c.l.b16 %v2791
      %v3859 = vunpack.c.h.b16 %v2791
      %v3860 = vunpack.c.l.b16 %v2792
      %v3861 = vunpack.c.h.b16 %v2792
      %v3862 = vunpack.c.l.b16 %v2793
      %v3863 = vunpack.c.h.b16 %v2793
      %v3864 = vunpack.c.l.b16 %v2794
      %v3865 = vunpack.c.h.b16 %v2794
      %v3866 = vunpack.c.l.b16 %v2795
      %v3867 = vunpack.c.h.b16 %v2795
      %v3868 = vunpack.c.l.b16 %v2796
      %v3869 = vunpack.c.h.b16 %v2796
      %v3870 = vunpack.c.l.b16 %v2797
      %v3871 = vunpack.c.h.b16 %v2797
      %v3872 = vunpack.c.l.b16 %v2798
      %v3873 = vunpack.c.h.b16 %v2798
      %v3874 = vunpack.c.l.b16 %v2799
      %v3875 = vunpack.c.h.b16 %v2799
      %v3876 = vunpack.c.l.b16 %v2800
      %v3877 = vunpack.c.h.b16 %v2800
      %v3878 = vunpack.c.l.b16 %v2801
      %v3879 = vunpack.c.h.b16 %v2801
      %v3880 = vunpack.c.l.b16 %v2802
      %v3881 = vunpack.c.h.b16 %v2802
      %v3882 = vunpack.c.l.b16 %v2803
      %v3883 = vunpack.c.h.b16 %v2803
      %v3884 = vunpack.c.l.b16 %v2804
      %v3885 = vunpack.c.h.b16 %v2804
      %v3886 = vunpack.c.l.b16 %v2805
      %v3887 = vunpack.c.h.b16 %v2805
      %v3888 = vunpack.c.l.b16 %v2806
      %v3889 = vunpack.c.h.b16 %v2806
      %v3890 = vunpack.c.l.b16 %v2807
      %v3891 = vunpack.c.h.b16 %v2807
      %v3892 = vunpack.c.l.b16 %v2808
      %v3893 = vunpack.c.h.b16 %v2808
      %v3894 = vunpack.c.l.b16 %v2809
      %v3895 = vunpack.c.h.b16 %v2809
      %v3896 = vunpack.c.l.b16 %v2810
      %v3897 = vunpack.c.h.b16 %v2810
      %v3898 = vunpack.c.l.b16 %v2811
      %v3899 = vunpack.c.h.b16 %v2811
      %v3900 = vunpack.c.l.b16 %v2812
      %v3901 = vunpack.c.h.b16 %v2812
      %v3902 = vunpack.c.l.b16 %v2813
      %v3903 = vunpack.c.h.b16 %v2813
      %v3904 = vunpack.c.l.b16 %v2814
      %v3905 = vunpack.c.h.b16 %v2814
      %v3906 = vunpack.c.l.b16 %v2815
      %v3907 = vunpack.c.h.b16 %v2815
      %v3908 = vunpack.c.l.b16 %v2816
      %v3909 = vunpack.c.h.b16 %v2816
      %v3910 = vunpack.c.l.b16 %v2817
      %v3911 = vunpack.c.h.b16 %v2817
      %v3912 = vunpack.c.l.b16 %v2818
      %v3913 = vunpack.c.h.b16 %v2818
      %v3914 = vunpack.c.l.b16 %v2819
      %v3915 = vunpack.c.h.b16 %v2819
      %v3916 = vunpack.c.l.b16 %v2820
      %v3917 = vunpack.c.h.b16 %v2820
      %v3918 = vunpack.c.l.b16 %v2821
      %v3919 = vunpack.c.h.b16 %v2821
      %v3920 = vunpack.c.l.b16 %v2822
      %v3921 = vunpack.c.h.b16 %v2822
      %v3922 = vunpack.c.l.b16 %v2823
      %v3923 = vunpack.c.h.b16 %v2823
      %v3924 = vunpack.c.l.b16 %v2824
      %v3925 = vunpack.c.h.b16 %v2824
      %v3926 = vunpack.c.l.b16 %v2825
      %v3927 = vunpack.c.h.b16 %v2825
      %v3928 = vunpack.c.l.b16 %v2826
      %v3929 = vunpack.c.h.b16 %v2826
      %v3930 = vunpack.c.l.b16 %v2827
      %v3931 = vunpack.c.h.b16 %v2827
      %v3932 = vunpack.c.l.b16 %v2828
      %v3933 = vunpack.c.h.b16 %v2828
      %v3934 = vunpack.c.l.b16 %v2829
      %v3935 = vunpack.c.h.b16 %v2829
      %v3936 = vunpack.c.l.b16 %v2830
      %v3937 = vunpack.c.h.b16 %v2830
      %v3938 = vunpack.c.l.b16 %v2831
      %v3939 = vunpack.c.h.b16 %v2831
      %v3940 = vunpack.c.l.b16 %v2832
      %v3941 = vunpack.c.h.b16 %v2832
      %v3942 = vunpack.c.l.b16 %v2833
      %v3943 = vunpack.c.h.b16 %v2833
      %v3944 = vunpack.c.l.b16 %v2834
      %v3945 = vunpack.c.h.b16 %v2834
      %v3946 = vunpack.c.l.b16 %v2835
      %v3947 = vunpack.c.h.b16 %v2835
      %v3948 = vunpack.c.l.b16 %v2836
      %v3949 = vunpack.c.h.b16 %v2836
      %v3950 = vunpack.c.l.b16 %v2837
      %v3951 = vunpack.c.h.b16 %v2837
      %v3952 = vunpack.c.l.b16 %v2838
      %v3953 = vunpack.c.h.b16 %v2838
      %v3954 = vunpack.c.l.b16 %v2839
      %v3955 = vunpack.c.h.b16 %v2839
      %v3956 = vunpack.c.l.b16 %v2840
      %v3957 = vunpack.c.h.b16 %v2840
      %v3958 = vunpack.c.l.b16 %v2841
      %v3959 = vunpack.c.h.b16 %v2841
      %v3960 = vunpack.c.l.b16 %v2842
      %v3961 = vunpack.c.h.b16 %v2842
      %v3962 = vunpack.c.l.b16 %v2843
      %v3963 = vunpack.c.h.b16 %v2843
      %v3964 = vunpack.c.l.b16 %v2844
      %v3965 = vunpack.c.h.b16 %v2844
      %v3966 = vunpack.c.l.b16 %v2845
      %v3967 = vunpack.c.h.b16 %v2845
      %v3968 = vunpack.c.l.b16 %v2846
      %v3969 = vunpack.c.h.b16 %v2846
      %v3970 = vunpack.c.l.b16 %v2847
      %v3971 = vunpack.c.h.b16 %v2847
      %v3972 = vunpack.c.l.b16 %v2848
      %v3973 = vunpack.c.h.b16 %v2848
      %v3974 = vunpack.c.l.b16 %v2849
      %v3975 = vunpack.c.h.b16 %v2849
      %v3976 = vunpack.c.l.b16 %v2850
      %v3977 = vunpack.c.h.b16 %v2850
      %v3978 = vunpack.c.l.b16 %v2851
      %v3979 = vunpack.c.h.b16 %v2851
      %v3980 = vunpack.c.l.b16 %v2852
      %v3981 = vunpack.c.h.b16 %v2852
      %v3982 = vunpack.c.l.b16 %v2853
      %v3983 = vunpack.c.h.b16 %v2853
      %v3984 = vunpack.c.l.b16 %v2854
      %v3985 = vunpack.c.h.b16 %v2854
      %v3986 = vunpack.c.l.b16 %v2855
      %v3987 = vunpack.c.h.b16 %v2855
      %v3988 = vunpack.c.l.b16 %v2856
      %v3989 = vunpack.c.h.b16 %v2856
      %v3990 = vunpack.c.l.b16 %v2857
      %v3991 = vunpack.c.h.b16 %v2857
      %v3992 = vunpack.c.l.b16 %v2858
      %v3993 = vunpack.c.h.b16 %v2858
      %v3994 = vunpack.c.l.b16 %v2859
      %v3995 = vunpack.c.h.b16 %v2859
      %v3996 = vunpack.c.l.b16 %v2860
      %v3997 = vunpack.c.h.b16 %v2860
      %v3998 = vunpack.c.l.b16 %v2861
      %v3999 = vunpack.c.h.b16 %v2861
      %v4000 = vunpack.c.l.b16 %v2862
      %v4001 = vunpack.c.h.b16 %v2862
      %v4002 = vunpack.c.l.b16 %v2863
      %v4003 = vunpack.c.h.b16 %v2863
      %v4004 = vunpack.c.l.b16 %v2864
      %v4005 = vunpack.c.h.b16 %v2864
      %v4006 = vunpack.c.l.b16 %v2865
      %v4007 = vunpack.c.h.b16 %v2865
      %v4008 = vunpack.c.l.b16 %v2866
      %v4009 = vunpack.c.h.b16 %v2866
      %v4010 = vunpack.c.l.b16 %v2867
      %v4011 = vunpack.c.h.b16 %v2867
      %v4012 = vunpack.c.l.b16 %v2868
      %v4013 = vunpack.c.h.b16 %v2868
      %v4014 = vunpack.c.l.b16 %v2869
      %v4015 = vunpack.c.h.b16 %v2869
      %v4016 = vunpack.c.l.b16 %v2870
      %v4017 = vunpack.c.h.b16 %v2870
      %v4018 = vunpack.c.l.b16 %v2871
      %v4019 = vunpack.c.h.b16 %v2871
      %v4020 = vunpack.c.l.b16 %v2872
      %v4021 = vunpack.c.h.b16 %v2872
      %v4022 = vunpack.c.l.b16 %v2873
      %v4023 = vunpack.c.h.b16 %v2873
      %v4024 = vunpack.c.l.b16 %v2874
      %v4025 = vunpack.c.h.b16 %v2874
      %v4026 = vunpack.c.l.b16 %v2875
      %v4027 = vunpack.c.h.b16 %v2875
      %v4028 = vunpack.c.l.b16 %v2876
      %v4029 = vunpack.c.h.b16 %v2876
      %v4030 = vunpack.c.l.b16 %v2877
      %v4031 = vunpack.c.h.b16 %v2877
      %v4032 = vunpack.c.l.b16 %v2878
      %v4033 = vunpack.c.h.b16 %v2878
      %v4034 = vunpack.c.l.b16 %v2879
      %v4035 = vunpack.c.h.b16 %v2879
      %v4036 = vunpack.c.l.b16 %v2880
      %v4037 = vunpack.c.h.b16 %v2880
      %v4038 = vunpack.c.l.b16 %v2881
      %v4039 = vunpack.c.h.b16 %v2881
      %v4040 = vunpack.c.l.b16 %v2882
      %v4041 = vunpack.c.h.b16 %v2882
      %v4042 = vunpack.c.l.b16 %v2883
      %v4043 = vunpack.c.h.b16 %v2883
      %v4044 = vunpack.c.l.b16 %v2884
      %v4045 = vunpack.c.h.b16 %v2884
      %v4046 = vunpack.c.l.b16 %v2885
      %v4047 = vunpack.c.h.b16 %v2885
      %v4048 = vunpack.c.l.b16 %v2886
      %v4049 = vunpack.c.h.b16 %v2886
      %v4050 = vunpack.c.l.b16 %v2887
      %v4051 = vunpack.c.h.b16 %v2887
      %v4052 = vunpack.c.l.b16 %v2888
      %v4053 = vunpack.c.h.b16 %v2888
      %v4054 = vunpack.c.l.b16 %v2889
      %v4055 = vunpack.c.h.b16 %v2889
      %v4056 = vunpack.c.l.b16 %v2890
      %v4057 = vunpack.c.h.b16 %v2890
      %v4058 = vunpack.c.l.b16 %v2891
      %v4059 = vunpack.c.h.b16 %v2891
      %v4060 = vunpack.c.l.b16 %v2892
      %v4061 = vunpack.c.h.b16 %v2892
      %v4062 = vunpack.c.l.b16 %v2893
      %v4063 = vunpack.c.h.b16 %v2893
      %v4064 = vunpack.c.l.b16 %v2894
      %v4065 = vunpack.c.h.b16 %v2894
      %v4066 = vunpack.c.l.b16 %v2895
      %v4067 = vunpack.c.h.b16 %v2895
      %v4068 = vunpack.c.l.b16 %v2896
      %v4069 = vunpack.c.h.b16 %v2896
      %v4070 = vunpack.c.l.b16 %v2897
      %v4071 = vunpack.c.h.b16 %v2897
      %v4072 = vunpack.c.l.b16 %v2898
      %v4073 = vunpack.c.h.b16 %v2898
      %v4074 = vunpack.c.l.b16 %v2899
      %v4075 = vunpack.c.h.b16 %v2899
      %v4076 = vunpack.c.l.b16 %v2900
      %v4077 = vunpack.c.h.b16 %v2900
      %v4078 = vunpack.c.l.b16 %v2901
      %v4079 = vunpack.c.h.b16 %v2901
      %v4080 = vunpack.c.l.b16 %v2902
      %v4081 = vunpack.c.h.b16 %v2902
      %v4082 = vunpack.c.l.b16 %v2903
      %v4083 = vunpack.c.h.b16 %v2903
      %v4084 = vunpack.c.l.b16 %v2904
      %v4085 = vunpack.c.h.b16 %v2904
      %v4086 = vunpack.c.l.b16 %v2905
      %v4087 = vunpack.c.h.b16 %v2905
      %v4088 = vunpack.c.l.b16 %v2906
      %v4089 = vunpack.c.h.b16 %v2906
      %v4090 = vunpack.c.l.b16 %v2907
      %v4091 = vunpack.c.h.b16 %v2907
      %v4092 = vunpack.c.l.b16 %v2908
      %v4093 = vunpack.c.h.b16 %v2908
      %v4094 = vunpack.c.l.b16 %v2909
      %v4095 = vunpack.c.h.b16 %v2909
      %v4096 = vunpack.c.l.b16 %v2910
      %v4097 = vunpack.c.h.b16 %v2910
      %v4098 = vunpack.c.l.b16 %v2911
      %v4099 = vunpack.c.h.b16 %v2911
      %v4100 = vunpack.c.l.b16 %v2912
      %v4101 = vunpack.c.h.b16 %v2912
      %v4102 = vunpack.c.l.b16 %v2913
      %v4103 = vunpack.c.h.b16 %v2913
      %v4104 = vunpack.c.l.b16 %v2914
      %v4105 = vunpack.c.h.b16 %v2914
      %v4106 = vunpack.c.l.b16 %v2915
      %v4107 = vunpack.c.h.b16 %v2915
      %v4108 = vunpack.c.l.b16 %v2916
      %v4109 = vunpack.c.h.b16 %v2916
      %v4110 = vunpack.c.l.b16 %v2917
      %v4111 = vunpack.c.h.b16 %v2917
      %v4112 = vunpack.c.l.b16 %v2918
      %v4113 = vunpack.c.h.b16 %v2918
      %v4114 = vunpack.c.l.b16 %v2919
      %v4115 = vunpack.c.h.b16 %v2919
      %v4116 = vunpack.c.l.b16 %v2920
      %v4117 = vunpack.c.h.b16 %v2920
      %v4118 = vunpack.c.l.b16 %v2921
      %v4119 = vunpack.c.h.b16 %v2921
      %v4120 = vunpack.c.l.b16 %v2922
      %v4121 = vunpack.c.h.b16 %v2922
      %v4122 = vunpack.c.l.b16 %v2923
      %v4123 = vunpack.c.h.b16 %v2923
      %v4124 = vunpack.c.l.b16 %v2924
      %v4125 = vunpack.c.h.b16 %v2924
      %v4126 = vunpack.c.l.b16 %v2925
      %v4127 = vunpack.c.h.b16 %v2925
      %v4128 = vunpack.c.l.b16 %v2926
      %v4129 = vunpack.c.h.b16 %v2926
      %v4130 = vunpack.c.l.b16 %v2927
      %v4131 = vunpack.c.h.b16 %v2927
      %v4132 = vunpack.c.l.b16 %v2928
      %v4133 = vunpack.c.h.b16 %v2928
      %v4134 = vunpack.c.l.b16 %v2929
      %v4135 = vunpack.c.h.b16 %v2929
      %v4136 = vunpack.c.l.b16 %v2930
      %v4137 = vunpack.c.h.b16 %v2930
      %v4138 = vunpack.c.l.b16 %v2931
      %v4139 = vunpack.c.h.b16 %v2931
      %v4140 = vunpack.c.l.b16 %v2932
      %v4141 = vunpack.c.h.b16 %v2932
      %v4142 = vunpack.c.l.b16 %v2933
      %v4143 = vunpack.c.h.b16 %v2933
      %v4144 = vunpack.c.l.b16 %v2934
      %v4145 = vunpack.c.h.b16 %v2934
      %v4146 = vunpack.c.l.b16 %v2935
      %v4147 = vunpack.c.h.b16 %v2935
      %v4148 = vunpack.c.l.b16 %v2936
      %v4149 = vunpack.c.h.b16 %v2936
      %v4150 = vunpack.c.l.b16 %v2937
      %v4151 = vunpack.c.h.b16 %v2937
      %v4152 = vunpack.c.l.b16 %v2938
      %v4153 = vunpack.c.h.b16 %v2938
      %v4154 = vunpack.c.l.b16 %v2939
      %v4155 = vunpack.c.h.b16 %v2939
      %v4156 = vunpack.c.l.b16 %v2940
      %v4157 = vunpack.c.h.b16 %v2940
      %v4158 = vunpack.c.l.b16 %v2941
      %v4159 = vunpack.c.h.b16 %v2941
      %v4160 = vunpack.c.l.b16 %v2942
      %v4161 = vunpack.c.h.b16 %v2942
      %v4162 = vunpack.c.l.b16 %v2943
      %v4163 = vunpack.c.h.b16 %v2943
      %v4164 = vunpack.c.l.b16 %v2944
      %v4165 = vunpack.c.h.b16 %v2944
      %v4166 = vunpack.c.l.b16 %v2945
      %v4167 = vunpack.c.h.b16 %v2945
      %v4168 = vunpack.c.l.b16 %v2946
      %v4169 = vunpack.c.h.b16 %v2946
      %v4170 = vunpack.c.l.b16 %v2947
      %v4171 = vunpack.c.h.b16 %v2947
      %v4172 = vunpack.c.l.b16 %v2948
      %v4173 = vunpack.c.h.b16 %v2948
      %v4174 = vunpack.c.l.b16 %v2949
      %v4175 = vunpack.c.h.b16 %v2949
      %v4176 = vunpack.c.l.b16 %v2950
      %v4177 = vunpack.c.h.b16 %v2950
      %v4178 = vunpack.c.l.b16 %v2951
      %v4179 = vunpack.c.h.b16 %v2951
      %v4180 = vunpack.c.l.b16 %v2952
      %v4181 = vunpack.c.h.b16 %v2952
      %v4182 = vunpack.c.l.b16 %v2953
      %v4183 = vunpack.c.h.b16 %v2953
      %v4184 = vunpack.c.l.b16 %v2954
      %v4185 = vunpack.c.h.b16 %v2954
      %v4186 = vunpack.c.l.b16 %v2955
      %v4187 = vunpack.c.h.b16 %v2955
      %v4188 = vunpack.c.l.b16 %v2956
      %v4189 = vunpack.c.h.b16 %v2956
      %v4190 = vunpack.c.l.b16 %v2957
      %v4191 = vunpack.c.h.b16 %v2957
      %v4192 = vunpack.c.l.b16 %v2958
      %v4193 = vunpack.c.h.b16 %v2958
      %v4194 = vunpack.c.l.b16 %v2959
      %v4195 = vunpack.c.h.b16 %v2959
      %v4196 = vunpack.c.l.b16 %v2960
      %v4197 = vunpack.c.h.b16 %v2960
      %v4198 = vunpack.c.l.b16 %v2961
      %v4199 = vunpack.c.h.b16 %v2961
      %v4200 = vunpack.c.l.b16 %v2962
      %v4201 = vunpack.c.h.b16 %v2962
      %v4202 = vunpack.c.l.b16 %v2963
      %v4203 = vunpack.c.h.b16 %v2963
      %v4204 = vunpack.c.l.b16 %v2964
      %v4205 = vunpack.c.h.b16 %v2964
      %v4206 = vunpack.c.l.b16 %v2965
      %v4207 = vunpack.c.h.b16 %v2965
      %v4208 = vunpack.c.l.b16 %v2966
      %v4209 = vunpack.c.h.b16 %v2966
      %v4210 = vunpack.c.l.b16 %v2967
      %v4211 = vunpack.c.h.b16 %v2967
      %v4212 = vunpack.c.l.b16 %v2968
      %v4213 = vunpack.c.h.b16 %v2968
      %v4214 = vunpack.c.l.b16 %v2969
      %v4215 = vunpack.c.h.b16 %v2969
      %v4216 = vunpack.c.l.b16 %v2970
      %v4217 = vunpack.c.h.b16 %v2970
      %v4218 = vunpack.c.l.b16 %v2971
      %v4219 = vunpack.c.h.b16 %v2971
      %v4220 = vunpack.c.l.b16 %v2972
      %v4221 = vunpack.c.h.b16 %v2972
      %v4222 = vunpack.c.l.b16 %v2973
      %v4223 = vunpack.c.h.b16 %v2973
      %v4224 = vunpack.c.l.b16 %v2974
      %v4225 = vunpack.c.h.b16 %v2974
      %v4226 = vunpack.c.l.b16 %v2975
      %v4227 = vunpack.c.h.b16 %v2975
      %v4228 = vunpack.c.l.b16 %v2976
      %v4229 = vunpack.c.h.b16 %v2976
      %v4230 = vunpack.c.l.b16 %v2977
      %v4231 = vunpack.c.h.b16 %v2977
      %v4232 = vunpack.c.l.b16 %v2978
      %v4233 = vunpack.c.h.b16 %v2978
      %v4234 = vunpack.c.l.b16 %v2979
      %v4235 = vunpack.c.h.b16 %v2979
      %v4236 = vunpack.c.l.b16 %v2980
      %v4237 = vunpack.c.h.b16 %v2980
      %v4238 = vunpack.c.l.b16 %v2981
      %v4239 = vunpack.c.h.b16 %v2981
      %v4240 = vunpack.c.l.b16 %v2982
      %v4241 = vunpack.c.h.b16 %v2982
      %v4242 = vunpack.c.l.b16 %v2983
      %v4243 = vunpack.c.h.b16 %v2983
      %v4244 = vunpack.c.l.b16 %v2984
      %v4245 = vunpack.c.h.b16 %v2984
      %v4246 = vunpack.c.l.b16 %v2985
      %v4247 = vunpack.c.h.b16 %v2985
      %v4248 = vunpack.c.l.b16 %v2986
      %v4249 = vunpack.c.h.b16 %v2986
      %v4250 = vunpack.c.l.b16 %v2987
      %v4251 = vunpack.c.h.b16 %v2987
      %v4252 = vunpack.c.l.b16 %v2988
      %v4253 = vunpack.c.h.b16 %v2988
      %v4254 = vunpack.c.l.b16 %v2989
      %v4255 = vunpack.c.h.b16 %v2989
      %v4256 = vunpack.c.l.b16 %v2990
      %v4257 = vunpack.c.h.b16 %v2990
      %v4258 = vunpack.c.l.b16 %v2991
      %v4259 = vunpack.c.h.b16 %v2991
      %v4260 = vunpack.c.l.b16 %v2992
      %v4261 = vunpack.c.h.b16 %v2992
      %v4262 = vunpack.c.l.b16 %v2993
      %v4263 = vunpack.c.h.b16 %v2993
      %v4264 = vunpack.c.l.b16 %v2994
      %v4265 = vunpack.c.h.b16 %v2994
      %v4266 = vunpack.c.l.b16 %v2995
      %v4267 = vunpack.c.h.b16 %v2995
      %v4268 = vunpack.c.l.b16 %v2996
      %v4269 = vunpack.c.h.b16 %v2996
      %v4270 = vunpack.c.l.b16 %v2997
      %v4271 = vunpack.c.h.b16 %v2997
      %v4272 = vunpack.c.l.b16 %v2998
      %v4273 = vunpack.c.h.b16 %v2998
      %v4274 = vunpack.c.l.b16 %v2999
      %v4275 = vunpack.c.h.b16 %v2999
      %v4276 = vunpack.c.l.b16 %v3000
      %v4277 = vunpack.c.h.b16 %v3000
      %v4278 = vunpack.c.l.b16 %v3001
      %v4279 = vunpack.c.h.b16 %v3001
      %v4280 = vunpack.c.l.b16 %v3002
      %v4281 = vunpack.c.h.b16 %v3002
      %v4282 = vunpack.c.l.b16 %v3003
      %v4283 = vunpack.c.h.b16 %v3003
      %v4284 = vunpack.c.l.b16 %v3004
      %v4285 = vunpack.c.h.b16 %v3004
      %v4286 = vunpack.c.l.b16 %v3005
      %v4287 = vunpack.c.h.b16 %v3005
      %v4288 = vunpack.c.l.b16 %v3006
      %v4289 = vunpack.c.h.b16 %v3006
      %v4290 = vunpack.c.l.b16 %v3007
      %v4291 = vunpack.c.h.b16 %v3007
      %v4292 = vunpack.c.l.b16 %v3008
      %v4293 = vunpack.c.h.b16 %v3008
      %v4294 = vunpack.c.l.b16 %v3009
      %v4295 = vunpack.c.h.b16 %v3009
      %v4296 = vunpack.c.l.b16 %v3010
      %v4297 = vunpack.c.h.b16 %v3010
      %v4298 = vunpack.c.l.b16 %v3011
      %v4299 = vunpack.c.h.b16 %v3011
      %v4300 = vunpack.c.l.b16 %v3012
      %v4301 = vunpack.c.h.b16 %v3012
      %v4302 = vunpack.c.l.b16 %v3013
      %v4303 = vunpack.c.h.b16 %v3013
      %v4304 = vunpack.c.l.b16 %v3014
      %v4305 = vunpack.c.h.b16 %v3014
      %v4306 = vunpack.c.l.b16 %v3015
      %v4307 = vunpack.c.h.b16 %v3015
      %v4308 = vunpack.c.l.b16 %v3016
      %v4309 = vunpack.c.h.b16 %v3016
      %v4310 = vunpack.c.l.b16 %v3017
      %v4311 = vunpack.c.h.b16 %v3017
      %v4312 = vunpack.c.l.b16 %v3018
      %v4313 = vunpack.c.h.b16 %v3018
      %v4314 = vunpack.c.l.b16 %v3019
      %v4315 = vunpack.c.h.b16 %v3019
      %v4316 = vunpack.c.l.b16 %v3020
      %v4317 = vunpack.c.h.b16 %v3020
      %v4318 = vunpack.c.l.b16 %v3021
      %v4319 = vunpack.c.h.b16 %v3021
      %v4320 = vunpack.c.l.b16 %v3022
      %v4321 = vunpack.c.h.b16 %v3022
      %v4322 = vunpack.c.l.b16 %v3023
      %v4323 = vunpack.c.h.b16 %v3023
      %v4324 = vunpack.c.l.b16 %v3024
      %v4325 = vunpack.c.h.b16 %v3024
      %v4326 = vunpack.c.l.b16 %v3025
      %v4327 = vunpack.c.h.b16 %v3025
      %v4328 = vunpack.c.l.b16 %v3026
      %v4329 = vunpack.c.h.b16 %v3026
      %v4330 = vunpack.c.l.b16 %v3027
      %v4331 = vunpack.c.h.b16 %v3027
      %v4332 = vunpack.c.l.b16 %v3028
      %v4333 = vunpack.c.h.b16 %v3028
      %v4334 = vunpack.c.l.b16 %v3029
      %v4335 = vunpack.c.h.b16 %v3029
      %v4336 = vunpack.c.l.b16 %v3030
      %v4337 = vunpack.c.h.b16 %v3030
      %v4338 = vunpack.c.l.b16 %v3031
      %v4339 = vunpack.c.h.b16 %v3031
      %v4340 = vunpack.c.l.b16 %v3032
      %v4341 = vunpack.c.h.b16 %v3032
      %v4342 = vunpack.c.l.b16 %v3033
      %v4343 = vunpack.c.h.b16 %v3033
      %v4344 = vunpack.c.l.b16 %v3034
      %v4345 = vunpack.c.h.b16 %v3034
      %v4346 = vunpack.c.l.b16 %v3035
      %v4347 = vunpack.c.h.b16 %v3035
      %v4348 = vunpack.c.l.b16 %v3036
      %v4349 = vunpack.c.h.b16 %v3036
      %v4350 = vunpack.c.l.b16 %v3037
      %v4351 = vunpack.c.h.b16 %v3037
      %v4352 = vunpack.c.l.b16 %v3038
      %v4353 = vunpack.c.h.b16 %v3038
      %v4354 = vunpack.c.l.b16 %v3039
      %v4355 = vunpack.c.h.b16 %v3039
      %v4356 = vunpack.c.l.b16 %v3040
      %v4357 = vunpack.c.h.b16 %v3040
      %v4358 = vunpack.c.l.b16 %v3041
      %v4359 = vunpack.c.h.b16 %v3041
      %v4360 = vunpack.c.l.b16 %v3042
      %v4361 = vunpack.c.h.b16 %v3042
      %v4362 = vunpack.c.l.b16 %v3043
      %v4363 = vunpack.c.h.b16 %v3043
      %v4364 = vunpack.c.l.b16 %v3044
      %v4365 = vunpack.c.h.b16 %v3044
      %v4366 = vunpack.c.l.b16 %v3045
      %v4367 = vunpack.c.h.b16 %v3045
      %v4368 = vunpack.c.l.b16 %v3046
      %v4369 = vunpack.c.h.b16 %v3046
      %v4370 = vunpack.c.l.b16 %v3047
      %v4371 = vunpack.c.h.b16 %v3047
      %v4372 = vunpack.c.l.b16 %v3048
      %v4373 = vunpack.c.h.b16 %v3048
      %v4374 = vunpack.c.l.b16 %v3049
      %v4375 = vunpack.c.h.b16 %v3049
      %v4376 = vunpack.c.l.b16 %v3050
      %v4377 = vunpack.c.h.b16 %v3050
      %v4378 = vunpack.c.l.b16 %v3051
      %v4379 = vunpack.c.h.b16 %v3051
      %v4380 = vunpack.c.l.b16 %v3052
      %v4381 = vunpack.c.h.b16 %v3052
      %v4382 = vunpack.c.l.b16 %v3053
      %v4383 = vunpack.c.h.b16 %v3053
      %v4384 = vunpack.c.l.b16 %v3054
      %v4385 = vunpack.c.h.b16 %v3054
      %v4386 = vunpack.c.l.b16 %v3055
      %v4387 = vunpack.c.h.b16 %v3055
      %v4388 = vunpack.c.l.b16 %v3056
      %v4389 = vunpack.c.h.b16 %v3056
      %v4390 = vunpack.c.l.b16 %v3057
      %v4391 = vunpack.c.h.b16 %v3057
      %v4392 = vunpack.c.l.b16 %v3058
      %v4393 = vunpack.c.h.b16 %v3058
      %v4394 = vunpack.c.l.b16 %v3059
      %v4395 = vunpack.c.h.b16 %v3059
      %v4396 = vunpack.c.l.b16 %v3060
      %v4397 = vunpack.c.h.b16 %v3060
      %v4398 = vunpack.c.l.b16 %v3061
      %v4399 = vunpack.c.h.b16 %v3061
      %v4400 = vunpack.c.l.b16 %v3062
      %v4401 = vunpack.c.h.b16 %v3062
      %v4402 = vunpack.c.l.b16 %v3063
      %v4403 = vunpack.c.h.b16 %v3063
      %v4404 = vunpack.c.l.b16 %v3064
      %v4405 = vunpack.c.h.b16 %v3064
      %v4406 = vunpack.c.l.b16 %v3065
      %v4407 = vunpack.c.h.b16 %v3065
      %v4408 = vunpack.c.l.b16 %v3066
      %v4409 = vunpack.c.h.b16 %v3066
      %v4410 = vunpack.c.l.b16 %v3067
      %v4411 = vunpack.c.h.b16 %v3067
      %v4412 = vunpack.c.l.b16 %v3068
      %v4413 = vunpack.c.h.b16 %v3068
      %v4414 = vunpack.c.l.b16 %v3069
      %v4415 = vunpack.c.h.b16 %v3069
      %v4416 = vunpack.c.l.b16 %v3070
      %v4417 = vunpack.c.h.b16 %v3070
      %v4418 = vunpack.c.l.b16 %v3071
      %v4419 = vunpack.c.h.b16 %v3071
      %v4420 = vunpack.c.l.b16 %v3072
      %v4421 = vunpack.c.h.b16 %v3072
      %v4422 = vunpack.c.l.b16 %v3073
      %v4423 = vunpack.c.h.b16 %v3073
      %v4424 = vunpack.c.l.b16 %v3074
      %v4425 = vunpack.c.h.b16 %v3074
      %v4426 = vunpack.c.l.b16 %v3075
      %v4427 = vunpack.c.h.b16 %v3075
      %v4428 = vunpack.c.l.b16 %v3076
      %v4429 = vunpack.c.h.b16 %v3076
      %v4430 = vunpack.c.l.b16 %v3077
      %v4431 = vunpack.c.h.b16 %v3077
      %v4432 = vunpack.c.l.b16 %v3078
      %v4433 = vunpack.c.h.b16 %v3078
      %v4434 = vunpack.c.l.b16 %v3079
      %v4435 = vunpack.c.h.b16 %v3079
      %v4436 = vunpack.c.l.b16 %v3080
      %v4437 = vunpack.c.h.b16 %v3080
      %v4438 = vunpack.c.l.b16 %v3081
      %v4439 = vunpack.c.h.b16 %v3081
      %v4440 = vunpack.c.l.b16 %v3082
      %v4441 = vunpack.c.h.b16 %v3082
      %v4442 = vunpack.c.l.b16 %v3083
      %v4443 = vunpack.c.h.b16 %v3083
      %v4444 = vunpack.c.l.b16 %v3084
      %v4445 = vunpack.c.h.b16 %v3084
      %v4446 = vunpack.c.l.b16 %v3085
      %v4447 = vunpack.c.h.b16 %v3085
      %v4448 = vunpack.c.l.b16 %v3086
      %v4449 = vunpack.c.h.b16 %v3086
      %v4450 = vunpack.c.l.b16 %v3087
      %v4451 = vunpack.c.h.b16 %v3087
      %v4452 = vunpack.c.l.b16 %v3088
      %v4453 = vunpack.c.h.b16 %v3088
      %v4454 = vunpack.c.l.b16 %v3089
      %v4455 = vunpack.c.h.b16 %v3089
      %v4456 = vunpack.c.l.b16 %v3090
      %v4457 = vunpack.c.h.b16 %v3090
      %v4458 = vunpack.c.l.b16 %v3091
      %v4459 = vunpack.c.h.b16 %v3091
      %v4460 = vunpack.c.l.b16 %v3092
      %v4461 = vunpack.c.h.b16 %v3092
      %v4462 = vunpack.c.l.b16 %v3093
      %v4463 = vunpack.c.h.b16 %v3093
      %v4464 = vunpack.c.l.b16 %v3094
      %v4465 = vunpack.c.h.b16 %v3094
      %v4466 = vunpack.c.l.b16 %v3095
      %v4467 = vunpack.c.h.b16 %v3095
      %v4468 = vunpack.c.l.b16 %v3096
      %v4469 = vunpack.c.h.b16 %v3096
      %v4470 = vunpack.c.l.b16 %v3097
      %v4471 = vunpack.c.h.b16 %v3097
      %v4472 = vunpack.c.l.b16 %v3098
      %v4473 = vunpack.c.h.b16 %v3098
      %v4474 = vunpack.c.l.b16 %v3099
      %v4475 = vunpack.c.h.b16 %v3099
      %v4476 = vunpack.c.l.b16 %v3100
      %v4477 = vunpack.c.h.b16 %v3100
      %v4478 = vunpack.c.l.b16 %v3101
      %v4479 = vunpack.c.h.b16 %v3101
      %v4480 = vunpack.c.l.b16 %v3102
      %v4481 = vunpack.c.h.b16 %v3102
      %v4482 = vunpack.c.l.b16 %v3103
      %v4483 = vunpack.c.h.b16 %v3103
      %v4484 = vunpack.c.l.b16 %v3104
      %v4485 = vunpack.c.h.b16 %v3104
      %v4486 = vunpack.c.l.b16 %v3105
      %v4487 = vunpack.c.h.b16 %v3105
      %v4488 = vunpack.c.l.b16 %v3106
      %v4489 = vunpack.c.h.b16 %v3106
      %v4490 = vunpack.c.l.b16 %v3107
      %v4491 = vunpack.c.h.b16 %v3107
      %v4492 = vunpack.c.l.b16 %v3108
      %v4493 = vunpack.c.h.b16 %v3108
      %v4494 = vunpack.c.l.b16 %v3109
      %v4495 = vunpack.c.h.b16 %v3109
      %v4496 = vunpack.c.l.b16 %v3110
      %v4497 = vunpack.c.h.b16 %v3110
      %v4498 = vunpack.c.l.b16 %v3111
      %v4499 = vunpack.c.h.b16 %v3111
      %v4500 = vunpack.c.l.b16 %v3112
      %v4501 = vunpack.c.h.b16 %v3112
      %v4502 = vunpack.c.l.b16 %v3113
      %v4503 = vunpack.c.h.b16 %v3113
      %v4504 = vunpack.c.l.b16 %v3114
      %v4505 = vunpack.c.h.b16 %v3114
      %v4506 = vunpack.c.l.b16 %v3115
      %v4507 = vunpack.c.h.b16 %v3115
      %v4508 = vunpack.c.l.b16 %v3116
      %v4509 = vunpack.c.h.b16 %v3116
      %v4510 = vunpack.c.l.b16 %v3117
      %v4511 = vunpack.c.h.b16 %v3117
      %v4512 = vunpack.c.l.b16 %v3118
      %v4513 = vunpack.c.h.b16 %v3118
      %v4514 = vunpack.c.l.b16 %v3119
      %v4515 = vunpack.c.h.b16 %v3119
      %v4516 = vunpack.c.l.b16 %v3120
      %v4517 = vunpack.c.h.b16 %v3120
      %v4518 = vunpack.c.l.b16 %v3121
      %v4519 = vunpack.c.h.b16 %v3121
      %v4520 = vunpack.c.l.b16 %v3122
      %v4521 = vunpack.c.h.b16 %v3122
      %v4522 = vunpack.c.l.b16 %v3123
      %v4523 = vunpack.c.h.b16 %v3123
      %v4524 = vunpack.c.l.b16 %v3124
      %v4525 = vunpack.c.h.b16 %v3124
      %v4526 = vunpack.c.l.b16 %v3125
      %v4527 = vunpack.c.h.b16 %v3125
      %v4528 = vunpack.c.l.b16 %v3126
      %v4529 = vunpack.c.h.b16 %v3126
      %v4530 = vunpack.c.l.b16 %v3127
      %v4531 = vunpack.c.h.b16 %v3127
      %v4532 = vunpack.c.l.b16 %v3128
      %v4533 = vunpack.c.h.b16 %v3128
      %v4534 = vunpack.c.l.b16 %v3129
      %v4535 = vunpack.c.h.b16 %v3129
      %v4536 = vunpack.c.l.b16 %v3130
      %v4537 = vunpack.c.h.b16 %v3130
      %v4538 = vunpack.c.l.b16 %v3131
      %v4539 = vunpack.c.h.b16 %v3131
      %v4540 = vunpack.c.l.b16 %v3132
      %v4541 = vunpack.c.h.b16 %v3132
      %v4542 = vunpack.c.l.b16 %v3133
      %v4543 = vunpack.c.h.b16 %v3133
      %v4544 = vunpack.c.l.b16 %v3134
      %v4545 = vunpack.c.h.b16 %v3134
      %v4546 = vunpack.c.l.b16 %v3135
      %v4547 = vunpack.c.h.b16 %v3135
      %v4548 = vunpack.c.l.b16 %v3136
      %v4549 = vunpack.c.h.b16 %v3136
      %v4550 = vunpack.c.l.b16 %v3137
      %v4551 = vunpack.c.h.b16 %v3137
      %v4552 = vunpack.c.l.b16 %v3138
      %v4553 = vunpack.c.h.b16 %v3138
      %v4554 = vunpack.c.l.b16 %v3139
      %v4555 = vunpack.c.h.b16 %v3139
      %v4556 = vunpack.c.l.b16 %v3140
      %v4557 = vunpack.c.h.b16 %v3140
      %v4558 = vunpack.c.l.b16 %v3141
      %v4559 = vunpack.c.h.b16 %v3141
      %v4560 = vunpack.c.l.b16 %v3142
      %v4561 = vunpack.c.h.b16 %v3142
      %v4562 = vunpack.c.l.b16 %v3143
      %v4563 = vunpack.c.h.b16 %v3143
      %v4564 = vunpack.c.l.b16 %v3144
      %v4565 = vunpack.c.h.b16 %v3144
      %v4566 = vunpack.c.l.b16 %v3145
      %v4567 = vunpack.c.h.b16 %v3145
      %v4568 = vunpack.c.l.b16 %v3146
      %v4569 = vunpack.c.h.b16 %v3146
      %v4570 = vunpack.c.l.b16 %v3147
      %v4571 = vunpack.c.h.b16 %v3147
      %v4572 = vunpack.c.l.b16 %v3148
      %v4573 = vunpack.c.h.b16 %v3148
      %v4574 = vunpack.c.l.b16 %v3149
      %v4575 = vunpack.c.h.b16 %v3149
      %v4576 = vunpack.c.l.b16 %v3150
      %v4577 = vunpack.c.h.b16 %v3150
      %v4578 = vunpack.c.l.b16 %v3151
      %v4579 = vunpack.c.h.b16 %v3151
      %v4580 = vunpack.c.l.b16 %v3152
      %v4581 = vunpack.c.h.b16 %v3152
      %v4582 = vunpack.c.l.b16 %v3153
      %v4583 = vunpack.c.h.b16 %v3153
      %v4584 = vunpack.c.l.b16 %v3154
      %v4585 = vunpack.c.h.b16 %v3154
      %v4586 = vunpack.c.l.b16 %v3155
      %v4587 = vunpack.c.h.b16 %v3155
      %v4588 = vunpack.c.l.b16 %v3156
      %v4589 = vunpack.c.h.b16 %v3156
      %v4590 = vunpack.c.l.b16 %v3157
      %v4591 = vunpack.c.h.b16 %v3157
      %v4592 = vunpack.c.l.b16 %v3158
      %v4593 = vunpack.c.h.b16 %v3158
      %v4594 = vunpack.c.l.b16 %v3159
      %v4595 = vunpack.c.h.b16 %v3159
      %v4596 = vunpack.c.l.b16 %v3160
      %v4597 = vunpack.c.h.b16 %v3160
      %v4598 = vunpack.c.l.b16 %v3161
      %v4599 = vunpack.c.h.b16 %v3161
      %v4600 = vunpack.c.l.b16 %v3162
      %v4601 = vunpack.c.h.b16 %v3162
      %v4602 = vunpack.c.l.b16 %v3163
      %v4603 = vunpack.c.h.b16 %v3163
      %v4604 = vunpack.c.l.b16 %v3164
      %v4605 = vunpack.c.h.b16 %v3164
      %v4606 = vunpack.c.l.b16 %v3165
      %v4607 = vunpack.c.h.b16 %v3165
      %v4608 = vunpack.c.l.b16 %v3166
      %v4609 = vunpack.c.h.b16 %v3166
      %v4610 = vunpack.c.l.b16 %v3167
      %v4611 = vunpack.c.h.b16 %v3167
      %v4612 = vunpack.c.l.b16 %v3168
      %v4613 = vunpack.c.h.b16 %v3168
      %v4614 = vunpack.c.l.b16 %v3169
      %v4615 = vunpack.c.h.b16 %v3169
      %v4616 = vunpack.c.l.b16 %v3170
      %v4617 = vunpack.c.h.b16 %v3170
      %v4618 = vunpack.c.l.b16 %v3171
      %v4619 = vunpack.c.h.b16 %v3171
      %v4620 = vunpack.c.l.b16 %v3172
      %v4621 = vunpack.c.h.b16 %v3172
      %v4622 = vunpack.c.l.b16 %v3173
      %v4623 = vunpack.c.h.b16 %v3173
      %v4624 = vunpack.c.l.b16 %v3174
      %v4625 = vunpack.c.h.b16 %v3174
      %v4626 = vunpack.c.l.b16 %v3175
      %v4627 = vunpack.c.h.b16 %v3175
      %v4628 = vunpack.c.l.b16 %v3176
      %v4629 = vunpack.c.h.b16 %v3176
      %v4630 = vunpack.c.l.b16 %v3177
      %v4631 = vunpack.c.h.b16 %v3177
      %v4632 = vunpack.c.l.b16 %v3178
      %v4633 = vunpack.c.h.b16 %v3178
      %v4634 = vunpack.c.l.b16 %v3179
      %v4635 = vunpack.c.h.b16 %v3179
      %v4636 = vunpack.c.l.b16 %v3180
      %v4637 = vunpack.c.h.b16 %v3180
      %v4638 = vunpack.c.l.b16 %v3181
      %v4639 = vunpack.c.h.b16 %v3181
      %v4640 = vunpack.c.l.b16 %v3182
      %v4641 = vunpack.c.h.b16 %v3182
      %v4642 = vunpack.c.l.b16 %v3183
      %v4643 = vunpack.c.h.b16 %v3183
      %v4644 = vunpack.c.l.b16 %v3184
      %v4645 = vunpack.c.h.b16 %v3184
      %v4646 = vunpack.c.l.b16 %v3185
      %v4647 = vunpack.c.h.b16 %v3185
      %v4648 = vunpack.c.l.b16 %v3186
      %v4649 = vunpack.c.h.b16 %v3186
      %v4650 = vunpack.c.l.b16 %v3187
      %v4651 = vunpack.c.h.b16 %v3187
      %v4652 = vunpack.c.l.b16 %v3188
      %v4653 = vunpack.c.h.b16 %v3188
      %v4654 = vunpack.c.l.b16 %v3189
      %v4655 = vunpack.c.h.b16 %v3189
      %v4656 = vunpack.c.l.b16 %v3190
      %v4657 = vunpack.c.h.b16 %v3190
      %v4658 = vunpack.c.l.b16 %v3191
      %v4659 = vunpack.c.h.b16 %v3191
      %v4660 = vunpack.c.l.b16 %v3192
      %v4661 = vunpack.c.h.b16 %v3192
      %v4662 = vunpack.c.l.b16 %v3193
      %v4663 = vunpack.c.h.b16 %v3193
      %v4664 = vunpack.c.l.b16 %v3194
      %v4665 = vunpack.c.h.b16 %v3194
      %v4666 = vunpack.c.l.b16 %v3195
      %v4667 = vunpack.c.h.b16 %v3195
      %v4668 = vunpack.c.l.b16 %v3196
      %v4669 = vunpack.c.h.b16 %v3196
      %v4670 = vunpack.c.l.b16 %v3197
      %v4671 = vunpack.c.h.b16 %v3197
      %v4672 = vunpack.c.l.b16 %v3198
      %v4673 = vunpack.c.h.b16 %v3198
      %v4674 = vunpack.c.l.b16 %v3199
      %v4675 = vunpack.c.h.b16 %v3199
      %v4676 = vunpack.c.l.b16 %v3200
      %v4677 = vunpack.c.h.b16 %v3200
      %v4678 = vunpack.c.l.b16 %v3201
      %v4679 = vunpack.c.h.b16 %v3201
      %v4680 = vunpack.c.l.b16 %v3202
      %v4681 = vunpack.c.h.b16 %v3202
      %v4682 = vunpack.c.l.b16 %v3203
      %v4683 = vunpack.c.h.b16 %v3203
      %v4684 = vunpack.c.l.b16 %v3204
      %v4685 = vunpack.c.h.b16 %v3204
      %v4686 = vunpack.c.l.b16 %v3205
      %v4687 = vunpack.c.h.b16 %v3205
      %v4688 = vunpack.c.l.b16 %v3206
      %v4689 = vunpack.c.h.b16 %v3206
      %v4690 = vunpack.c.l.b16 %v3207
      %v4691 = vunpack.c.h.b16 %v3207
      %v4692 = vunpack.c.l.b16 %v3208
      %v4693 = vunpack.c.h.b16 %v3208
      %v4694 = vunpack.c.l.b16 %v3209
      %v4695 = vunpack.c.h.b16 %v3209
      %v4696 = vunpack.c.l.b16 %v3210
      %v4697 = vunpack.c.h.b16 %v3210
      %v4698 = vunpack.c.l.b16 %v3211
      %v4699 = vunpack.c.h.b16 %v3211
      %v4700 = vunpack.c.l.b16 %v3212
      %v4701 = vunpack.c.h.b16 %v3212
      %v4702 = vunpack.c.l.b16 %v3213
      %v4703 = vunpack.c.h.b16 %v3213
      %v4704 = vunpack.c.l.b16 %v3214
      %v4705 = vunpack.c.h.b16 %v3214
      %v4706 = vunpack.c.l.b16 %v3215
      %v4707 = vunpack.c.h.b16 %v3215
      %v4708 = vunpack.c.l.b16 %v3216
      %v4709 = vunpack.c.h.b16 %v3216
      %v4710 = vunpack.c.l.b16 %v3217
      %v4711 = vunpack.c.h.b16 %v3217
      %v4712 = vunpack.c.l.b16 %v3218
      %v4713 = vunpack.c.h.b16 %v3218
      %v4714 = vunpack.c.l.b16 %v3219
      %v4715 = vunpack.c.h.b16 %v3219
      %v4716 = vunpack.c.l.b16 %v3220
      %v4717 = vunpack.c.h.b16 %v3220
      %v4718 = vunpack.c.l.b16 %v3221
      %v4719 = vunpack.c.h.b16 %v3221
      %v4720 = vunpack.c.l.b16 %v3222
      %v4721 = vunpack.c.h.b16 %v3222
      %v4722 = vunpack.c.l.b16 %v3223
      %v4723 = vunpack.c.h.b16 %v3223
      %v4724 = vunpack.c.l.b16 %v3224
      %v4725 = vunpack.c.h.b16 %v3224
      %v4726 = vunpack.c.l.b16 %v3225
      %v4727 = vunpack.c.h.b16 %v3225
      %v4728 = vunpack.c.l.b16 %v3226
      %v4729 = vunpack.c.h.b16 %v3226
      %v4730 = vunpack.c.l.b16 %v3227
      %v4731 = vunpack.c.h.b16 %v3227
      %v4732 = vunpack.c.l.b16 %v3228
      %v4733 = vunpack.c.h.b16 %v3228
      %v4734 = vunpack.c.l.b16 %v3229
      %v4735 = vunpack.c.h.b16 %v3229
      %v4736 = vunpack.c.l.b16 %v3230
      %v4737 = vunpack.c.h.b16 %v3230
      %v4738 = vunpack.c.l.b16 %v3231
      %v4739 = vunpack.c.h.b16 %v3231
      %v4740 = vunpack.c.l.b16 %v3232
      %v4741 = vunpack.c.h.b16 %v3232
      %v4742 = vunpack.c.l.b16 %v3233
      %v4743 = vunpack.c.h.b16 %v3233
      %v4744 = vunpack.c.l.b16 %v3234
      %v4745 = vunpack.c.h.b16 %v3234
      %v4746 = vunpack.c.l.b16 %v3235
      %v4747 = vunpack.c.h.b16 %v3235
      %v4748 = vunpack.c.l.b16 %v3236
      %v4749 = vunpack.c.h.b16 %v3236
      %v4750 = vunpack.c.l.b16 %v3237
      %v4751 = vunpack.c.h.b16 %v3237
      %v4752 = vunpack.c.l.b16 %v3238
      %v4753 = vunpack.c.h.b16 %v3238
      %v4754 = vunpack.c.l.b16 %v3239
      %v4755 = vunpack.c.h.b16 %v3239
      %v4756 = vunpack.c.l.b16 %v3240
      %v4757 = vunpack.c.h.b16 %v3240
      %v4758 = vunpack.c.l.b16 %v3241
      %v4759 = vunpack.c.h.b16 %v3241
      %v4760 = vunpack.c.l.b16 %v3242
      %v4761 = vunpack.c.h.b16 %v3242
      %v4762 = vunpack.c.l.b16 %v3243
      %v4763 = vunpack.c.h.b16 %v3243
      %v4764 = vunpack.c.l.b16 %v3244
      %v4765 = vunpack.c.h.b16 %v3244
      %v4766 = vunpack.c.l.b16 %v3245
      %v4767 = vunpack.c.h.b16 %v3245
      %v4768 = vunpack.c.l.b16 %v3246
      %v4769 = vunpack.c.h.b16 %v3246
      %v4770 = vunpack.c.l.b16 %v3247
      %v4771 = vunpack.c.h.b16 %v3247
      %v4772 = vunpack.c.l.b16 %v3248
      %v4773 = vunpack.c.h.b16 %v3248
      %v4774 = vunpack.c.l.b16 %v3249
      %v4775 = vunpack.c.h.b16 %v3249
      %v4776 = vunpack.c.l.b16 %v3250
      %v4777 = vunpack.c.h.b16 %v3250
      %v4778 = vunpack.c.l.b16 %v3251
      %v4779 = vunpack.c.h.b16 %v3251
      %v4780 = vunpack.c.l.b16 %v3252
      %v4781 = vunpack.c.h.b16 %v3252
      %v4782 = vunpack.c.l.b16 %v3253
      %v4783 = vunpack.c.h.b16 %v3253
      %v4784 = vunpack.c.l.b16 %v3254
      %v4785 = vunpack.c.h.b16 %v3254
      %v4786 = vunpack.c.l.b16 %v3255
      %v4787 = vunpack.c.h.b16 %v3255
      %v4788 = vunpack.c.l.b16 %v3256
      %v4789 = vunpack.c.h.b16 %v3256
      %v4790 = vunpack.c.l.b16 %v3257
      %v4791 = vunpack.c.h.b16 %v3257
      %v4792 = vunpack.c.l.b16 %v3258
      %v4793 = vunpack.c.h.b16 %v3258
      %v4794 = vunpack.c.l.b16 %v3259
      %v4795 = vunpack.c.h.b16 %v3259
      %v4796 = vunpack.c.l.b16 %v3260
      %v4797 = vunpack.c.h.b16 %v3260
      %v4798 = vunpack.c.l.b16 %v3261
      %v4799 = vunpack.c.h.b16 %v3261
      %v4800 = vunpack.c.l.b16 %v3262
      %v4801 = vunpack.c.h.b16 %v3262
      %v4802 = vunpack.c.l.b16 %v3263
      %v4803 = vunpack.c.h.b16 %v3263
      %v4804 = vunpack.c.l.b16 %v3264
      %v4805 = vunpack.c.h.b16 %v3264
      %v4806 = vunpack.c.l.b16 %v3265
      %v4807 = vunpack.c.h.b16 %v3265
      %v4808 = vunpack.c.l.b16 %v3266
      %v4809 = vunpack.c.h.b16 %v3266
      %v4810 = vunpack.c.l.b16 %v3267
      %v4811 = vunpack.c.h.b16 %v3267
      %v4812 = vunpack.c.l.b16 %v3268
      %v4813 = vunpack.c.h.b16 %v3268
      %v4814 = vunpack.c.l.b16 %v3269
      %v4815 = vunpack.c.h.b16 %v3269
      %v4816 = vunpack.c.l.b16 %v3270
      %v4817 = vunpack.c.h.b16 %v3270
      %v4818 = vunpack.c.l.b16 %v3271
      %v4819 = vunpack.c.h.b16 %v3271
      %v4820 = vunpack.c.l.b16 %v3272
      %v4821 = vunpack.c.h.b16 %v3272
      %v4822 = vunpack.c.l.b16 %v3273
      %v4823 = vunpack.c.h.b16 %v3273
      %v4824 = vunpack.c.l.b16 %v3274
      %v4825 = vunpack.c.h.b16 %v3274
      %v4826 = vunpack.c.l.b16 %v3275
      %v4827 = vunpack.c.h.b16 %v3275
      %v4828 = vunpack.c.l.b16 %v3276
      %v4829 = vunpack.c.h.b16 %v3276
      %v4830 = vunpack.c.l.b16 %v3277
      %v4831 = vunpack.c.h.b16 %v3277
      %v4832 = vpack.c.b16 %v3816, %v3808
      %v4833 = vpack.c.b16 %v3817, %v3809
      %v4834 = vpack.c.b16 %v3818, %v3810
      %v4835 = vpack.c.b16 %v3819, %v3811
      %v4836 = vpack.c.b16 %v3820, %v3812
      %v4837 = vpack.c.b16 %v3821, %v3813
      %v4838 = vpack.c.b16 %v3822, %v3814
      %v4839 = vpack.c.b16 %v3823, %v3815
      %v4840 = vpack.c.b16 %v3832, %v3824
      %v4841 = vpack.c.b16 %v3833, %v3825
      %v4842 = vpack.c.b16 %v3834, %v3826
      %v4843 = vpack.c.b16 %v3835, %v3827
      %v4844 = vpack.c.b16 %v3836, %v3828
      %v4845 = vpack.c.b16 %v3837, %v3829
      %v4846 = vpack.c.b16 %v3838, %v3830
      %v4847 = vpack.c.b16 %v3839, %v3831
      %v4848 = vpack.c.b16 %v3848, %v3840
      %v4849 = vpack.c.b16 %v3849, %v3841
      %v4850 = vpack.c.b16 %v3850, %v3842
      %v4851 = vpack.c.b16 %v3851, %v3843
      %v4852 = vpack.c.b16 %v3852, %v3844
      %v4853 = vpack.c.b16 %v3853, %v3845
      %v4854 = vpack.c.b16 %v3854, %v3846
      %v4855 = vpack.c.b16 %v3855, %v3847
      %v4856 = vpack.c.b16 %v3864, %v3856
      %v4857 = vpack.c.b16 %v3865, %v3857
      %v4858 = vpack.c.b16 %v3866, %v3858
      %v4859 = vpack.c.b16 %v3867, %v3859
      %v4860 = vpack.c.b16 %v3868, %v3860
      %v4861 = vpack.c.b16 %v3869, %v3861
      %v4862 = vpack.c.b16 %v3870, %v3862
      %v4863 = vpack.c.b16 %v3871, %v3863
      %v4864 = vpack.c.b16 %v3880, %v3872
      %v4865 = vpack.c.b16 %v3881, %v3873
      %v4866 = vpack.c.b16 %v3882, %v3874
      %v4867 = vpack.c.b16 %v3883, %v3875
      %v4868 = vpack.c.b16 %v3884, %v3876
      %v4869 = vpack.c.b16 %v3885, %v3877
      %v4870 = vpack.c.b16 %v3886, %v3878
      %v4871 = vpack.c.b16 %v3887, %v3879
      %v4872 = vpack.c.b16 %v3896, %v3888
      %v4873 = vpack.c.b16 %v3897, %v3889
      %v4874 = vpack.c.b16 %v3898, %v3890
      %v4875 = vpack.c.b16 %v3899, %v3891
      %v4876 = vpack.c.b16 %v3900, %v3892
      %v4877 = vpack.c.b16 %v3901, %v3893
      %v4878 = vpack.c.b16 %v3902, %v3894
      %v4879 = vpack.c.b16 %v3903, %v3895
      %v4880 = vpack.c.b16 %v3912, %v3904
      %v4881 = vpack.c.b16 %v3913, %v3905
      %v4882 = vpack.c.b16 %v3914, %v3906
      %v4883 = vpack.c.b16 %v3915, %v3907
      %v4884 = vpack.c.b16 %v3916, %v3908
      %v4885 = vpack.c.b16 %v3917, %v3909
      %v4886 = vpack.c.b16 %v3918, %v3910
      %v4887 = vpack.c.b16 %v3919, %v3911
      %v4888 = vpack.c.b16 %v3928, %v3920
      %v4889 = vpack.c.b16 %v3929, %v3921
      %v4890 = vpack.c.b16 %v3930, %v3922
      %v4891 = vpack.c.b16 %v3931, %v3923
      %v4892 = vpack.c.b16 %v3932, %v3924
      %v4893 = vpack.c.b16 %v3933, %v3925
      %v4894 = vpack.c.b16 %v3934, %v3926
      %v4895 = vpack.c.b16 %v3935, %v3927
      %v4896 = vpack.c.b16 %v3944, %v3936
      %v4897 = vpack.c.b16 %v3945, %v3937
      %v4898 = vpack.c.b16 %v3946, %v3938
      %v4899 = vpack.c.b16 %v3947, %v3939
      %v4900 = vpack.c.b16 %v3948, %v3940
      %v4901 = vpack.c.b16 %v3949, %v3941
      %v4902 = vpack.c.b16 %v3950, %v3942
      %v4903 = vpack.c.b16 %v3951, %v3943
      %v4904 = vpack.c.b16 %v3960, %v3952
      %v4905 = vpack.c.b16 %v3961, %v3953
      %v4906 = vpack.c.b16 %v3962, %v3954
      %v4907 = vpack.c.b16 %v3963, %v3955
      %v4908 = vpack.c.b16 %v3964, %v3956
      %v4909 = vpack.c.b16 %v3965, %v3957
      %v4910 = vpack.c.b16 %v3966, %v3958
      %v4911 = vpack.c.b16 %v3967, %v3959
      %v4912 = vpack.c.b16 %v3976, %v3968
      %v4913 = vpack.c.b16 %v3977, %v3969
      %v4914 = vpack.c.b16 %v3978, %v3970
      %v4915 = vpack.c.b16 %v3979, %v3971
      %v4916 = vpack.c.b16 %v3980, %v3972
      %v4917 = vpack.c.b16 %v3981, %v3973
      %v4918 = vpack.c.b16 %v3982, %v3974
      %v4919 = vpack.c.b16 %v3983, %v3975
      %v4920 = vpack.c.b16 %v3992, %v3984
      %v4921 = vpack.c.b16 %v3993, %v3985
      %v4922 = vpack.c.b16 %v3994, %v3986
      %v4923 = vpack.c.b16 %v3995, %v3987
      %v4924 = vpack.c.b16 %v3996, %v3988
      %v4925 = vpack.c.b16 %v3997, %v3989
      %v4926 = vpack.c.b16 %v3998, %v3990
      %v4927 = vpack.c.b16 %v3999, %v3991
      %v4928 = vpack.c.b16 %v4008, %v4000
      %v4929 = vpack.c.b16 %v4009, %v4001
      %v4930 = vpack.c.b16 %v4010, %v4002
      %v4931 = vpack.c.b16 %v4011, %v4003
      %v4932 = vpack.c.b16 %v4012, %v4004
      %v4933 = vpack.c.b16 %v4013, %v4005
      %v4934 = vpack.c.b16 %v4014, %v4006
      %v4935 = vpack.c.b16 %v4015, %v4007
      %v4936 = vpack.c.b16 %v4024, %v4016
      %v4937 = vpack.c.b16 %v4025, %v4017
      %v4938 = vpack.c.b16 %v4026, %v4018
      %v4939 = vpack.c.b16 %v4027, %v4019
      %v4940 = vpack.c.b16 %v4028, %v4020
      %v4941 = vpack.c.b16 %v4029, %v4021
      %v4942 = vpack.c.b16 %v4030, %v4022
      %v4943 = vpack.c.b16 %v4031, %v4023
      %v4944 = vpack.c.b16 %v4040, %v4032
      %v4945 = vpack.c.b16 %v4041, %v4033
      %v4946 = vpack.c.b16 %v4042, %v4034
      %v4947 = vpack.c.b16 %v4043, %v4035
      %v4948 = vpack.c.b16 %v4044, %v4036
      %v4949 = vpack.c.b16 %v4045, %v4037
      %v4950 = vpack.c.b16 %v4046, %v4038
      %v4951 = vpack.c.b16 %v4047, %v4039
      %v4952 = vpack.c.b16 %v4056, %v4048
      %v4953 = vpack.c.b16 %v4057, %v4049
      %v4954 = vpack.c.b16 %v4058, %v4050
      %v4955 = vpack.c.b16 %v4059, %v4051
      %v4956 = vpack.c.b16 %v4060, %v4052
      %v4957 = vpack.c.b16 %v4061, %v4053
      %v4958 = vpack.c.b16 %v4062, %v4054
      %v4959 = vpack.c.b16 %v4063, %v4055
      %v4960 = vpack.c.b16 %v4072, %v4064
      %v4961 = vpack.c.b16 %v4073, %v4065
      %v4962 = vpack.c.b16 %v4074, %v4066
      %v4963 = vpack.c.b16 %v4075, %v4067
      %v4964 = vpack.c.b16 %v4076, %v4068
      %v4965 = vpack.c.b16 %v4077, %v4069
      %v4966 = vpack.c.b16 %v4078, %v4070
      %v4967 = vpack.c.b16 %v4079, %v4071
      %v4968 = vpack.c.b16 %v4088, %v4080
      %v4969 = vpack.c.b16 %v4089, %v4081
      %v4970 = vpack.c.b16 %v4090, %v4082
      %v4971 = vpack.c.b16 %v4091, %v4083
      %v4972 = vpack.c.b16 %v4092, %v4084
      %v4973 = vpack.c.b16 %v4093, %v4085
      %v4974 = vpack.c.b16 %v4094, %v4086
      %v4975 = vpack.c.b16 %v4095, %v4087
      %v4976 = vpack.c.b16 %v4104, %v4096
      %v4977 = vpack.c.b16 %v4105, %v4097
      %v4978 = vpack.c.b16 %v4106, %v4098
      %v4979 = vpack.c.b16 %v4107, %v4099
      %v4980 = vpack.c.b16 %v4108, %v4100
      %v4981 = vpack.c.b16 %v4109, %v4101
      %v4982 = vpack.c.b16 %v4110, %v4102
      %v4983 = vpack.c.b16 %v4111, %v4103
      %v4984 = vpack.c.b16 %v4120, %v4112
      %v4985 = vpack.c.b16 %v4121, %v4113
      %v4986 = vpack.c.b16 %v4122, %v4114
      %v4987 = vpack.c.b16 %v4123, %v4115
      %v4988 = vpack.c.b16 %v4124, %v4116
      %v4989 = vpack.c.b16 %v4125, %v4117
      %v4990 = vpack.c.b16 %v4126, %v4118
      %v4991 = vpack.c.b16 %v4127, %v4119
      %v4992 = vpack.c.b16 %v4136, %v4128
      %v4993 = vpack.c.b16 %v4137, %v4129
      %v4994 = vpack.c.b16 %v4138, %v4130
      %v4995 = vpack.c.b16 %v4139, %v4131
      %v4996 = vpack.c.b16 %v4140, %v4132
      %v4997 = vpack.c.b16 %v4141, %v4133
      %v4998 = vpack.c.b16 %v4142, %v4134
      %v4999 = vpack.c.b16 %v4143, %v4135
      %v5000 = vpack.c.b16 %v4152, %v4144
      %v5001 = vpack.c.b16 %v4153, %v4145
      %v5002 = vpack.c.b16 %v4154, %v4146
      %v5003 = vpack.c.b16 %v4155, %v4147
      %v5004 = vpack.c.b16 %v4156, %v4148
      %v5005 = vpack.c.b16 %v4157, %v4149
      %v5006 = vpack.c.b16 %v4158, %v4150
      %v5007 = vpack.c.b16 %v4159, %v4151
      %v5008 = vpack.c.b16 %v4168, %v4160
      %v5009 = vpack.c.b16 %v4169, %v4161
      %v5010 = vpack.c.b16 %v4170, %v4162
      %v5011 = vpack.c.b16 %v4171, %v4163
      %v5012 = vpack.c.b16 %v4172, %v4164
      %v5013 = vpack.c.b16 %v4173, %v4165
      %v5014 = vpack.c.b16 %v4174, %v4166
      %v5015 = vpack.c.b16 %v4175, %v4167
      %v5016 = vpack.c.b16 %v4184, %v4176
      %v5017 = vpack.c.b16 %v4185, %v4177
      %v5018 = vpack.c.b16 %v4186, %v4178
      %v5019 = vpack.c.b16 %v4187, %v4179
      %v5020 = vpack.c.b16 %v4188, %v4180
      %v5021 = vpack.c.b16 %v4189, %v4181
      %v5022 = vpack.c.b16 %v4190, %v4182
      %v5023 = vpack.c.b16 %v4191, %v4183
      %v5024 = vpack.c.b16 %v4200, %v4192
      %v5025 = vpack.c.b16 %v4201, %v4193
      %v5026 = vpack.c.b16 %v4202, %v4194
      %v5027 = vpack.c.b16 %v4203, %v4195
      %v5028 = vpack.c.b16 %v4204, %v4196
      %v5029 = vpack.c.b16 %v4205, %v4197
      %v5030 = vpack.c.b16 %v4206, %v4198
      %v5031 = vpack.c.b16 %v4207, %v4199
      %v5032 = vpack.c.b16 %v4216, %v4208
      %v5033 = vpack.c.b16 %v4217, %v4209
      %v5034 = vpack.c.b16 %v4218, %v4210
      %v5035 = vpack.c.b16 %v4219, %v4211
      %v5036 = vpack.c.b16 %v4220, %v4212
      %v5037 = vpack.c.b16 %v4221, %v4213
      %v5038 = vpack.c.b16 %v4222, %v4214
      %v5039 = vpack.c.b16 %v4223, %v4215
      %v5040 = vpack.c.b16 %v4232, %v4224
      %v5041 = vpack.c.b16 %v4233, %v4225
      %v5042 = vpack.c.b16 %v4234, %v4226
      %v5043 = vpack.c.b16 %v4235, %v4227
      %v5044 = vpack.c.b16 %v4236, %v4228
      %v5045 = vpack.c.b16 %v4237, %v4229
      %v5046 = vpack.c.b16 %v4238, %v4230
      %v5047 = vpack.c.b16 %v4239, %v4231
      %v5048 = vpack.c.b16 %v4248, %v4240
      %v5049 = vpack.c.b16 %v4249, %v4241
      %v5050 = vpack.c.b16 %v4250, %v4242
      %v5051 = vpack.c.b16 %v4251, %v4243
      %v5052 = vpack.c.b16 %v4252, %v4244
      %v5053 = vpack.c.b16 %v4253, %v4245
      %v5054 = vpack.c.b16 %v4254, %v4246
      %v5055 = vpack.c.b16 %v4255, %v4247
      %v5056 = vpack.c.b16 %v4264, %v4256
      %v5057 = vpack.c.b16 %v4265, %v4257
      %v5058 = vpack.c.b16 %v4266, %v4258
      %v5059 = vpack.c.b16 %v4267, %v4259
      %v5060 = vpack.c.b16 %v4268, %v4260
      %v5061 = vpack.c.b16 %v4269, %v4261
      %v5062 = vpack.c.b16 %v4270, %v4262
      %v5063 = vpack.c.b16 %v4271, %v4263
      %v5064 = vpack.c.b16 %v4280, %v4272
      %v5065 = vpack.c.b16 %v4281, %v4273
      %v5066 = vpack.c.b16 %v4282, %v4274
      %v5067 = vpack.c.b16 %v4283, %v4275
      %v5068 = vpack.c.b16 %v4284, %v4276
      %v5069 = vpack.c.b16 %v4285, %v4277
      %v5070 = vpack.c.b16 %v4286, %v4278
      %v5071 = vpack.c.b16 %v4287, %v4279
      %v5072 = vpack.c.b16 %v4296, %v4288
      %v5073 = vpack.c.b16 %v4297, %v4289
      %v5074 = vpack.c.b16 %v4298, %v4290
      %v5075 = vpack.c.b16 %v4299, %v4291
      %v5076 = vpack.c.b16 %v4300, %v4292
      %v5077 = vpack.c.b16 %v4301, %v4293
      %v5078 = vpack.c.b16 %v4302, %v4294
      %v5079 = vpack.c.b16 %v4303, %v4295
      %v5080 = vpack.c.b16 %v4312, %v4304
      %v5081 = vpack.c.b16 %v4313, %v4305
      %v5082 = vpack.c.b16 %v4314, %v4306
      %v5083 = vpack.c.b16 %v4315, %v4307
      %v5084 = vpack.c.b16 %v4316, %v4308
      %v5085 = vpack.c.b16 %v4317, %v4309
      %v5086 = vpack.c.b16 %v4318, %v4310
      %v5087 = vpack.c.b16 %v4319, %v4311
      %v5088 = vpack.c.b16 %v4328, %v4320
      %v5089 = vpack.c.b16 %v4329, %v4321
      %v5090 = vpack.c.b16 %v4330, %v4322
      %v5091 = vpack.c.b16 %v4331, %v4323
      %v5092 = vpack.c.b16 %v4332, %v4324
      %v5093 = vpack.c.b16 %v4333, %v4325
      %v5094 = vpack.c.b16 %v4334, %v4326
      %v5095 = vpack.c.b16 %v4335, %v4327
      %v5096 = vpack.c.b16 %v4344, %v4336
      %v5097 = vpack.c.b16 %v4345, %v4337
      %v5098 = vpack.c.b16 %v4346, %v4338
      %v5099 = vpack.c.b16 %v4347, %v4339
      %v5100 = vpack.c.b16 %v4348, %v4340
      %v5101 = vpack.c.b16 %v4349, %v4341
      %v5102 = vpack.c.b16 %v4350, %v4342
      %v5103 = vpack.c.b16 %v4351, %v4343
      %v5104 = vpack.c.b16 %v4360, %v4352
      %v5105 = vpack.c.b16 %v4361, %v4353
      %v5106 = vpack.c.b16 %v4362, %v4354
      %v5107 = vpack.c.b16 %v4363, %v4355
      %v5108 = vpack.c.b16 %v4364, %v4356
      %v5109 = vpack.c.b16 %v4365, %v4357
      %v5110 = vpack.c.b16 %v4366, %v4358
      %v5111 = vpack.c.b16 %v4367, %v4359
      %v5112 = vpack.c.b16 %v4376, %v4368
      %v5113 = vpack.c.b16 %v4377, %v4369
      %v5114 = vpack.c.b16 %v4378, %v4370
      %v5115 = vpack.c.b16 %v4379, %v4371
      %v5116 = vpack.c.b16 %v4380, %v4372
      %v5117 = vpack.c.b16 %v4381, %v4373
      %v5118 = vpack.c.b16 %v4382, %v4374
      %v5119 = vpack.c.b16 %v4383, %v4375
      %v5120 = vpack.c.b16 %v4392, %v4384
      %v5121 = vpack.c.b16 %v4393, %v4385
      %v5122 = vpack.c.b16 %v4394, %v4386
      %v5123 = vpack.c.b16 %v4395, %v4387
      %v5124 = vpack.c.b16 %v4396, %v4388
      %v5125 = vpack.c.b16 %v4397, %v4389
      %v5126 = vpack.c.b16 %v4398, %v4390
      %v5127 = vpack.c.b16 %v4399, %v4391
      %v5128 = vpack.c.b16 %v4408, %v4400
      %v5129 = vpack.c.b16 %v4409, %v4401
      %v5130 = vpack.c.b16 %v4410, %v4402
      %v5131 = vpack.c.b16 %v4411, %v4403
      %v5132 = vpack.c.b16 %v4412, %v4404
      %v5133 = vpack.c.b16 %v4413, %v4405
      %v5134 = vpack.c.b16 %v4414, %v4406
      %v5135 = vpack.c.b16 %v4415, %v4407
      %v5136 = vpack.c.b16 %v4424, %v4416
      %v5137 = vpack.c.b16 %v4425, %v4417
      %v5138 = vpack.c.b16 %v4426, %v4418
      %v5139 = vpack.c.b16 %v4427, %v4419
      %v5140 = vpack.c.b16 %v4428, %v4420
      %v5141 = vpack.c.b16 %v4429, %v4421
      %v5142 = vpack.c.b16 %v4430, %v4422
      %v5143 = vpack.c.b16 %v4431, %v4423
      %v5144 = vpack.c.b16 %v4440, %v4432
      %v5145 = vpack.c.b16 %v4441, %v4433
      %v5146 = vpack.c.b16 %v4442, %v4434
      %v5147 = vpack.c.b16 %v4443, %v4435
      %v5148 = vpack.c.b16 %v4444, %v4436
      %v5149 = vpack.c.b16 %v4445, %v4437
      %v5150 = vpack.c.b16 %v4446, %v4438
      %v5151 = vpack.c.b16 %v4447, %v4439
      %v5152 = vpack.c.b16 %v4456, %v4448
      %v5153 = vpack.c.b16 %v4457, %v4449
      %v5154 = vpack.c.b16 %v4458, %v4450
      %v5155 = vpack.c.b16 %v4459, %v4451
      %v5156 = vpack.c.b16 %v4460, %v4452
      %v5157 = vpack.c.b16 %v4461, %v4453
      %v5158 = vpack.c.b16 %v4462, %v4454
      %v5159 = vpack.c.b16 %v4463, %v4455
      %v5160 = vpack.c.b16 %v4472, %v4464
      %v5161 = vpack.c.b16 %v4473, %v4465
      %v5162 = vpack.c.b16 %v4474, %v4466
      %v5163 = vpack.c.b16 %v4475, %v4467
      %v5164 = vpack.c.b16 %v4476, %v4468
      %v5165 = vpack.c.b16 %v4477, %v4469
      %v5166 = vpack.c.b16 %v4478, %v4470
      %v5167 = vpack.c.b16 %v4479, %v4471
      %v5168 = vpack.c.b16 %v4488, %v4480
      %v5169 = vpack.c.b16 %v4489, %v4481
      %v5170 = vpack.c.b16 %v4490, %v4482
      %v5171 = vpack.c.b16 %v4491, %v4483
      %v5172 = vpack.c.b16 %v4492, %v4484
      %v5173 = vpack.c.b16 %v4493, %v4485
      %v5174 = vpack.c.b16 %v4494, %v4486
      %v5175 = vpack.c.b16 %v4495, %v4487
      %v5176 = vpack.c.b16 %v4504, %v4496
      %v5177 = vpack.c.b16 %v4505, %v4497
      %v5178 = vpack.c.b16 %v4506, %v4498
      %v5179 = vpack.c.b16 %v4507, %v4499
      %v5180 = vpack.c.b16 %v4508, %v4500
      %v5181 = vpack.c.b16 %v4509, %v4501
      %v5182 = vpack.c.b16 %v4510, %v4502
      %v5183 = vpack.c.b16 %v4511, %v4503
      %v5184 = vpack.c.b16 %v4520, %v4512
      %v5185 = vpack.c.b16 %v4521, %v4513
      %v5186 = vpack.c.b16 %v4522, %v4514
      %v5187 = vpack.c.b16 %v4523, %v4515
      %v5188 = vpack.c.b16 %v4524, %v4516
      %v5189 = vpack.c.b16 %v4525, %v4517
      %v5190 = vpack.c.b16 %v4526, %v4518
      %v5191 = vpack.c.b16 %v4527, %v4519
      %v5192 = vpack.c.b16 %v4536, %v4528
      %v5193 = vpack.c.b16 %v4537, %v4529
      %v5194 = vpack.c.b16 %v4538, %v4530
      %v5195 = vpack.c.b16 %v4539, %v4531
      %v5196 = vpack.c.b16 %v4540, %v4532
      %v5197 = vpack.c.b16 %v4541, %v4533
      %v5198 = vpack.c.b16 %v4542, %v4534
      %v5199 = vpack.c.b16 %v4543, %v4535
      %v5200 = vpack.c.b16 %v4552, %v4544
      %v5201 = vpack.c.b16 %v4553, %v4545
      %v5202 = vpack.c.b16 %v4554, %v4546
      %v5203 = vpack.c.b16 %v4555, %v4547
      %v5204 = vpack.c.b16 %v4556, %v4548
      %v5205 = vpack.c.b16 %v4557, %v4549
      %v5206 = vpack.c.b16 %v4558, %v4550
      %v5207 = vpack.c.b16 %v4559, %v4551
      %v5208 = vpack.c.b16 %v4568, %v4560
      %v5209 = vpack.c.b16 %v4569, %v4561
      %v5210 = vpack.c.b16 %v4570, %v4562
      %v5211 = vpack.c.b16 %v4571, %v4563
      %v5212 = vpack.c.b16 %v4572, %v4564
      %v5213 = vpack.c.b16 %v4573, %v4565
      %v5214 = vpack.c.b16 %v4574, %v4566
      %v5215 = vpack.c.b16 %v4575, %v4567
      %v5216 = vpack.c.b16 %v4584, %v4576
      %v5217 = vpack.c.b16 %v4585, %v4577
      %v5218 = vpack.c.b16 %v4586, %v4578
      %v5219 = vpack.c.b16 %v4587, %v4579
      %v5220 = vpack.c.b16 %v4588, %v4580
      %v5221 = vpack.c.b16 %v4589, %v4581
      %v5222 = vpack.c.b16 %v4590, %v4582
      %v5223 = vpack.c.b16 %v4591, %v4583
      %v5224 = vpack.c.b16 %v4600, %v4592
      %v5225 = vpack.c.b16 %v4601, %v4593
      %v5226 = vpack.c.b16 %v4602, %v4594
      %v5227 = vpack.c.b16 %v4603, %v4595
      %v5228 = vpack.c.b16 %v4604, %v4596
      %v5229 = vpack.c.b16 %v4605, %v4597
      %v5230 = vpack.c.b16 %v4606, %v4598
      %v5231 = vpack.c.b16 %v4607, %v4599
      %v5232 = vpack.c.b16 %v4616, %v4608
      %v5233 = vpack.c.b16 %v4617, %v4609
      %v5234 = vpack.c.b16 %v4618, %v4610
      %v5235 = vpack.c.b16 %v4619, %v4611
      %v5236 = vpack.c.b16 %v4620, %v4612
      %v5237 = vpack.c.b16 %v4621, %v4613
      %v5238 = vpack.c.b16 %v4622, %v4614
      %v5239 = vpack.c.b16 %v4623, %v4615
      %v5240 = vpack.c.b16 %v4632, %v4624
      %v5241 = vpack.c.b16 %v4633, %v4625
      %v5242 = vpack.c.b16 %v4634, %v4626
      %v5243 = vpack.c.b16 %v4635, %v4627
      %v5244 = vpack.c.b16 %v4636, %v4628
      %v5245 = vpack.c.b16 %v4637, %v4629
      %v5246 = vpack.c.b16 %v4638, %v4630
      %v5247 = vpack.c.b16 %v4639, %v4631
      %v5248 = vpack.c.b16 %v4648, %v4640
      %v5249 = vpack.c.b16 %v4649, %v4641
      %v5250 = vpack.c.b16 %v4650, %v4642
      %v5251 = vpack.c.b16 %v4651, %v4643
      %v5252 = vpack.c.b16 %v4652, %v4644
      %v5253 = vpack.c.b16 %v4653, %v4645
      %v5254 = vpack.c.b16 %v4654, %v4646
      %v5255 = vpack.c.b16 %v4655, %v4647
      %v5256 = vpack.c.b16 %v4664, %v4656
      %v5257 = vpack.c.b16 %v4665, %v4657
      %v5258 = vpack.c.b16 %v4666, %v4658
      %v5259 = vpack.c.b16 %v4667, %v4659
      %v5260 = vpack.c.b16 %v4668, %v4660
      %v5261 = vpack.c.b16 %v4669, %v4661
      %v5262 = vpack.c.b16 %v4670, %v4662
      %v5263 = vpack.c.b16 %v4671, %v4663
      %v5264 = vpack.c.b16 %v4680, %v4672
      %v5265 = vpack.c.b16 %v4681, %v4673
      %v5266 = vpack.c.b16 %v4682, %v4674
      %v5267 = vpack.c.b16 %v4683, %v4675
      %v5268 = vpack.c.b16 %v4684, %v4676
      %v5269 = vpack.c.b16 %v4685, %v4677
      %v5270 = vpack.c.b16 %v4686, %v4678
      %v5271 = vpack.c.b16 %v4687, %v4679
      %v5272 = vpack.c.b16 %v4696, %v4688
      %v5273 = vpack.c.b16 %v4697, %v4689
      %v5274 = vpack.c.b16 %v4698, %v4690
      %v5275 = vpack.c.b16 %v4699, %v4691
      %v5276 = vpack.c.b16 %v4700, %v4692
      %v5277 = vpack.c.b16 %v4701, %v4693
      %v5278 = vpack.c.b16 %v4702, %v4694
      %v5279 = vpack.c.b16 %v4703, %v4695
      %v5280 = vpack.c.b16 %v4712, %v4704
      %v5281 = vpack.c.b16 %v4713, %v4705
      %v5282 = vpack.c.b16 %v4714, %v4706
      %v5283 = vpack.c.b16 %v4715, %v4707
      %v5284 = vpack.c.b16 %v4716, %v4708
      %v5285 = vpack.c.b16 %v4717, %v4709
      %v5286 = vpack.c.b16 %v4718, %v4710
      %v5287 = vpack.c.b16 %v4719, %v4711
      %v5288 = vpack.c.b16 %v4728, %v4720
      %v5289 = vpack.c.b16 %v4729, %v4721
      %v5290 = vpack.c.b16 %v4730, %v4722
      %v5291 = vpack.c.b16 %v4731, %v4723
      %v5292 = vpack.c.b16 %v4732, %v4724
      %v5293 = vpack.c.b16 %v4733, %v4725
      %v5294 = vpack.c.b16 %v4734, %v4726
      %v5295 = vpack.c.b16 %v4735, %v4727
      %v5296 = vpack.c.b16 %v4744, %v4736
      %v5297 = vpack.c.b16 %v4745, %v4737
      %v5298 = vpack.c.b16 %v4746, %v4738
      %v5299 = vpack.c.b16 %v4747, %v4739
      %v5300 = vpack.c.b16 %v4748, %v4740
      %v5301 = vpack.c.b16 %v4749, %v4741
      %v5302 = vpack.c.b16 %v4750, %v4742
      %v5303 = vpack.c.b16 %v4751, %v4743
      %v5304 = vpack.c.b16 %v4760, %v4752
      %v5305 = vpack.c.b16 %v4761, %v4753
      %v5306 = vpack.c.b16 %v4762, %v4754
      %v5307 = vpack.c.b16 %v4763, %v4755
      %v5308 = vpack.c.b16 %v4764, %v4756
      %v5309 = vpack.c.b16 %v4765, %v4757
      %v5310 = vpack.c.b16 %v4766, %v4758
      %v5311 = vpack.c.b16 %v4767, %v4759
      %v5312 = vpack.c.b16 %v4776, %v4768
      %v5313 = vpack.c.b16 %v4777, %v4769
      %v5314 = vpack.c.b16 %v4778, %v4770
      %v5315 = vpack.c.b16 %v4779, %v4771
      %v5316 = vpack.c.b16 %v4780, %v4772
      %v5317 = vpack.c.b16 %v4781, %v4773
      %v5318 = vpack.c.b16 %v4782, %v4774
      %v5319 = vpack.c.b16 %v4783, %v4775
      %v5320 = vpack.c.b16 %v4792, %v4784
      %v5321 = vpack.c.b16 %v4793, %v4785
      %v5322 = vpack.c.b16 %v4794, %v4786
      %v5323 = vpack.c.b16 %v4795, %v4787
      %v5324 = vpack.c.b16 %v4796, %v4788
      %v5325 = vpack.c.b16 %v4797, %v4789
      %v5326 = vpack.c.b16 %v4798, %v4790
      %v5327 = vpack.c.b16 %v4799, %v4791
      %v5328 = vpack.c.b16 %v4808, %v4800
      %v5329 = vpack.c.b16 %v4809, %v4801
      %v5330 = vpack.c.b16 %v4810, %v4802
      %v5331 = vpack.c.b16 %v4811, %v4803
      %v5332 = vpack.c.b16 %v4812, %v4804
      %v5333 = vpack.c.b16 %v4813, %v4805
      %v5334 = vpack.c.b16 %v4814, %v4806
      %v5335 = vpack.c.b16 %v4815, %v4807
      %v5336 = vpack.c.b16 %v4824, %v4816
      %v5337 = vpack.c.b16 %v4825, %v4817
      %v5338 = vpack.c.b16 %v4826, %v4818
      %v5339 = vpack.c.b16 %v4827, %v4819
      %v5340 = vpack.c.b16 %v4828, %v4820
      %v5341 = vpack.c.b16 %v4829, %v4821
      %v5342 = vpack.c.b16 %v4830, %v4822
      %v5343 = vpack.c.b16 %v4831, %v4823
      %5856 = vmatpush.bf16.msra.mxu0 %v4888
      %5857 = vmatpush.bf16.msra.mxu0 %v4880
      %5858 = vmatpush.bf16.msra.mxu0 %v4872
      %5859 = vmatpush.bf16.msra.mxu0 %v4864
      %5860 = vmatpush.bf16.msra.mxu0 %v4856
      %5861 = vmatpush.bf16.msra.mxu0 %v4848
      %5862 = vmatpush.bf16.msra.mxu0 %v4840
      %5863 = vmatpush.bf16.msra.mxu0 %v4832
      %5864 = vmatmul.bf16.gmra.mxu0 %v2702
      %v5865 = vpop.f32.mrf.mxu0
      %v5866 = vadd.f32 %v3280, %v5865
      %v5867 = vpop.f32.mrf.mxu0
      %v5868 = vadd.f32 %v3280, %v5867
      %5869 = vmatmul.bf16.gmra.mxu0 %v2710
      %v5870 = vpop.f32.mrf.mxu0
      %v5871 = vadd.f32 %v3280, %v5870
      %v5872 = vpop.f32.mrf.mxu0
      %v5873 = vadd.f32 %v3280, %v5872
      %5874 = vmatmul.bf16.gmra.mxu0 %v2718
      %v5875 = vpop.f32.mrf.mxu0
      %v5876 = vadd.f32 %v3280, %v5875
      %v5877 = vpop.f32.mrf.mxu0
      %v5878 = vadd.f32 %v3280, %v5877
      %5879 = vmatmul.bf16.gmra.mxu0 %v2726
      %v5880 = vpop.f32.mrf.mxu0
      %v5881 = vadd.f32 %v3280, %v5880
      %v5882 = vpop.f32.mrf.mxu0
      %v5883 = vadd.f32 %v3280, %v5882
      %5884 = vmatmul.bf16.gmra.mxu0 %v2734
      %v5885 = vpop.f32.mrf.mxu0
      %v5886 = vadd.f32 %v3280, %v5885
      %v5887 = vpop.f32.mrf.mxu0
      %v5888 = vadd.f32 %v3280, %v5887
      %5889 = vmatmul.bf16.gmra.mxu0 %v2742
      %v5890 = vpop.f32.mrf.mxu0
      %v5891 = vadd.f32 %v3280, %v5890
      %v5892 = vpop.f32.mrf.mxu0
      %v5893 = vadd.f32 %v3280, %v5892
      %5894 = vmatmul.bf16.gmra.mxu0 %v2750
      %v5895 = vpop.f32.mrf.mxu0
      %v5896 = vadd.f32 %v3280, %v5895
      %v5897 = vpop.f32.mrf.mxu0
      %v5898 = vadd.f32 %v3280, %v5897
      %5899 = vmatmul.bf16.gmra.mxu0 %v2758
      %v5900 = vpop.f32.mrf.mxu0
      %v5901 = vadd.f32 %v3280, %v5900
      %v5902 = vpop.f32.mrf.mxu0
      %v5903 = vadd.f32 %v3280, %v5902
      %5904 = vdwg.mxu0
      %5905 = vmatpush.bf16.msra.mxu0 %v4952
      %5906 = vmatpush.bf16.msra.mxu0 %v4944
      %5907 = vmatpush.bf16.msra.mxu0 %v4936
      %5908 = vmatpush.bf16.msra.mxu0 %v4928
      %5909 = vmatpush.bf16.msra.mxu0 %v4920
      %5910 = vmatpush.bf16.msra.mxu0 %v4912
      %5911 = vmatpush.bf16.msra.mxu0 %v4904
      %5912 = vmatpush.bf16.msra.mxu0 %v4896
      %5913 = vmatmul.bf16.gmra.mxu0 %v2703
      %v5914 = vpop.f32.mrf.mxu0
      %v5915 = vadd.f32 %v5866, %v5914
      %v5916 = vpop.f32.mrf.mxu0
      %v5917 = vadd.f32 %v5868, %v5916
      %5918 = vmatmul.bf16.gmra.mxu0 %v2711
      %v5919 = vpop.f32.mrf.mxu0
      %v5920 = vadd.f32 %v5871, %v5919
      %v5921 = vpop.f32.mrf.mxu0
      %v5922 = vadd.f32 %v5873, %v5921
      %5923 = vmatmul.bf16.gmra.mxu0 %v2719
      %v5924 = vpop.f32.mrf.mxu0
      %v5925 = vadd.f32 %v5876, %v5924
      %v5926 = vpop.f32.mrf.mxu0
      %v5927 = vadd.f32 %v5878, %v5926
      %5928 = vmatmul.bf16.gmra.mxu0 %v2727
      %v5929 = vpop.f32.mrf.mxu0
      %v5930 = vadd.f32 %v5881, %v5929
      %v5931 = vpop.f32.mrf.mxu0
      %v5932 = vadd.f32 %v5883, %v5931
      %5933 = vmatmul.bf16.gmra.mxu0 %v2735
      %v5934 = vpop.f32.mrf.mxu0
      %v5935 = vadd.f32 %v5886, %v5934
      %v5936 = vpop.f32.mrf.mxu0
      %v5937 = vadd.f32 %v5888, %v5936
      %5938 = vmatmul.bf16.gmra.mxu0 %v2743
      %v5939 = vpop.f32.mrf.mxu0
      %v5940 = vadd.f32 %v5891, %v5939
      %v5941 = vpop.f32.mrf.mxu0
      %v5942 = vadd.f32 %v5893, %v5941
      %5943 = vmatmul.bf16.gmra.mxu0 %v2751
      %v5944 = vpop.f32.mrf.mxu0
      %v5945 = vadd.f32 %v5896, %v5944
      %v5946 = vpop.f32.mrf.mxu0
      %v5947 = vadd.f32 %v5898, %v5946
      %5948 = vmatmul.bf16.gmra.mxu0 %v2759
      %v5949 = vpop.f32.mrf.mxu0
      %v5950 = vadd.f32 %v5901, %v5949
      %v5951 = vpop.f32.mrf.mxu0
      %v5952 = vadd.f32 %v5903, %v5951
      %5953 = vdwg.mxu0
      %5954 = vmatpush.bf16.msra.mxu0 %v5016
      %5955 = vmatpush.bf16.msra.mxu0 %v5008
      %5956 = vmatpush.bf16.msra.mxu0 %v5000
      %5957 = vmatpush.bf16.msra.mxu0 %v4992
      %5958 = vmatpush.bf16.msra.mxu0 %v4984
      %5959 = vmatpush.bf16.msra.mxu0 %v4976
      %5960 = vmatpush.bf16.msra.mxu0 %v4968
      %5961 = vmatpush.bf16.msra.mxu0 %v4960
      %5962 = vmatmul.bf16.gmra.mxu0 %v2704
      %v5963 = vpop.f32.mrf.mxu0
      %v5964 = vadd.f32 %v5915, %v5963
      %v5965 = vpop.f32.mrf.mxu0
      %v5966 = vadd.f32 %v5917, %v5965
      %5967 = vmatmul.bf16.gmra.mxu0 %v2712
      %v5968 = vpop.f32.mrf.mxu0
      %v5969 = vadd.f32 %v5920, %v5968
      %v5970 = vpop.f32.mrf.mxu0
      %v5971 = vadd.f32 %v5922, %v5970
      %5972 = vmatmul.bf16.gmra.mxu0 %v2720
      %v5973 = vpop.f32.mrf.mxu0
      %v5974 = vadd.f32 %v5925, %v5973
      %v5975 = vpop.f32.mrf.mxu0
      %v5976 = vadd.f32 %v5927, %v5975
      %5977 = vmatmul.bf16.gmra.mxu0 %v2728
      %v5978 = vpop.f32.mrf.mxu0
      %v5979 = vadd.f32 %v5930, %v5978
      %v5980 = vpop.f32.mrf.mxu0
      %v5981 = vadd.f32 %v5932, %v5980
      %5982 = vmatmul.bf16.gmra.mxu0 %v2736
      %v5983 = vpop.f32.mrf.mxu0
      %v5984 = vadd.f32 %v5935, %v5983
      %v5985 = vpop.f32.mrf.mxu0
      %v5986 = vadd.f32 %v5937, %v5985
      %5987 = vmatmul.bf16.gmra.mxu0 %v2744
      %v5988 = vpop.f32.mrf.mxu0
      %v5989 = vadd.f32 %v5940, %v5988
      %v5990 = vpop.f32.mrf.mxu0
      %v5991 = vadd.f32 %v5942, %v5990
      %5992 = vmatmul.bf16.gmra.mxu0 %v2752
      %v5993 = vpop.f32.mrf.mxu0
      %v5994 = vadd.f32 %v5945, %v5993
      %v5995 = vpop.f32.mrf.mxu0
      %v5996 = vadd.f32 %v5947, %v5995
      %5997 = vmatmul.bf16.gmra.mxu0 %v2760
      %v5998 = vpop.f32.mrf.mxu0
      %v5999 = vadd.f32 %v5950, %v5998
      %v6000 = vpop.f32.mrf.mxu0
      %v6001 = vadd.f32 %v5952, %v6000
      %6002 = vdwg.mxu0
      %6003 = vmatpush.bf16.msra.mxu0 %v5080
      %6004 = vmatpush.bf16.msra.mxu0 %v5072
      %6005 = vmatpush.bf16.msra.mxu0 %v5064
      %6006 = vmatpush.bf16.msra.mxu0 %v5056
      %6007 = vmatpush.bf16.msra.mxu0 %v5048
      %6008 = vmatpush.bf16.msra.mxu0 %v5040
      %6009 = vmatpush.bf16.msra.mxu0 %v5032
      %6010 = vmatpush.bf16.msra.mxu0 %v5024
      %6011 = vmatmul.bf16.gmra.mxu0 %v2705
      %v6012 = vpop.f32.mrf.mxu0
      %v6013 = vadd.f32 %v5964, %v6012
      %v6014 = vpop.f32.mrf.mxu0
      %v6015 = vadd.f32 %v5966, %v6014
      %6016 = vmatmul.bf16.gmra.mxu0 %v2713
      %v6017 = vpop.f32.mrf.mxu0
      %v6018 = vadd.f32 %v5969, %v6017
      %v6019 = vpop.f32.mrf.mxu0
      %v6020 = vadd.f32 %v5971, %v6019
      %6021 = vmatmul.bf16.gmra.mxu0 %v2721
      %v6022 = vpop.f32.mrf.mxu0
      %v6023 = vadd.f32 %v5974, %v6022
      %v6024 = vpop.f32.mrf.mxu0
      %v6025 = vadd.f32 %v5976, %v6024
      %6026 = vmatmul.bf16.gmra.mxu0 %v2729
      %v6027 = vpop.f32.mrf.mxu0
      %v6028 = vadd.f32 %v5979, %v6027
      %v6029 = vpop.f32.mrf.mxu0
      %v6030 = vadd.f32 %v5981, %v6029
      %6031 = vmatmul.bf16.gmra.mxu0 %v2737
      %v6032 = vpop.f32.mrf.mxu0
      %v6033 = vadd.f32 %v5984, %v6032
      %v6034 = vpop.f32.mrf.mxu0
      %v6035 = vadd.f32 %v5986, %v6034
      %6036 = vmatmul.bf16.gmra.mxu0 %v2745
      %v6037 = vpop.f32.mrf.mxu0
      %v6038 = vadd.f32 %v5989, %v6037
      %v6039 = vpop.f32.mrf.mxu0
      %v6040 = vadd.f32 %v5991, %v6039
      %6041 = vmatmul.bf16.gmra.mxu0 %v2753
      %v6042 = vpop.f32.mrf.mxu0
      %v6043 = vadd.f32 %v5994, %v6042
      %v6044 = vpop.f32.mrf.mxu0
      %v6045 = vadd.f32 %v5996, %v6044
      %6046 = vmatmul.bf16.gmra.mxu0 %v2761
      %v6047 = vpop.f32.mrf.mxu0
      %v6048 = vadd.f32 %v5999, %v6047
      %v6049 = vpop.f32.mrf.mxu0
      %v6050 = vadd.f32 %v6001, %v6049
      %6051 = vdwg.mxu0
      %6052 = vmatpush.bf16.msra.mxu0 %v5144
      %6053 = vmatpush.bf16.msra.mxu0 %v5136
      %6054 = vmatpush.bf16.msra.mxu0 %v5128
      %6055 = vmatpush.bf16.msra.mxu0 %v5120
      %6056 = vmatpush.bf16.msra.mxu0 %v5112
      %6057 = vmatpush.bf16.msra.mxu0 %v5104
      %6058 = vmatpush.bf16.msra.mxu0 %v5096
      %6059 = vmatpush.bf16.msra.mxu0 %v5088
      %6060 = vmatmul.bf16.gmra.mxu0 %v2706
      %v6061 = vpop.f32.mrf.mxu0
      %v6062 = vadd.f32 %v6013, %v6061
      %v6063 = vpop.f32.mrf.mxu0
      %v6064 = vadd.f32 %v6015, %v6063
      %6065 = vmatmul.bf16.gmra.mxu0 %v2714
      %v6066 = vpop.f32.mrf.mxu0
      %v6067 = vadd.f32 %v6018, %v6066
      %v6068 = vpop.f32.mrf.mxu0
      %v6069 = vadd.f32 %v6020, %v6068
      %6070 = vmatmul.bf16.gmra.mxu0 %v2722
      %v6071 = vpop.f32.mrf.mxu0
      %v6072 = vadd.f32 %v6023, %v6071
      %v6073 = vpop.f32.mrf.mxu0
      %v6074 = vadd.f32 %v6025, %v6073
      %6075 = vmatmul.bf16.gmra.mxu0 %v2730
      %v6076 = vpop.f32.mrf.mxu0
      %v6077 = vadd.f32 %v6028, %v6076
      %v6078 = vpop.f32.mrf.mxu0
      %v6079 = vadd.f32 %v6030, %v6078
      %6080 = vmatmul.bf16.gmra.mxu0 %v2738
      %v6081 = vpop.f32.mrf.mxu0
      %v6082 = vadd.f32 %v6033, %v6081
      %v6083 = vpop.f32.mrf.mxu0
      %v6084 = vadd.f32 %v6035, %v6083
      %6085 = vmatmul.bf16.gmra.mxu0 %v2746
      %v6086 = vpop.f32.mrf.mxu0
      %v6087 = vadd.f32 %v6038, %v6086
      %v6088 = vpop.f32.mrf.mxu0
      %v6089 = vadd.f32 %v6040, %v6088
      %6090 = vmatmul.bf16.gmra.mxu0 %v2754
      %v6091 = vpop.f32.mrf.mxu0
      %v6092 = vadd.f32 %v6043, %v6091
      %v6093 = vpop.f32.mrf.mxu0
      %v6094 = vadd.f32 %v6045, %v6093
      %6095 = vmatmul.bf16.gmra.mxu0 %v2762
      %v6096 = vpop.f32.mrf.mxu0
      %v6097 = vadd.f32 %v6048, %v6096
      %v6098 = vpop.f32.mrf.mxu0
      %v6099 = vadd.f32 %v6050, %v6098
      %6100 = vdwg.mxu0
      %6101 = vmatpush.bf16.msra.mxu0 %v5208
      %6102 = vmatpush.bf16.msra.mxu0 %v5200
      %6103 = vmatpush.bf16.msra.mxu0 %v5192
      %6104 = vmatpush.bf16.msra.mxu0 %v5184
      %6105 = vmatpush.bf16.msra.mxu0 %v5176
      %6106 = vmatpush.bf16.msra.mxu0 %v5168
      %6107 = vmatpush.bf16.msra.mxu0 %v5160
      %6108 = vmatpush.bf16.msra.mxu0 %v5152
      %6109 = vmatmul.bf16.gmra.mxu0 %v2707
      %v6110 = vpop.f32.mrf.mxu0
      %v6111 = vadd.f32 %v6062, %v6110
      %v6112 = vpop.f32.mrf.mxu0
      %v6113 = vadd.f32 %v6064, %v6112
      %6114 = vmatmul.bf16.gmra.mxu0 %v2715
      %v6115 = vpop.f32.mrf.mxu0
      %v6116 = vadd.f32 %v6067, %v6115
      %v6117 = vpop.f32.mrf.mxu0
      %v6118 = vadd.f32 %v6069, %v6117
      %6119 = vmatmul.bf16.gmra.mxu0 %v2723
      %v6120 = vpop.f32.mrf.mxu0
      %v6121 = vadd.f32 %v6072, %v6120
      %v6122 = vpop.f32.mrf.mxu0
      %v6123 = vadd.f32 %v6074, %v6122
      %6124 = vmatmul.bf16.gmra.mxu0 %v2731
      %v6125 = vpop.f32.mrf.mxu0
      %v6126 = vadd.f32 %v6077, %v6125
      %v6127 = vpop.f32.mrf.mxu0
      %v6128 = vadd.f32 %v6079, %v6127
      %6129 = vmatmul.bf16.gmra.mxu0 %v2739
      %v6130 = vpop.f32.mrf.mxu0
      %v6131 = vadd.f32 %v6082, %v6130
      %v6132 = vpop.f32.mrf.mxu0
      %v6133 = vadd.f32 %v6084, %v6132
      %6134 = vmatmul.bf16.gmra.mxu0 %v2747
      %v6135 = vpop.f32.mrf.mxu0
      %v6136 = vadd.f32 %v6087, %v6135
      %v6137 = vpop.f32.mrf.mxu0
      %v6138 = vadd.f32 %v6089, %v6137
      %6139 = vmatmul.bf16.gmra.mxu0 %v2755
      %v6140 = vpop.f32.mrf.mxu0
      %v6141 = vadd.f32 %v6092, %v6140
      %v6142 = vpop.f32.mrf.mxu0
      %v6143 = vadd.f32 %v6094, %v6142
      %6144 = vmatmul.bf16.gmra.mxu0 %v2763
      %v6145 = vpop.f32.mrf.mxu0
      %v6146 = vadd.f32 %v6097, %v6145
      %v6147 = vpop.f32.mrf.mxu0
      %v6148 = vadd.f32 %v6099, %v6147
      %6149 = vdwg.mxu0
      %6150 = vmatpush.bf16.msra.mxu0 %v5272
      %6151 = vmatpush.bf16.msra.mxu0 %v5264
      %6152 = vmatpush.bf16.msra.mxu0 %v5256
      %6153 = vmatpush.bf16.msra.mxu0 %v5248
      %6154 = vmatpush.bf16.msra.mxu0 %v5240
      %6155 = vmatpush.bf16.msra.mxu0 %v5232
      %6156 = vmatpush.bf16.msra.mxu0 %v5224
      %6157 = vmatpush.bf16.msra.mxu0 %v5216
      %6158 = vmatmul.bf16.gmra.mxu0 %v2708
      %v6159 = vpop.f32.mrf.mxu0
      %v6160 = vadd.f32 %v6111, %v6159
      %v6161 = vpop.f32.mrf.mxu0
      %v6162 = vadd.f32 %v6113, %v6161
      %6163 = vmatmul.bf16.gmra.mxu0 %v2716
      %v6164 = vpop.f32.mrf.mxu0
      %v6165 = vadd.f32 %v6116, %v6164
      %v6166 = vpop.f32.mrf.mxu0
      %v6167 = vadd.f32 %v6118, %v6166
      %6168 = vmatmul.bf16.gmra.mxu0 %v2724
      %v6169 = vpop.f32.mrf.mxu0
      %v6170 = vadd.f32 %v6121, %v6169
      %v6171 = vpop.f32.mrf.mxu0
      %v6172 = vadd.f32 %v6123, %v6171
      %6173 = vmatmul.bf16.gmra.mxu0 %v2732
      %v6174 = vpop.f32.mrf.mxu0
      %v6175 = vadd.f32 %v6126, %v6174
      %v6176 = vpop.f32.mrf.mxu0
      %v6177 = vadd.f32 %v6128, %v6176
      %6178 = vmatmul.bf16.gmra.mxu0 %v2740
      %v6179 = vpop.f32.mrf.mxu0
      %v6180 = vadd.f32 %v6131, %v6179
      %v6181 = vpop.f32.mrf.mxu0
      %v6182 = vadd.f32 %v6133, %v6181
      %6183 = vmatmul.bf16.gmra.mxu0 %v2748
      %v6184 = vpop.f32.mrf.mxu0
      %v6185 = vadd.f32 %v6136, %v6184
      %v6186 = vpop.f32.mrf.mxu0
      %v6187 = vadd.f32 %v6138, %v6186
      %6188 = vmatmul.bf16.gmra.mxu0 %v2756
      %v6189 = vpop.f32.mrf.mxu0
      %v6190 = vadd.f32 %v6141, %v6189
      %v6191 = vpop.f32.mrf.mxu0
      %v6192 = vadd.f32 %v6143, %v6191
      %6193 = vmatmul.bf16.gmra.mxu0 %v2764
      %v6194 = vpop.f32.mrf.mxu0
      %v6195 = vadd.f32 %v6146, %v6194
      %v6196 = vpop.f32.mrf.mxu0
      %v6197 = vadd.f32 %v6148, %v6196
      %6198 = vdwg.mxu0
      %6199 = vmatpush.bf16.msra.mxu0 %v5336
      %6200 = vmatpush.bf16.msra.mxu0 %v5328
      %6201 = vmatpush.bf16.msra.mxu0 %v5320
      %6202 = vmatpush.bf16.msra.mxu0 %v5312
      %6203 = vmatpush.bf16.msra.mxu0 %v5304
      %6204 = vmatpush.bf16.msra.mxu0 %v5296
      %6205 = vmatpush.bf16.msra.mxu0 %v5288
      %6206 = vmatpush.bf16.msra.mxu0 %v5280
      %6207 = vmatmul.bf16.gmra.mxu0 %v2709
      %v6208 = vpop.f32.mrf.mxu0
      %v6209 = vadd.f32 %v6160, %v6208
      %v6210 = vpop.f32.mrf.mxu0
      %v6211 = vadd.f32 %v6162, %v6210
      %6212 = vmatmul.bf16.gmra.mxu0 %v2717
      %v6213 = vpop.f32.mrf.mxu0
      %v6214 = vadd.f32 %v6165, %v6213
      %v6215 = vpop.f32.mrf.mxu0
      %v6216 = vadd.f32 %v6167, %v6215
      %6217 = vmatmul.bf16.gmra.mxu0 %v2725
      %v6218 = vpop.f32.mrf.mxu0
      %v6219 = vadd.f32 %v6170, %v6218
      %v6220 = vpop.f32.mrf.mxu0
      %v6221 = vadd.f32 %v6172, %v6220
      %6222 = vmatmul.bf16.gmra.mxu0 %v2733
      %v6223 = vpop.f32.mrf.mxu0
      %v6224 = vadd.f32 %v6175, %v6223
      %v6225 = vpop.f32.mrf.mxu0
      %v6226 = vadd.f32 %v6177, %v6225
      %6227 = vmatmul.bf16.gmra.mxu0 %v2741
      %v6228 = vpop.f32.mrf.mxu0
      %v6229 = vadd.f32 %v6180, %v6228
      %v6230 = vpop.f32.mrf.mxu0
      %v6231 = vadd.f32 %v6182, %v6230
      %6232 = vmatmul.bf16.gmra.mxu0 %v2749
      %v6233 = vpop.f32.mrf.mxu0
      %v6234 = vadd.f32 %v6185, %v6233
      %v6235 = vpop.f32.mrf.mxu0
      %v6236 = vadd.f32 %v6187, %v6235
      %6237 = vmatmul.bf16.gmra.mxu0 %v2757
      %v6238 = vpop.f32.mrf.mxu0
      %v6239 = vadd.f32 %v6190, %v6238
      %v6240 = vpop.f32.mrf.mxu0
      %v6241 = vadd.f32 %v6192, %v6240
      %6242 = vmatmul.bf16.gmra.mxu0 %v2765
      %v6243 = vpop.f32.mrf.mxu0
      %v6244 = vadd.f32 %v6195, %v6243
      %v6245 = vpop.f32.mrf.mxu0
      %v6246 = vadd.f32 %v6197, %v6245
      %6247 = vdwg.mxu0
      %6248 = vmatpush.bf16.msra.mxu0 %v4889
      %6249 = vmatpush.bf16.msra.mxu0 %v4881
      %6250 = vmatpush.bf16.msra.mxu0 %v4873
      %6251 = vmatpush.bf16.msra.mxu0 %v4865
      %6252 = vmatpush.bf16.msra.mxu0 %v4857
      %6253 = vmatpush.bf16.msra.mxu0 %v4849
      %6254 = vmatpush.bf16.msra.mxu0 %v4841
      %6255 = vmatpush.bf16.msra.mxu0 %v4833
      %6256 = vmatmul.bf16.gmra.mxu0 %v2702
      %v6257 = vpop.f32.mrf.mxu0
      %v6258 = vadd.f32 %v3281, %v6257
      %v6259 = vpop.f32.mrf.mxu0
      %v6260 = vadd.f32 %v3281, %v6259
      %6261 = vmatmul.bf16.gmra.mxu0 %v2710
      %v6262 = vpop.f32.mrf.mxu0
      %v6263 = vadd.f32 %v3281, %v6262
      %v6264 = vpop.f32.mrf.mxu0
      %v6265 = vadd.f32 %v3281, %v6264
      %6266 = vmatmul.bf16.gmra.mxu0 %v2718
      %v6267 = vpop.f32.mrf.mxu0
      %v6268 = vadd.f32 %v3281, %v6267
      %v6269 = vpop.f32.mrf.mxu0
      %v6270 = vadd.f32 %v3281, %v6269
      %6271 = vmatmul.bf16.gmra.mxu0 %v2726
      %v6272 = vpop.f32.mrf.mxu0
      %v6273 = vadd.f32 %v3281, %v6272
      %v6274 = vpop.f32.mrf.mxu0
      %v6275 = vadd.f32 %v3281, %v6274
      %6276 = vmatmul.bf16.gmra.mxu0 %v2734
      %v6277 = vpop.f32.mrf.mxu0
      %v6278 = vadd.f32 %v3281, %v6277
      %v6279 = vpop.f32.mrf.mxu0
      %v6280 = vadd.f32 %v3281, %v6279
      %6281 = vmatmul.bf16.gmra.mxu0 %v2742
      %v6282 = vpop.f32.mrf.mxu0
      %v6283 = vadd.f32 %v3281, %v6282
      %v6284 = vpop.f32.mrf.mxu0
      %v6285 = vadd.f32 %v3281, %v6284
      %6286 = vmatmul.bf16.gmra.mxu0 %v2750
      %v6287 = vpop.f32.mrf.mxu0
      %v6288 = vadd.f32 %v3281, %v6287
      %v6289 = vpop.f32.mrf.mxu0
      %v6290 = vadd.f32 %v3281, %v6289
      %6291 = vmatmul.bf16.gmra.mxu0 %v2758
      %v6292 = vpop.f32.mrf.mxu0
      %v6293 = vadd.f32 %v3281, %v6292
      %v6294 = vpop.f32.mrf.mxu0
      %v6295 = vadd.f32 %v3281, %v6294
      %6296 = vdwg.mxu0
      %6297 = vmatpush.bf16.msra.mxu0 %v4953
      %6298 = vmatpush.bf16.msra.mxu0 %v4945
      %6299 = vmatpush.bf16.msra.mxu0 %v4937
      %6300 = vmatpush.bf16.msra.mxu0 %v4929
      %6301 = vmatpush.bf16.msra.mxu0 %v4921
      %6302 = vmatpush.bf16.msra.mxu0 %v4913
      %6303 = vmatpush.bf16.msra.mxu0 %v4905
      %6304 = vmatpush.bf16.msra.mxu0 %v4897
      %6305 = vmatmul.bf16.gmra.mxu0 %v2703
      %v6306 = vpop.f32.mrf.mxu0
      %v6307 = vadd.f32 %v6258, %v6306
      %v6308 = vpop.f32.mrf.mxu0
      %v6309 = vadd.f32 %v6260, %v6308
      %6310 = vmatmul.bf16.gmra.mxu0 %v2711
      %v6311 = vpop.f32.mrf.mxu0
      %v6312 = vadd.f32 %v6263, %v6311
      %v6313 = vpop.f32.mrf.mxu0
      %v6314 = vadd.f32 %v6265, %v6313
      %6315 = vmatmul.bf16.gmra.mxu0 %v2719
      %v6316 = vpop.f32.mrf.mxu0
      %v6317 = vadd.f32 %v6268, %v6316
      %v6318 = vpop.f32.mrf.mxu0
      %v6319 = vadd.f32 %v6270, %v6318
      %6320 = vmatmul.bf16.gmra.mxu0 %v2727
      %v6321 = vpop.f32.mrf.mxu0
      %v6322 = vadd.f32 %v6273, %v6321
      %v6323 = vpop.f32.mrf.mxu0
      %v6324 = vadd.f32 %v6275, %v6323
      %6325 = vmatmul.bf16.gmra.mxu0 %v2735
      %v6326 = vpop.f32.mrf.mxu0
      %v6327 = vadd.f32 %v6278, %v6326
      %v6328 = vpop.f32.mrf.mxu0
      %v6329 = vadd.f32 %v6280, %v6328
      %6330 = vmatmul.bf16.gmra.mxu0 %v2743
      %v6331 = vpop.f32.mrf.mxu0
      %v6332 = vadd.f32 %v6283, %v6331
      %v6333 = vpop.f32.mrf.mxu0
      %v6334 = vadd.f32 %v6285, %v6333
      %6335 = vmatmul.bf16.gmra.mxu0 %v2751
      %v6336 = vpop.f32.mrf.mxu0
      %v6337 = vadd.f32 %v6288, %v6336
      %v6338 = vpop.f32.mrf.mxu0
      %v6339 = vadd.f32 %v6290, %v6338
      %6340 = vmatmul.bf16.gmra.mxu0 %v2759
      %v6341 = vpop.f32.mrf.mxu0
      %v6342 = vadd.f32 %v6293, %v6341
      %v6343 = vpop.f32.mrf.mxu0
      %v6344 = vadd.f32 %v6295, %v6343
      %6345 = vdwg.mxu0
      %6346 = vmatpush.bf16.msra.mxu0 %v5017
      %6347 = vmatpush.bf16.msra.mxu0 %v5009
      %6348 = vmatpush.bf16.msra.mxu0 %v5001
      %6349 = vmatpush.bf16.msra.mxu0 %v4993
      %6350 = vmatpush.bf16.msra.mxu0 %v4985
      %6351 = vmatpush.bf16.msra.mxu0 %v4977
      %6352 = vmatpush.bf16.msra.mxu0 %v4969
      %6353 = vmatpush.bf16.msra.mxu0 %v4961
      %6354 = vmatmul.bf16.gmra.mxu0 %v2704
      %v6355 = vpop.f32.mrf.mxu0
      %v6356 = vadd.f32 %v6307, %v6355
      %v6357 = vpop.f32.mrf.mxu0
      %v6358 = vadd.f32 %v6309, %v6357
      %6359 = vmatmul.bf16.gmra.mxu0 %v2712
      %v6360 = vpop.f32.mrf.mxu0
      %v6361 = vadd.f32 %v6312, %v6360
      %v6362 = vpop.f32.mrf.mxu0
      %v6363 = vadd.f32 %v6314, %v6362
      %6364 = vmatmul.bf16.gmra.mxu0 %v2720
      %v6365 = vpop.f32.mrf.mxu0
      %v6366 = vadd.f32 %v6317, %v6365
      %v6367 = vpop.f32.mrf.mxu0
      %v6368 = vadd.f32 %v6319, %v6367
      %6369 = vmatmul.bf16.gmra.mxu0 %v2728
      %v6370 = vpop.f32.mrf.mxu0
      %v6371 = vadd.f32 %v6322, %v6370
      %v6372 = vpop.f32.mrf.mxu0
      %v6373 = vadd.f32 %v6324, %v6372
      %6374 = vmatmul.bf16.gmra.mxu0 %v2736
      %v6375 = vpop.f32.mrf.mxu0
      %v6376 = vadd.f32 %v6327, %v6375
      %v6377 = vpop.f32.mrf.mxu0
      %v6378 = vadd.f32 %v6329, %v6377
      %6379 = vmatmul.bf16.gmra.mxu0 %v2744
      %v6380 = vpop.f32.mrf.mxu0
      %v6381 = vadd.f32 %v6332, %v6380
      %v6382 = vpop.f32.mrf.mxu0
      %v6383 = vadd.f32 %v6334, %v6382
      %6384 = vmatmul.bf16.gmra.mxu0 %v2752
      %v6385 = vpop.f32.mrf.mxu0
      %v6386 = vadd.f32 %v6337, %v6385
      %v6387 = vpop.f32.mrf.mxu0
      %v6388 = vadd.f32 %v6339, %v6387
      %6389 = vmatmul.bf16.gmra.mxu0 %v2760
      %v6390 = vpop.f32.mrf.mxu0
      %v6391 = vadd.f32 %v6342, %v6390
      %v6392 = vpop.f32.mrf.mxu0
      %v6393 = vadd.f32 %v6344, %v6392
      %6394 = vdwg.mxu0
      %6395 = vmatpush.bf16.msra.mxu0 %v5081
      %6396 = vmatpush.bf16.msra.mxu0 %v5073
      %6397 = vmatpush.bf16.msra.mxu0 %v5065
      %6398 = vmatpush.bf16.msra.mxu0 %v5057
      %6399 = vmatpush.bf16.msra.mxu0 %v5049
      %6400 = vmatpush.bf16.msra.mxu0 %v5041
      %6401 = vmatpush.bf16.msra.mxu0 %v5033
      %6402 = vmatpush.bf16.msra.mxu0 %v5025
      %6403 = vmatmul.bf16.gmra.mxu0 %v2705
      %v6404 = vpop.f32.mrf.mxu0
      %v6405 = vadd.f32 %v6356, %v6404
      %v6406 = vpop.f32.mrf.mxu0
      %v6407 = vadd.f32 %v6358, %v6406
      %6408 = vmatmul.bf16.gmra.mxu0 %v2713
      %v6409 = vpop.f32.mrf.mxu0
      %v6410 = vadd.f32 %v6361, %v6409
      %v6411 = vpop.f32.mrf.mxu0
      %v6412 = vadd.f32 %v6363, %v6411
      %6413 = vmatmul.bf16.gmra.mxu0 %v2721
      %v6414 = vpop.f32.mrf.mxu0
      %v6415 = vadd.f32 %v6366, %v6414
      %v6416 = vpop.f32.mrf.mxu0
      %v6417 = vadd.f32 %v6368, %v6416
      %6418 = vmatmul.bf16.gmra.mxu0 %v2729
      %v6419 = vpop.f32.mrf.mxu0
      %v6420 = vadd.f32 %v6371, %v6419
      %v6421 = vpop.f32.mrf.mxu0
      %v6422 = vadd.f32 %v6373, %v6421
      %6423 = vmatmul.bf16.gmra.mxu0 %v2737
      %v6424 = vpop.f32.mrf.mxu0
      %v6425 = vadd.f32 %v6376, %v6424
      %v6426 = vpop.f32.mrf.mxu0
      %v6427 = vadd.f32 %v6378, %v6426
      %6428 = vmatmul.bf16.gmra.mxu0 %v2745
      %v6429 = vpop.f32.mrf.mxu0
      %v6430 = vadd.f32 %v6381, %v6429
      %v6431 = vpop.f32.mrf.mxu0
      %v6432 = vadd.f32 %v6383, %v6431
      %6433 = vmatmul.bf16.gmra.mxu0 %v2753
      %v6434 = vpop.f32.mrf.mxu0
      %v6435 = vadd.f32 %v6386, %v6434
      %v6436 = vpop.f32.mrf.mxu0
      %v6437 = vadd.f32 %v6388, %v6436
      %6438 = vmatmul.bf16.gmra.mxu0 %v2761
      %v6439 = vpop.f32.mrf.mxu0
      %v6440 = vadd.f32 %v6391, %v6439
      %v6441 = vpop.f32.mrf.mxu0
      %v6442 = vadd.f32 %v6393, %v6441
      %6443 = vdwg.mxu0
      %6444 = vmatpush.bf16.msra.mxu0 %v5145
      %6445 = vmatpush.bf16.msra.mxu0 %v5137
      %6446 = vmatpush.bf16.msra.mxu0 %v5129
      %6447 = vmatpush.bf16.msra.mxu0 %v5121
      %6448 = vmatpush.bf16.msra.mxu0 %v5113
      %6449 = vmatpush.bf16.msra.mxu0 %v5105
      %6450 = vmatpush.bf16.msra.mxu0 %v5097
      %6451 = vmatpush.bf16.msra.mxu0 %v5089
      %6452 = vmatmul.bf16.gmra.mxu0 %v2706
      %v6453 = vpop.f32.mrf.mxu0
      %v6454 = vadd.f32 %v6405, %v6453
      %v6455 = vpop.f32.mrf.mxu0
      %v6456 = vadd.f32 %v6407, %v6455
      %6457 = vmatmul.bf16.gmra.mxu0 %v2714
      %v6458 = vpop.f32.mrf.mxu0
      %v6459 = vadd.f32 %v6410, %v6458
      %v6460 = vpop.f32.mrf.mxu0
      %v6461 = vadd.f32 %v6412, %v6460
      %6462 = vmatmul.bf16.gmra.mxu0 %v2722
      %v6463 = vpop.f32.mrf.mxu0
      %v6464 = vadd.f32 %v6415, %v6463
      %v6465 = vpop.f32.mrf.mxu0
      %v6466 = vadd.f32 %v6417, %v6465
      %6467 = vmatmul.bf16.gmra.mxu0 %v2730
      %v6468 = vpop.f32.mrf.mxu0
      %v6469 = vadd.f32 %v6420, %v6468
      %v6470 = vpop.f32.mrf.mxu0
      %v6471 = vadd.f32 %v6422, %v6470
      %6472 = vmatmul.bf16.gmra.mxu0 %v2738
      %v6473 = vpop.f32.mrf.mxu0
      %v6474 = vadd.f32 %v6425, %v6473
      %v6475 = vpop.f32.mrf.mxu0
      %v6476 = vadd.f32 %v6427, %v6475
      %6477 = vmatmul.bf16.gmra.mxu0 %v2746
      %v6478 = vpop.f32.mrf.mxu0
      %v6479 = vadd.f32 %v6430, %v6478
      %v6480 = vpop.f32.mrf.mxu0
      %v6481 = vadd.f32 %v6432, %v6480
      %6482 = vmatmul.bf16.gmra.mxu0 %v2754
      %v6483 = vpop.f32.mrf.mxu0
      %v6484 = vadd.f32 %v6435, %v6483
      %v6485 = vpop.f32.mrf.mxu0
      %v6486 = vadd.f32 %v6437, %v6485
      %6487 = vmatmul.bf16.gmra.mxu0 %v2762
      %v6488 = vpop.f32.mrf.mxu0
      %v6489 = vadd.f32 %v6440, %v6488
      %v6490 = vpop.f32.mrf.mxu0
      %v6491 = vadd.f32 %v6442, %v6490
      %6492 = vdwg.mxu0
      %6493 = vmatpush.bf16.msra.mxu0 %v5209
      %6494 = vmatpush.bf16.msra.mxu0 %v5201
      %6495 = vmatpush.bf16.msra.mxu0 %v5193
      %6496 = vmatpush.bf16.msra.mxu0 %v5185
      %6497 = vmatpush.bf16.msra.mxu0 %v5177
      %6498 = vmatpush.bf16.msra.mxu0 %v5169
      %6499 = vmatpush.bf16.msra.mxu0 %v5161
      %6500 = vmatpush.bf16.msra.mxu0 %v5153
      %6501 = vmatmul.bf16.gmra.mxu0 %v2707
      %v6502 = vpop.f32.mrf.mxu0
      %v6503 = vadd.f32 %v6454, %v6502
      %v6504 = vpop.f32.mrf.mxu0
      %v6505 = vadd.f32 %v6456, %v6504
      %6506 = vmatmul.bf16.gmra.mxu0 %v2715
      %v6507 = vpop.f32.mrf.mxu0
      %v6508 = vadd.f32 %v6459, %v6507
      %v6509 = vpop.f32.mrf.mxu0
      %v6510 = vadd.f32 %v6461, %v6509
      %6511 = vmatmul.bf16.gmra.mxu0 %v2723
      %v6512 = vpop.f32.mrf.mxu0
      %v6513 = vadd.f32 %v6464, %v6512
      %v6514 = vpop.f32.mrf.mxu0
      %v6515 = vadd.f32 %v6466, %v6514
      %6516 = vmatmul.bf16.gmra.mxu0 %v2731
      %v6517 = vpop.f32.mrf.mxu0
      %v6518 = vadd.f32 %v6469, %v6517
      %v6519 = vpop.f32.mrf.mxu0
      %v6520 = vadd.f32 %v6471, %v6519
      %6521 = vmatmul.bf16.gmra.mxu0 %v2739
      %v6522 = vpop.f32.mrf.mxu0
      %v6523 = vadd.f32 %v6474, %v6522
      %v6524 = vpop.f32.mrf.mxu0
      %v6525 = vadd.f32 %v6476, %v6524
      %6526 = vmatmul.bf16.gmra.mxu0 %v2747
      %v6527 = vpop.f32.mrf.mxu0
      %v6528 = vadd.f32 %v6479, %v6527
      %v6529 = vpop.f32.mrf.mxu0
      %v6530 = vadd.f32 %v6481, %v6529
      %6531 = vmatmul.bf16.gmra.mxu0 %v2755
      %v6532 = vpop.f32.mrf.mxu0
      %v6533 = vadd.f32 %v6484, %v6532
      %v6534 = vpop.f32.mrf.mxu0
      %v6535 = vadd.f32 %v6486, %v6534
      %6536 = vmatmul.bf16.gmra.mxu0 %v2763
      %v6537 = vpop.f32.mrf.mxu0
      %v6538 = vadd.f32 %v6489, %v6537
      %v6539 = vpop.f32.mrf.mxu0
      %v6540 = vadd.f32 %v6491, %v6539
      %6541 = vdwg.mxu0
      %6542 = vmatpush.bf16.msra.mxu0 %v5273
      %6543 = vmatpush.bf16.msra.mxu0 %v5265
      %6544 = vmatpush.bf16.msra.mxu0 %v5257
      %6545 = vmatpush.bf16.msra.mxu0 %v5249
      %6546 = vmatpush.bf16.msra.mxu0 %v5241
      %6547 = vmatpush.bf16.msra.mxu0 %v5233
      %6548 = vmatpush.bf16.msra.mxu0 %v5225
      %6549 = vmatpush.bf16.msra.mxu0 %v5217
      %6550 = vmatmul.bf16.gmra.mxu0 %v2708
      %v6551 = vpop.f32.mrf.mxu0
      %v6552 = vadd.f32 %v6503, %v6551
      %v6553 = vpop.f32.mrf.mxu0
      %v6554 = vadd.f32 %v6505, %v6553
      %6555 = vmatmul.bf16.gmra.mxu0 %v2716
      %v6556 = vpop.f32.mrf.mxu0
      %v6557 = vadd.f32 %v6508, %v6556
      %v6558 = vpop.f32.mrf.mxu0
      %v6559 = vadd.f32 %v6510, %v6558
      %6560 = vmatmul.bf16.gmra.mxu0 %v2724
      %v6561 = vpop.f32.mrf.mxu0
      %v6562 = vadd.f32 %v6513, %v6561
      %v6563 = vpop.f32.mrf.mxu0
      %v6564 = vadd.f32 %v6515, %v6563
      %6565 = vmatmul.bf16.gmra.mxu0 %v2732
      %v6566 = vpop.f32.mrf.mxu0
      %v6567 = vadd.f32 %v6518, %v6566
      %v6568 = vpop.f32.mrf.mxu0
      %v6569 = vadd.f32 %v6520, %v6568
      %6570 = vmatmul.bf16.gmra.mxu0 %v2740
      %v6571 = vpop.f32.mrf.mxu0
      %v6572 = vadd.f32 %v6523, %v6571
      %v6573 = vpop.f32.mrf.mxu0
      %v6574 = vadd.f32 %v6525, %v6573
      %6575 = vmatmul.bf16.gmra.mxu0 %v2748
      %v6576 = vpop.f32.mrf.mxu0
      %v6577 = vadd.f32 %v6528, %v6576
      %v6578 = vpop.f32.mrf.mxu0
      %v6579 = vadd.f32 %v6530, %v6578
      %6580 = vmatmul.bf16.gmra.mxu0 %v2756
      %v6581 = vpop.f32.mrf.mxu0
      %v6582 = vadd.f32 %v6533, %v6581
      %v6583 = vpop.f32.mrf.mxu0
      %v6584 = vadd.f32 %v6535, %v6583
      %6585 = vmatmul.bf16.gmra.mxu0 %v2764
      %v6586 = vpop.f32.mrf.mxu0
      %v6587 = vadd.f32 %v6538, %v6586
      %v6588 = vpop.f32.mrf.mxu0
      %v6589 = vadd.f32 %v6540, %v6588
      %6590 = vdwg.mxu0
      %6591 = vmatpush.bf16.msra.mxu0 %v5337
      %6592 = vmatpush.bf16.msra.mxu0 %v5329
      %6593 = vmatpush.bf16.msra.mxu0 %v5321
      %6594 = vmatpush.bf16.msra.mxu0 %v5313
      %6595 = vmatpush.bf16.msra.mxu0 %v5305
      %6596 = vmatpush.bf16.msra.mxu0 %v5297
      %6597 = vmatpush.bf16.msra.mxu0 %v5289
      %6598 = vmatpush.bf16.msra.mxu0 %v5281
      %6599 = vmatmul.bf16.gmra.mxu0 %v2709
      %v6600 = vpop.f32.mrf.mxu0
      %v6601 = vadd.f32 %v6552, %v6600
      %v6602 = vpop.f32.mrf.mxu0
      %v6603 = vadd.f32 %v6554, %v6602
      %6604 = vmatmul.bf16.gmra.mxu0 %v2717
      %v6605 = vpop.f32.mrf.mxu0
      %v6606 = vadd.f32 %v6557, %v6605
      %v6607 = vpop.f32.mrf.mxu0
      %v6608 = vadd.f32 %v6559, %v6607
      %6609 = vmatmul.bf16.gmra.mxu0 %v2725
      %v6610 = vpop.f32.mrf.mxu0
      %v6611 = vadd.f32 %v6562, %v6610
      %v6612 = vpop.f32.mrf.mxu0
      %v6613 = vadd.f32 %v6564, %v6612
      %6614 = vmatmul.bf16.gmra.mxu0 %v2733
      %v6615 = vpop.f32.mrf.mxu0
      %v6616 = vadd.f32 %v6567, %v6615
      %v6617 = vpop.f32.mrf.mxu0
      %v6618 = vadd.f32 %v6569, %v6617
      %6619 = vmatmul.bf16.gmra.mxu0 %v2741
      %v6620 = vpop.f32.mrf.mxu0
      %v6621 = vadd.f32 %v6572, %v6620
      %v6622 = vpop.f32.mrf.mxu0
      %v6623 = vadd.f32 %v6574, %v6622
      %6624 = vmatmul.bf16.gmra.mxu0 %v2749
      %v6625 = vpop.f32.mrf.mxu0
      %v6626 = vadd.f32 %v6577, %v6625
      %v6627 = vpop.f32.mrf.mxu0
      %v6628 = vadd.f32 %v6579, %v6627
      %6629 = vmatmul.bf16.gmra.mxu0 %v2757
      %v6630 = vpop.f32.mrf.mxu0
      %v6631 = vadd.f32 %v6582, %v6630
      %v6632 = vpop.f32.mrf.mxu0
      %v6633 = vadd.f32 %v6584, %v6632
      %6634 = vmatmul.bf16.gmra.mxu0 %v2765
      %v6635 = vpop.f32.mrf.mxu0
      %v6636 = vadd.f32 %v6587, %v6635
      %v6637 = vpop.f32.mrf.mxu0
      %v6638 = vadd.f32 %v6589, %v6637
      %6639 = vdwg.mxu0
      %6640 = vmatpush.bf16.msra.mxu0 %v4890
      %6641 = vmatpush.bf16.msra.mxu0 %v4882
      %6642 = vmatpush.bf16.msra.mxu0 %v4874
      %6643 = vmatpush.bf16.msra.mxu0 %v4866
      %6644 = vmatpush.bf16.msra.mxu0 %v4858
      %6645 = vmatpush.bf16.msra.mxu0 %v4850
      %6646 = vmatpush.bf16.msra.mxu0 %v4842
      %6647 = vmatpush.bf16.msra.mxu0 %v4834
      %6648 = vmatmul.bf16.gmra.mxu0 %v2702
      %v6649 = vpop.f32.mrf.mxu0
      %v6650 = vadd.f32 %v3282, %v6649
      %v6651 = vpop.f32.mrf.mxu0
      %v6652 = vadd.f32 %v3282, %v6651
      %6653 = vmatmul.bf16.gmra.mxu0 %v2710
      %v6654 = vpop.f32.mrf.mxu0
      %v6655 = vadd.f32 %v3282, %v6654
      %v6656 = vpop.f32.mrf.mxu0
      %v6657 = vadd.f32 %v3282, %v6656
      %6658 = vmatmul.bf16.gmra.mxu0 %v2718
      %v6659 = vpop.f32.mrf.mxu0
      %v6660 = vadd.f32 %v3282, %v6659
      %v6661 = vpop.f32.mrf.mxu0
      %v6662 = vadd.f32 %v3282, %v6661
      %6663 = vmatmul.bf16.gmra.mxu0 %v2726
      %v6664 = vpop.f32.mrf.mxu0
      %v6665 = vadd.f32 %v3282, %v6664
      %v6666 = vpop.f32.mrf.mxu0
      %v6667 = vadd.f32 %v3282, %v6666
      %6668 = vmatmul.bf16.gmra.mxu0 %v2734
      %v6669 = vpop.f32.mrf.mxu0
      %v6670 = vadd.f32 %v3282, %v6669
      %v6671 = vpop.f32.mrf.mxu0
      %v6672 = vadd.f32 %v3282, %v6671
      %6673 = vmatmul.bf16.gmra.mxu0 %v2742
      %v6674 = vpop.f32.mrf.mxu0
      %v6675 = vadd.f32 %v3282, %v6674
      %v6676 = vpop.f32.mrf.mxu0
      %v6677 = vadd.f32 %v3282, %v6676
      %6678 = vmatmul.bf16.gmra.mxu0 %v2750
      %v6679 = vpop.f32.mrf.mxu0
      %v6680 = vadd.f32 %v3282, %v6679
      %v6681 = vpop.f32.mrf.mxu0
      %v6682 = vadd.f32 %v3282, %v6681
      %6683 = vmatmul.bf16.gmra.mxu0 %v2758
      %v6684 = vpop.f32.mrf.mxu0
      %v6685 = vadd.f32 %v3282, %v6684
      %v6686 = vpop.f32.mrf.mxu0
      %v6687 = vadd.f32 %v3282, %v6686
      %6688 = vdwg.mxu0
      %6689 = vmatpush.bf16.msra.mxu0 %v4954
      %6690 = vmatpush.bf16.msra.mxu0 %v4946
      %6691 = vmatpush.bf16.msra.mxu0 %v4938
      %6692 = vmatpush.bf16.msra.mxu0 %v4930
      %6693 = vmatpush.bf16.msra.mxu0 %v4922
      %6694 = vmatpush.bf16.msra.mxu0 %v4914
      %6695 = vmatpush.bf16.msra.mxu0 %v4906
      %6696 = vmatpush.bf16.msra.mxu0 %v4898
      %6697 = vmatmul.bf16.gmra.mxu0 %v2703
      %v6698 = vpop.f32.mrf.mxu0
      %v6699 = vadd.f32 %v6650, %v6698
      %v6700 = vpop.f32.mrf.mxu0
      %v6701 = vadd.f32 %v6652, %v6700
      %6702 = vmatmul.bf16.gmra.mxu0 %v2711
      %v6703 = vpop.f32.mrf.mxu0
      %v6704 = vadd.f32 %v6655, %v6703
      %v6705 = vpop.f32.mrf.mxu0
      %v6706 = vadd.f32 %v6657, %v6705
      %6707 = vmatmul.bf16.gmra.mxu0 %v2719
      %v6708 = vpop.f32.mrf.mxu0
      %v6709 = vadd.f32 %v6660, %v6708
      %v6710 = vpop.f32.mrf.mxu0
      %v6711 = vadd.f32 %v6662, %v6710
      %6712 = vmatmul.bf16.gmra.mxu0 %v2727
      %v6713 = vpop.f32.mrf.mxu0
      %v6714 = vadd.f32 %v6665, %v6713
      %v6715 = vpop.f32.mrf.mxu0
      %v6716 = vadd.f32 %v6667, %v6715
      %6717 = vmatmul.bf16.gmra.mxu0 %v2735
      %v6718 = vpop.f32.mrf.mxu0
      %v6719 = vadd.f32 %v6670, %v6718
      %v6720 = vpop.f32.mrf.mxu0
      %v6721 = vadd.f32 %v6672, %v6720
      %6722 = vmatmul.bf16.gmra.mxu0 %v2743
      %v6723 = vpop.f32.mrf.mxu0
      %v6724 = vadd.f32 %v6675, %v6723
      %v6725 = vpop.f32.mrf.mxu0
      %v6726 = vadd.f32 %v6677, %v6725
      %6727 = vmatmul.bf16.gmra.mxu0 %v2751
      %v6728 = vpop.f32.mrf.mxu0
      %v6729 = vadd.f32 %v6680, %v6728
      %v6730 = vpop.f32.mrf.mxu0
      %v6731 = vadd.f32 %v6682, %v6730
      %6732 = vmatmul.bf16.gmra.mxu0 %v2759
      %v6733 = vpop.f32.mrf.mxu0
      %v6734 = vadd.f32 %v6685, %v6733
      %v6735 = vpop.f32.mrf.mxu0
      %v6736 = vadd.f32 %v6687, %v6735
      %6737 = vdwg.mxu0
      %6738 = vmatpush.bf16.msra.mxu0 %v5018
      %6739 = vmatpush.bf16.msra.mxu0 %v5010
      %6740 = vmatpush.bf16.msra.mxu0 %v5002
      %6741 = vmatpush.bf16.msra.mxu0 %v4994
      %6742 = vmatpush.bf16.msra.mxu0 %v4986
      %6743 = vmatpush.bf16.msra.mxu0 %v4978
      %6744 = vmatpush.bf16.msra.mxu0 %v4970
      %6745 = vmatpush.bf16.msra.mxu0 %v4962
      %6746 = vmatmul.bf16.gmra.mxu0 %v2704
      %v6747 = vpop.f32.mrf.mxu0
      %v6748 = vadd.f32 %v6699, %v6747
      %v6749 = vpop.f32.mrf.mxu0
      %v6750 = vadd.f32 %v6701, %v6749
      %6751 = vmatmul.bf16.gmra.mxu0 %v2712
      %v6752 = vpop.f32.mrf.mxu0
      %v6753 = vadd.f32 %v6704, %v6752
      %v6754 = vpop.f32.mrf.mxu0
      %v6755 = vadd.f32 %v6706, %v6754
      %6756 = vmatmul.bf16.gmra.mxu0 %v2720
      %v6757 = vpop.f32.mrf.mxu0
      %v6758 = vadd.f32 %v6709, %v6757
      %v6759 = vpop.f32.mrf.mxu0
      %v6760 = vadd.f32 %v6711, %v6759
      %6761 = vmatmul.bf16.gmra.mxu0 %v2728
      %v6762 = vpop.f32.mrf.mxu0
      %v6763 = vadd.f32 %v6714, %v6762
      %v6764 = vpop.f32.mrf.mxu0
      %v6765 = vadd.f32 %v6716, %v6764
      %6766 = vmatmul.bf16.gmra.mxu0 %v2736
      %v6767 = vpop.f32.mrf.mxu0
      %v6768 = vadd.f32 %v6719, %v6767
      %v6769 = vpop.f32.mrf.mxu0
      %v6770 = vadd.f32 %v6721, %v6769
      %6771 = vmatmul.bf16.gmra.mxu0 %v2744
      %v6772 = vpop.f32.mrf.mxu0
      %v6773 = vadd.f32 %v6724, %v6772
      %v6774 = vpop.f32.mrf.mxu0
      %v6775 = vadd.f32 %v6726, %v6774
      %6776 = vmatmul.bf16.gmra.mxu0 %v2752
      %v6777 = vpop.f32.mrf.mxu0
      %v6778 = vadd.f32 %v6729, %v6777
      %v6779 = vpop.f32.mrf.mxu0
      %v6780 = vadd.f32 %v6731, %v6779
      %6781 = vmatmul.bf16.gmra.mxu0 %v2760
      %v6782 = vpop.f32.mrf.mxu0
      %v6783 = vadd.f32 %v6734, %v6782
      %v6784 = vpop.f32.mrf.mxu0
      %v6785 = vadd.f32 %v6736, %v6784
      %6786 = vdwg.mxu0
      %6787 = vmatpush.bf16.msra.mxu0 %v5082
      %6788 = vmatpush.bf16.msra.mxu0 %v5074
      %6789 = vmatpush.bf16.msra.mxu0 %v5066
      %6790 = vmatpush.bf16.msra.mxu0 %v5058
      %6791 = vmatpush.bf16.msra.mxu0 %v5050
      %6792 = vmatpush.bf16.msra.mxu0 %v5042
      %6793 = vmatpush.bf16.msra.mxu0 %v5034
      %6794 = vmatpush.bf16.msra.mxu0 %v5026
      %6795 = vmatmul.bf16.gmra.mxu0 %v2705
      %v6796 = vpop.f32.mrf.mxu0
      %v6797 = vadd.f32 %v6748, %v6796
      %v6798 = vpop.f32.mrf.mxu0
      %v6799 = vadd.f32 %v6750, %v6798
      %6800 = vmatmul.bf16.gmra.mxu0 %v2713
      %v6801 = vpop.f32.mrf.mxu0
      %v6802 = vadd.f32 %v6753, %v6801
      %v6803 = vpop.f32.mrf.mxu0
      %v6804 = vadd.f32 %v6755, %v6803
      %6805 = vmatmul.bf16.gmra.mxu0 %v2721
      %v6806 = vpop.f32.mrf.mxu0
      %v6807 = vadd.f32 %v6758, %v6806
      %v6808 = vpop.f32.mrf.mxu0
      %v6809 = vadd.f32 %v6760, %v6808
      %6810 = vmatmul.bf16.gmra.mxu0 %v2729
      %v6811 = vpop.f32.mrf.mxu0
      %v6812 = vadd.f32 %v6763, %v6811
      %v6813 = vpop.f32.mrf.mxu0
      %v6814 = vadd.f32 %v6765, %v6813
      %6815 = vmatmul.bf16.gmra.mxu0 %v2737
      %v6816 = vpop.f32.mrf.mxu0
      %v6817 = vadd.f32 %v6768, %v6816
      %v6818 = vpop.f32.mrf.mxu0
      %v6819 = vadd.f32 %v6770, %v6818
      %6820 = vmatmul.bf16.gmra.mxu0 %v2745
      %v6821 = vpop.f32.mrf.mxu0
      %v6822 = vadd.f32 %v6773, %v6821
      %v6823 = vpop.f32.mrf.mxu0
      %v6824 = vadd.f32 %v6775, %v6823
      %6825 = vmatmul.bf16.gmra.mxu0 %v2753
      %v6826 = vpop.f32.mrf.mxu0
      %v6827 = vadd.f32 %v6778, %v6826
      %v6828 = vpop.f32.mrf.mxu0
      %v6829 = vadd.f32 %v6780, %v6828
      %6830 = vmatmul.bf16.gmra.mxu0 %v2761
      %v6831 = vpop.f32.mrf.mxu0
      %v6832 = vadd.f32 %v6783, %v6831
      %v6833 = vpop.f32.mrf.mxu0
      %v6834 = vadd.f32 %v6785, %v6833
      %6835 = vdwg.mxu0
      %6836 = vmatpush.bf16.msra.mxu0 %v5146
      %6837 = vmatpush.bf16.msra.mxu0 %v5138
      %6838 = vmatpush.bf16.msra.mxu0 %v5130
      %6839 = vmatpush.bf16.msra.mxu0 %v5122
      %6840 = vmatpush.bf16.msra.mxu0 %v5114
      %6841 = vmatpush.bf16.msra.mxu0 %v5106
      %6842 = vmatpush.bf16.msra.mxu0 %v5098
      %6843 = vmatpush.bf16.msra.mxu0 %v5090
      %6844 = vmatmul.bf16.gmra.mxu0 %v2706
      %v6845 = vpop.f32.mrf.mxu0
      %v6846 = vadd.f32 %v6797, %v6845
      %v6847 = vpop.f32.mrf.mxu0
      %v6848 = vadd.f32 %v6799, %v6847
      %6849 = vmatmul.bf16.gmra.mxu0 %v2714
      %v6850 = vpop.f32.mrf.mxu0
      %v6851 = vadd.f32 %v6802, %v6850
      %v6852 = vpop.f32.mrf.mxu0
      %v6853 = vadd.f32 %v6804, %v6852
      %6854 = vmatmul.bf16.gmra.mxu0 %v2722
      %v6855 = vpop.f32.mrf.mxu0
      %v6856 = vadd.f32 %v6807, %v6855
      %v6857 = vpop.f32.mrf.mxu0
      %v6858 = vadd.f32 %v6809, %v6857
      %6859 = vmatmul.bf16.gmra.mxu0 %v2730
      %v6860 = vpop.f32.mrf.mxu0
      %v6861 = vadd.f32 %v6812, %v6860
      %v6862 = vpop.f32.mrf.mxu0
      %v6863 = vadd.f32 %v6814, %v6862
      %6864 = vmatmul.bf16.gmra.mxu0 %v2738
      %v6865 = vpop.f32.mrf.mxu0
      %v6866 = vadd.f32 %v6817, %v6865
      %v6867 = vpop.f32.mrf.mxu0
      %v6868 = vadd.f32 %v6819, %v6867
      %6869 = vmatmul.bf16.gmra.mxu0 %v2746
      %v6870 = vpop.f32.mrf.mxu0
      %v6871 = vadd.f32 %v6822, %v6870
      %v6872 = vpop.f32.mrf.mxu0
      %v6873 = vadd.f32 %v6824, %v6872
      %6874 = vmatmul.bf16.gmra.mxu0 %v2754
      %v6875 = vpop.f32.mrf.mxu0
      %v6876 = vadd.f32 %v6827, %v6875
      %v6877 = vpop.f32.mrf.mxu0
      %v6878 = vadd.f32 %v6829, %v6877
      %6879 = vmatmul.bf16.gmra.mxu0 %v2762
      %v6880 = vpop.f32.mrf.mxu0
      %v6881 = vadd.f32 %v6832, %v6880
      %v6882 = vpop.f32.mrf.mxu0
      %v6883 = vadd.f32 %v6834, %v6882
      %6884 = vdwg.mxu0
      %6885 = vmatpush.bf16.msra.mxu0 %v5210
      %6886 = vmatpush.bf16.msra.mxu0 %v5202
      %6887 = vmatpush.bf16.msra.mxu0 %v5194
      %6888 = vmatpush.bf16.msra.mxu0 %v5186
      %6889 = vmatpush.bf16.msra.mxu0 %v5178
      %6890 = vmatpush.bf16.msra.mxu0 %v5170
      %6891 = vmatpush.bf16.msra.mxu0 %v5162
      %6892 = vmatpush.bf16.msra.mxu0 %v5154
      %6893 = vmatmul.bf16.gmra.mxu0 %v2707
      %v6894 = vpop.f32.mrf.mxu0
      %v6895 = vadd.f32 %v6846, %v6894
      %v6896 = vpop.f32.mrf.mxu0
      %v6897 = vadd.f32 %v6848, %v6896
      %6898 = vmatmul.bf16.gmra.mxu0 %v2715
      %v6899 = vpop.f32.mrf.mxu0
      %v6900 = vadd.f32 %v6851, %v6899
      %v6901 = vpop.f32.mrf.mxu0
      %v6902 = vadd.f32 %v6853, %v6901
      %6903 = vmatmul.bf16.gmra.mxu0 %v2723
      %v6904 = vpop.f32.mrf.mxu0
      %v6905 = vadd.f32 %v6856, %v6904
      %v6906 = vpop.f32.mrf.mxu0
      %v6907 = vadd.f32 %v6858, %v6906
      %6908 = vmatmul.bf16.gmra.mxu0 %v2731
      %v6909 = vpop.f32.mrf.mxu0
      %v6910 = vadd.f32 %v6861, %v6909
      %v6911 = vpop.f32.mrf.mxu0
      %v6912 = vadd.f32 %v6863, %v6911
      %6913 = vmatmul.bf16.gmra.mxu0 %v2739
      %v6914 = vpop.f32.mrf.mxu0
      %v6915 = vadd.f32 %v6866, %v6914
      %v6916 = vpop.f32.mrf.mxu0
      %v6917 = vadd.f32 %v6868, %v6916
      %6918 = vmatmul.bf16.gmra.mxu0 %v2747
      %v6919 = vpop.f32.mrf.mxu0
      %v6920 = vadd.f32 %v6871, %v6919
      %v6921 = vpop.f32.mrf.mxu0
      %v6922 = vadd.f32 %v6873, %v6921
      %6923 = vmatmul.bf16.gmra.mxu0 %v2755
      %v6924 = vpop.f32.mrf.mxu0
      %v6925 = vadd.f32 %v6876, %v6924
      %v6926 = vpop.f32.mrf.mxu0
      %v6927 = vadd.f32 %v6878, %v6926
      %6928 = vmatmul.bf16.gmra.mxu0 %v2763
      %v6929 = vpop.f32.mrf.mxu0
      %v6930 = vadd.f32 %v6881, %v6929
      %v6931 = vpop.f32.mrf.mxu0
      %v6932 = vadd.f32 %v6883, %v6931
      %6933 = vdwg.mxu0
      %6934 = vmatpush.bf16.msra.mxu0 %v5274
      %6935 = vmatpush.bf16.msra.mxu0 %v5266
      %6936 = vmatpush.bf16.msra.mxu0 %v5258
      %6937 = vmatpush.bf16.msra.mxu0 %v5250
      %6938 = vmatpush.bf16.msra.mxu0 %v5242
      %6939 = vmatpush.bf16.msra.mxu0 %v5234
      %6940 = vmatpush.bf16.msra.mxu0 %v5226
      %6941 = vmatpush.bf16.msra.mxu0 %v5218
      %6942 = vmatmul.bf16.gmra.mxu0 %v2708
      %v6943 = vpop.f32.mrf.mxu0
      %v6944 = vadd.f32 %v6895, %v6943
      %v6945 = vpop.f32.mrf.mxu0
      %v6946 = vadd.f32 %v6897, %v6945
      %6947 = vmatmul.bf16.gmra.mxu0 %v2716
      %v6948 = vpop.f32.mrf.mxu0
      %v6949 = vadd.f32 %v6900, %v6948
      %v6950 = vpop.f32.mrf.mxu0
      %v6951 = vadd.f32 %v6902, %v6950
      %6952 = vmatmul.bf16.gmra.mxu0 %v2724
      %v6953 = vpop.f32.mrf.mxu0
      %v6954 = vadd.f32 %v6905, %v6953
      %v6955 = vpop.f32.mrf.mxu0
      %v6956 = vadd.f32 %v6907, %v6955
      %6957 = vmatmul.bf16.gmra.mxu0 %v2732
      %v6958 = vpop.f32.mrf.mxu0
      %v6959 = vadd.f32 %v6910, %v6958
      %v6960 = vpop.f32.mrf.mxu0
      %v6961 = vadd.f32 %v6912, %v6960
      %6962 = vmatmul.bf16.gmra.mxu0 %v2740
      %v6963 = vpop.f32.mrf.mxu0
      %v6964 = vadd.f32 %v6915, %v6963
      %v6965 = vpop.f32.mrf.mxu0
      %v6966 = vadd.f32 %v6917, %v6965
      %6967 = vmatmul.bf16.gmra.mxu0 %v2748
      %v6968 = vpop.f32.mrf.mxu0
      %v6969 = vadd.f32 %v6920, %v6968
      %v6970 = vpop.f32.mrf.mxu0
      %v6971 = vadd.f32 %v6922, %v6970
      %6972 = vmatmul.bf16.gmra.mxu0 %v2756
      %v6973 = vpop.f32.mrf.mxu0
      %v6974 = vadd.f32 %v6925, %v6973
      %v6975 = vpop.f32.mrf.mxu0
      %v6976 = vadd.f32 %v6927, %v6975
      %6977 = vmatmul.bf16.gmra.mxu0 %v2764
      %v6978 = vpop.f32.mrf.mxu0
      %v6979 = vadd.f32 %v6930, %v6978
      %v6980 = vpop.f32.mrf.mxu0
      %v6981 = vadd.f32 %v6932, %v6980
      %6982 = vdwg.mxu0
      %6983 = vmatpush.bf16.msra.mxu0 %v5338
      %6984 = vmatpush.bf16.msra.mxu0 %v5330
      %6985 = vmatpush.bf16.msra.mxu0 %v5322
      %6986 = vmatpush.bf16.msra.mxu0 %v5314
      %6987 = vmatpush.bf16.msra.mxu0 %v5306
      %6988 = vmatpush.bf16.msra.mxu0 %v5298
      %6989 = vmatpush.bf16.msra.mxu0 %v5290
      %6990 = vmatpush.bf16.msra.mxu0 %v5282
      %6991 = vmatmul.bf16.gmra.mxu0 %v2709
      %v6992 = vpop.f32.mrf.mxu0
      %v6993 = vadd.f32 %v6944, %v6992
      %v6994 = vpop.f32.mrf.mxu0
      %v6995 = vadd.f32 %v6946, %v6994
      %6996 = vmatmul.bf16.gmra.mxu0 %v2717
      %v6997 = vpop.f32.mrf.mxu0
      %v6998 = vadd.f32 %v6949, %v6997
      %v6999 = vpop.f32.mrf.mxu0
      %v7000 = vadd.f32 %v6951, %v6999
      %7001 = vmatmul.bf16.gmra.mxu0 %v2725
      %v7002 = vpop.f32.mrf.mxu0
      %v7003 = vadd.f32 %v6954, %v7002
      %v7004 = vpop.f32.mrf.mxu0
      %v7005 = vadd.f32 %v6956, %v7004
      %7006 = vmatmul.bf16.gmra.mxu0 %v2733
      %v7007 = vpop.f32.mrf.mxu0
      %v7008 = vadd.f32 %v6959, %v7007
      %v7009 = vpop.f32.mrf.mxu0
      %v7010 = vadd.f32 %v6961, %v7009
      %7011 = vmatmul.bf16.gmra.mxu0 %v2741
      %v7012 = vpop.f32.mrf.mxu0
      %v7013 = vadd.f32 %v6964, %v7012
      %v7014 = vpop.f32.mrf.mxu0
      %v7015 = vadd.f32 %v6966, %v7014
      %7016 = vmatmul.bf16.gmra.mxu0 %v2749
      %v7017 = vpop.f32.mrf.mxu0
      %v7018 = vadd.f32 %v6969, %v7017
      %v7019 = vpop.f32.mrf.mxu0
      %v7020 = vadd.f32 %v6971, %v7019
      %7021 = vmatmul.bf16.gmra.mxu0 %v2757
      %v7022 = vpop.f32.mrf.mxu0
      %v7023 = vadd.f32 %v6974, %v7022
      %v7024 = vpop.f32.mrf.mxu0
      %v7025 = vadd.f32 %v6976, %v7024
      %7026 = vmatmul.bf16.gmra.mxu0 %v2765
      %v7027 = vpop.f32.mrf.mxu0
      %v7028 = vadd.f32 %v6979, %v7027
      %v7029 = vpop.f32.mrf.mxu0
      %v7030 = vadd.f32 %v6981, %v7029
      %7031 = vdwg.mxu0
      %7032 = vmatpush.bf16.msra.mxu0 %v4891
      %7033 = vmatpush.bf16.msra.mxu0 %v4883
      %7034 = vmatpush.bf16.msra.mxu0 %v4875
      %7035 = vmatpush.bf16.msra.mxu0 %v4867
      %7036 = vmatpush.bf16.msra.mxu0 %v4859
      %7037 = vmatpush.bf16.msra.mxu0 %v4851
      %7038 = vmatpush.bf16.msra.mxu0 %v4843
      %7039 = vmatpush.bf16.msra.mxu0 %v4835
      %7040 = vmatmul.bf16.gmra.mxu0 %v2702
      %v7041 = vpop.f32.mrf.mxu0
      %v7042 = vadd.f32 %v3283, %v7041
      %v7043 = vpop.f32.mrf.mxu0
      %v7044 = vadd.f32 %v3283, %v7043
      %7045 = vmatmul.bf16.gmra.mxu0 %v2710
      %v7046 = vpop.f32.mrf.mxu0
      %v7047 = vadd.f32 %v3283, %v7046
      %v7048 = vpop.f32.mrf.mxu0
      %v7049 = vadd.f32 %v3283, %v7048
      %7050 = vmatmul.bf16.gmra.mxu0 %v2718
      %v7051 = vpop.f32.mrf.mxu0
      %v7052 = vadd.f32 %v3283, %v7051
      %v7053 = vpop.f32.mrf.mxu0
      %v7054 = vadd.f32 %v3283, %v7053
      %7055 = vmatmul.bf16.gmra.mxu0 %v2726
      %v7056 = vpop.f32.mrf.mxu0
      %v7057 = vadd.f32 %v3283, %v7056
      %v7058 = vpop.f32.mrf.mxu0
      %v7059 = vadd.f32 %v3283, %v7058
      %7060 = vmatmul.bf16.gmra.mxu0 %v2734
      %v7061 = vpop.f32.mrf.mxu0
      %v7062 = vadd.f32 %v3283, %v7061
      %v7063 = vpop.f32.mrf.mxu0
      %v7064 = vadd.f32 %v3283, %v7063
      %7065 = vmatmul.bf16.gmra.mxu0 %v2742
      %v7066 = vpop.f32.mrf.mxu0
      %v7067 = vadd.f32 %v3283, %v7066
      %v7068 = vpop.f32.mrf.mxu0
      %v7069 = vadd.f32 %v3283, %v7068
      %7070 = vmatmul.bf16.gmra.mxu0 %v2750
      %v7071 = vpop.f32.mrf.mxu0
      %v7072 = vadd.f32 %v3283, %v7071
      %v7073 = vpop.f32.mrf.mxu0
      %v7074 = vadd.f32 %v3283, %v7073
      %7075 = vmatmul.bf16.gmra.mxu0 %v2758
      %v7076 = vpop.f32.mrf.mxu0
      %v7077 = vadd.f32 %v3283, %v7076
      %v7078 = vpop.f32.mrf.mxu0
      %v7079 = vadd.f32 %v3283, %v7078
      %7080 = vdwg.mxu0
      %7081 = vmatpush.bf16.msra.mxu0 %v4955
      %7082 = vmatpush.bf16.msra.mxu0 %v4947
      %7083 = vmatpush.bf16.msra.mxu0 %v4939
      %7084 = vmatpush.bf16.msra.mxu0 %v4931
      %7085 = vmatpush.bf16.msra.mxu0 %v4923
      %7086 = vmatpush.bf16.msra.mxu0 %v4915
      %7087 = vmatpush.bf16.msra.mxu0 %v4907
      %7088 = vmatpush.bf16.msra.mxu0 %v4899
      %7089 = vmatmul.bf16.gmra.mxu0 %v2703
      %v7090 = vpop.f32.mrf.mxu0
      %v7091 = vadd.f32 %v7042, %v7090
      %v7092 = vpop.f32.mrf.mxu0
      %v7093 = vadd.f32 %v7044, %v7092
      %7094 = vmatmul.bf16.gmra.mxu0 %v2711
      %v7095 = vpop.f32.mrf.mxu0
      %v7096 = vadd.f32 %v7047, %v7095
      %v7097 = vpop.f32.mrf.mxu0
      %v7098 = vadd.f32 %v7049, %v7097
      %7099 = vmatmul.bf16.gmra.mxu0 %v2719
      %v7100 = vpop.f32.mrf.mxu0
      %v7101 = vadd.f32 %v7052, %v7100
      %v7102 = vpop.f32.mrf.mxu0
      %v7103 = vadd.f32 %v7054, %v7102
      %7104 = vmatmul.bf16.gmra.mxu0 %v2727
      %v7105 = vpop.f32.mrf.mxu0
      %v7106 = vadd.f32 %v7057, %v7105
      %v7107 = vpop.f32.mrf.mxu0
      %v7108 = vadd.f32 %v7059, %v7107
      %7109 = vmatmul.bf16.gmra.mxu0 %v2735
      %v7110 = vpop.f32.mrf.mxu0
      %v7111 = vadd.f32 %v7062, %v7110
      %v7112 = vpop.f32.mrf.mxu0
      %v7113 = vadd.f32 %v7064, %v7112
      %7114 = vmatmul.bf16.gmra.mxu0 %v2743
      %v7115 = vpop.f32.mrf.mxu0
      %v7116 = vadd.f32 %v7067, %v7115
      %v7117 = vpop.f32.mrf.mxu0
      %v7118 = vadd.f32 %v7069, %v7117
      %7119 = vmatmul.bf16.gmra.mxu0 %v2751
      %v7120 = vpop.f32.mrf.mxu0
      %v7121 = vadd.f32 %v7072, %v7120
      %v7122 = vpop.f32.mrf.mxu0
      %v7123 = vadd.f32 %v7074, %v7122
      %7124 = vmatmul.bf16.gmra.mxu0 %v2759
      %v7125 = vpop.f32.mrf.mxu0
      %v7126 = vadd.f32 %v7077, %v7125
      %v7127 = vpop.f32.mrf.mxu0
      %v7128 = vadd.f32 %v7079, %v7127
      %7129 = vdwg.mxu0
      %7130 = vmatpush.bf16.msra.mxu0 %v5019
      %7131 = vmatpush.bf16.msra.mxu0 %v5011
      %7132 = vmatpush.bf16.msra.mxu0 %v5003
      %7133 = vmatpush.bf16.msra.mxu0 %v4995
      %7134 = vmatpush.bf16.msra.mxu0 %v4987
      %7135 = vmatpush.bf16.msra.mxu0 %v4979
      %7136 = vmatpush.bf16.msra.mxu0 %v4971
      %7137 = vmatpush.bf16.msra.mxu0 %v4963
      %7138 = vmatmul.bf16.gmra.mxu0 %v2704
      %v7139 = vpop.f32.mrf.mxu0
      %v7140 = vadd.f32 %v7091, %v7139
      %v7141 = vpop.f32.mrf.mxu0
      %v7142 = vadd.f32 %v7093, %v7141
      %7143 = vmatmul.bf16.gmra.mxu0 %v2712
      %v7144 = vpop.f32.mrf.mxu0
      %v7145 = vadd.f32 %v7096, %v7144
      %v7146 = vpop.f32.mrf.mxu0
      %v7147 = vadd.f32 %v7098, %v7146
      %7148 = vmatmul.bf16.gmra.mxu0 %v2720
      %v7149 = vpop.f32.mrf.mxu0
      %v7150 = vadd.f32 %v7101, %v7149
      %v7151 = vpop.f32.mrf.mxu0
      %v7152 = vadd.f32 %v7103, %v7151
      %7153 = vmatmul.bf16.gmra.mxu0 %v2728
      %v7154 = vpop.f32.mrf.mxu0
      %v7155 = vadd.f32 %v7106, %v7154
      %v7156 = vpop.f32.mrf.mxu0
      %v7157 = vadd.f32 %v7108, %v7156
      %7158 = vmatmul.bf16.gmra.mxu0 %v2736
      %v7159 = vpop.f32.mrf.mxu0
      %v7160 = vadd.f32 %v7111, %v7159
      %v7161 = vpop.f32.mrf.mxu0
      %v7162 = vadd.f32 %v7113, %v7161
      %7163 = vmatmul.bf16.gmra.mxu0 %v2744
      %v7164 = vpop.f32.mrf.mxu0
      %v7165 = vadd.f32 %v7116, %v7164
      %v7166 = vpop.f32.mrf.mxu0
      %v7167 = vadd.f32 %v7118, %v7166
      %7168 = vmatmul.bf16.gmra.mxu0 %v2752
      %v7169 = vpop.f32.mrf.mxu0
      %v7170 = vadd.f32 %v7121, %v7169
      %v7171 = vpop.f32.mrf.mxu0
      %v7172 = vadd.f32 %v7123, %v7171
      %7173 = vmatmul.bf16.gmra.mxu0 %v2760
      %v7174 = vpop.f32.mrf.mxu0
      %v7175 = vadd.f32 %v7126, %v7174
      %v7176 = vpop.f32.mrf.mxu0
      %v7177 = vadd.f32 %v7128, %v7176
      %7178 = vdwg.mxu0
      %7179 = vmatpush.bf16.msra.mxu0 %v5083
      %7180 = vmatpush.bf16.msra.mxu0 %v5075
      %7181 = vmatpush.bf16.msra.mxu0 %v5067
      %7182 = vmatpush.bf16.msra.mxu0 %v5059
      %7183 = vmatpush.bf16.msra.mxu0 %v5051
      %7184 = vmatpush.bf16.msra.mxu0 %v5043
      %7185 = vmatpush.bf16.msra.mxu0 %v5035
      %7186 = vmatpush.bf16.msra.mxu0 %v5027
      %7187 = vmatmul.bf16.gmra.mxu0 %v2705
      %v7188 = vpop.f32.mrf.mxu0
      %v7189 = vadd.f32 %v7140, %v7188
      %v7190 = vpop.f32.mrf.mxu0
      %v7191 = vadd.f32 %v7142, %v7190
      %7192 = vmatmul.bf16.gmra.mxu0 %v2713
      %v7193 = vpop.f32.mrf.mxu0
      %v7194 = vadd.f32 %v7145, %v7193
      %v7195 = vpop.f32.mrf.mxu0
      %v7196 = vadd.f32 %v7147, %v7195
      %7197 = vmatmul.bf16.gmra.mxu0 %v2721
      %v7198 = vpop.f32.mrf.mxu0
      %v7199 = vadd.f32 %v7150, %v7198
      %v7200 = vpop.f32.mrf.mxu0
      %v7201 = vadd.f32 %v7152, %v7200
      %7202 = vmatmul.bf16.gmra.mxu0 %v2729
      %v7203 = vpop.f32.mrf.mxu0
      %v7204 = vadd.f32 %v7155, %v7203
      %v7205 = vpop.f32.mrf.mxu0
      %v7206 = vadd.f32 %v7157, %v7205
      %7207 = vmatmul.bf16.gmra.mxu0 %v2737
      %v7208 = vpop.f32.mrf.mxu0
      %v7209 = vadd.f32 %v7160, %v7208
      %v7210 = vpop.f32.mrf.mxu0
      %v7211 = vadd.f32 %v7162, %v7210
      %7212 = vmatmul.bf16.gmra.mxu0 %v2745
      %v7213 = vpop.f32.mrf.mxu0
      %v7214 = vadd.f32 %v7165, %v7213
      %v7215 = vpop.f32.mrf.mxu0
      %v7216 = vadd.f32 %v7167, %v7215
      %7217 = vmatmul.bf16.gmra.mxu0 %v2753
      %v7218 = vpop.f32.mrf.mxu0
      %v7219 = vadd.f32 %v7170, %v7218
      %v7220 = vpop.f32.mrf.mxu0
      %v7221 = vadd.f32 %v7172, %v7220
      %7222 = vmatmul.bf16.gmra.mxu0 %v2761
      %v7223 = vpop.f32.mrf.mxu0
      %v7224 = vadd.f32 %v7175, %v7223
      %v7225 = vpop.f32.mrf.mxu0
      %v7226 = vadd.f32 %v7177, %v7225
      %7227 = vdwg.mxu0
      %7228 = vmatpush.bf16.msra.mxu0 %v5147
      %7229 = vmatpush.bf16.msra.mxu0 %v5139
      %7230 = vmatpush.bf16.msra.mxu0 %v5131
      %7231 = vmatpush.bf16.msra.mxu0 %v5123
      %7232 = vmatpush.bf16.msra.mxu0 %v5115
      %7233 = vmatpush.bf16.msra.mxu0 %v5107
      %7234 = vmatpush.bf16.msra.mxu0 %v5099
      %7235 = vmatpush.bf16.msra.mxu0 %v5091
      %7236 = vmatmul.bf16.gmra.mxu0 %v2706
      %v7237 = vpop.f32.mrf.mxu0
      %v7238 = vadd.f32 %v7189, %v7237
      %v7239 = vpop.f32.mrf.mxu0
      %v7240 = vadd.f32 %v7191, %v7239
      %7241 = vmatmul.bf16.gmra.mxu0 %v2714
      %v7242 = vpop.f32.mrf.mxu0
      %v7243 = vadd.f32 %v7194, %v7242
      %v7244 = vpop.f32.mrf.mxu0
      %v7245 = vadd.f32 %v7196, %v7244
      %7246 = vmatmul.bf16.gmra.mxu0 %v2722
      %v7247 = vpop.f32.mrf.mxu0
      %v7248 = vadd.f32 %v7199, %v7247
      %v7249 = vpop.f32.mrf.mxu0
      %v7250 = vadd.f32 %v7201, %v7249
      %7251 = vmatmul.bf16.gmra.mxu0 %v2730
      %v7252 = vpop.f32.mrf.mxu0
      %v7253 = vadd.f32 %v7204, %v7252
      %v7254 = vpop.f32.mrf.mxu0
      %v7255 = vadd.f32 %v7206, %v7254
      %7256 = vmatmul.bf16.gmra.mxu0 %v2738
      %v7257 = vpop.f32.mrf.mxu0
      %v7258 = vadd.f32 %v7209, %v7257
      %v7259 = vpop.f32.mrf.mxu0
      %v7260 = vadd.f32 %v7211, %v7259
      %7261 = vmatmul.bf16.gmra.mxu0 %v2746
      %v7262 = vpop.f32.mrf.mxu0
      %v7263 = vadd.f32 %v7214, %v7262
      %v7264 = vpop.f32.mrf.mxu0
      %v7265 = vadd.f32 %v7216, %v7264
      %7266 = vmatmul.bf16.gmra.mxu0 %v2754
      %v7267 = vpop.f32.mrf.mxu0
      %v7268 = vadd.f32 %v7219, %v7267
      %v7269 = vpop.f32.mrf.mxu0
      %v7270 = vadd.f32 %v7221, %v7269
      %7271 = vmatmul.bf16.gmra.mxu0 %v2762
      %v7272 = vpop.f32.mrf.mxu0
      %v7273 = vadd.f32 %v7224, %v7272
      %v7274 = vpop.f32.mrf.mxu0
      %v7275 = vadd.f32 %v7226, %v7274
      %7276 = vdwg.mxu0
      %7277 = vmatpush.bf16.msra.mxu0 %v5211
      %7278 = vmatpush.bf16.msra.mxu0 %v5203
      %7279 = vmatpush.bf16.msra.mxu0 %v5195
      %7280 = vmatpush.bf16.msra.mxu0 %v5187
      %7281 = vmatpush.bf16.msra.mxu0 %v5179
      %7282 = vmatpush.bf16.msra.mxu0 %v5171
      %7283 = vmatpush.bf16.msra.mxu0 %v5163
      %7284 = vmatpush.bf16.msra.mxu0 %v5155
      %7285 = vmatmul.bf16.gmra.mxu0 %v2707
      %v7286 = vpop.f32.mrf.mxu0
      %v7287 = vadd.f32 %v7238, %v7286
      %v7288 = vpop.f32.mrf.mxu0
      %v7289 = vadd.f32 %v7240, %v7288
      %7290 = vmatmul.bf16.gmra.mxu0 %v2715
      %v7291 = vpop.f32.mrf.mxu0
      %v7292 = vadd.f32 %v7243, %v7291
      %v7293 = vpop.f32.mrf.mxu0
      %v7294 = vadd.f32 %v7245, %v7293
      %7295 = vmatmul.bf16.gmra.mxu0 %v2723
      %v7296 = vpop.f32.mrf.mxu0
      %v7297 = vadd.f32 %v7248, %v7296
      %v7298 = vpop.f32.mrf.mxu0
      %v7299 = vadd.f32 %v7250, %v7298
      %7300 = vmatmul.bf16.gmra.mxu0 %v2731
      %v7301 = vpop.f32.mrf.mxu0
      %v7302 = vadd.f32 %v7253, %v7301
      %v7303 = vpop.f32.mrf.mxu0
      %v7304 = vadd.f32 %v7255, %v7303
      %7305 = vmatmul.bf16.gmra.mxu0 %v2739
      %v7306 = vpop.f32.mrf.mxu0
      %v7307 = vadd.f32 %v7258, %v7306
      %v7308 = vpop.f32.mrf.mxu0
      %v7309 = vadd.f32 %v7260, %v7308
      %7310 = vmatmul.bf16.gmra.mxu0 %v2747
      %v7311 = vpop.f32.mrf.mxu0
      %v7312 = vadd.f32 %v7263, %v7311
      %v7313 = vpop.f32.mrf.mxu0
      %v7314 = vadd.f32 %v7265, %v7313
      %7315 = vmatmul.bf16.gmra.mxu0 %v2755
      %v7316 = vpop.f32.mrf.mxu0
      %v7317 = vadd.f32 %v7268, %v7316
      %v7318 = vpop.f32.mrf.mxu0
      %v7319 = vadd.f32 %v7270, %v7318
      %7320 = vmatmul.bf16.gmra.mxu0 %v2763
      %v7321 = vpop.f32.mrf.mxu0
      %v7322 = vadd.f32 %v7273, %v7321
      %v7323 = vpop.f32.mrf.mxu0
      %v7324 = vadd.f32 %v7275, %v7323
      %7325 = vdwg.mxu0
      %7326 = vmatpush.bf16.msra.mxu0 %v5275
      %7327 = vmatpush.bf16.msra.mxu0 %v5267
      %7328 = vmatpush.bf16.msra.mxu0 %v5259
      %7329 = vmatpush.bf16.msra.mxu0 %v5251
      %7330 = vmatpush.bf16.msra.mxu0 %v5243
      %7331 = vmatpush.bf16.msra.mxu0 %v5235
      %7332 = vmatpush.bf16.msra.mxu0 %v5227
      %7333 = vmatpush.bf16.msra.mxu0 %v5219
      %7334 = vmatmul.bf16.gmra.mxu0 %v2708
      %v7335 = vpop.f32.mrf.mxu0
      %v7336 = vadd.f32 %v7287, %v7335
      %v7337 = vpop.f32.mrf.mxu0
      %v7338 = vadd.f32 %v7289, %v7337
      %7339 = vmatmul.bf16.gmra.mxu0 %v2716
      %v7340 = vpop.f32.mrf.mxu0
      %v7341 = vadd.f32 %v7292, %v7340
      %v7342 = vpop.f32.mrf.mxu0
      %v7343 = vadd.f32 %v7294, %v7342
      %7344 = vmatmul.bf16.gmra.mxu0 %v2724
      %v7345 = vpop.f32.mrf.mxu0
      %v7346 = vadd.f32 %v7297, %v7345
      %v7347 = vpop.f32.mrf.mxu0
      %v7348 = vadd.f32 %v7299, %v7347
      %7349 = vmatmul.bf16.gmra.mxu0 %v2732
      %v7350 = vpop.f32.mrf.mxu0
      %v7351 = vadd.f32 %v7302, %v7350
      %v7352 = vpop.f32.mrf.mxu0
      %v7353 = vadd.f32 %v7304, %v7352
      %7354 = vmatmul.bf16.gmra.mxu0 %v2740
      %v7355 = vpop.f32.mrf.mxu0
      %v7356 = vadd.f32 %v7307, %v7355
      %v7357 = vpop.f32.mrf.mxu0
      %v7358 = vadd.f32 %v7309, %v7357
      %7359 = vmatmul.bf16.gmra.mxu0 %v2748
      %v7360 = vpop.f32.mrf.mxu0
      %v7361 = vadd.f32 %v7312, %v7360
      %v7362 = vpop.f32.mrf.mxu0
      %v7363 = vadd.f32 %v7314, %v7362
      %7364 = vmatmul.bf16.gmra.mxu0 %v2756
      %v7365 = vpop.f32.mrf.mxu0
      %v7366 = vadd.f32 %v7317, %v7365
      %v7367 = vpop.f32.mrf.mxu0
      %v7368 = vadd.f32 %v7319, %v7367
      %7369 = vmatmul.bf16.gmra.mxu0 %v2764
      %v7370 = vpop.f32.mrf.mxu0
      %v7371 = vadd.f32 %v7322, %v7370
      %v7372 = vpop.f32.mrf.mxu0
      %v7373 = vadd.f32 %v7324, %v7372
      %7374 = vdwg.mxu0
      %7375 = vmatpush.bf16.msra.mxu0 %v5339
      %7376 = vmatpush.bf16.msra.mxu0 %v5331
      %7377 = vmatpush.bf16.msra.mxu0 %v5323
      %7378 = vmatpush.bf16.msra.mxu0 %v5315
      %7379 = vmatpush.bf16.msra.mxu0 %v5307
      %7380 = vmatpush.bf16.msra.mxu0 %v5299
      %7381 = vmatpush.bf16.msra.mxu0 %v5291
      %7382 = vmatpush.bf16.msra.mxu0 %v5283
      %7383 = vmatmul.bf16.gmra.mxu0 %v2709
      %v7384 = vpop.f32.mrf.mxu0
      %v7385 = vadd.f32 %v7336, %v7384
      %v7386 = vpop.f32.mrf.mxu0
      %v7387 = vadd.f32 %v7338, %v7386
      %7388 = vmatmul.bf16.gmra.mxu0 %v2717
      %v7389 = vpop.f32.mrf.mxu0
      %v7390 = vadd.f32 %v7341, %v7389
      %v7391 = vpop.f32.mrf.mxu0
      %v7392 = vadd.f32 %v7343, %v7391
      %7393 = vmatmul.bf16.gmra.mxu0 %v2725
      %v7394 = vpop.f32.mrf.mxu0
      %v7395 = vadd.f32 %v7346, %v7394
      %v7396 = vpop.f32.mrf.mxu0
      %v7397 = vadd.f32 %v7348, %v7396
      %7398 = vmatmul.bf16.gmra.mxu0 %v2733
      %v7399 = vpop.f32.mrf.mxu0
      %v7400 = vadd.f32 %v7351, %v7399
      %v7401 = vpop.f32.mrf.mxu0
      %v7402 = vadd.f32 %v7353, %v7401
      %7403 = vmatmul.bf16.gmra.mxu0 %v2741
      %v7404 = vpop.f32.mrf.mxu0
      %v7405 = vadd.f32 %v7356, %v7404
      %v7406 = vpop.f32.mrf.mxu0
      %v7407 = vadd.f32 %v7358, %v7406
      %7408 = vmatmul.bf16.gmra.mxu0 %v2749
      %v7409 = vpop.f32.mrf.mxu0
      %v7410 = vadd.f32 %v7361, %v7409
      %v7411 = vpop.f32.mrf.mxu0
      %v7412 = vadd.f32 %v7363, %v7411
      %7413 = vmatmul.bf16.gmra.mxu0 %v2757
      %v7414 = vpop.f32.mrf.mxu0
      %v7415 = vadd.f32 %v7366, %v7414
      %v7416 = vpop.f32.mrf.mxu0
      %v7417 = vadd.f32 %v7368, %v7416
      %7418 = vmatmul.bf16.gmra.mxu0 %v2765
      %v7419 = vpop.f32.mrf.mxu0
      %v7420 = vadd.f32 %v7371, %v7419
      %v7421 = vpop.f32.mrf.mxu0
      %v7422 = vadd.f32 %v7373, %v7421
      %7423 = vdwg.mxu0
      %7424 = vmatpush.bf16.msra.mxu0 %v4892
      %7425 = vmatpush.bf16.msra.mxu0 %v4884
      %7426 = vmatpush.bf16.msra.mxu0 %v4876
      %7427 = vmatpush.bf16.msra.mxu0 %v4868
      %7428 = vmatpush.bf16.msra.mxu0 %v4860
      %7429 = vmatpush.bf16.msra.mxu0 %v4852
      %7430 = vmatpush.bf16.msra.mxu0 %v4844
      %7431 = vmatpush.bf16.msra.mxu0 %v4836
      %7432 = vmatmul.bf16.gmra.mxu0 %v2702
      %v7433 = vpop.f32.mrf.mxu0
      %v7434 = vadd.f32 %v3284, %v7433
      %v7435 = vpop.f32.mrf.mxu0
      %v7436 = vadd.f32 %v3284, %v7435
      %7437 = vmatmul.bf16.gmra.mxu0 %v2710
      %v7438 = vpop.f32.mrf.mxu0
      %v7439 = vadd.f32 %v3284, %v7438
      %v7440 = vpop.f32.mrf.mxu0
      %v7441 = vadd.f32 %v3284, %v7440
      %7442 = vmatmul.bf16.gmra.mxu0 %v2718
      %v7443 = vpop.f32.mrf.mxu0
      %v7444 = vadd.f32 %v3284, %v7443
      %v7445 = vpop.f32.mrf.mxu0
      %v7446 = vadd.f32 %v3284, %v7445
      %7447 = vmatmul.bf16.gmra.mxu0 %v2726
      %v7448 = vpop.f32.mrf.mxu0
      %v7449 = vadd.f32 %v3284, %v7448
      %v7450 = vpop.f32.mrf.mxu0
      %v7451 = vadd.f32 %v3284, %v7450
      %7452 = vmatmul.bf16.gmra.mxu0 %v2734
      %v7453 = vpop.f32.mrf.mxu0
      %v7454 = vadd.f32 %v3284, %v7453
      %v7455 = vpop.f32.mrf.mxu0
      %v7456 = vadd.f32 %v3284, %v7455
      %7457 = vmatmul.bf16.gmra.mxu0 %v2742
      %v7458 = vpop.f32.mrf.mxu0
      %v7459 = vadd.f32 %v3284, %v7458
      %v7460 = vpop.f32.mrf.mxu0
      %v7461 = vadd.f32 %v3284, %v7460
      %7462 = vmatmul.bf16.gmra.mxu0 %v2750
      %v7463 = vpop.f32.mrf.mxu0
      %v7464 = vadd.f32 %v3284, %v7463
      %v7465 = vpop.f32.mrf.mxu0
      %v7466 = vadd.f32 %v3284, %v7465
      %7467 = vmatmul.bf16.gmra.mxu0 %v2758
      %v7468 = vpop.f32.mrf.mxu0
      %v7469 = vadd.f32 %v3284, %v7468
      %v7470 = vpop.f32.mrf.mxu0
      %v7471 = vadd.f32 %v3284, %v7470
      %7472 = vdwg.mxu0
      %7473 = vmatpush.bf16.msra.mxu0 %v4956
      %7474 = vmatpush.bf16.msra.mxu0 %v4948
      %7475 = vmatpush.bf16.msra.mxu0 %v4940
      %7476 = vmatpush.bf16.msra.mxu0 %v4932
      %7477 = vmatpush.bf16.msra.mxu0 %v4924
      %7478 = vmatpush.bf16.msra.mxu0 %v4916
      %7479 = vmatpush.bf16.msra.mxu0 %v4908
      %7480 = vmatpush.bf16.msra.mxu0 %v4900
      %7481 = vmatmul.bf16.gmra.mxu0 %v2703
      %v7482 = vpop.f32.mrf.mxu0
      %v7483 = vadd.f32 %v7434, %v7482
      %v7484 = vpop.f32.mrf.mxu0
      %v7485 = vadd.f32 %v7436, %v7484
      %7486 = vmatmul.bf16.gmra.mxu0 %v2711
      %v7487 = vpop.f32.mrf.mxu0
      %v7488 = vadd.f32 %v7439, %v7487
      %v7489 = vpop.f32.mrf.mxu0
      %v7490 = vadd.f32 %v7441, %v7489
      %7491 = vmatmul.bf16.gmra.mxu0 %v2719
      %v7492 = vpop.f32.mrf.mxu0
      %v7493 = vadd.f32 %v7444, %v7492
      %v7494 = vpop.f32.mrf.mxu0
      %v7495 = vadd.f32 %v7446, %v7494
      %7496 = vmatmul.bf16.gmra.mxu0 %v2727
      %v7497 = vpop.f32.mrf.mxu0
      %v7498 = vadd.f32 %v7449, %v7497
      %v7499 = vpop.f32.mrf.mxu0
      %v7500 = vadd.f32 %v7451, %v7499
      %7501 = vmatmul.bf16.gmra.mxu0 %v2735
      %v7502 = vpop.f32.mrf.mxu0
      %v7503 = vadd.f32 %v7454, %v7502
      %v7504 = vpop.f32.mrf.mxu0
      %v7505 = vadd.f32 %v7456, %v7504
      %7506 = vmatmul.bf16.gmra.mxu0 %v2743
      %v7507 = vpop.f32.mrf.mxu0
      %v7508 = vadd.f32 %v7459, %v7507
      %v7509 = vpop.f32.mrf.mxu0
      %v7510 = vadd.f32 %v7461, %v7509
      %7511 = vmatmul.bf16.gmra.mxu0 %v2751
      %v7512 = vpop.f32.mrf.mxu0
      %v7513 = vadd.f32 %v7464, %v7512
      %v7514 = vpop.f32.mrf.mxu0
      %v7515 = vadd.f32 %v7466, %v7514
      %7516 = vmatmul.bf16.gmra.mxu0 %v2759
      %v7517 = vpop.f32.mrf.mxu0
      %v7518 = vadd.f32 %v7469, %v7517
      %v7519 = vpop.f32.mrf.mxu0
      %v7520 = vadd.f32 %v7471, %v7519
      %7521 = vdwg.mxu0
      %7522 = vmatpush.bf16.msra.mxu0 %v5020
      %7523 = vmatpush.bf16.msra.mxu0 %v5012
      %7524 = vmatpush.bf16.msra.mxu0 %v5004
      %7525 = vmatpush.bf16.msra.mxu0 %v4996
      %7526 = vmatpush.bf16.msra.mxu0 %v4988
      %7527 = vmatpush.bf16.msra.mxu0 %v4980
      %7528 = vmatpush.bf16.msra.mxu0 %v4972
      %7529 = vmatpush.bf16.msra.mxu0 %v4964
      %7530 = vmatmul.bf16.gmra.mxu0 %v2704
      %v7531 = vpop.f32.mrf.mxu0
      %v7532 = vadd.f32 %v7483, %v7531
      %v7533 = vpop.f32.mrf.mxu0
      %v7534 = vadd.f32 %v7485, %v7533
      %7535 = vmatmul.bf16.gmra.mxu0 %v2712
      %v7536 = vpop.f32.mrf.mxu0
      %v7537 = vadd.f32 %v7488, %v7536
      %v7538 = vpop.f32.mrf.mxu0
      %v7539 = vadd.f32 %v7490, %v7538
      %7540 = vmatmul.bf16.gmra.mxu0 %v2720
      %v7541 = vpop.f32.mrf.mxu0
      %v7542 = vadd.f32 %v7493, %v7541
      %v7543 = vpop.f32.mrf.mxu0
      %v7544 = vadd.f32 %v7495, %v7543
      %7545 = vmatmul.bf16.gmra.mxu0 %v2728
      %v7546 = vpop.f32.mrf.mxu0
      %v7547 = vadd.f32 %v7498, %v7546
      %v7548 = vpop.f32.mrf.mxu0
      %v7549 = vadd.f32 %v7500, %v7548
      %7550 = vmatmul.bf16.gmra.mxu0 %v2736
      %v7551 = vpop.f32.mrf.mxu0
      %v7552 = vadd.f32 %v7503, %v7551
      %v7553 = vpop.f32.mrf.mxu0
      %v7554 = vadd.f32 %v7505, %v7553
      %7555 = vmatmul.bf16.gmra.mxu0 %v2744
      %v7556 = vpop.f32.mrf.mxu0
      %v7557 = vadd.f32 %v7508, %v7556
      %v7558 = vpop.f32.mrf.mxu0
      %v7559 = vadd.f32 %v7510, %v7558
      %7560 = vmatmul.bf16.gmra.mxu0 %v2752
      %v7561 = vpop.f32.mrf.mxu0
      %v7562 = vadd.f32 %v7513, %v7561
      %v7563 = vpop.f32.mrf.mxu0
      %v7564 = vadd.f32 %v7515, %v7563
      %7565 = vmatmul.bf16.gmra.mxu0 %v2760
      %v7566 = vpop.f32.mrf.mxu0
      %v7567 = vadd.f32 %v7518, %v7566
      %v7568 = vpop.f32.mrf.mxu0
      %v7569 = vadd.f32 %v7520, %v7568
      %7570 = vdwg.mxu0
      %7571 = vmatpush.bf16.msra.mxu0 %v5084
      %7572 = vmatpush.bf16.msra.mxu0 %v5076
      %7573 = vmatpush.bf16.msra.mxu0 %v5068
      %7574 = vmatpush.bf16.msra.mxu0 %v5060
      %7575 = vmatpush.bf16.msra.mxu0 %v5052
      %7576 = vmatpush.bf16.msra.mxu0 %v5044
      %7577 = vmatpush.bf16.msra.mxu0 %v5036
      %7578 = vmatpush.bf16.msra.mxu0 %v5028
      %7579 = vmatmul.bf16.gmra.mxu0 %v2705
      %v7580 = vpop.f32.mrf.mxu0
      %v7581 = vadd.f32 %v7532, %v7580
      %v7582 = vpop.f32.mrf.mxu0
      %v7583 = vadd.f32 %v7534, %v7582
      %7584 = vmatmul.bf16.gmra.mxu0 %v2713
      %v7585 = vpop.f32.mrf.mxu0
      %v7586 = vadd.f32 %v7537, %v7585
      %v7587 = vpop.f32.mrf.mxu0
      %v7588 = vadd.f32 %v7539, %v7587
      %7589 = vmatmul.bf16.gmra.mxu0 %v2721
      %v7590 = vpop.f32.mrf.mxu0
      %v7591 = vadd.f32 %v7542, %v7590
      %v7592 = vpop.f32.mrf.mxu0
      %v7593 = vadd.f32 %v7544, %v7592
      %7594 = vmatmul.bf16.gmra.mxu0 %v2729
      %v7595 = vpop.f32.mrf.mxu0
      %v7596 = vadd.f32 %v7547, %v7595
      %v7597 = vpop.f32.mrf.mxu0
      %v7598 = vadd.f32 %v7549, %v7597
      %7599 = vmatmul.bf16.gmra.mxu0 %v2737
      %v7600 = vpop.f32.mrf.mxu0
      %v7601 = vadd.f32 %v7552, %v7600
      %v7602 = vpop.f32.mrf.mxu0
      %v7603 = vadd.f32 %v7554, %v7602
      %7604 = vmatmul.bf16.gmra.mxu0 %v2745
      %v7605 = vpop.f32.mrf.mxu0
      %v7606 = vadd.f32 %v7557, %v7605
      %v7607 = vpop.f32.mrf.mxu0
      %v7608 = vadd.f32 %v7559, %v7607
      %7609 = vmatmul.bf16.gmra.mxu0 %v2753
      %v7610 = vpop.f32.mrf.mxu0
      %v7611 = vadd.f32 %v7562, %v7610
      %v7612 = vpop.f32.mrf.mxu0
      %v7613 = vadd.f32 %v7564, %v7612
      %7614 = vmatmul.bf16.gmra.mxu0 %v2761
      %v7615 = vpop.f32.mrf.mxu0
      %v7616 = vadd.f32 %v7567, %v7615
      %v7617 = vpop.f32.mrf.mxu0
      %v7618 = vadd.f32 %v7569, %v7617
      %7619 = vdwg.mxu0
      %7620 = vmatpush.bf16.msra.mxu0 %v5148
      %7621 = vmatpush.bf16.msra.mxu0 %v5140
      %7622 = vmatpush.bf16.msra.mxu0 %v5132
      %7623 = vmatpush.bf16.msra.mxu0 %v5124
      %7624 = vmatpush.bf16.msra.mxu0 %v5116
      %7625 = vmatpush.bf16.msra.mxu0 %v5108
      %7626 = vmatpush.bf16.msra.mxu0 %v5100
      %7627 = vmatpush.bf16.msra.mxu0 %v5092
      %7628 = vmatmul.bf16.gmra.mxu0 %v2706
      %v7629 = vpop.f32.mrf.mxu0
      %v7630 = vadd.f32 %v7581, %v7629
      %v7631 = vpop.f32.mrf.mxu0
      %v7632 = vadd.f32 %v7583, %v7631
      %7633 = vmatmul.bf16.gmra.mxu0 %v2714
      %v7634 = vpop.f32.mrf.mxu0
      %v7635 = vadd.f32 %v7586, %v7634
      %v7636 = vpop.f32.mrf.mxu0
      %v7637 = vadd.f32 %v7588, %v7636
      %7638 = vmatmul.bf16.gmra.mxu0 %v2722
      %v7639 = vpop.f32.mrf.mxu0
      %v7640 = vadd.f32 %v7591, %v7639
      %v7641 = vpop.f32.mrf.mxu0
      %v7642 = vadd.f32 %v7593, %v7641
      %7643 = vmatmul.bf16.gmra.mxu0 %v2730
      %v7644 = vpop.f32.mrf.mxu0
      %v7645 = vadd.f32 %v7596, %v7644
      %v7646 = vpop.f32.mrf.mxu0
      %v7647 = vadd.f32 %v7598, %v7646
      %7648 = vmatmul.bf16.gmra.mxu0 %v2738
      %v7649 = vpop.f32.mrf.mxu0
      %v7650 = vadd.f32 %v7601, %v7649
      %v7651 = vpop.f32.mrf.mxu0
      %v7652 = vadd.f32 %v7603, %v7651
      %7653 = vmatmul.bf16.gmra.mxu0 %v2746
      %v7654 = vpop.f32.mrf.mxu0
      %v7655 = vadd.f32 %v7606, %v7654
      %v7656 = vpop.f32.mrf.mxu0
      %v7657 = vadd.f32 %v7608, %v7656
      %7658 = vmatmul.bf16.gmra.mxu0 %v2754
      %v7659 = vpop.f32.mrf.mxu0
      %v7660 = vadd.f32 %v7611, %v7659
      %v7661 = vpop.f32.mrf.mxu0
      %v7662 = vadd.f32 %v7613, %v7661
      %7663 = vmatmul.bf16.gmra.mxu0 %v2762
      %v7664 = vpop.f32.mrf.mxu0
      %v7665 = vadd.f32 %v7616, %v7664
      %v7666 = vpop.f32.mrf.mxu0
      %v7667 = vadd.f32 %v7618, %v7666
      %7668 = vdwg.mxu0
      %7669 = vmatpush.bf16.msra.mxu0 %v5212
      %7670 = vmatpush.bf16.msra.mxu0 %v5204
      %7671 = vmatpush.bf16.msra.mxu0 %v5196
      %7672 = vmatpush.bf16.msra.mxu0 %v5188
      %7673 = vmatpush.bf16.msra.mxu0 %v5180
      %7674 = vmatpush.bf16.msra.mxu0 %v5172
      %7675 = vmatpush.bf16.msra.mxu0 %v5164
      %7676 = vmatpush.bf16.msra.mxu0 %v5156
      %7677 = vmatmul.bf16.gmra.mxu0 %v2707
      %v7678 = vpop.f32.mrf.mxu0
      %v7679 = vadd.f32 %v7630, %v7678
      %v7680 = vpop.f32.mrf.mxu0
      %v7681 = vadd.f32 %v7632, %v7680
      %7682 = vmatmul.bf16.gmra.mxu0 %v2715
      %v7683 = vpop.f32.mrf.mxu0
      %v7684 = vadd.f32 %v7635, %v7683
      %v7685 = vpop.f32.mrf.mxu0
      %v7686 = vadd.f32 %v7637, %v7685
      %7687 = vmatmul.bf16.gmra.mxu0 %v2723
      %v7688 = vpop.f32.mrf.mxu0
      %v7689 = vadd.f32 %v7640, %v7688
      %v7690 = vpop.f32.mrf.mxu0
      %v7691 = vadd.f32 %v7642, %v7690
      %7692 = vmatmul.bf16.gmra.mxu0 %v2731
      %v7693 = vpop.f32.mrf.mxu0
      %v7694 = vadd.f32 %v7645, %v7693
      %v7695 = vpop.f32.mrf.mxu0
      %v7696 = vadd.f32 %v7647, %v7695
      %7697 = vmatmul.bf16.gmra.mxu0 %v2739
      %v7698 = vpop.f32.mrf.mxu0
      %v7699 = vadd.f32 %v7650, %v7698
      %v7700 = vpop.f32.mrf.mxu0
      %v7701 = vadd.f32 %v7652, %v7700
      %7702 = vmatmul.bf16.gmra.mxu0 %v2747
      %v7703 = vpop.f32.mrf.mxu0
      %v7704 = vadd.f32 %v7655, %v7703
      %v7705 = vpop.f32.mrf.mxu0
      %v7706 = vadd.f32 %v7657, %v7705
      %7707 = vmatmul.bf16.gmra.mxu0 %v2755
      %v7708 = vpop.f32.mrf.mxu0
      %v7709 = vadd.f32 %v7660, %v7708
      %v7710 = vpop.f32.mrf.mxu0
      %v7711 = vadd.f32 %v7662, %v7710
      %7712 = vmatmul.bf16.gmra.mxu0 %v2763
      %v7713 = vpop.f32.mrf.mxu0
      %v7714 = vadd.f32 %v7665, %v7713
      %v7715 = vpop.f32.mrf.mxu0
      %v7716 = vadd.f32 %v7667, %v7715
      %7717 = vdwg.mxu0
      %7718 = vmatpush.bf16.msra.mxu0 %v5276
      %7719 = vmatpush.bf16.msra.mxu0 %v5268
      %7720 = vmatpush.bf16.msra.mxu0 %v5260
      %7721 = vmatpush.bf16.msra.mxu0 %v5252
      %7722 = vmatpush.bf16.msra.mxu0 %v5244
      %7723 = vmatpush.bf16.msra.mxu0 %v5236
      %7724 = vmatpush.bf16.msra.mxu0 %v5228
      %7725 = vmatpush.bf16.msra.mxu0 %v5220
      %7726 = vmatmul.bf16.gmra.mxu0 %v2708
      %v7727 = vpop.f32.mrf.mxu0
      %v7728 = vadd.f32 %v7679, %v7727
      %v7729 = vpop.f32.mrf.mxu0
      %v7730 = vadd.f32 %v7681, %v7729
      %7731 = vmatmul.bf16.gmra.mxu0 %v2716
      %v7732 = vpop.f32.mrf.mxu0
      %v7733 = vadd.f32 %v7684, %v7732
      %v7734 = vpop.f32.mrf.mxu0
      %v7735 = vadd.f32 %v7686, %v7734
      %7736 = vmatmul.bf16.gmra.mxu0 %v2724
      %v7737 = vpop.f32.mrf.mxu0
      %v7738 = vadd.f32 %v7689, %v7737
      %v7739 = vpop.f32.mrf.mxu0
      %v7740 = vadd.f32 %v7691, %v7739
      %7741 = vmatmul.bf16.gmra.mxu0 %v2732
      %v7742 = vpop.f32.mrf.mxu0
      %v7743 = vadd.f32 %v7694, %v7742
      %v7744 = vpop.f32.mrf.mxu0
      %v7745 = vadd.f32 %v7696, %v7744
      %7746 = vmatmul.bf16.gmra.mxu0 %v2740
      %v7747 = vpop.f32.mrf.mxu0
      %v7748 = vadd.f32 %v7699, %v7747
      %v7749 = vpop.f32.mrf.mxu0
      %v7750 = vadd.f32 %v7701, %v7749
      %7751 = vmatmul.bf16.gmra.mxu0 %v2748
      %v7752 = vpop.f32.mrf.mxu0
      %v7753 = vadd.f32 %v7704, %v7752
      %v7754 = vpop.f32.mrf.mxu0
      %v7755 = vadd.f32 %v7706, %v7754
      %7756 = vmatmul.bf16.gmra.mxu0 %v2756
      %v7757 = vpop.f32.mrf.mxu0
      %v7758 = vadd.f32 %v7709, %v7757
      %v7759 = vpop.f32.mrf.mxu0
      %v7760 = vadd.f32 %v7711, %v7759
      %7761 = vmatmul.bf16.gmra.mxu0 %v2764
      %v7762 = vpop.f32.mrf.mxu0
      %v7763 = vadd.f32 %v7714, %v7762
      %v7764 = vpop.f32.mrf.mxu0
      %v7765 = vadd.f32 %v7716, %v7764
      %7766 = vdwg.mxu0
      %7767 = vmatpush.bf16.msra.mxu0 %v5340
      %7768 = vmatpush.bf16.msra.mxu0 %v5332
      %7769 = vmatpush.bf16.msra.mxu0 %v5324
      %7770 = vmatpush.bf16.msra.mxu0 %v5316
      %7771 = vmatpush.bf16.msra.mxu0 %v5308
      %7772 = vmatpush.bf16.msra.mxu0 %v5300
      %7773 = vmatpush.bf16.msra.mxu0 %v5292
      %7774 = vmatpush.bf16.msra.mxu0 %v5284
      %7775 = vmatmul.bf16.gmra.mxu0 %v2709
      %v7776 = vpop.f32.mrf.mxu0
      %v7777 = vadd.f32 %v7728, %v7776
      %v7778 = vpop.f32.mrf.mxu0
      %v7779 = vadd.f32 %v7730, %v7778
      %7780 = vmatmul.bf16.gmra.mxu0 %v2717
      %v7781 = vpop.f32.mrf.mxu0
      %v7782 = vadd.f32 %v7733, %v7781
      %v7783 = vpop.f32.mrf.mxu0
      %v7784 = vadd.f32 %v7735, %v7783
      %7785 = vmatmul.bf16.gmra.mxu0 %v2725
      %v7786 = vpop.f32.mrf.mxu0
      %v7787 = vadd.f32 %v7738, %v7786
      %v7788 = vpop.f32.mrf.mxu0
      %v7789 = vadd.f32 %v7740, %v7788
      %7790 = vmatmul.bf16.gmra.mxu0 %v2733
      %v7791 = vpop.f32.mrf.mxu0
      %v7792 = vadd.f32 %v7743, %v7791
      %v7793 = vpop.f32.mrf.mxu0
      %v7794 = vadd.f32 %v7745, %v7793
      %7795 = vmatmul.bf16.gmra.mxu0 %v2741
      %v7796 = vpop.f32.mrf.mxu0
      %v7797 = vadd.f32 %v7748, %v7796
      %v7798 = vpop.f32.mrf.mxu0
      %v7799 = vadd.f32 %v7750, %v7798
      %7800 = vmatmul.bf16.gmra.mxu0 %v2749
      %v7801 = vpop.f32.mrf.mxu0
      %v7802 = vadd.f32 %v7753, %v7801
      %v7803 = vpop.f32.mrf.mxu0
      %v7804 = vadd.f32 %v7755, %v7803
      %7805 = vmatmul.bf16.gmra.mxu0 %v2757
      %v7806 = vpop.f32.mrf.mxu0
      %v7807 = vadd.f32 %v7758, %v7806
      %v7808 = vpop.f32.mrf.mxu0
      %v7809 = vadd.f32 %v7760, %v7808
      %7810 = vmatmul.bf16.gmra.mxu0 %v2765
      %v7811 = vpop.f32.mrf.mxu0
      %v7812 = vadd.f32 %v7763, %v7811
      %v7813 = vpop.f32.mrf.mxu0
      %v7814 = vadd.f32 %v7765, %v7813
      %7815 = vdwg.mxu0
      %7816 = vmatpush.bf16.msra.mxu0 %v4893
      %7817 = vmatpush.bf16.msra.mxu0 %v4885
      %7818 = vmatpush.bf16.msra.mxu0 %v4877
      %7819 = vmatpush.bf16.msra.mxu0 %v4869
      %7820 = vmatpush.bf16.msra.mxu0 %v4861
      %7821 = vmatpush.bf16.msra.mxu0 %v4853
      %7822 = vmatpush.bf16.msra.mxu0 %v4845
      %7823 = vmatpush.bf16.msra.mxu0 %v4837
      %7824 = vmatmul.bf16.gmra.mxu0 %v2702
      %v7825 = vpop.f32.mrf.mxu0
      %v7826 = vadd.f32 %v3285, %v7825
      %v7827 = vpop.f32.mrf.mxu0
      %v7828 = vadd.f32 %v3285, %v7827
      %7829 = vmatmul.bf16.gmra.mxu0 %v2710
      %v7830 = vpop.f32.mrf.mxu0
      %v7831 = vadd.f32 %v3285, %v7830
      %v7832 = vpop.f32.mrf.mxu0
      %v7833 = vadd.f32 %v3285, %v7832
      %7834 = vmatmul.bf16.gmra.mxu0 %v2718
      %v7835 = vpop.f32.mrf.mxu0
      %v7836 = vadd.f32 %v3285, %v7835
      %v7837 = vpop.f32.mrf.mxu0
      %v7838 = vadd.f32 %v3285, %v7837
      %7839 = vmatmul.bf16.gmra.mxu0 %v2726
      %v7840 = vpop.f32.mrf.mxu0
      %v7841 = vadd.f32 %v3285, %v7840
      %v7842 = vpop.f32.mrf.mxu0
      %v7843 = vadd.f32 %v3285, %v7842
      %7844 = vmatmul.bf16.gmra.mxu0 %v2734
      %v7845 = vpop.f32.mrf.mxu0
      %v7846 = vadd.f32 %v3285, %v7845
      %v7847 = vpop.f32.mrf.mxu0
      %v7848 = vadd.f32 %v3285, %v7847
      %7849 = vmatmul.bf16.gmra.mxu0 %v2742
      %v7850 = vpop.f32.mrf.mxu0
      %v7851 = vadd.f32 %v3285, %v7850
      %v7852 = vpop.f32.mrf.mxu0
      %v7853 = vadd.f32 %v3285, %v7852
      %7854 = vmatmul.bf16.gmra.mxu0 %v2750
      %v7855 = vpop.f32.mrf.mxu0
      %v7856 = vadd.f32 %v3285, %v7855
      %v7857 = vpop.f32.mrf.mxu0
      %v7858 = vadd.f32 %v3285, %v7857
      %7859 = vmatmul.bf16.gmra.mxu0 %v2758
      %v7860 = vpop.f32.mrf.mxu0
      %v7861 = vadd.f32 %v3285, %v7860
      %v7862 = vpop.f32.mrf.mxu0
      %v7863 = vadd.f32 %v3285, %v7862
      %7864 = vdwg.mxu0
      %7865 = vmatpush.bf16.msra.mxu0 %v4957
      %7866 = vmatpush.bf16.msra.mxu0 %v4949
      %7867 = vmatpush.bf16.msra.mxu0 %v4941
      %7868 = vmatpush.bf16.msra.mxu0 %v4933
      %7869 = vmatpush.bf16.msra.mxu0 %v4925
      %7870 = vmatpush.bf16.msra.mxu0 %v4917
      %7871 = vmatpush.bf16.msra.mxu0 %v4909
      %7872 = vmatpush.bf16.msra.mxu0 %v4901
      %7873 = vmatmul.bf16.gmra.mxu0 %v2703
      %v7874 = vpop.f32.mrf.mxu0
      %v7875 = vadd.f32 %v7826, %v7874
      %v7876 = vpop.f32.mrf.mxu0
      %v7877 = vadd.f32 %v7828, %v7876
      %7878 = vmatmul.bf16.gmra.mxu0 %v2711
      %v7879 = vpop.f32.mrf.mxu0
      %v7880 = vadd.f32 %v7831, %v7879
      %v7881 = vpop.f32.mrf.mxu0
      %v7882 = vadd.f32 %v7833, %v7881
      %7883 = vmatmul.bf16.gmra.mxu0 %v2719
      %v7884 = vpop.f32.mrf.mxu0
      %v7885 = vadd.f32 %v7836, %v7884
      %v7886 = vpop.f32.mrf.mxu0
      %v7887 = vadd.f32 %v7838, %v7886
      %7888 = vmatmul.bf16.gmra.mxu0 %v2727
      %v7889 = vpop.f32.mrf.mxu0
      %v7890 = vadd.f32 %v7841, %v7889
      %v7891 = vpop.f32.mrf.mxu0
      %v7892 = vadd.f32 %v7843, %v7891
      %7893 = vmatmul.bf16.gmra.mxu0 %v2735
      %v7894 = vpop.f32.mrf.mxu0
      %v7895 = vadd.f32 %v7846, %v7894
      %v7896 = vpop.f32.mrf.mxu0
      %v7897 = vadd.f32 %v7848, %v7896
      %7898 = vmatmul.bf16.gmra.mxu0 %v2743
      %v7899 = vpop.f32.mrf.mxu0
      %v7900 = vadd.f32 %v7851, %v7899
      %v7901 = vpop.f32.mrf.mxu0
      %v7902 = vadd.f32 %v7853, %v7901
      %7903 = vmatmul.bf16.gmra.mxu0 %v2751
      %v7904 = vpop.f32.mrf.mxu0
      %v7905 = vadd.f32 %v7856, %v7904
      %v7906 = vpop.f32.mrf.mxu0
      %v7907 = vadd.f32 %v7858, %v7906
      %7908 = vmatmul.bf16.gmra.mxu0 %v2759
      %v7909 = vpop.f32.mrf.mxu0
      %v7910 = vadd.f32 %v7861, %v7909
      %v7911 = vpop.f32.mrf.mxu0
      %v7912 = vadd.f32 %v7863, %v7911
      %7913 = vdwg.mxu0
      %7914 = vmatpush.bf16.msra.mxu0 %v5021
      %7915 = vmatpush.bf16.msra.mxu0 %v5013
      %7916 = vmatpush.bf16.msra.mxu0 %v5005
      %7917 = vmatpush.bf16.msra.mxu0 %v4997
      %7918 = vmatpush.bf16.msra.mxu0 %v4989
      %7919 = vmatpush.bf16.msra.mxu0 %v4981
      %7920 = vmatpush.bf16.msra.mxu0 %v4973
      %7921 = vmatpush.bf16.msra.mxu0 %v4965
      %7922 = vmatmul.bf16.gmra.mxu0 %v2704
      %v7923 = vpop.f32.mrf.mxu0
      %v7924 = vadd.f32 %v7875, %v7923
      %v7925 = vpop.f32.mrf.mxu0
      %v7926 = vadd.f32 %v7877, %v7925
      %7927 = vmatmul.bf16.gmra.mxu0 %v2712
      %v7928 = vpop.f32.mrf.mxu0
      %v7929 = vadd.f32 %v7880, %v7928
      %v7930 = vpop.f32.mrf.mxu0
      %v7931 = vadd.f32 %v7882, %v7930
      %7932 = vmatmul.bf16.gmra.mxu0 %v2720
      %v7933 = vpop.f32.mrf.mxu0
      %v7934 = vadd.f32 %v7885, %v7933
      %v7935 = vpop.f32.mrf.mxu0
      %v7936 = vadd.f32 %v7887, %v7935
      %7937 = vmatmul.bf16.gmra.mxu0 %v2728
      %v7938 = vpop.f32.mrf.mxu0
      %v7939 = vadd.f32 %v7890, %v7938
      %v7940 = vpop.f32.mrf.mxu0
      %v7941 = vadd.f32 %v7892, %v7940
      %7942 = vmatmul.bf16.gmra.mxu0 %v2736
      %v7943 = vpop.f32.mrf.mxu0
      %v7944 = vadd.f32 %v7895, %v7943
      %v7945 = vpop.f32.mrf.mxu0
      %v7946 = vadd.f32 %v7897, %v7945
      %7947 = vmatmul.bf16.gmra.mxu0 %v2744
      %v7948 = vpop.f32.mrf.mxu0
      %v7949 = vadd.f32 %v7900, %v7948
      %v7950 = vpop.f32.mrf.mxu0
      %v7951 = vadd.f32 %v7902, %v7950
      %7952 = vmatmul.bf16.gmra.mxu0 %v2752
      %v7953 = vpop.f32.mrf.mxu0
      %v7954 = vadd.f32 %v7905, %v7953
      %v7955 = vpop.f32.mrf.mxu0
      %v7956 = vadd.f32 %v7907, %v7955
      %7957 = vmatmul.bf16.gmra.mxu0 %v2760
      %v7958 = vpop.f32.mrf.mxu0
      %v7959 = vadd.f32 %v7910, %v7958
      %v7960 = vpop.f32.mrf.mxu0
      %v7961 = vadd.f32 %v7912, %v7960
      %7962 = vdwg.mxu0
      %7963 = vmatpush.bf16.msra.mxu0 %v5085
      %7964 = vmatpush.bf16.msra.mxu0 %v5077
      %7965 = vmatpush.bf16.msra.mxu0 %v5069
      %7966 = vmatpush.bf16.msra.mxu0 %v5061
      %7967 = vmatpush.bf16.msra.mxu0 %v5053
      %7968 = vmatpush.bf16.msra.mxu0 %v5045
      %7969 = vmatpush.bf16.msra.mxu0 %v5037
      %7970 = vmatpush.bf16.msra.mxu0 %v5029
      %7971 = vmatmul.bf16.gmra.mxu0 %v2705
      %v7972 = vpop.f32.mrf.mxu0
      %v7973 = vadd.f32 %v7924, %v7972
      %v7974 = vpop.f32.mrf.mxu0
      %v7975 = vadd.f32 %v7926, %v7974
      %7976 = vmatmul.bf16.gmra.mxu0 %v2713
      %v7977 = vpop.f32.mrf.mxu0
      %v7978 = vadd.f32 %v7929, %v7977
      %v7979 = vpop.f32.mrf.mxu0
      %v7980 = vadd.f32 %v7931, %v7979
      %7981 = vmatmul.bf16.gmra.mxu0 %v2721
      %v7982 = vpop.f32.mrf.mxu0
      %v7983 = vadd.f32 %v7934, %v7982
      %v7984 = vpop.f32.mrf.mxu0
      %v7985 = vadd.f32 %v7936, %v7984
      %7986 = vmatmul.bf16.gmra.mxu0 %v2729
      %v7987 = vpop.f32.mrf.mxu0
      %v7988 = vadd.f32 %v7939, %v7987
      %v7989 = vpop.f32.mrf.mxu0
      %v7990 = vadd.f32 %v7941, %v7989
      %7991 = vmatmul.bf16.gmra.mxu0 %v2737
      %v7992 = vpop.f32.mrf.mxu0
      %v7993 = vadd.f32 %v7944, %v7992
      %v7994 = vpop.f32.mrf.mxu0
      %v7995 = vadd.f32 %v7946, %v7994
      %7996 = vmatmul.bf16.gmra.mxu0 %v2745
      %v7997 = vpop.f32.mrf.mxu0
      %v7998 = vadd.f32 %v7949, %v7997
      %v7999 = vpop.f32.mrf.mxu0
      %v8000 = vadd.f32 %v7951, %v7999
      %8001 = vmatmul.bf16.gmra.mxu0 %v2753
      %v8002 = vpop.f32.mrf.mxu0
      %v8003 = vadd.f32 %v7954, %v8002
      %v8004 = vpop.f32.mrf.mxu0
      %v8005 = vadd.f32 %v7956, %v8004
      %8006 = vmatmul.bf16.gmra.mxu0 %v2761
      %v8007 = vpop.f32.mrf.mxu0
      %v8008 = vadd.f32 %v7959, %v8007
      %v8009 = vpop.f32.mrf.mxu0
      %v8010 = vadd.f32 %v7961, %v8009
      %8011 = vdwg.mxu0
      %8012 = vmatpush.bf16.msra.mxu0 %v5149
      %8013 = vmatpush.bf16.msra.mxu0 %v5141
      %8014 = vmatpush.bf16.msra.mxu0 %v5133
      %8015 = vmatpush.bf16.msra.mxu0 %v5125
      %8016 = vmatpush.bf16.msra.mxu0 %v5117
      %8017 = vmatpush.bf16.msra.mxu0 %v5109
      %8018 = vmatpush.bf16.msra.mxu0 %v5101
      %8019 = vmatpush.bf16.msra.mxu0 %v5093
      %8020 = vmatmul.bf16.gmra.mxu0 %v2706
      %v8021 = vpop.f32.mrf.mxu0
      %v8022 = vadd.f32 %v7973, %v8021
      %v8023 = vpop.f32.mrf.mxu0
      %v8024 = vadd.f32 %v7975, %v8023
      %8025 = vmatmul.bf16.gmra.mxu0 %v2714
      %v8026 = vpop.f32.mrf.mxu0
      %v8027 = vadd.f32 %v7978, %v8026
      %v8028 = vpop.f32.mrf.mxu0
      %v8029 = vadd.f32 %v7980, %v8028
      %8030 = vmatmul.bf16.gmra.mxu0 %v2722
      %v8031 = vpop.f32.mrf.mxu0
      %v8032 = vadd.f32 %v7983, %v8031
      %v8033 = vpop.f32.mrf.mxu0
      %v8034 = vadd.f32 %v7985, %v8033
      %8035 = vmatmul.bf16.gmra.mxu0 %v2730
      %v8036 = vpop.f32.mrf.mxu0
      %v8037 = vadd.f32 %v7988, %v8036
      %v8038 = vpop.f32.mrf.mxu0
      %v8039 = vadd.f32 %v7990, %v8038
      %8040 = vmatmul.bf16.gmra.mxu0 %v2738
      %v8041 = vpop.f32.mrf.mxu0
      %v8042 = vadd.f32 %v7993, %v8041
      %v8043 = vpop.f32.mrf.mxu0
      %v8044 = vadd.f32 %v7995, %v8043
      %8045 = vmatmul.bf16.gmra.mxu0 %v2746
      %v8046 = vpop.f32.mrf.mxu0
      %v8047 = vadd.f32 %v7998, %v8046
      %v8048 = vpop.f32.mrf.mxu0
      %v8049 = vadd.f32 %v8000, %v8048
      %8050 = vmatmul.bf16.gmra.mxu0 %v2754
      %v8051 = vpop.f32.mrf.mxu0
      %v8052 = vadd.f32 %v8003, %v8051
      %v8053 = vpop.f32.mrf.mxu0
      %v8054 = vadd.f32 %v8005, %v8053
      %8055 = vmatmul.bf16.gmra.mxu0 %v2762
      %v8056 = vpop.f32.mrf.mxu0
      %v8057 = vadd.f32 %v8008, %v8056
      %v8058 = vpop.f32.mrf.mxu0
      %v8059 = vadd.f32 %v8010, %v8058
      %8060 = vdwg.mxu0
      %8061 = vmatpush.bf16.msra.mxu0 %v5213
      %8062 = vmatpush.bf16.msra.mxu0 %v5205
      %8063 = vmatpush.bf16.msra.mxu0 %v5197
      %8064 = vmatpush.bf16.msra.mxu0 %v5189
      %8065 = vmatpush.bf16.msra.mxu0 %v5181
      %8066 = vmatpush.bf16.msra.mxu0 %v5173
      %8067 = vmatpush.bf16.msra.mxu0 %v5165
      %8068 = vmatpush.bf16.msra.mxu0 %v5157
      %8069 = vmatmul.bf16.gmra.mxu0 %v2707
      %v8070 = vpop.f32.mrf.mxu0
      %v8071 = vadd.f32 %v8022, %v8070
      %v8072 = vpop.f32.mrf.mxu0
      %v8073 = vadd.f32 %v8024, %v8072
      %8074 = vmatmul.bf16.gmra.mxu0 %v2715
      %v8075 = vpop.f32.mrf.mxu0
      %v8076 = vadd.f32 %v8027, %v8075
      %v8077 = vpop.f32.mrf.mxu0
      %v8078 = vadd.f32 %v8029, %v8077
      %8079 = vmatmul.bf16.gmra.mxu0 %v2723
      %v8080 = vpop.f32.mrf.mxu0
      %v8081 = vadd.f32 %v8032, %v8080
      %v8082 = vpop.f32.mrf.mxu0
      %v8083 = vadd.f32 %v8034, %v8082
      %8084 = vmatmul.bf16.gmra.mxu0 %v2731
      %v8085 = vpop.f32.mrf.mxu0
      %v8086 = vadd.f32 %v8037, %v8085
      %v8087 = vpop.f32.mrf.mxu0
      %v8088 = vadd.f32 %v8039, %v8087
      %8089 = vmatmul.bf16.gmra.mxu0 %v2739
      %v8090 = vpop.f32.mrf.mxu0
      %v8091 = vadd.f32 %v8042, %v8090
      %v8092 = vpop.f32.mrf.mxu0
      %v8093 = vadd.f32 %v8044, %v8092
      %8094 = vmatmul.bf16.gmra.mxu0 %v2747
      %v8095 = vpop.f32.mrf.mxu0
      %v8096 = vadd.f32 %v8047, %v8095
      %v8097 = vpop.f32.mrf.mxu0
      %v8098 = vadd.f32 %v8049, %v8097
      %8099 = vmatmul.bf16.gmra.mxu0 %v2755
      %v8100 = vpop.f32.mrf.mxu0
      %v8101 = vadd.f32 %v8052, %v8100
      %v8102 = vpop.f32.mrf.mxu0
      %v8103 = vadd.f32 %v8054, %v8102
      %8104 = vmatmul.bf16.gmra.mxu0 %v2763
      %v8105 = vpop.f32.mrf.mxu0
      %v8106 = vadd.f32 %v8057, %v8105
      %v8107 = vpop.f32.mrf.mxu0
      %v8108 = vadd.f32 %v8059, %v8107
      %8109 = vdwg.mxu0
      %8110 = vmatpush.bf16.msra.mxu0 %v5277
      %8111 = vmatpush.bf16.msra.mxu0 %v5269
      %8112 = vmatpush.bf16.msra.mxu0 %v5261
      %8113 = vmatpush.bf16.msra.mxu0 %v5253
      %8114 = vmatpush.bf16.msra.mxu0 %v5245
      %8115 = vmatpush.bf16.msra.mxu0 %v5237
      %8116 = vmatpush.bf16.msra.mxu0 %v5229
      %8117 = vmatpush.bf16.msra.mxu0 %v5221
      %8118 = vmatmul.bf16.gmra.mxu0 %v2708
      %v8119 = vpop.f32.mrf.mxu0
      %v8120 = vadd.f32 %v8071, %v8119
      %v8121 = vpop.f32.mrf.mxu0
      %v8122 = vadd.f32 %v8073, %v8121
      %8123 = vmatmul.bf16.gmra.mxu0 %v2716
      %v8124 = vpop.f32.mrf.mxu0
      %v8125 = vadd.f32 %v8076, %v8124
      %v8126 = vpop.f32.mrf.mxu0
      %v8127 = vadd.f32 %v8078, %v8126
      %8128 = vmatmul.bf16.gmra.mxu0 %v2724
      %v8129 = vpop.f32.mrf.mxu0
      %v8130 = vadd.f32 %v8081, %v8129
      %v8131 = vpop.f32.mrf.mxu0
      %v8132 = vadd.f32 %v8083, %v8131
      %8133 = vmatmul.bf16.gmra.mxu0 %v2732
      %v8134 = vpop.f32.mrf.mxu0
      %v8135 = vadd.f32 %v8086, %v8134
      %v8136 = vpop.f32.mrf.mxu0
      %v8137 = vadd.f32 %v8088, %v8136
      %8138 = vmatmul.bf16.gmra.mxu0 %v2740
      %v8139 = vpop.f32.mrf.mxu0
      %v8140 = vadd.f32 %v8091, %v8139
      %v8141 = vpop.f32.mrf.mxu0
      %v8142 = vadd.f32 %v8093, %v8141
      %8143 = vmatmul.bf16.gmra.mxu0 %v2748
      %v8144 = vpop.f32.mrf.mxu0
      %v8145 = vadd.f32 %v8096, %v8144
      %v8146 = vpop.f32.mrf.mxu0
      %v8147 = vadd.f32 %v8098, %v8146
      %8148 = vmatmul.bf16.gmra.mxu0 %v2756
      %v8149 = vpop.f32.mrf.mxu0
      %v8150 = vadd.f32 %v8101, %v8149
      %v8151 = vpop.f32.mrf.mxu0
      %v8152 = vadd.f32 %v8103, %v8151
      %8153 = vmatmul.bf16.gmra.mxu0 %v2764
      %v8154 = vpop.f32.mrf.mxu0
      %v8155 = vadd.f32 %v8106, %v8154
      %v8156 = vpop.f32.mrf.mxu0
      %v8157 = vadd.f32 %v8108, %v8156
      %8158 = vdwg.mxu0
      %8159 = vmatpush.bf16.msra.mxu0 %v5341
      %8160 = vmatpush.bf16.msra.mxu0 %v5333
      %8161 = vmatpush.bf16.msra.mxu0 %v5325
      %8162 = vmatpush.bf16.msra.mxu0 %v5317
      %8163 = vmatpush.bf16.msra.mxu0 %v5309
      %8164 = vmatpush.bf16.msra.mxu0 %v5301
      %8165 = vmatpush.bf16.msra.mxu0 %v5293
      %8166 = vmatpush.bf16.msra.mxu0 %v5285
      %8167 = vmatmul.bf16.gmra.mxu0 %v2709
      %v8168 = vpop.f32.mrf.mxu0
      %v8169 = vadd.f32 %v8120, %v8168
      %v8170 = vpop.f32.mrf.mxu0
      %v8171 = vadd.f32 %v8122, %v8170
      %8172 = vmatmul.bf16.gmra.mxu0 %v2717
      %v8173 = vpop.f32.mrf.mxu0
      %v8174 = vadd.f32 %v8125, %v8173
      %v8175 = vpop.f32.mrf.mxu0
      %v8176 = vadd.f32 %v8127, %v8175
      %8177 = vmatmul.bf16.gmra.mxu0 %v2725
      %v8178 = vpop.f32.mrf.mxu0
      %v8179 = vadd.f32 %v8130, %v8178
      %v8180 = vpop.f32.mrf.mxu0
      %v8181 = vadd.f32 %v8132, %v8180
      %8182 = vmatmul.bf16.gmra.mxu0 %v2733
      %v8183 = vpop.f32.mrf.mxu0
      %v8184 = vadd.f32 %v8135, %v8183
      %v8185 = vpop.f32.mrf.mxu0
      %v8186 = vadd.f32 %v8137, %v8185
      %8187 = vmatmul.bf16.gmra.mxu0 %v2741
      %v8188 = vpop.f32.mrf.mxu0
      %v8189 = vadd.f32 %v8140, %v8188
      %v8190 = vpop.f32.mrf.mxu0
      %v8191 = vadd.f32 %v8142, %v8190
      %8192 = vmatmul.bf16.gmra.mxu0 %v2749
      %v8193 = vpop.f32.mrf.mxu0
      %v8194 = vadd.f32 %v8145, %v8193
      %v8195 = vpop.f32.mrf.mxu0
      %v8196 = vadd.f32 %v8147, %v8195
      %8197 = vmatmul.bf16.gmra.mxu0 %v2757
      %v8198 = vpop.f32.mrf.mxu0
      %v8199 = vadd.f32 %v8150, %v8198
      %v8200 = vpop.f32.mrf.mxu0
      %v8201 = vadd.f32 %v8152, %v8200
      %8202 = vmatmul.bf16.gmra.mxu0 %v2765
      %v8203 = vpop.f32.mrf.mxu0
      %v8204 = vadd.f32 %v8155, %v8203
      %v8205 = vpop.f32.mrf.mxu0
      %v8206 = vadd.f32 %v8157, %v8205
      %8207 = vdwg.mxu0
      %8208 = vmatpush.bf16.msra.mxu0 %v4894
      %8209 = vmatpush.bf16.msra.mxu0 %v4886
      %8210 = vmatpush.bf16.msra.mxu0 %v4878
      %8211 = vmatpush.bf16.msra.mxu0 %v4870
      %8212 = vmatpush.bf16.msra.mxu0 %v4862
      %8213 = vmatpush.bf16.msra.mxu0 %v4854
      %8214 = vmatpush.bf16.msra.mxu0 %v4846
      %8215 = vmatpush.bf16.msra.mxu0 %v4838
      %8216 = vmatmul.bf16.gmra.mxu0 %v2702
      %v8217 = vpop.f32.mrf.mxu0
      %v8218 = vadd.f32 %v3286, %v8217
      %v8219 = vpop.f32.mrf.mxu0
      %v8220 = vadd.f32 %v3286, %v8219
      %8221 = vmatmul.bf16.gmra.mxu0 %v2710
      %v8222 = vpop.f32.mrf.mxu0
      %v8223 = vadd.f32 %v3286, %v8222
      %v8224 = vpop.f32.mrf.mxu0
      %v8225 = vadd.f32 %v3286, %v8224
      %8226 = vmatmul.bf16.gmra.mxu0 %v2718
      %v8227 = vpop.f32.mrf.mxu0
      %v8228 = vadd.f32 %v3286, %v8227
      %v8229 = vpop.f32.mrf.mxu0
      %v8230 = vadd.f32 %v3286, %v8229
      %8231 = vmatmul.bf16.gmra.mxu0 %v2726
      %v8232 = vpop.f32.mrf.mxu0
      %v8233 = vadd.f32 %v3286, %v8232
      %v8234 = vpop.f32.mrf.mxu0
      %v8235 = vadd.f32 %v3286, %v8234
      %8236 = vmatmul.bf16.gmra.mxu0 %v2734
      %v8237 = vpop.f32.mrf.mxu0
      %v8238 = vadd.f32 %v3286, %v8237
      %v8239 = vpop.f32.mrf.mxu0
      %v8240 = vadd.f32 %v3286, %v8239
      %8241 = vmatmul.bf16.gmra.mxu0 %v2742
      %v8242 = vpop.f32.mrf.mxu0
      %v8243 = vadd.f32 %v3286, %v8242
      %v8244 = vpop.f32.mrf.mxu0
      %v8245 = vadd.f32 %v3286, %v8244
      %8246 = vmatmul.bf16.gmra.mxu0 %v2750
      %v8247 = vpop.f32.mrf.mxu0
      %v8248 = vadd.f32 %v3286, %v8247
      %v8249 = vpop.f32.mrf.mxu0
      %v8250 = vadd.f32 %v3286, %v8249
      %8251 = vmatmul.bf16.gmra.mxu0 %v2758
      %v8252 = vpop.f32.mrf.mxu0
      %v8253 = vadd.f32 %v3286, %v8252
      %v8254 = vpop.f32.mrf.mxu0
      %v8255 = vadd.f32 %v3286, %v8254
      %8256 = vdwg.mxu0
      %8257 = vmatpush.bf16.msra.mxu0 %v4958
      %8258 = vmatpush.bf16.msra.mxu0 %v4950
      %8259 = vmatpush.bf16.msra.mxu0 %v4942
      %8260 = vmatpush.bf16.msra.mxu0 %v4934
      %8261 = vmatpush.bf16.msra.mxu0 %v4926
      %8262 = vmatpush.bf16.msra.mxu0 %v4918
      %8263 = vmatpush.bf16.msra.mxu0 %v4910
      %8264 = vmatpush.bf16.msra.mxu0 %v4902
      %8265 = vmatmul.bf16.gmra.mxu0 %v2703
      %v8266 = vpop.f32.mrf.mxu0
      %v8267 = vadd.f32 %v8218, %v8266
      %v8268 = vpop.f32.mrf.mxu0
      %v8269 = vadd.f32 %v8220, %v8268
      %8270 = vmatmul.bf16.gmra.mxu0 %v2711
      %v8271 = vpop.f32.mrf.mxu0
      %v8272 = vadd.f32 %v8223, %v8271
      %v8273 = vpop.f32.mrf.mxu0
      %v8274 = vadd.f32 %v8225, %v8273
      %8275 = vmatmul.bf16.gmra.mxu0 %v2719
      %v8276 = vpop.f32.mrf.mxu0
      %v8277 = vadd.f32 %v8228, %v8276
      %v8278 = vpop.f32.mrf.mxu0
      %v8279 = vadd.f32 %v8230, %v8278
      %8280 = vmatmul.bf16.gmra.mxu0 %v2727
      %v8281 = vpop.f32.mrf.mxu0
      %v8282 = vadd.f32 %v8233, %v8281
      %v8283 = vpop.f32.mrf.mxu0
      %v8284 = vadd.f32 %v8235, %v8283
      %8285 = vmatmul.bf16.gmra.mxu0 %v2735
      %v8286 = vpop.f32.mrf.mxu0
      %v8287 = vadd.f32 %v8238, %v8286
      %v8288 = vpop.f32.mrf.mxu0
      %v8289 = vadd.f32 %v8240, %v8288
      %8290 = vmatmul.bf16.gmra.mxu0 %v2743
      %v8291 = vpop.f32.mrf.mxu0
      %v8292 = vadd.f32 %v8243, %v8291
      %v8293 = vpop.f32.mrf.mxu0
      %v8294 = vadd.f32 %v8245, %v8293
      %8295 = vmatmul.bf16.gmra.mxu0 %v2751
      %v8296 = vpop.f32.mrf.mxu0
      %v8297 = vadd.f32 %v8248, %v8296
      %v8298 = vpop.f32.mrf.mxu0
      %v8299 = vadd.f32 %v8250, %v8298
      %8300 = vmatmul.bf16.gmra.mxu0 %v2759
      %v8301 = vpop.f32.mrf.mxu0
      %v8302 = vadd.f32 %v8253, %v8301
      %v8303 = vpop.f32.mrf.mxu0
      %v8304 = vadd.f32 %v8255, %v8303
      %8305 = vdwg.mxu0
      %8306 = vmatpush.bf16.msra.mxu0 %v5022
      %8307 = vmatpush.bf16.msra.mxu0 %v5014
      %8308 = vmatpush.bf16.msra.mxu0 %v5006
      %8309 = vmatpush.bf16.msra.mxu0 %v4998
      %8310 = vmatpush.bf16.msra.mxu0 %v4990
      %8311 = vmatpush.bf16.msra.mxu0 %v4982
      %8312 = vmatpush.bf16.msra.mxu0 %v4974
      %8313 = vmatpush.bf16.msra.mxu0 %v4966
      %8314 = vmatmul.bf16.gmra.mxu0 %v2704
      %v8315 = vpop.f32.mrf.mxu0
      %v8316 = vadd.f32 %v8267, %v8315
      %v8317 = vpop.f32.mrf.mxu0
      %v8318 = vadd.f32 %v8269, %v8317
      %8319 = vmatmul.bf16.gmra.mxu0 %v2712
      %v8320 = vpop.f32.mrf.mxu0
      %v8321 = vadd.f32 %v8272, %v8320
      %v8322 = vpop.f32.mrf.mxu0
      %v8323 = vadd.f32 %v8274, %v8322
      %8324 = vmatmul.bf16.gmra.mxu0 %v2720
      %v8325 = vpop.f32.mrf.mxu0
      %v8326 = vadd.f32 %v8277, %v8325
      %v8327 = vpop.f32.mrf.mxu0
      %v8328 = vadd.f32 %v8279, %v8327
      %8329 = vmatmul.bf16.gmra.mxu0 %v2728
      %v8330 = vpop.f32.mrf.mxu0
      %v8331 = vadd.f32 %v8282, %v8330
      %v8332 = vpop.f32.mrf.mxu0
      %v8333 = vadd.f32 %v8284, %v8332
      %8334 = vmatmul.bf16.gmra.mxu0 %v2736
      %v8335 = vpop.f32.mrf.mxu0
      %v8336 = vadd.f32 %v8287, %v8335
      %v8337 = vpop.f32.mrf.mxu0
      %v8338 = vadd.f32 %v8289, %v8337
      %8339 = vmatmul.bf16.gmra.mxu0 %v2744
      %v8340 = vpop.f32.mrf.mxu0
      %v8341 = vadd.f32 %v8292, %v8340
      %v8342 = vpop.f32.mrf.mxu0
      %v8343 = vadd.f32 %v8294, %v8342
      %8344 = vmatmul.bf16.gmra.mxu0 %v2752
      %v8345 = vpop.f32.mrf.mxu0
      %v8346 = vadd.f32 %v8297, %v8345
      %v8347 = vpop.f32.mrf.mxu0
      %v8348 = vadd.f32 %v8299, %v8347
      %8349 = vmatmul.bf16.gmra.mxu0 %v2760
      %v8350 = vpop.f32.mrf.mxu0
      %v8351 = vadd.f32 %v8302, %v8350
      %v8352 = vpop.f32.mrf.mxu0
      %v8353 = vadd.f32 %v8304, %v8352
      %8354 = vdwg.mxu0
      %8355 = vmatpush.bf16.msra.mxu0 %v5086
      %8356 = vmatpush.bf16.msra.mxu0 %v5078
      %8357 = vmatpush.bf16.msra.mxu0 %v5070
      %8358 = vmatpush.bf16.msra.mxu0 %v5062
      %8359 = vmatpush.bf16.msra.mxu0 %v5054
      %8360 = vmatpush.bf16.msra.mxu0 %v5046
      %8361 = vmatpush.bf16.msra.mxu0 %v5038
      %8362 = vmatpush.bf16.msra.mxu0 %v5030
      %8363 = vmatmul.bf16.gmra.mxu0 %v2705
      %v8364 = vpop.f32.mrf.mxu0
      %v8365 = vadd.f32 %v8316, %v8364
      %v8366 = vpop.f32.mrf.mxu0
      %v8367 = vadd.f32 %v8318, %v8366
      %8368 = vmatmul.bf16.gmra.mxu0 %v2713
      %v8369 = vpop.f32.mrf.mxu0
      %v8370 = vadd.f32 %v8321, %v8369
      %v8371 = vpop.f32.mrf.mxu0
      %v8372 = vadd.f32 %v8323, %v8371
      %8373 = vmatmul.bf16.gmra.mxu0 %v2721
      %v8374 = vpop.f32.mrf.mxu0
      %v8375 = vadd.f32 %v8326, %v8374
      %v8376 = vpop.f32.mrf.mxu0
      %v8377 = vadd.f32 %v8328, %v8376
      %8378 = vmatmul.bf16.gmra.mxu0 %v2729
      %v8379 = vpop.f32.mrf.mxu0
      %v8380 = vadd.f32 %v8331, %v8379
      %v8381 = vpop.f32.mrf.mxu0
      %v8382 = vadd.f32 %v8333, %v8381
      %8383 = vmatmul.bf16.gmra.mxu0 %v2737
      %v8384 = vpop.f32.mrf.mxu0
      %v8385 = vadd.f32 %v8336, %v8384
      %v8386 = vpop.f32.mrf.mxu0
      %v8387 = vadd.f32 %v8338, %v8386
      %8388 = vmatmul.bf16.gmra.mxu0 %v2745
      %v8389 = vpop.f32.mrf.mxu0
      %v8390 = vadd.f32 %v8341, %v8389
      %v8391 = vpop.f32.mrf.mxu0
      %v8392 = vadd.f32 %v8343, %v8391
      %8393 = vmatmul.bf16.gmra.mxu0 %v2753
      %v8394 = vpop.f32.mrf.mxu0
      %v8395 = vadd.f32 %v8346, %v8394
      %v8396 = vpop.f32.mrf.mxu0
      %v8397 = vadd.f32 %v8348, %v8396
      %8398 = vmatmul.bf16.gmra.mxu0 %v2761
      %v8399 = vpop.f32.mrf.mxu0
      %v8400 = vadd.f32 %v8351, %v8399
      %v8401 = vpop.f32.mrf.mxu0
      %v8402 = vadd.f32 %v8353, %v8401
      %8403 = vdwg.mxu0
      %8404 = vmatpush.bf16.msra.mxu0 %v5150
      %8405 = vmatpush.bf16.msra.mxu0 %v5142
      %8406 = vmatpush.bf16.msra.mxu0 %v5134
      %8407 = vmatpush.bf16.msra.mxu0 %v5126
      %8408 = vmatpush.bf16.msra.mxu0 %v5118
      %8409 = vmatpush.bf16.msra.mxu0 %v5110
      %8410 = vmatpush.bf16.msra.mxu0 %v5102
      %8411 = vmatpush.bf16.msra.mxu0 %v5094
      %8412 = vmatmul.bf16.gmra.mxu0 %v2706
      %v8413 = vpop.f32.mrf.mxu0
      %v8414 = vadd.f32 %v8365, %v8413
      %v8415 = vpop.f32.mrf.mxu0
      %v8416 = vadd.f32 %v8367, %v8415
      %8417 = vmatmul.bf16.gmra.mxu0 %v2714
      %v8418 = vpop.f32.mrf.mxu0
      %v8419 = vadd.f32 %v8370, %v8418
      %v8420 = vpop.f32.mrf.mxu0
      %v8421 = vadd.f32 %v8372, %v8420
      %8422 = vmatmul.bf16.gmra.mxu0 %v2722
      %v8423 = vpop.f32.mrf.mxu0
      %v8424 = vadd.f32 %v8375, %v8423
      %v8425 = vpop.f32.mrf.mxu0
      %v8426 = vadd.f32 %v8377, %v8425
      %8427 = vmatmul.bf16.gmra.mxu0 %v2730
      %v8428 = vpop.f32.mrf.mxu0
      %v8429 = vadd.f32 %v8380, %v8428
      %v8430 = vpop.f32.mrf.mxu0
      %v8431 = vadd.f32 %v8382, %v8430
      %8432 = vmatmul.bf16.gmra.mxu0 %v2738
      %v8433 = vpop.f32.mrf.mxu0
      %v8434 = vadd.f32 %v8385, %v8433
      %v8435 = vpop.f32.mrf.mxu0
      %v8436 = vadd.f32 %v8387, %v8435
      %8437 = vmatmul.bf16.gmra.mxu0 %v2746
      %v8438 = vpop.f32.mrf.mxu0
      %v8439 = vadd.f32 %v8390, %v8438
      %v8440 = vpop.f32.mrf.mxu0
      %v8441 = vadd.f32 %v8392, %v8440
      %8442 = vmatmul.bf16.gmra.mxu0 %v2754
      %v8443 = vpop.f32.mrf.mxu0
      %v8444 = vadd.f32 %v8395, %v8443
      %v8445 = vpop.f32.mrf.mxu0
      %v8446 = vadd.f32 %v8397, %v8445
      %8447 = vmatmul.bf16.gmra.mxu0 %v2762
      %v8448 = vpop.f32.mrf.mxu0
      %v8449 = vadd.f32 %v8400, %v8448
      %v8450 = vpop.f32.mrf.mxu0
      %v8451 = vadd.f32 %v8402, %v8450
      %8452 = vdwg.mxu0
      %8453 = vmatpush.bf16.msra.mxu0 %v5214
      %8454 = vmatpush.bf16.msra.mxu0 %v5206
      %8455 = vmatpush.bf16.msra.mxu0 %v5198
      %8456 = vmatpush.bf16.msra.mxu0 %v5190
      %8457 = vmatpush.bf16.msra.mxu0 %v5182
      %8458 = vmatpush.bf16.msra.mxu0 %v5174
      %8459 = vmatpush.bf16.msra.mxu0 %v5166
      %8460 = vmatpush.bf16.msra.mxu0 %v5158
      %8461 = vmatmul.bf16.gmra.mxu0 %v2707
      %v8462 = vpop.f32.mrf.mxu0
      %v8463 = vadd.f32 %v8414, %v8462
      %v8464 = vpop.f32.mrf.mxu0
      %v8465 = vadd.f32 %v8416, %v8464
      %8466 = vmatmul.bf16.gmra.mxu0 %v2715
      %v8467 = vpop.f32.mrf.mxu0
      %v8468 = vadd.f32 %v8419, %v8467
      %v8469 = vpop.f32.mrf.mxu0
      %v8470 = vadd.f32 %v8421, %v8469
      %8471 = vmatmul.bf16.gmra.mxu0 %v2723
      %v8472 = vpop.f32.mrf.mxu0
      %v8473 = vadd.f32 %v8424, %v8472
      %v8474 = vpop.f32.mrf.mxu0
      %v8475 = vadd.f32 %v8426, %v8474
      %8476 = vmatmul.bf16.gmra.mxu0 %v2731
      %v8477 = vpop.f32.mrf.mxu0
      %v8478 = vadd.f32 %v8429, %v8477
      %v8479 = vpop.f32.mrf.mxu0
      %v8480 = vadd.f32 %v8431, %v8479
      %8481 = vmatmul.bf16.gmra.mxu0 %v2739
      %v8482 = vpop.f32.mrf.mxu0
      %v8483 = vadd.f32 %v8434, %v8482
      %v8484 = vpop.f32.mrf.mxu0
      %v8485 = vadd.f32 %v8436, %v8484
      %8486 = vmatmul.bf16.gmra.mxu0 %v2747
      %v8487 = vpop.f32.mrf.mxu0
      %v8488 = vadd.f32 %v8439, %v8487
      %v8489 = vpop.f32.mrf.mxu0
      %v8490 = vadd.f32 %v8441, %v8489
      %8491 = vmatmul.bf16.gmra.mxu0 %v2755
      %v8492 = vpop.f32.mrf.mxu0
      %v8493 = vadd.f32 %v8444, %v8492
      %v8494 = vpop.f32.mrf.mxu0
      %v8495 = vadd.f32 %v8446, %v8494
      %8496 = vmatmul.bf16.gmra.mxu0 %v2763
      %v8497 = vpop.f32.mrf.mxu0
      %v8498 = vadd.f32 %v8449, %v8497
      %v8499 = vpop.f32.mrf.mxu0
      %v8500 = vadd.f32 %v8451, %v8499
      %8501 = vdwg.mxu0
      %8502 = vmatpush.bf16.msra.mxu0 %v5278
      %8503 = vmatpush.bf16.msra.mxu0 %v5270
      %8504 = vmatpush.bf16.msra.mxu0 %v5262
      %8505 = vmatpush.bf16.msra.mxu0 %v5254
      %8506 = vmatpush.bf16.msra.mxu0 %v5246
      %8507 = vmatpush.bf16.msra.mxu0 %v5238
      %8508 = vmatpush.bf16.msra.mxu0 %v5230
      %8509 = vmatpush.bf16.msra.mxu0 %v5222
      %8510 = vmatmul.bf16.gmra.mxu0 %v2708
      %v8511 = vpop.f32.mrf.mxu0
      %v8512 = vadd.f32 %v8463, %v8511
      %v8513 = vpop.f32.mrf.mxu0
      %v8514 = vadd.f32 %v8465, %v8513
      %8515 = vmatmul.bf16.gmra.mxu0 %v2716
      %v8516 = vpop.f32.mrf.mxu0
      %v8517 = vadd.f32 %v8468, %v8516
      %v8518 = vpop.f32.mrf.mxu0
      %v8519 = vadd.f32 %v8470, %v8518
      %8520 = vmatmul.bf16.gmra.mxu0 %v2724
      %v8521 = vpop.f32.mrf.mxu0
      %v8522 = vadd.f32 %v8473, %v8521
      %v8523 = vpop.f32.mrf.mxu0
      %v8524 = vadd.f32 %v8475, %v8523
      %8525 = vmatmul.bf16.gmra.mxu0 %v2732
      %v8526 = vpop.f32.mrf.mxu0
      %v8527 = vadd.f32 %v8478, %v8526
      %v8528 = vpop.f32.mrf.mxu0
      %v8529 = vadd.f32 %v8480, %v8528
      %8530 = vmatmul.bf16.gmra.mxu0 %v2740
      %v8531 = vpop.f32.mrf.mxu0
      %v8532 = vadd.f32 %v8483, %v8531
      %v8533 = vpop.f32.mrf.mxu0
      %v8534 = vadd.f32 %v8485, %v8533
      %8535 = vmatmul.bf16.gmra.mxu0 %v2748
      %v8536 = vpop.f32.mrf.mxu0
      %v8537 = vadd.f32 %v8488, %v8536
      %v8538 = vpop.f32.mrf.mxu0
      %v8539 = vadd.f32 %v8490, %v8538
      %8540 = vmatmul.bf16.gmra.mxu0 %v2756
      %v8541 = vpop.f32.mrf.mxu0
      %v8542 = vadd.f32 %v8493, %v8541
      %v8543 = vpop.f32.mrf.mxu0
      %v8544 = vadd.f32 %v8495, %v8543
      %8545 = vmatmul.bf16.gmra.mxu0 %v2764
      %v8546 = vpop.f32.mrf.mxu0
      %v8547 = vadd.f32 %v8498, %v8546
      %v8548 = vpop.f32.mrf.mxu0
      %v8549 = vadd.f32 %v8500, %v8548
      %8550 = vdwg.mxu0
      %8551 = vmatpush.bf16.msra.mxu0 %v5342
      %8552 = vmatpush.bf16.msra.mxu0 %v5334
      %8553 = vmatpush.bf16.msra.mxu0 %v5326
      %8554 = vmatpush.bf16.msra.mxu0 %v5318
      %8555 = vmatpush.bf16.msra.mxu0 %v5310
      %8556 = vmatpush.bf16.msra.mxu0 %v5302
      %8557 = vmatpush.bf16.msra.mxu0 %v5294
      %8558 = vmatpush.bf16.msra.mxu0 %v5286
      %8559 = vmatmul.bf16.gmra.mxu0 %v2709
      %v8560 = vpop.f32.mrf.mxu0
      %v8561 = vadd.f32 %v8512, %v8560
      %v8562 = vpop.f32.mrf.mxu0
      %v8563 = vadd.f32 %v8514, %v8562
      %8564 = vmatmul.bf16.gmra.mxu0 %v2717
      %v8565 = vpop.f32.mrf.mxu0
      %v8566 = vadd.f32 %v8517, %v8565
      %v8567 = vpop.f32.mrf.mxu0
      %v8568 = vadd.f32 %v8519, %v8567
      %8569 = vmatmul.bf16.gmra.mxu0 %v2725
      %v8570 = vpop.f32.mrf.mxu0
      %v8571 = vadd.f32 %v8522, %v8570
      %v8572 = vpop.f32.mrf.mxu0
      %v8573 = vadd.f32 %v8524, %v8572
      %8574 = vmatmul.bf16.gmra.mxu0 %v2733
      %v8575 = vpop.f32.mrf.mxu0
      %v8576 = vadd.f32 %v8527, %v8575
      %v8577 = vpop.f32.mrf.mxu0
      %v8578 = vadd.f32 %v8529, %v8577
      %8579 = vmatmul.bf16.gmra.mxu0 %v2741
      %v8580 = vpop.f32.mrf.mxu0
      %v8581 = vadd.f32 %v8532, %v8580
      %v8582 = vpop.f32.mrf.mxu0
      %v8583 = vadd.f32 %v8534, %v8582
      %8584 = vmatmul.bf16.gmra.mxu0 %v2749
      %v8585 = vpop.f32.mrf.mxu0
      %v8586 = vadd.f32 %v8537, %v8585
      %v8587 = vpop.f32.mrf.mxu0
      %v8588 = vadd.f32 %v8539, %v8587
      %8589 = vmatmul.bf16.gmra.mxu0 %v2757
      %v8590 = vpop.f32.mrf.mxu0
      %v8591 = vadd.f32 %v8542, %v8590
      %v8592 = vpop.f32.mrf.mxu0
      %v8593 = vadd.f32 %v8544, %v8592
      %8594 = vmatmul.bf16.gmra.mxu0 %v2765
      %v8595 = vpop.f32.mrf.mxu0
      %v8596 = vadd.f32 %v8547, %v8595
      %v8597 = vpop.f32.mrf.mxu0
      %v8598 = vadd.f32 %v8549, %v8597
      %8599 = vdwg.mxu0
      %8600 = vmatpush.bf16.msra.mxu0 %v4895
      %8601 = vmatpush.bf16.msra.mxu0 %v4887
      %8602 = vmatpush.bf16.msra.mxu0 %v4879
      %8603 = vmatpush.bf16.msra.mxu0 %v4871
      %8604 = vmatpush.bf16.msra.mxu0 %v4863
      %8605 = vmatpush.bf16.msra.mxu0 %v4855
      %8606 = vmatpush.bf16.msra.mxu0 %v4847
      %8607 = vmatpush.bf16.msra.mxu0 %v4839
      %8608 = vmatmul.bf16.gmra.mxu0 %v2702
      %v8609 = vpop.f32.mrf.mxu0
      %v8610 = vadd.f32 %v3287, %v8609
      %v8611 = vpop.f32.mrf.mxu0
      %v8612 = vadd.f32 %v3287, %v8611
      %8613 = vmatmul.bf16.gmra.mxu0 %v2710
      %v8614 = vpop.f32.mrf.mxu0
      %v8615 = vadd.f32 %v3287, %v8614
      %v8616 = vpop.f32.mrf.mxu0
      %v8617 = vadd.f32 %v3287, %v8616
      %8618 = vmatmul.bf16.gmra.mxu0 %v2718
      %v8619 = vpop.f32.mrf.mxu0
      %v8620 = vadd.f32 %v3287, %v8619
      %v8621 = vpop.f32.mrf.mxu0
      %v8622 = vadd.f32 %v3287, %v8621
      %8623 = vmatmul.bf16.gmra.mxu0 %v2726
      %v8624 = vpop.f32.mrf.mxu0
      %v8625 = vadd.f32 %v3287, %v8624
      %v8626 = vpop.f32.mrf.mxu0
      %v8627 = vadd.f32 %v3287, %v8626
      %8628 = vmatmul.bf16.gmra.mxu0 %v2734
      %v8629 = vpop.f32.mrf.mxu0
      %v8630 = vadd.f32 %v3287, %v8629
      %v8631 = vpop.f32.mrf.mxu0
      %v8632 = vadd.f32 %v3287, %v8631
      %8633 = vmatmul.bf16.gmra.mxu0 %v2742
      %v8634 = vpop.f32.mrf.mxu0
      %v8635 = vadd.f32 %v3287, %v8634
      %v8636 = vpop.f32.mrf.mxu0
      %v8637 = vadd.f32 %v3287, %v8636
      %8638 = vmatmul.bf16.gmra.mxu0 %v2750
      %v8639 = vpop.f32.mrf.mxu0
      %v8640 = vadd.f32 %v3287, %v8639
      %v8641 = vpop.f32.mrf.mxu0
      %v8642 = vadd.f32 %v3287, %v8641
      %8643 = vmatmul.bf16.gmra.mxu0 %v2758
      %v8644 = vpop.f32.mrf.mxu0
      %v8645 = vadd.f32 %v3287, %v8644
      %v8646 = vpop.f32.mrf.mxu0
      %v8647 = vadd.f32 %v3287, %v8646
      %8648 = vdwg.mxu0
      %8649 = vmatpush.bf16.msra.mxu0 %v4959
      %8650 = vmatpush.bf16.msra.mxu0 %v4951
      %8651 = vmatpush.bf16.msra.mxu0 %v4943
      %8652 = vmatpush.bf16.msra.mxu0 %v4935
      %8653 = vmatpush.bf16.msra.mxu0 %v4927
      %8654 = vmatpush.bf16.msra.mxu0 %v4919
      %8655 = vmatpush.bf16.msra.mxu0 %v4911
      %8656 = vmatpush.bf16.msra.mxu0 %v4903
      %8657 = vmatmul.bf16.gmra.mxu0 %v2703
      %v8658 = vpop.f32.mrf.mxu0
      %v8659 = vadd.f32 %v8610, %v8658
      %v8660 = vpop.f32.mrf.mxu0
      %v8661 = vadd.f32 %v8612, %v8660
      %8662 = vmatmul.bf16.gmra.mxu0 %v2711
      %v8663 = vpop.f32.mrf.mxu0
      %v8664 = vadd.f32 %v8615, %v8663
      %v8665 = vpop.f32.mrf.mxu0
      %v8666 = vadd.f32 %v8617, %v8665
      %8667 = vmatmul.bf16.gmra.mxu0 %v2719
      %v8668 = vpop.f32.mrf.mxu0
      %v8669 = vadd.f32 %v8620, %v8668
      %v8670 = vpop.f32.mrf.mxu0
      %v8671 = vadd.f32 %v8622, %v8670
      %8672 = vmatmul.bf16.gmra.mxu0 %v2727
      %v8673 = vpop.f32.mrf.mxu0
      %v8674 = vadd.f32 %v8625, %v8673
      %v8675 = vpop.f32.mrf.mxu0
      %v8676 = vadd.f32 %v8627, %v8675
      %8677 = vmatmul.bf16.gmra.mxu0 %v2735
      %v8678 = vpop.f32.mrf.mxu0
      %v8679 = vadd.f32 %v8630, %v8678
      %v8680 = vpop.f32.mrf.mxu0
      %v8681 = vadd.f32 %v8632, %v8680
      %8682 = vmatmul.bf16.gmra.mxu0 %v2743
      %v8683 = vpop.f32.mrf.mxu0
      %v8684 = vadd.f32 %v8635, %v8683
      %v8685 = vpop.f32.mrf.mxu0
      %v8686 = vadd.f32 %v8637, %v8685
      %8687 = vmatmul.bf16.gmra.mxu0 %v2751
      %v8688 = vpop.f32.mrf.mxu0
      %v8689 = vadd.f32 %v8640, %v8688
      %v8690 = vpop.f32.mrf.mxu0
      %v8691 = vadd.f32 %v8642, %v8690
      %8692 = vmatmul.bf16.gmra.mxu0 %v2759
      %v8693 = vpop.f32.mrf.mxu0
      %v8694 = vadd.f32 %v8645, %v8693
      %v8695 = vpop.f32.mrf.mxu0
      %v8696 = vadd.f32 %v8647, %v8695
      %8697 = vdwg.mxu0
      %8698 = vmatpush.bf16.msra.mxu0 %v5023
      %8699 = vmatpush.bf16.msra.mxu0 %v5015
      %8700 = vmatpush.bf16.msra.mxu0 %v5007
      %8701 = vmatpush.bf16.msra.mxu0 %v4999
      %8702 = vmatpush.bf16.msra.mxu0 %v4991
      %8703 = vmatpush.bf16.msra.mxu0 %v4983
      %8704 = vmatpush.bf16.msra.mxu0 %v4975
      %8705 = vmatpush.bf16.msra.mxu0 %v4967
      %8706 = vmatmul.bf16.gmra.mxu0 %v2704
      %v8707 = vpop.f32.mrf.mxu0
      %v8708 = vadd.f32 %v8659, %v8707
      %v8709 = vpop.f32.mrf.mxu0
      %v8710 = vadd.f32 %v8661, %v8709
      %8711 = vmatmul.bf16.gmra.mxu0 %v2712
      %v8712 = vpop.f32.mrf.mxu0
      %v8713 = vadd.f32 %v8664, %v8712
      %v8714 = vpop.f32.mrf.mxu0
      %v8715 = vadd.f32 %v8666, %v8714
      %8716 = vmatmul.bf16.gmra.mxu0 %v2720
      %v8717 = vpop.f32.mrf.mxu0
      %v8718 = vadd.f32 %v8669, %v8717
      %v8719 = vpop.f32.mrf.mxu0
      %v8720 = vadd.f32 %v8671, %v8719
      %8721 = vmatmul.bf16.gmra.mxu0 %v2728
      %v8722 = vpop.f32.mrf.mxu0
      %v8723 = vadd.f32 %v8674, %v8722
      %v8724 = vpop.f32.mrf.mxu0
      %v8725 = vadd.f32 %v8676, %v8724
      %8726 = vmatmul.bf16.gmra.mxu0 %v2736
      %v8727 = vpop.f32.mrf.mxu0
      %v8728 = vadd.f32 %v8679, %v8727
      %v8729 = vpop.f32.mrf.mxu0
      %v8730 = vadd.f32 %v8681, %v8729
      %8731 = vmatmul.bf16.gmra.mxu0 %v2744
      %v8732 = vpop.f32.mrf.mxu0
      %v8733 = vadd.f32 %v8684, %v8732
      %v8734 = vpop.f32.mrf.mxu0
      %v8735 = vadd.f32 %v8686, %v8734
      %8736 = vmatmul.bf16.gmra.mxu0 %v2752
      %v8737 = vpop.f32.mrf.mxu0
      %v8738 = vadd.f32 %v8689, %v8737
      %v8739 = vpop.f32.mrf.mxu0
      %v8740 = vadd.f32 %v8691, %v8739
      %8741 = vmatmul.bf16.gmra.mxu0 %v2760
      %v8742 = vpop.f32.mrf.mxu0
      %v8743 = vadd.f32 %v8694, %v8742
      %v8744 = vpop.f32.mrf.mxu0
      %v8745 = vadd.f32 %v8696, %v8744
      %8746 = vdwg.mxu0
      %8747 = vmatpush.bf16.msra.mxu0 %v5087
      %8748 = vmatpush.bf16.msra.mxu0 %v5079
      %8749 = vmatpush.bf16.msra.mxu0 %v5071
      %8750 = vmatpush.bf16.msra.mxu0 %v5063
      %8751 = vmatpush.bf16.msra.mxu0 %v5055
      %8752 = vmatpush.bf16.msra.mxu0 %v5047
      %8753 = vmatpush.bf16.msra.mxu0 %v5039
      %8754 = vmatpush.bf16.msra.mxu0 %v5031
      %8755 = vmatmul.bf16.gmra.mxu0 %v2705
      %v8756 = vpop.f32.mrf.mxu0
      %v8757 = vadd.f32 %v8708, %v8756
      %v8758 = vpop.f32.mrf.mxu0
      %v8759 = vadd.f32 %v8710, %v8758
      %8760 = vmatmul.bf16.gmra.mxu0 %v2713
      %v8761 = vpop.f32.mrf.mxu0
      %v8762 = vadd.f32 %v8713, %v8761
      %v8763 = vpop.f32.mrf.mxu0
      %v8764 = vadd.f32 %v8715, %v8763
      %8765 = vmatmul.bf16.gmra.mxu0 %v2721
      %v8766 = vpop.f32.mrf.mxu0
      %v8767 = vadd.f32 %v8718, %v8766
      %v8768 = vpop.f32.mrf.mxu0
      %v8769 = vadd.f32 %v8720, %v8768
      %8770 = vmatmul.bf16.gmra.mxu0 %v2729
      %v8771 = vpop.f32.mrf.mxu0
      %v8772 = vadd.f32 %v8723, %v8771
      %v8773 = vpop.f32.mrf.mxu0
      %v8774 = vadd.f32 %v8725, %v8773
      %8775 = vmatmul.bf16.gmra.mxu0 %v2737
      %v8776 = vpop.f32.mrf.mxu0
      %v8777 = vadd.f32 %v8728, %v8776
      %v8778 = vpop.f32.mrf.mxu0
      %v8779 = vadd.f32 %v8730, %v8778
      %8780 = vmatmul.bf16.gmra.mxu0 %v2745
      %v8781 = vpop.f32.mrf.mxu0
      %v8782 = vadd.f32 %v8733, %v8781
      %v8783 = vpop.f32.mrf.mxu0
      %v8784 = vadd.f32 %v8735, %v8783
      %8785 = vmatmul.bf16.gmra.mxu0 %v2753
      %v8786 = vpop.f32.mrf.mxu0
      %v8787 = vadd.f32 %v8738, %v8786
      %v8788 = vpop.f32.mrf.mxu0
      %v8789 = vadd.f32 %v8740, %v8788
      %8790 = vmatmul.bf16.gmra.mxu0 %v2761
      %v8791 = vpop.f32.mrf.mxu0
      %v8792 = vadd.f32 %v8743, %v8791
      %v8793 = vpop.f32.mrf.mxu0
      %v8794 = vadd.f32 %v8745, %v8793
      %8795 = vdwg.mxu0
      %8796 = vmatpush.bf16.msra.mxu0 %v5151
      %8797 = vmatpush.bf16.msra.mxu0 %v5143
      %8798 = vmatpush.bf16.msra.mxu0 %v5135
      %8799 = vmatpush.bf16.msra.mxu0 %v5127
      %8800 = vmatpush.bf16.msra.mxu0 %v5119
      %8801 = vmatpush.bf16.msra.mxu0 %v5111
      %8802 = vmatpush.bf16.msra.mxu0 %v5103
      %8803 = vmatpush.bf16.msra.mxu0 %v5095
      %8804 = vmatmul.bf16.gmra.mxu0 %v2706
      %v8805 = vpop.f32.mrf.mxu0
      %v8806 = vadd.f32 %v8757, %v8805
      %v8807 = vpop.f32.mrf.mxu0
      %v8808 = vadd.f32 %v8759, %v8807
      %8809 = vmatmul.bf16.gmra.mxu0 %v2714
      %v8810 = vpop.f32.mrf.mxu0
      %v8811 = vadd.f32 %v8762, %v8810
      %v8812 = vpop.f32.mrf.mxu0
      %v8813 = vadd.f32 %v8764, %v8812
      %8814 = vmatmul.bf16.gmra.mxu0 %v2722
      %v8815 = vpop.f32.mrf.mxu0
      %v8816 = vadd.f32 %v8767, %v8815
      %v8817 = vpop.f32.mrf.mxu0
      %v8818 = vadd.f32 %v8769, %v8817
      %8819 = vmatmul.bf16.gmra.mxu0 %v2730
      %v8820 = vpop.f32.mrf.mxu0
      %v8821 = vadd.f32 %v8772, %v8820
      %v8822 = vpop.f32.mrf.mxu0
      %v8823 = vadd.f32 %v8774, %v8822
      %8824 = vmatmul.bf16.gmra.mxu0 %v2738
      %v8825 = vpop.f32.mrf.mxu0
      %v8826 = vadd.f32 %v8777, %v8825
      %v8827 = vpop.f32.mrf.mxu0
      %v8828 = vadd.f32 %v8779, %v8827
      %8829 = vmatmul.bf16.gmra.mxu0 %v2746
      %v8830 = vpop.f32.mrf.mxu0
      %v8831 = vadd.f32 %v8782, %v8830
      %v8832 = vpop.f32.mrf.mxu0
      %v8833 = vadd.f32 %v8784, %v8832
      %8834 = vmatmul.bf16.gmra.mxu0 %v2754
      %v8835 = vpop.f32.mrf.mxu0
      %v8836 = vadd.f32 %v8787, %v8835
      %v8837 = vpop.f32.mrf.mxu0
      %v8838 = vadd.f32 %v8789, %v8837
      %8839 = vmatmul.bf16.gmra.mxu0 %v2762
      %v8840 = vpop.f32.mrf.mxu0
      %v8841 = vadd.f32 %v8792, %v8840
      %v8842 = vpop.f32.mrf.mxu0
      %v8843 = vadd.f32 %v8794, %v8842
      %8844 = vdwg.mxu0
      %8845 = vmatpush.bf16.msra.mxu0 %v5215
      %8846 = vmatpush.bf16.msra.mxu0 %v5207
      %8847 = vmatpush.bf16.msra.mxu0 %v5199
      %8848 = vmatpush.bf16.msra.mxu0 %v5191
      %8849 = vmatpush.bf16.msra.mxu0 %v5183
      %8850 = vmatpush.bf16.msra.mxu0 %v5175
      %8851 = vmatpush.bf16.msra.mxu0 %v5167
      %8852 = vmatpush.bf16.msra.mxu0 %v5159
      %8853 = vmatmul.bf16.gmra.mxu0 %v2707
      %v8854 = vpop.f32.mrf.mxu0
      %v8855 = vadd.f32 %v8806, %v8854
      %v8856 = vpop.f32.mrf.mxu0
      %v8857 = vadd.f32 %v8808, %v8856
      %8858 = vmatmul.bf16.gmra.mxu0 %v2715
      %v8859 = vpop.f32.mrf.mxu0
      %v8860 = vadd.f32 %v8811, %v8859
      %v8861 = vpop.f32.mrf.mxu0
      %v8862 = vadd.f32 %v8813, %v8861
      %8863 = vmatmul.bf16.gmra.mxu0 %v2723
      %v8864 = vpop.f32.mrf.mxu0
      %v8865 = vadd.f32 %v8816, %v8864
      %v8866 = vpop.f32.mrf.mxu0
      %v8867 = vadd.f32 %v8818, %v8866
      %8868 = vmatmul.bf16.gmra.mxu0 %v2731
      %v8869 = vpop.f32.mrf.mxu0
      %v8870 = vadd.f32 %v8821, %v8869
      %v8871 = vpop.f32.mrf.mxu0
      %v8872 = vadd.f32 %v8823, %v8871
      %8873 = vmatmul.bf16.gmra.mxu0 %v2739
      %v8874 = vpop.f32.mrf.mxu0
      %v8875 = vadd.f32 %v8826, %v8874
      %v8876 = vpop.f32.mrf.mxu0
      %v8877 = vadd.f32 %v8828, %v8876
      %8878 = vmatmul.bf16.gmra.mxu0 %v2747
      %v8879 = vpop.f32.mrf.mxu0
      %v8880 = vadd.f32 %v8831, %v8879
      %v8881 = vpop.f32.mrf.mxu0
      %v8882 = vadd.f32 %v8833, %v8881
      %8883 = vmatmul.bf16.gmra.mxu0 %v2755
      %v8884 = vpop.f32.mrf.mxu0
      %v8885 = vadd.f32 %v8836, %v8884
      %v8886 = vpop.f32.mrf.mxu0
      %v8887 = vadd.f32 %v8838, %v8886
      %8888 = vmatmul.bf16.gmra.mxu0 %v2763
      %v8889 = vpop.f32.mrf.mxu0
      %v8890 = vadd.f32 %v8841, %v8889
      %v8891 = vpop.f32.mrf.mxu0
      %v8892 = vadd.f32 %v8843, %v8891
      %8893 = vdwg.mxu0
      %8894 = vmatpush.bf16.msra.mxu0 %v5279
      %8895 = vmatpush.bf16.msra.mxu0 %v5271
      %8896 = vmatpush.bf16.msra.mxu0 %v5263
      %8897 = vmatpush.bf16.msra.mxu0 %v5255
      %8898 = vmatpush.bf16.msra.mxu0 %v5247
      %8899 = vmatpush.bf16.msra.mxu0 %v5239
      %8900 = vmatpush.bf16.msra.mxu0 %v5231
      %8901 = vmatpush.bf16.msra.mxu0 %v5223
      %8902 = vmatmul.bf16.gmra.mxu0 %v2708
      %v8903 = vpop.f32.mrf.mxu0
      %v8904 = vadd.f32 %v8855, %v8903
      %v8905 = vpop.f32.mrf.mxu0
      %v8906 = vadd.f32 %v8857, %v8905
      %8907 = vmatmul.bf16.gmra.mxu0 %v2716
      %v8908 = vpop.f32.mrf.mxu0
      %v8909 = vadd.f32 %v8860, %v8908
      %v8910 = vpop.f32.mrf.mxu0
      %v8911 = vadd.f32 %v8862, %v8910
      %8912 = vmatmul.bf16.gmra.mxu0 %v2724
      %v8913 = vpop.f32.mrf.mxu0
      %v8914 = vadd.f32 %v8865, %v8913
      %v8915 = vpop.f32.mrf.mxu0
      %v8916 = vadd.f32 %v8867, %v8915
      %8917 = vmatmul.bf16.gmra.mxu0 %v2732
      %v8918 = vpop.f32.mrf.mxu0
      %v8919 = vadd.f32 %v8870, %v8918
      %v8920 = vpop.f32.mrf.mxu0
      %v8921 = vadd.f32 %v8872, %v8920
      %8922 = vmatmul.bf16.gmra.mxu0 %v2740
      %v8923 = vpop.f32.mrf.mxu0
      %v8924 = vadd.f32 %v8875, %v8923
      %v8925 = vpop.f32.mrf.mxu0
      %v8926 = vadd.f32 %v8877, %v8925
      %8927 = vmatmul.bf16.gmra.mxu0 %v2748
      %v8928 = vpop.f32.mrf.mxu0
      %v8929 = vadd.f32 %v8880, %v8928
      %v8930 = vpop.f32.mrf.mxu0
      %v8931 = vadd.f32 %v8882, %v8930
      %8932 = vmatmul.bf16.gmra.mxu0 %v2756
      %v8933 = vpop.f32.mrf.mxu0
      %v8934 = vadd.f32 %v8885, %v8933
      %v8935 = vpop.f32.mrf.mxu0
      %v8936 = vadd.f32 %v8887, %v8935
      %8937 = vmatmul.bf16.gmra.mxu0 %v2764
      %v8938 = vpop.f32.mrf.mxu0
      %v8939 = vadd.f32 %v8890, %v8938
      %v8940 = vpop.f32.mrf.mxu0
      %v8941 = vadd.f32 %v8892, %v8940
      %8942 = vdwg.mxu0
      %8943 = vmatpush.bf16.msra.mxu0 %v5343
      %8944 = vmatpush.bf16.msra.mxu0 %v5335
      %8945 = vmatpush.bf16.msra.mxu0 %v5327
      %8946 = vmatpush.bf16.msra.mxu0 %v5319
      %8947 = vmatpush.bf16.msra.mxu0 %v5311
      %8948 = vmatpush.bf16.msra.mxu0 %v5303
      %8949 = vmatpush.bf16.msra.mxu0 %v5295
      %8950 = vmatpush.bf16.msra.mxu0 %v5287
      %8951 = vmatmul.bf16.gmra.mxu0 %v2709
      %v8952 = vpop.f32.mrf.mxu0
      %v8953 = vadd.f32 %v8904, %v8952
      %v8954 = vpop.f32.mrf.mxu0
      %v8955 = vadd.f32 %v8906, %v8954
      %8956 = vmatmul.bf16.gmra.mxu0 %v2717
      %v8957 = vpop.f32.mrf.mxu0
      %v8958 = vadd.f32 %v8909, %v8957
      %v8959 = vpop.f32.mrf.mxu0
      %v8960 = vadd.f32 %v8911, %v8959
      %8961 = vmatmul.bf16.gmra.mxu0 %v2725
      %v8962 = vpop.f32.mrf.mxu0
      %v8963 = vadd.f32 %v8914, %v8962
      %v8964 = vpop.f32.mrf.mxu0
      %v8965 = vadd.f32 %v8916, %v8964
      %8966 = vmatmul.bf16.gmra.mxu0 %v2733
      %v8967 = vpop.f32.mrf.mxu0
      %v8968 = vadd.f32 %v8919, %v8967
      %v8969 = vpop.f32.mrf.mxu0
      %v8970 = vadd.f32 %v8921, %v8969
      %8971 = vmatmul.bf16.gmra.mxu0 %v2741
      %v8972 = vpop.f32.mrf.mxu0
      %v8973 = vadd.f32 %v8924, %v8972
      %v8974 = vpop.f32.mrf.mxu0
      %v8975 = vadd.f32 %v8926, %v8974
      %8976 = vmatmul.bf16.gmra.mxu0 %v2749
      %v8977 = vpop.f32.mrf.mxu0
      %v8978 = vadd.f32 %v8929, %v8977
      %v8979 = vpop.f32.mrf.mxu0
      %v8980 = vadd.f32 %v8931, %v8979
      %8981 = vmatmul.bf16.gmra.mxu0 %v2757
      %v8982 = vpop.f32.mrf.mxu0
      %v8983 = vadd.f32 %v8934, %v8982
      %v8984 = vpop.f32.mrf.mxu0
      %v8985 = vadd.f32 %v8936, %v8984
      %8986 = vmatmul.bf16.gmra.mxu0 %v2765
      %v8987 = vpop.f32.mrf.mxu0
      %v8988 = vadd.f32 %v8939, %v8987
      %v8989 = vpop.f32.mrf.mxu0
      %v8990 = vadd.f32 %v8941, %v8989
      %8991 = vdwg.mxu0
      %v8992 = vmax.f32 %v6209, 0.0
      %v8993 = vmax.f32 %v6601, 0.0
      %v8994 = vmax.f32 %v6993, 0.0
      %v8995 = vmax.f32 %v7385, 0.0
      %v8996 = vmax.f32 %v7777, 0.0
      %v8997 = vmax.f32 %v8169, 0.0
      %v8998 = vmax.f32 %v8561, 0.0
      %v8999 = vmax.f32 %v8953, 0.0
      %v9000 = vmax.f32 %v6211, 0.0
      %v9001 = vmax.f32 %v6603, 0.0
      %v9002 = vmax.f32 %v6995, 0.0
      %v9003 = vmax.f32 %v7387, 0.0
      %v9004 = vmax.f32 %v7779, 0.0
      %v9005 = vmax.f32 %v8171, 0.0
      %v9006 = vmax.f32 %v8563, 0.0
      %v9007 = vmax.f32 %v8955, 0.0
      %v9008 = vmax.f32 %v6214, 0.0
      %v9009 = vmax.f32 %v6606, 0.0
      %v9010 = vmax.f32 %v6998, 0.0
      %v9011 = vmax.f32 %v7390, 0.0
      %v9012 = vmax.f32 %v7782, 0.0
      %v9013 = vmax.f32 %v8174, 0.0
      %v9014 = vmax.f32 %v8566, 0.0
      %v9015 = vmax.f32 %v8958, 0.0
      %v9016 = vmax.f32 %v6216, 0.0
      %v9017 = vmax.f32 %v6608, 0.0
      %v9018 = vmax.f32 %v7000, 0.0
      %v9019 = vmax.f32 %v7392, 0.0
      %v9020 = vmax.f32 %v7784, 0.0
      %v9021 = vmax.f32 %v8176, 0.0
      %v9022 = vmax.f32 %v8568, 0.0
      %v9023 = vmax.f32 %v8960, 0.0
      %v9024 = vmax.f32 %v6219, 0.0
      %v9025 = vmax.f32 %v6611, 0.0
      %v9026 = vmax.f32 %v7003, 0.0
      %v9027 = vmax.f32 %v7395, 0.0
      %v9028 = vmax.f32 %v7787, 0.0
      %v9029 = vmax.f32 %v8179, 0.0
      %v9030 = vmax.f32 %v8571, 0.0
      %v9031 = vmax.f32 %v8963, 0.0
      %v9032 = vmax.f32 %v6221, 0.0
      %v9033 = vmax.f32 %v6613, 0.0
      %v9034 = vmax.f32 %v7005, 0.0
      %v9035 = vmax.f32 %v7397, 0.0
      %v9036 = vmax.f32 %v7789, 0.0
      %v9037 = vmax.f32 %v8181, 0.0
      %v9038 = vmax.f32 %v8573, 0.0
      %v9039 = vmax.f32 %v8965, 0.0
      %v9040 = vmax.f32 %v6224, 0.0
      %v9041 = vmax.f32 %v6616, 0.0
      %v9042 = vmax.f32 %v7008, 0.0
      %v9043 = vmax.f32 %v7400, 0.0
      %v9044 = vmax.f32 %v7792, 0.0
      %v9045 = vmax.f32 %v8184, 0.0
      %v9046 = vmax.f32 %v8576, 0.0
      %v9047 = vmax.f32 %v8968, 0.0
      %v9048 = vmax.f32 %v6226, 0.0
      %v9049 = vmax.f32 %v6618, 0.0
      %v9050 = vmax.f32 %v7010, 0.0
      %v9051 = vmax.f32 %v7402, 0.0
      %v9052 = vmax.f32 %v7794, 0.0
      %v9053 = vmax.f32 %v8186, 0.0
      %v9054 = vmax.f32 %v8578, 0.0
      %v9055 = vmax.f32 %v8970, 0.0
      %v9056 = vmax.f32 %v6229, 0.0
      %v9057 = vmax.f32 %v6621, 0.0
      %v9058 = vmax.f32 %v7013, 0.0
      %v9059 = vmax.f32 %v7405, 0.0
      %v9060 = vmax.f32 %v7797, 0.0
      %v9061 = vmax.f32 %v8189, 0.0
      %v9062 = vmax.f32 %v8581, 0.0
      %v9063 = vmax.f32 %v8973, 0.0
      %v9064 = vmax.f32 %v6231, 0.0
      %v9065 = vmax.f32 %v6623, 0.0
      %v9066 = vmax.f32 %v7015, 0.0
      %v9067 = vmax.f32 %v7407, 0.0
      %v9068 = vmax.f32 %v7799, 0.0
      %v9069 = vmax.f32 %v8191, 0.0
      %v9070 = vmax.f32 %v8583, 0.0
      %v9071 = vmax.f32 %v8975, 0.0
      %v9072 = vmax.f32 %v6234, 0.0
      %v9073 = vmax.f32 %v6626, 0.0
      %v9074 = vmax.f32 %v7018, 0.0
      %v9075 = vmax.f32 %v7410, 0.0
      %v9076 = vmax.f32 %v7802, 0.0
      %v9077 = vmax.f32 %v8194, 0.0
      %v9078 = vmax.f32 %v8586, 0.0
      %v9079 = vmax.f32 %v8978, 0.0
      %v9080 = vmax.f32 %v6236, 0.0
      %v9081 = vmax.f32 %v6628, 0.0
      %v9082 = vmax.f32 %v7020, 0.0
      %v9083 = vmax.f32 %v7412, 0.0
      %v9084 = vmax.f32 %v7804, 0.0
      %v9085 = vmax.f32 %v8196, 0.0
      %v9086 = vmax.f32 %v8588, 0.0
      %v9087 = vmax.f32 %v8980, 0.0
      %v9088 = vmax.f32 %v6239, 0.0
      %v9089 = vmax.f32 %v6631, 0.0
      %v9090 = vmax.f32 %v7023, 0.0
      %v9091 = vmax.f32 %v7415, 0.0
      %v9092 = vmax.f32 %v7807, 0.0
      %v9093 = vmax.f32 %v8199, 0.0
      %v9094 = vmax.f32 %v8591, 0.0
      %v9095 = vmax.f32 %v8983, 0.0
      %v9096 = vmax.f32 %v6241, 0.0
      %v9097 = vmax.f32 %v6633, 0.0
      %v9098 = vmax.f32 %v7025, 0.0
      %v9099 = vmax.f32 %v7417, 0.0
      %v9100 = vmax.f32 %v7809, 0.0
      %v9101 = vmax.f32 %v8201, 0.0
      %v9102 = vmax.f32 %v8593, 0.0
      %v9103 = vmax.f32 %v8985, 0.0
      %v9104 = vmax.f32 %v6244, 0.0
      %v9105 = vmax.f32 %v6636, 0.0
      %v9106 = vmax.f32 %v7028, 0.0
      %v9107 = vmax.f32 %v7420, 0.0
      %v9108 = vmax.f32 %v7812, 0.0
      %v9109 = vmax.f32 %v8204, 0.0
      %v9110 = vmax.f32 %v8596, 0.0
      %v9111 = vmax.f32 %v8988, 0.0
      %v9112 = vmax.f32 %v6246, 0.0
      %v9113 = vmax.f32 %v6638, 0.0
      %v9114 = vmax.f32 %v7030, 0.0
      %v9115 = vmax.f32 %v7422, 0.0
      %v9116 = vmax.f32 %v7814, 0.0
      %v9117 = vmax.f32 %v8206, 0.0
      %v9118 = vmax.f32 %v8598, 0.0
      %v9119 = vmax.f32 %v8990, 0.0
      %v9120 = vpack.c.bf16 %v9000, %v8992
      %v9121 = vpack.c.bf16 %v9001, %v8993
      %v9122 = vpack.c.bf16 %v9002, %v8994
      %v9123 = vpack.c.bf16 %v9003, %v8995
      %v9124 = vpack.c.bf16 %v9004, %v8996
      %v9125 = vpack.c.bf16 %v9005, %v8997
      %v9126 = vpack.c.bf16 %v9006, %v8998
      %v9127 = vpack.c.bf16 %v9007, %v8999
      %v9128 = vpack.c.bf16 %v9016, %v9008
      %v9129 = vpack.c.bf16 %v9017, %v9009
      %v9130 = vpack.c.bf16 %v9018, %v9010
      %v9131 = vpack.c.bf16 %v9019, %v9011
      %v9132 = vpack.c.bf16 %v9020, %v9012
      %v9133 = vpack.c.bf16 %v9021, %v9013
      %v9134 = vpack.c.bf16 %v9022, %v9014
      %v9135 = vpack.c.bf16 %v9023, %v9015
      %v9136 = vpack.c.bf16 %v9032, %v9024
      %v9137 = vpack.c.bf16 %v9033, %v9025
      %v9138 = vpack.c.bf16 %v9034, %v9026
      %v9139 = vpack.c.bf16 %v9035, %v9027
      %v9140 = vpack.c.bf16 %v9036, %v9028
      %v9141 = vpack.c.bf16 %v9037, %v9029
      %v9142 = vpack.c.bf16 %v9038, %v9030
      %v9143 = vpack.c.bf16 %v9039, %v9031
      %v9144 = vpack.c.bf16 %v9048, %v9040
      %v9145 = vpack.c.bf16 %v9049, %v9041
      %v9146 = vpack.c.bf16 %v9050, %v9042
      %v9147 = vpack.c.bf16 %v9051, %v9043
      %v9148 = vpack.c.bf16 %v9052, %v9044
      %v9149 = vpack.c.bf16 %v9053, %v9045
      %v9150 = vpack.c.bf16 %v9054, %v9046
      %v9151 = vpack.c.bf16 %v9055, %v9047
      %v9152 = vpack.c.bf16 %v9064, %v9056
      %v9153 = vpack.c.bf16 %v9065, %v9057
      %v9154 = vpack.c.bf16 %v9066, %v9058
      %v9155 = vpack.c.bf16 %v9067, %v9059
      %v9156 = vpack.c.bf16 %v9068, %v9060
      %v9157 = vpack.c.bf16 %v9069, %v9061
      %v9158 = vpack.c.bf16 %v9070, %v9062
      %v9159 = vpack.c.bf16 %v9071, %v9063
      %v9160 = vpack.c.bf16 %v9080, %v9072
      %v9161 = vpack.c.bf16 %v9081, %v9073
      %v9162 = vpack.c.bf16 %v9082, %v9074
      %v9163 = vpack.c.bf16 %v9083, %v9075
      %v9164 = vpack.c.bf16 %v9084, %v9076
      %v9165 = vpack.c.bf16 %v9085, %v9077
      %v9166 = vpack.c.bf16 %v9086, %v9078
      %v9167 = vpack.c.bf16 %v9087, %v9079
      %v9168 = vpack.c.bf16 %v9096, %v9088
      %v9169 = vpack.c.bf16 %v9097, %v9089
      %v9170 = vpack.c.bf16 %v9098, %v9090
      %v9171 = vpack.c.bf16 %v9099, %v9091
      %v9172 = vpack.c.bf16 %v9100, %v9092
      %v9173 = vpack.c.bf16 %v9101, %v9093
      %v9174 = vpack.c.bf16 %v9102, %v9094
      %v9175 = vpack.c.bf16 %v9103, %v9095
      %v9176 = vpack.c.bf16 %v9112, %v9104
      %v9177 = vpack.c.bf16 %v9113, %v9105
      %v9178 = vpack.c.bf16 %v9114, %v9106
      %v9179 = vpack.c.bf16 %v9115, %v9107
      %v9180 = vpack.c.bf16 %v9116, %v9108
      %v9181 = vpack.c.bf16 %v9117, %v9109
      %v9182 = vpack.c.bf16 %v9118, %v9110
      %v9183 = vpack.c.bf16 %v9119, %v9111
      %v9184 = vld [vmem:[#allocation12] sm:$0xf]
      %v9185 = vld [vmem:[#allocation12 + $0x4] sm:$0xf]
      %v9186 = vld [vmem:[#allocation12 + $0x8] sm:$0xf]
      %v9187 = vld [vmem:[#allocation12 + $0xc] sm:$0xf]
      %v9188 = vld [vmem:[#allocation12 + $0x10] sm:$0xf]
      %v9189 = vld [vmem:[#allocation12 + $0x14] sm:$0xf]
      %v9190 = vld [vmem:[#allocation12 + $0x18] sm:$0xf]
      %v9191 = vld [vmem:[#allocation12 + $0x1c] sm:$0xf]
      %v9192 = vld [vmem:[#allocation12 + $0x20] sm:$0xf]
      %v9193 = vld [vmem:[#allocation12 + $0x24] sm:$0xf]
      %v9194 = vld [vmem:[#allocation12 + $0x28] sm:$0xf]
      %v9195 = vld [vmem:[#allocation12 + $0x2c] sm:$0xf]
      %v9196 = vld [vmem:[#allocation12 + $0x30] sm:$0xf]
      %v9197 = vld [vmem:[#allocation12 + $0x34] sm:$0xf]
      %v9198 = vld [vmem:[#allocation12 + $0x38] sm:$0xf]
      %v9199 = vld [vmem:[#allocation12 + $0x3c] sm:$0xf]
      %v9200 = vld [vmem:[#allocation12 + $0x40] sm:$0xf]
      %v9201 = vld [vmem:[#allocation12 + $0x44] sm:$0xf]
      %v9202 = vld [vmem:[#allocation12 + $0x48] sm:$0xf]
      %v9203 = vld [vmem:[#allocation12 + $0x4c] sm:$0xf]
      %v9204 = vld [vmem:[#allocation12 + $0x50] sm:$0xf]
      %v9205 = vld [vmem:[#allocation12 + $0x54] sm:$0xf]
      %v9206 = vld [vmem:[#allocation12 + $0x58] sm:$0xf]
      %v9207 = vld [vmem:[#allocation12 + $0x5c] sm:$0xf]
      %v9208 = vld [vmem:[#allocation12 + $0x60] sm:$0xf]
      %v9209 = vld [vmem:[#allocation12 + $0x64] sm:$0xf]
      %v9210 = vld [vmem:[#allocation12 + $0x68] sm:$0xf]
      %v9211 = vld [vmem:[#allocation12 + $0x6c] sm:$0xf]
      %v9212 = vld [vmem:[#allocation12 + $0x70] sm:$0xf]
      %v9213 = vld [vmem:[#allocation12 + $0x74] sm:$0xf]
      %v9214 = vld [vmem:[#allocation12 + $0x78] sm:$0xf]
      %v9215 = vld [vmem:[#allocation12 + $0x7c] sm:$0xf]
      %v9216 = vld [vmem:[#allocation12 + $0x80] sm:$0xf]
      %v9217 = vld [vmem:[#allocation12 + $0x84] sm:$0xf]
      %v9218 = vld [vmem:[#allocation12 + $0x88] sm:$0xf]
      %v9219 = vld [vmem:[#allocation12 + $0x8c] sm:$0xf]
      %v9220 = vld [vmem:[#allocation12 + $0x90] sm:$0xf]
      %v9221 = vld [vmem:[#allocation12 + $0x94] sm:$0xf]
      %v9222 = vld [vmem:[#allocation12 + $0x98] sm:$0xf]
      %v9223 = vld [vmem:[#allocation12 + $0x9c] sm:$0xf]
      %v9224 = vld [vmem:[#allocation12 + $0xa0] sm:$0xf]
      %v9225 = vld [vmem:[#allocation12 + $0xa4] sm:$0xf]
      %v9226 = vld [vmem:[#allocation12 + $0xa8] sm:$0xf]
      %v9227 = vld [vmem:[#allocation12 + $0xac] sm:$0xf]
      %v9228 = vld [vmem:[#allocation12 + $0xb0] sm:$0xf]
      %v9229 = vld [vmem:[#allocation12 + $0xb4] sm:$0xf]
      %v9230 = vld [vmem:[#allocation12 + $0xb8] sm:$0xf]
      %v9231 = vld [vmem:[#allocation12 + $0xbc] sm:$0xf]
      %v9232 = vld [vmem:[#allocation12 + $0xc0] sm:$0xf]
      %v9233 = vld [vmem:[#allocation12 + $0xc4] sm:$0xf]
      %v9234 = vld [vmem:[#allocation12 + $0xc8] sm:$0xf]
      %v9235 = vld [vmem:[#allocation12 + $0xcc] sm:$0xf]
      %v9236 = vld [vmem:[#allocation12 + $0xd0] sm:$0xf]
      %v9237 = vld [vmem:[#allocation12 + $0xd4] sm:$0xf]
      %v9238 = vld [vmem:[#allocation12 + $0xd8] sm:$0xf]
      %v9239 = vld [vmem:[#allocation12 + $0xdc] sm:$0xf]
      %v9240 = vld [vmem:[#allocation12 + $0xe0] sm:$0xf]
      %v9241 = vld [vmem:[#allocation12 + $0xe4] sm:$0xf]
      %v9242 = vld [vmem:[#allocation12 + $0xe8] sm:$0xf]
      %v9243 = vld [vmem:[#allocation12 + $0xec] sm:$0xf]
      %v9244 = vld [vmem:[#allocation12 + $0xf0] sm:$0xf]
      %v9245 = vld [vmem:[#allocation12 + $0xf4] sm:$0xf]
      %v9246 = vld [vmem:[#allocation12 + $0xf8] sm:$0xf]
      %v9247 = vld [vmem:[#allocation12 + $0xfc] sm:$0xf]
      %v9248 = vld [vmem:[#allocation12 + $0x100] sm:$0xf]
      %v9249 = vld [vmem:[#allocation12 + $0x104] sm:$0xf]
      %v9250 = vld [vmem:[#allocation12 + $0x108] sm:$0xf]
      %v9251 = vld [vmem:[#allocation12 + $0x10c] sm:$0xf]
      %v9252 = vld [vmem:[#allocation12 + $0x110] sm:$0xf]
      %v9253 = vld [vmem:[#allocation12 + $0x114] sm:$0xf]
      %v9254 = vld [vmem:[#allocation12 + $0x118] sm:$0xf]
      %v9255 = vld [vmem:[#allocation12 + $0x11c] sm:$0xf]
      %v9256 = vld [vmem:[#allocation12 + $0x120] sm:$0xf]
      %v9257 = vld [vmem:[#allocation12 + $0x124] sm:$0xf]
      %v9258 = vld [vmem:[#allocation12 + $0x128] sm:$0xf]
      %v9259 = vld [vmem:[#allocation12 + $0x12c] sm:$0xf]
      %v9260 = vld [vmem:[#allocation12 + $0x130] sm:$0xf]
      %v9261 = vld [vmem:[#allocation12 + $0x134] sm:$0xf]
      %v9262 = vld [vmem:[#allocation12 + $0x138] sm:$0xf]
      %v9263 = vld [vmem:[#allocation12 + $0x13c] sm:$0xf]
      %v9264 = vld [vmem:[#allocation12 + $0x140] sm:$0xf]
      %v9265 = vld [vmem:[#allocation12 + $0x144] sm:$0xf]
      %v9266 = vld [vmem:[#allocation12 + $0x148] sm:$0xf]
      %v9267 = vld [vmem:[#allocation12 + $0x14c] sm:$0xf]
      %v9268 = vld [vmem:[#allocation12 + $0x150] sm:$0xf]
      %v9269 = vld [vmem:[#allocation12 + $0x154] sm:$0xf]
      %v9270 = vld [vmem:[#allocation12 + $0x158] sm:$0xf]
      %v9271 = vld [vmem:[#allocation12 + $0x15c] sm:$0xf]
      %v9272 = vld [vmem:[#allocation12 + $0x160] sm:$0xf]
      %v9273 = vld [vmem:[#allocation12 + $0x164] sm:$0xf]
      %v9274 = vld [vmem:[#allocation12 + $0x168] sm:$0xf]
      %v9275 = vld [vmem:[#allocation12 + $0x16c] sm:$0xf]
      %v9276 = vld [vmem:[#allocation12 + $0x170] sm:$0xf]
      %v9277 = vld [vmem:[#allocation12 + $0x174] sm:$0xf]
      %v9278 = vld [vmem:[#allocation12 + $0x178] sm:$0xf]
      %v9279 = vld [vmem:[#allocation12 + $0x17c] sm:$0xf]
      %v9280 = vld [vmem:[#allocation12 + $0x180] sm:$0xf]
      %v9281 = vld [vmem:[#allocation12 + $0x184] sm:$0xf]
      %v9282 = vld [vmem:[#allocation12 + $0x188] sm:$0xf]
      %v9283 = vld [vmem:[#allocation12 + $0x18c] sm:$0xf]
      %v9284 = vld [vmem:[#allocation12 + $0x190] sm:$0xf]
      %v9285 = vld [vmem:[#allocation12 + $0x194] sm:$0xf]
      %v9286 = vld [vmem:[#allocation12 + $0x198] sm:$0xf]
      %v9287 = vld [vmem:[#allocation12 + $0x19c] sm:$0xf]
      %v9288 = vld [vmem:[#allocation12 + $0x1a0] sm:$0xf]
      %v9289 = vld [vmem:[#allocation12 + $0x1a4] sm:$0xf]
      %v9290 = vld [vmem:[#allocation12 + $0x1a8] sm:$0xf]
      %v9291 = vld [vmem:[#allocation12 + $0x1ac] sm:$0xf]
      %v9292 = vld [vmem:[#allocation12 + $0x1b0] sm:$0xf]
      %v9293 = vld [vmem:[#allocation12 + $0x1b4] sm:$0xf]
      %v9294 = vld [vmem:[#allocation12 + $0x1b8] sm:$0xf]
      %v9295 = vld [vmem:[#allocation12 + $0x1bc] sm:$0xf]
      %v9296 = vld [vmem:[#allocation12 + $0x1c0] sm:$0xf]
      %v9297 = vld [vmem:[#allocation12 + $0x1c4] sm:$0xf]
      %v9298 = vld [vmem:[#allocation12 + $0x1c8] sm:$0xf]
      %v9299 = vld [vmem:[#allocation12 + $0x1cc] sm:$0xf]
      %v9300 = vld [vmem:[#allocation12 + $0x1d0] sm:$0xf]
      %v9301 = vld [vmem:[#allocation12 + $0x1d4] sm:$0xf]
      %v9302 = vld [vmem:[#allocation12 + $0x1d8] sm:$0xf]
      %v9303 = vld [vmem:[#allocation12 + $0x1dc] sm:$0xf]
      %v9304 = vld [vmem:[#allocation12 + $0x1e0] sm:$0xf]
      %v9305 = vld [vmem:[#allocation12 + $0x1e4] sm:$0xf]
      %v9306 = vld [vmem:[#allocation12 + $0x1e8] sm:$0xf]
      %v9307 = vld [vmem:[#allocation12 + $0x1ec] sm:$0xf]
      %v9308 = vld [vmem:[#allocation12 + $0x1f0] sm:$0xf]
      %v9309 = vld [vmem:[#allocation12 + $0x1f4] sm:$0xf]
      %v9310 = vld [vmem:[#allocation12 + $0x1f8] sm:$0xf]
      %v9311 = vld [vmem:[#allocation12 + $0x1fc] sm:$0xf]
      %v9312 = vld [vmem:[#allocation14] sm:$0x1]
      %v9314 = vperm.slane %v9312, 0
      %v9444 = vunpack.c.l.b16 %v9184
      %v9445 = vunpack.c.l.b16 %v9185
      %v9446 = vunpack.c.l.b16 %v9186
      %v9447 = vunpack.c.l.b16 %v9187
      %v9448 = vunpack.c.l.b16 %v9188
      %v9449 = vunpack.c.l.b16 %v9189
      %v9450 = vunpack.c.l.b16 %v9190
      %v9451 = vunpack.c.l.b16 %v9191
      %v9452 = vunpack.c.l.b16 %v9192
      %v9453 = vunpack.c.l.b16 %v9193
      %v9454 = vunpack.c.l.b16 %v9194
      %v9455 = vunpack.c.l.b16 %v9195
      %v9456 = vunpack.c.l.b16 %v9196
      %v9457 = vunpack.c.l.b16 %v9197
      %v9458 = vunpack.c.l.b16 %v9198
      %v9459 = vunpack.c.l.b16 %v9199
      %v9460 = vunpack.c.l.b16 %v9200
      %v9461 = vunpack.c.l.b16 %v9201
      %v9462 = vunpack.c.l.b16 %v9202
      %v9463 = vunpack.c.l.b16 %v9203
      %v9464 = vunpack.c.l.b16 %v9204
      %v9465 = vunpack.c.l.b16 %v9205
      %v9466 = vunpack.c.l.b16 %v9206
      %v9467 = vunpack.c.l.b16 %v9207
      %v9468 = vunpack.c.l.b16 %v9208
      %v9469 = vunpack.c.l.b16 %v9209
      %v9470 = vunpack.c.l.b16 %v9210
      %v9471 = vunpack.c.l.b16 %v9211
      %v9472 = vunpack.c.l.b16 %v9212
      %v9473 = vunpack.c.l.b16 %v9213
      %v9474 = vunpack.c.l.b16 %v9214
      %v9475 = vunpack.c.l.b16 %v9215
      %v9476 = vunpack.c.l.b16 %v9216
      %v9477 = vunpack.c.l.b16 %v9217
      %v9478 = vunpack.c.l.b16 %v9218
      %v9479 = vunpack.c.l.b16 %v9219
      %v9480 = vunpack.c.l.b16 %v9220
      %v9481 = vunpack.c.l.b16 %v9221
      %v9482 = vunpack.c.l.b16 %v9222
      %v9483 = vunpack.c.l.b16 %v9223
      %v9484 = vunpack.c.l.b16 %v9224
      %v9485 = vunpack.c.l.b16 %v9225
      %v9486 = vunpack.c.l.b16 %v9226
      %v9487 = vunpack.c.l.b16 %v9227
      %v9488 = vunpack.c.l.b16 %v9228
      %v9489 = vunpack.c.l.b16 %v9229
      %v9490 = vunpack.c.l.b16 %v9230
      %v9491 = vunpack.c.l.b16 %v9231
      %v9492 = vunpack.c.l.b16 %v9232
      %v9493 = vunpack.c.l.b16 %v9233
      %v9494 = vunpack.c.l.b16 %v9234
      %v9495 = vunpack.c.l.b16 %v9235
      %v9496 = vunpack.c.l.b16 %v9236
      %v9497 = vunpack.c.l.b16 %v9237
      %v9498 = vunpack.c.l.b16 %v9238
      %v9499 = vunpack.c.l.b16 %v9239
      %v9500 = vunpack.c.l.b16 %v9240
      %v9501 = vunpack.c.l.b16 %v9241
      %v9502 = vunpack.c.l.b16 %v9242
      %v9503 = vunpack.c.l.b16 %v9243
      %v9504 = vunpack.c.l.b16 %v9244
      %v9505 = vunpack.c.l.b16 %v9245
      %v9506 = vunpack.c.l.b16 %v9246
      %v9507 = vunpack.c.l.b16 %v9247
      %v9508 = vunpack.c.l.b16 %v9248
      %v9509 = vunpack.c.l.b16 %v9249
      %v9510 = vunpack.c.l.b16 %v9250
      %v9511 = vunpack.c.l.b16 %v9251
      %v9512 = vunpack.c.l.b16 %v9252
      %v9513 = vunpack.c.l.b16 %v9253
      %v9514 = vunpack.c.l.b16 %v9254
      %v9515 = vunpack.c.l.b16 %v9255
      %v9516 = vunpack.c.l.b16 %v9256
      %v9517 = vunpack.c.l.b16 %v9257
      %v9518 = vunpack.c.l.b16 %v9258
      %v9519 = vunpack.c.l.b16 %v9259
      %v9520 = vunpack.c.l.b16 %v9260
      %v9521 = vunpack.c.l.b16 %v9261
      %v9522 = vunpack.c.l.b16 %v9262
      %v9523 = vunpack.c.l.b16 %v9263
      %v9524 = vunpack.c.l.b16 %v9264
      %v9525 = vunpack.c.l.b16 %v9265
      %v9526 = vunpack.c.l.b16 %v9266
      %v9527 = vunpack.c.l.b16 %v9267
      %v9528 = vunpack.c.l.b16 %v9268
      %v9529 = vunpack.c.l.b16 %v9269
      %v9530 = vunpack.c.l.b16 %v9270
      %v9531 = vunpack.c.l.b16 %v9271
      %v9532 = vunpack.c.l.b16 %v9272
      %v9533 = vunpack.c.l.b16 %v9273
      %v9534 = vunpack.c.l.b16 %v9274
      %v9535 = vunpack.c.l.b16 %v9275
      %v9536 = vunpack.c.l.b16 %v9276
      %v9537 = vunpack.c.l.b16 %v9277
      %v9538 = vunpack.c.l.b16 %v9278
      %v9539 = vunpack.c.l.b16 %v9279
      %v9540 = vunpack.c.l.b16 %v9280
      %v9541 = vunpack.c.l.b16 %v9281
      %v9542 = vunpack.c.l.b16 %v9282
      %v9543 = vunpack.c.l.b16 %v9283
      %v9544 = vunpack.c.l.b16 %v9284
      %v9545 = vunpack.c.l.b16 %v9285
      %v9546 = vunpack.c.l.b16 %v9286
      %v9547 = vunpack.c.l.b16 %v9287
      %v9548 = vunpack.c.l.b16 %v9288
      %v9549 = vunpack.c.l.b16 %v9289
      %v9550 = vunpack.c.l.b16 %v9290
      %v9551 = vunpack.c.l.b16 %v9291
      %v9552 = vunpack.c.l.b16 %v9292
      %v9553 = vunpack.c.l.b16 %v9293
      %v9554 = vunpack.c.l.b16 %v9294
      %v9555 = vunpack.c.l.b16 %v9295
      %v9556 = vunpack.c.l.b16 %v9296
      %v9557 = vunpack.c.l.b16 %v9297
      %v9558 = vunpack.c.l.b16 %v9298
      %v9559 = vunpack.c.l.b16 %v9299
      %v9560 = vunpack.c.l.b16 %v9300
      %v9561 = vunpack.c.l.b16 %v9301
      %v9562 = vunpack.c.l.b16 %v9302
      %v9563 = vunpack.c.l.b16 %v9303
      %v9564 = vunpack.c.l.b16 %v9304
      %v9565 = vunpack.c.l.b16 %v9305
      %v9566 = vunpack.c.l.b16 %v9306
      %v9567 = vunpack.c.l.b16 %v9307
      %v9568 = vunpack.c.l.b16 %v9308
      %v9569 = vunpack.c.l.b16 %v9309
      %v9570 = vunpack.c.l.b16 %v9310
      %v9571 = vunpack.c.l.b16 %v9311
      %v9572 = vpack.c.b16 %v9445, %v9444
      %v9573 = vpack.c.b16 %v9447, %v9446
      %v9574 = vpack.c.b16 %v9449, %v9448
      %v9575 = vpack.c.b16 %v9451, %v9450
      %v9576 = vpack.c.b16 %v9453, %v9452
      %v9577 = vpack.c.b16 %v9455, %v9454
      %v9578 = vpack.c.b16 %v9457, %v9456
      %v9579 = vpack.c.b16 %v9459, %v9458
      %v9580 = vpack.c.b16 %v9461, %v9460
      %v9581 = vpack.c.b16 %v9463, %v9462
      %v9582 = vpack.c.b16 %v9465, %v9464
      %v9583 = vpack.c.b16 %v9467, %v9466
      %v9584 = vpack.c.b16 %v9469, %v9468
      %v9585 = vpack.c.b16 %v9471, %v9470
      %v9586 = vpack.c.b16 %v9473, %v9472
      %v9587 = vpack.c.b16 %v9475, %v9474
      %v9588 = vpack.c.b16 %v9477, %v9476
      %v9589 = vpack.c.b16 %v9479, %v9478
      %v9590 = vpack.c.b16 %v9481, %v9480
      %v9591 = vpack.c.b16 %v9483, %v9482
      %v9592 = vpack.c.b16 %v9485, %v9484
      %v9593 = vpack.c.b16 %v9487, %v9486
      %v9594 = vpack.c.b16 %v9489, %v9488
      %v9595 = vpack.c.b16 %v9491, %v9490
      %v9596 = vpack.c.b16 %v9493, %v9492
      %v9597 = vpack.c.b16 %v9495, %v9494
      %v9598 = vpack.c.b16 %v9497, %v9496
      %v9599 = vpack.c.b16 %v9499, %v9498
      %v9600 = vpack.c.b16 %v9501, %v9500
      %v9601 = vpack.c.b16 %v9503, %v9502
      %v9602 = vpack.c.b16 %v9505, %v9504
      %v9603 = vpack.c.b16 %v9507, %v9506
      %v9604 = vpack.c.b16 %v9509, %v9508
      %v9605 = vpack.c.b16 %v9511, %v9510
      %v9606 = vpack.c.b16 %v9513, %v9512
      %v9607 = vpack.c.b16 %v9515, %v9514
      %v9608 = vpack.c.b16 %v9517, %v9516
      %v9609 = vpack.c.b16 %v9519, %v9518
      %v9610 = vpack.c.b16 %v9521, %v9520
      %v9611 = vpack.c.b16 %v9523, %v9522
      %v9612 = vpack.c.b16 %v9525, %v9524
      %v9613 = vpack.c.b16 %v9527, %v9526
      %v9614 = vpack.c.b16 %v9529, %v9528
      %v9615 = vpack.c.b16 %v9531, %v9530
      %v9616 = vpack.c.b16 %v9533, %v9532
      %v9617 = vpack.c.b16 %v9535, %v9534
      %v9618 = vpack.c.b16 %v9537, %v9536
      %v9619 = vpack.c.b16 %v9539, %v9538
      %v9620 = vpack.c.b16 %v9541, %v9540
      %v9621 = vpack.c.b16 %v9543, %v9542
      %v9622 = vpack.c.b16 %v9545, %v9544
      %v9623 = vpack.c.b16 %v9547, %v9546
      %v9624 = vpack.c.b16 %v9549, %v9548
      %v9625 = vpack.c.b16 %v9551, %v9550
      %v9626 = vpack.c.b16 %v9553, %v9552
      %v9627 = vpack.c.b16 %v9555, %v9554
      %v9628 = vpack.c.b16 %v9557, %v9556
      %v9629 = vpack.c.b16 %v9559, %v9558
      %v9630 = vpack.c.b16 %v9561, %v9560
      %v9631 = vpack.c.b16 %v9563, %v9562
      %v9632 = vpack.c.b16 %v9565, %v9564
      %v9633 = vpack.c.b16 %v9567, %v9566
      %v9634 = vpack.c.b16 %v9569, %v9568
      %v9635 = vpack.c.b16 %v9571, %v9570
      %9700 = vmatpush.bf16.msra.mxu0 %v9579
      %9701 = vmatpush.bf16.msra.mxu0 %v9578
      %9702 = vmatpush.bf16.msra.mxu0 %v9577
      %9703 = vmatpush.bf16.msra.mxu0 %v9576
      %9704 = vmatpush.bf16.msra.mxu0 %v9575
      %9705 = vmatpush.bf16.msra.mxu0 %v9574
      %9706 = vmatpush.bf16.msra.mxu0 %v9573
      %9707 = vmatpush.bf16.msra.mxu0 %v9572
      %9708 = vmatmul.bf16.gmra.mxu0 %v9120
      %v9709 = vpop.f32.mrf.mxu0
      %v9710 = vadd.f32 %v9314, %v9709
      %v9711 = vpop.f32.mrf.mxu0
      %v9712 = vadd.f32 %v9314, %v9711
      %9713 = vmatmul.bf16.gmra.mxu0 %v9128
      %v9714 = vpop.f32.mrf.mxu0
      %v9715 = vadd.f32 %v9314, %v9714
      %v9716 = vpop.f32.mrf.mxu0
      %v9717 = vadd.f32 %v9314, %v9716
      %9718 = vmatmul.bf16.gmra.mxu0 %v9136
      %v9719 = vpop.f32.mrf.mxu0
      %v9720 = vadd.f32 %v9314, %v9719
      %v9721 = vpop.f32.mrf.mxu0
      %v9722 = vadd.f32 %v9314, %v9721
      %9723 = vmatmul.bf16.gmra.mxu0 %v9144
      %v9724 = vpop.f32.mrf.mxu0
      %v9725 = vadd.f32 %v9314, %v9724
      %v9726 = vpop.f32.mrf.mxu0
      %v9727 = vadd.f32 %v9314, %v9726
      %9728 = vmatmul.bf16.gmra.mxu0 %v9152
      %v9729 = vpop.f32.mrf.mxu0
      %v9730 = vadd.f32 %v9314, %v9729
      %v9731 = vpop.f32.mrf.mxu0
      %v9732 = vadd.f32 %v9314, %v9731
      %9733 = vmatmul.bf16.gmra.mxu0 %v9160
      %v9734 = vpop.f32.mrf.mxu0
      %v9735 = vadd.f32 %v9314, %v9734
      %v9736 = vpop.f32.mrf.mxu0
      %v9737 = vadd.f32 %v9314, %v9736
      %9738 = vmatmul.bf16.gmra.mxu0 %v9168
      %v9739 = vpop.f32.mrf.mxu0
      %v9740 = vadd.f32 %v9314, %v9739
      %v9741 = vpop.f32.mrf.mxu0
      %v9742 = vadd.f32 %v9314, %v9741
      %9743 = vmatmul.bf16.gmra.mxu0 %v9176
      %v9744 = vpop.f32.mrf.mxu0
      %v9745 = vadd.f32 %v9314, %v9744
      %v9746 = vpop.f32.mrf.mxu0
      %v9747 = vadd.f32 %v9314, %v9746
      %9748 = vdwg.mxu0
      %9749 = vmatpush.bf16.msra.mxu0 %v9587
      %9750 = vmatpush.bf16.msra.mxu0 %v9586
      %9751 = vmatpush.bf16.msra.mxu0 %v9585
      %9752 = vmatpush.bf16.msra.mxu0 %v9584
      %9753 = vmatpush.bf16.msra.mxu0 %v9583
      %9754 = vmatpush.bf16.msra.mxu0 %v9582
      %9755 = vmatpush.bf16.msra.mxu0 %v9581
      %9756 = vmatpush.bf16.msra.mxu0 %v9580
      %9757 = vmatmul.bf16.gmra.mxu0 %v9121
      %v9758 = vpop.f32.mrf.mxu0
      %v9759 = vadd.f32 %v9710, %v9758
      %v9760 = vpop.f32.mrf.mxu0
      %v9761 = vadd.f32 %v9712, %v9760
      %9762 = vmatmul.bf16.gmra.mxu0 %v9129
      %v9763 = vpop.f32.mrf.mxu0
      %v9764 = vadd.f32 %v9715, %v9763
      %v9765 = vpop.f32.mrf.mxu0
      %v9766 = vadd.f32 %v9717, %v9765
      %9767 = vmatmul.bf16.gmra.mxu0 %v9137
      %v9768 = vpop.f32.mrf.mxu0
      %v9769 = vadd.f32 %v9720, %v9768
      %v9770 = vpop.f32.mrf.mxu0
      %v9771 = vadd.f32 %v9722, %v9770
      %9772 = vmatmul.bf16.gmra.mxu0 %v9145
      %v9773 = vpop.f32.mrf.mxu0
      %v9774 = vadd.f32 %v9725, %v9773
      %v9775 = vpop.f32.mrf.mxu0
      %v9776 = vadd.f32 %v9727, %v9775
      %9777 = vmatmul.bf16.gmra.mxu0 %v9153
      %v9778 = vpop.f32.mrf.mxu0
      %v9779 = vadd.f32 %v9730, %v9778
      %v9780 = vpop.f32.mrf.mxu0
      %v9781 = vadd.f32 %v9732, %v9780
      %9782 = vmatmul.bf16.gmra.mxu0 %v9161
      %v9783 = vpop.f32.mrf.mxu0
      %v9784 = vadd.f32 %v9735, %v9783
      %v9785 = vpop.f32.mrf.mxu0
      %v9786 = vadd.f32 %v9737, %v9785
      %9787 = vmatmul.bf16.gmra.mxu0 %v9169
      %v9788 = vpop.f32.mrf.mxu0
      %v9789 = vadd.f32 %v9740, %v9788
      %v9790 = vpop.f32.mrf.mxu0
      %v9791 = vadd.f32 %v9742, %v9790
      %9792 = vmatmul.bf16.gmra.mxu0 %v9177
      %v9793 = vpop.f32.mrf.mxu0
      %v9794 = vadd.f32 %v9745, %v9793
      %v9795 = vpop.f32.mrf.mxu0
      %v9796 = vadd.f32 %v9747, %v9795
      %9797 = vdwg.mxu0
      %9798 = vmatpush.bf16.msra.mxu0 %v9595
      %9799 = vmatpush.bf16.msra.mxu0 %v9594
      %9800 = vmatpush.bf16.msra.mxu0 %v9593
      %9801 = vmatpush.bf16.msra.mxu0 %v9592
      %9802 = vmatpush.bf16.msra.mxu0 %v9591
      %9803 = vmatpush.bf16.msra.mxu0 %v9590
      %9804 = vmatpush.bf16.msra.mxu0 %v9589
      %9805 = vmatpush.bf16.msra.mxu0 %v9588
      %9806 = vmatmul.bf16.gmra.mxu0 %v9122
      %v9807 = vpop.f32.mrf.mxu0
      %v9808 = vadd.f32 %v9759, %v9807
      %v9809 = vpop.f32.mrf.mxu0
      %v9810 = vadd.f32 %v9761, %v9809
      %9811 = vmatmul.bf16.gmra.mxu0 %v9130
      %v9812 = vpop.f32.mrf.mxu0
      %v9813 = vadd.f32 %v9764, %v9812
      %v9814 = vpop.f32.mrf.mxu0
      %v9815 = vadd.f32 %v9766, %v9814
      %9816 = vmatmul.bf16.gmra.mxu0 %v9138
      %v9817 = vpop.f32.mrf.mxu0
      %v9818 = vadd.f32 %v9769, %v9817
      %v9819 = vpop.f32.mrf.mxu0
      %v9820 = vadd.f32 %v9771, %v9819
      %9821 = vmatmul.bf16.gmra.mxu0 %v9146
      %v9822 = vpop.f32.mrf.mxu0
      %v9823 = vadd.f32 %v9774, %v9822
      %v9824 = vpop.f32.mrf.mxu0
      %v9825 = vadd.f32 %v9776, %v9824
      %9826 = vmatmul.bf16.gmra.mxu0 %v9154
      %v9827 = vpop.f32.mrf.mxu0
      %v9828 = vadd.f32 %v9779, %v9827
      %v9829 = vpop.f32.mrf.mxu0
      %v9830 = vadd.f32 %v9781, %v9829
      %9831 = vmatmul.bf16.gmra.mxu0 %v9162
      %v9832 = vpop.f32.mrf.mxu0
      %v9833 = vadd.f32 %v9784, %v9832
      %v9834 = vpop.f32.mrf.mxu0
      %v9835 = vadd.f32 %v9786, %v9834
      %9836 = vmatmul.bf16.gmra.mxu0 %v9170
      %v9837 = vpop.f32.mrf.mxu0
      %v9838 = vadd.f32 %v9789, %v9837
      %v9839 = vpop.f32.mrf.mxu0
      %v9840 = vadd.f32 %v9791, %v9839
      %9841 = vmatmul.bf16.gmra.mxu0 %v9178
      %v9842 = vpop.f32.mrf.mxu0
      %v9843 = vadd.f32 %v9794, %v9842
      %v9844 = vpop.f32.mrf.mxu0
      %v9845 = vadd.f32 %v9796, %v9844
      %9846 = vdwg.mxu0
      %9847 = vmatpush.bf16.msra.mxu0 %v9603
      %9848 = vmatpush.bf16.msra.mxu0 %v9602
      %9849 = vmatpush.bf16.msra.mxu0 %v9601
      %9850 = vmatpush.bf16.msra.mxu0 %v9600
      %9851 = vmatpush.bf16.msra.mxu0 %v9599
      %9852 = vmatpush.bf16.msra.mxu0 %v9598
      %9853 = vmatpush.bf16.msra.mxu0 %v9597
      %9854 = vmatpush.bf16.msra.mxu0 %v9596
      %9855 = vmatmul.bf16.gmra.mxu0 %v9123
      %v9856 = vpop.f32.mrf.mxu0
      %v9857 = vadd.f32 %v9808, %v9856
      %v9858 = vpop.f32.mrf.mxu0
      %v9859 = vadd.f32 %v9810, %v9858
      %9860 = vmatmul.bf16.gmra.mxu0 %v9131
      %v9861 = vpop.f32.mrf.mxu0
      %v9862 = vadd.f32 %v9813, %v9861
      %v9863 = vpop.f32.mrf.mxu0
      %v9864 = vadd.f32 %v9815, %v9863
      %9865 = vmatmul.bf16.gmra.mxu0 %v9139
      %v9866 = vpop.f32.mrf.mxu0
      %v9867 = vadd.f32 %v9818, %v9866
      %v9868 = vpop.f32.mrf.mxu0
      %v9869 = vadd.f32 %v9820, %v9868
      %9870 = vmatmul.bf16.gmra.mxu0 %v9147
      %v9871 = vpop.f32.mrf.mxu0
      %v9872 = vadd.f32 %v9823, %v9871
      %v9873 = vpop.f32.mrf.mxu0
      %v9874 = vadd.f32 %v9825, %v9873
      %9875 = vmatmul.bf16.gmra.mxu0 %v9155
      %v9876 = vpop.f32.mrf.mxu0
      %v9877 = vadd.f32 %v9828, %v9876
      %v9878 = vpop.f32.mrf.mxu0
      %v9879 = vadd.f32 %v9830, %v9878
      %9880 = vmatmul.bf16.gmra.mxu0 %v9163
      %v9881 = vpop.f32.mrf.mxu0
      %v9882 = vadd.f32 %v9833, %v9881
      %v9883 = vpop.f32.mrf.mxu0
      %v9884 = vadd.f32 %v9835, %v9883
      %9885 = vmatmul.bf16.gmra.mxu0 %v9171
      %v9886 = vpop.f32.mrf.mxu0
      %v9887 = vadd.f32 %v9838, %v9886
      %v9888 = vpop.f32.mrf.mxu0
      %v9889 = vadd.f32 %v9840, %v9888
      %9890 = vmatmul.bf16.gmra.mxu0 %v9179
      %v9891 = vpop.f32.mrf.mxu0
      %v9892 = vadd.f32 %v9843, %v9891
      %v9893 = vpop.f32.mrf.mxu0
      %v9894 = vadd.f32 %v9845, %v9893
      %9895 = vdwg.mxu0
      %9896 = vmatpush.bf16.msra.mxu0 %v9611
      %9897 = vmatpush.bf16.msra.mxu0 %v9610
      %9898 = vmatpush.bf16.msra.mxu0 %v9609
      %9899 = vmatpush.bf16.msra.mxu0 %v9608
      %9900 = vmatpush.bf16.msra.mxu0 %v9607
      %9901 = vmatpush.bf16.msra.mxu0 %v9606
      %9902 = vmatpush.bf16.msra.mxu0 %v9605
      %9903 = vmatpush.bf16.msra.mxu0 %v9604
      %9904 = vmatmul.bf16.gmra.mxu0 %v9124
      %v9905 = vpop.f32.mrf.mxu0
      %v9906 = vadd.f32 %v9857, %v9905
      %v9907 = vpop.f32.mrf.mxu0
      %v9908 = vadd.f32 %v9859, %v9907
      %9909 = vmatmul.bf16.gmra.mxu0 %v9132
      %v9910 = vpop.f32.mrf.mxu0
      %v9911 = vadd.f32 %v9862, %v9910
      %v9912 = vpop.f32.mrf.mxu0
      %v9913 = vadd.f32 %v9864, %v9912
      %9914 = vmatmul.bf16.gmra.mxu0 %v9140
      %v9915 = vpop.f32.mrf.mxu0
      %v9916 = vadd.f32 %v9867, %v9915
      %v9917 = vpop.f32.mrf.mxu0
      %v9918 = vadd.f32 %v9869, %v9917
      %9919 = vmatmul.bf16.gmra.mxu0 %v9148
      %v9920 = vpop.f32.mrf.mxu0
      %v9921 = vadd.f32 %v9872, %v9920
      %v9922 = vpop.f32.mrf.mxu0
      %v9923 = vadd.f32 %v9874, %v9922
      %9924 = vmatmul.bf16.gmra.mxu0 %v9156
      %v9925 = vpop.f32.mrf.mxu0
      %v9926 = vadd.f32 %v9877, %v9925
      %v9927 = vpop.f32.mrf.mxu0
      %v9928 = vadd.f32 %v9879, %v9927
      %9929 = vmatmul.bf16.gmra.mxu0 %v9164
      %v9930 = vpop.f32.mrf.mxu0
      %v9931 = vadd.f32 %v9882, %v9930
      %v9932 = vpop.f32.mrf.mxu0
      %v9933 = vadd.f32 %v9884, %v9932
      %9934 = vmatmul.bf16.gmra.mxu0 %v9172
      %v9935 = vpop.f32.mrf.mxu0
      %v9936 = vadd.f32 %v9887, %v9935
      %v9937 = vpop.f32.mrf.mxu0
      %v9938 = vadd.f32 %v9889, %v9937
      %9939 = vmatmul.bf16.gmra.mxu0 %v9180
      %v9940 = vpop.f32.mrf.mxu0
      %v9941 = vadd.f32 %v9892, %v9940
      %v9942 = vpop.f32.mrf.mxu0
      %v9943 = vadd.f32 %v9894, %v9942
      %9944 = vdwg.mxu0
      %9945 = vmatpush.bf16.msra.mxu0 %v9619
      %9946 = vmatpush.bf16.msra.mxu0 %v9618
      %9947 = vmatpush.bf16.msra.mxu0 %v9617
      %9948 = vmatpush.bf16.msra.mxu0 %v9616
      %9949 = vmatpush.bf16.msra.mxu0 %v9615
      %9950 = vmatpush.bf16.msra.mxu0 %v9614
      %9951 = vmatpush.bf16.msra.mxu0 %v9613
      %9952 = vmatpush.bf16.msra.mxu0 %v9612
      %9953 = vmatmul.bf16.gmra.mxu0 %v9125
      %v9954 = vpop.f32.mrf.mxu0
      %v9955 = vadd.f32 %v9906, %v9954
      %v9956 = vpop.f32.mrf.mxu0
      %v9957 = vadd.f32 %v9908, %v9956
      %9958 = vmatmul.bf16.gmra.mxu0 %v9133
      %v9959 = vpop.f32.mrf.mxu0
      %v9960 = vadd.f32 %v9911, %v9959
      %v9961 = vpop.f32.mrf.mxu0
      %v9962 = vadd.f32 %v9913, %v9961
      %9963 = vmatmul.bf16.gmra.mxu0 %v9141
      %v9964 = vpop.f32.mrf.mxu0
      %v9965 = vadd.f32 %v9916, %v9964
      %v9966 = vpop.f32.mrf.mxu0
      %v9967 = vadd.f32 %v9918, %v9966
      %9968 = vmatmul.bf16.gmra.mxu0 %v9149
      %v9969 = vpop.f32.mrf.mxu0
      %v9970 = vadd.f32 %v9921, %v9969
      %v9971 = vpop.f32.mrf.mxu0
      %v9972 = vadd.f32 %v9923, %v9971
      %9973 = vmatmul.bf16.gmra.mxu0 %v9157
      %v9974 = vpop.f32.mrf.mxu0
      %v9975 = vadd.f32 %v9926, %v9974
      %v9976 = vpop.f32.mrf.mxu0
      %v9977 = vadd.f32 %v9928, %v9976
      %9978 = vmatmul.bf16.gmra.mxu0 %v9165
      %v9979 = vpop.f32.mrf.mxu0
      %v9980 = vadd.f32 %v9931, %v9979
      %v9981 = vpop.f32.mrf.mxu0
      %v9982 = vadd.f32 %v9933, %v9981
      %9983 = vmatmul.bf16.gmra.mxu0 %v9173
      %v9984 = vpop.f32.mrf.mxu0
      %v9985 = vadd.f32 %v9936, %v9984
      %v9986 = vpop.f32.mrf.mxu0
      %v9987 = vadd.f32 %v9938, %v9986
      %9988 = vmatmul.bf16.gmra.mxu0 %v9181
      %v9989 = vpop.f32.mrf.mxu0
      %v9990 = vadd.f32 %v9941, %v9989
      %v9991 = vpop.f32.mrf.mxu0
      %v9992 = vadd.f32 %v9943, %v9991
      %9993 = vdwg.mxu0
      %9994 = vmatpush.bf16.msra.mxu0 %v9627
      %9995 = vmatpush.bf16.msra.mxu0 %v9626
      %9996 = vmatpush.bf16.msra.mxu0 %v9625
      %9997 = vmatpush.bf16.msra.mxu0 %v9624
      %9998 = vmatpush.bf16.msra.mxu0 %v9623
      %9999 = vmatpush.bf16.msra.mxu0 %v9622
      %10000 = vmatpush.bf16.msra.mxu0 %v9621
      %10001 = vmatpush.bf16.msra.mxu0 %v9620
      %10002 = vmatmul.bf16.gmra.mxu0 %v9126
      %v10003 = vpop.f32.mrf.mxu0
      %v10004 = vadd.f32 %v9955, %v10003
      %v10005 = vpop.f32.mrf.mxu0
      %v10006 = vadd.f32 %v9957, %v10005
      %10007 = vmatmul.bf16.gmra.mxu0 %v9134
      %v10008 = vpop.f32.mrf.mxu0
      %v10009 = vadd.f32 %v9960, %v10008
      %v10010 = vpop.f32.mrf.mxu0
      %v10011 = vadd.f32 %v9962, %v10010
      %10012 = vmatmul.bf16.gmra.mxu0 %v9142
      %v10013 = vpop.f32.mrf.mxu0
      %v10014 = vadd.f32 %v9965, %v10013
      %v10015 = vpop.f32.mrf.mxu0
      %v10016 = vadd.f32 %v9967, %v10015
      %10017 = vmatmul.bf16.gmra.mxu0 %v9150
      %v10018 = vpop.f32.mrf.mxu0
      %v10019 = vadd.f32 %v9970, %v10018
      %v10020 = vpop.f32.mrf.mxu0
      %v10021 = vadd.f32 %v9972, %v10020
      %10022 = vmatmul.bf16.gmra.mxu0 %v9158
      %v10023 = vpop.f32.mrf.mxu0
      %v10024 = vadd.f32 %v9975, %v10023
      %v10025 = vpop.f32.mrf.mxu0
      %v10026 = vadd.f32 %v9977, %v10025
      %10027 = vmatmul.bf16.gmra.mxu0 %v9166
      %v10028 = vpop.f32.mrf.mxu0
      %v10029 = vadd.f32 %v9980, %v10028
      %v10030 = vpop.f32.mrf.mxu0
      %v10031 = vadd.f32 %v9982, %v10030
      %10032 = vmatmul.bf16.gmra.mxu0 %v9174
      %v10033 = vpop.f32.mrf.mxu0
      %v10034 = vadd.f32 %v9985, %v10033
      %v10035 = vpop.f32.mrf.mxu0
      %v10036 = vadd.f32 %v9987, %v10035
      %10037 = vmatmul.bf16.gmra.mxu0 %v9182
      %v10038 = vpop.f32.mrf.mxu0
      %v10039 = vadd.f32 %v9990, %v10038
      %v10040 = vpop.f32.mrf.mxu0
      %v10041 = vadd.f32 %v9992, %v10040
      %10042 = vdwg.mxu0
      %10043 = vmatpush.bf16.msra.mxu0 %v9635
      %10044 = vmatpush.bf16.msra.mxu0 %v9634
      %10045 = vmatpush.bf16.msra.mxu0 %v9633
      %10046 = vmatpush.bf16.msra.mxu0 %v9632
      %10047 = vmatpush.bf16.msra.mxu0 %v9631
      %10048 = vmatpush.bf16.msra.mxu0 %v9630
      %10049 = vmatpush.bf16.msra.mxu0 %v9629
      %10050 = vmatpush.bf16.msra.mxu0 %v9628
      %10051 = vmatmul.bf16.gmra.mxu0 %v9127
      %v10052 = vpop.f32.mrf.mxu0
      %v10053 = vadd.f32 %v10004, %v10052
      %v10054 = vpop.f32.mrf.mxu0
      %v10055 = vadd.f32 %v10006, %v10054
      %10056 = vmatmul.bf16.gmra.mxu0 %v9135
      %v10057 = vpop.f32.mrf.mxu0
      %v10058 = vadd.f32 %v10009, %v10057
      %v10059 = vpop.f32.mrf.mxu0
      %v10060 = vadd.f32 %v10011, %v10059
      %10061 = vmatmul.bf16.gmra.mxu0 %v9143
      %v10062 = vpop.f32.mrf.mxu0
      %v10063 = vadd.f32 %v10014, %v10062
      %v10064 = vpop.f32.mrf.mxu0
      %v10065 = vadd.f32 %v10016, %v10064
      %10066 = vmatmul.bf16.gmra.mxu0 %v9151
      %v10067 = vpop.f32.mrf.mxu0
      %v10068 = vadd.f32 %v10019, %v10067
      %v10069 = vpop.f32.mrf.mxu0
      %v10070 = vadd.f32 %v10021, %v10069
      %10071 = vmatmul.bf16.gmra.mxu0 %v9159
      %v10072 = vpop.f32.mrf.mxu0
      %v10073 = vadd.f32 %v10024, %v10072
      %v10074 = vpop.f32.mrf.mxu0
      %v10075 = vadd.f32 %v10026, %v10074
      %10076 = vmatmul.bf16.gmra.mxu0 %v9167
      %v10077 = vpop.f32.mrf.mxu0
      %v10078 = vadd.f32 %v10029, %v10077
      %v10079 = vpop.f32.mrf.mxu0
      %v10080 = vadd.f32 %v10031, %v10079
      %10081 = vmatmul.bf16.gmra.mxu0 %v9175
      %v10082 = vpop.f32.mrf.mxu0
      %v10083 = vadd.f32 %v10034, %v10082
      %v10084 = vpop.f32.mrf.mxu0
      %v10085 = vadd.f32 %v10036, %v10084
      %10086 = vmatmul.bf16.gmra.mxu0 %v9183
      %v10087 = vpop.f32.mrf.mxu0
      %v10088 = vadd.f32 %v10039, %v10087
      %v10089 = vpop.f32.mrf.mxu0
      %v10090 = vadd.f32 %v10041, %v10089
      %10091 = vdwg.mxu0
      %10092 = vst [vmem:[#allocation15] sm:$0xff] %v10053
      %10093 = vst [vmem:[#allocation15 + $0x8] sm:$0xff] %v10055
      %10094 = vst [vmem:[#allocation15 + $0x10] sm:$0xff] %v10058
      %10095 = vst [vmem:[#allocation15 + $0x18] sm:$0xff] %v10060
      %10096 = vst [vmem:[#allocation15 + $0x20] sm:$0xff] %v10063
      %10097 = vst [vmem:[#allocation15 + $0x28] sm:$0xff] %v10065
      %10098 = vst [vmem:[#allocation15 + $0x30] sm:$0xff] %v10068
      %10099 = vst [vmem:[#allocation15 + $0x38] sm:$0xff] %v10070
      %10100 = vst [vmem:[#allocation15 + $0x40] sm:$0xff] %v10073
      %10101 = vst [vmem:[#allocation15 + $0x48] sm:$0xff] %v10075
      %10102 = vst [vmem:[#allocation15 + $0x50] sm:$0xff] %v10078
      %10103 = vst [vmem:[#allocation15 + $0x58] sm:$0xff] %v10080
      %10104 = vst [vmem:[#allocation15 + $0x60] sm:$0xff] %v10083
      %10105 = vst [vmem:[#allocation15 + $0x68] sm:$0xff] %v10085
      %10106 = vst [vmem:[#allocation15 + $0x70] sm:$0xff] %v10088
      %10107 = vst [vmem:[#allocation15 + $0x78] sm:$0xff] %v10090
      %v10108 = vlaneseq
      %v10109 = vand.u32 %v10108, 127
      %vm10110 = vcmp.lt.s32.totalorder %v10109, 8
      %v10111 = vsel %vm10110, %v10053, -1e+30
      %v10112 = vsel %vm10110, %v10055, -1e+30
      %v10113 = vsel %vm10110, %v10058, -1e+30
      %v10114 = vsel %vm10110, %v10060, -1e+30
      %v10115 = vsel %vm10110, %v10063, -1e+30
      %v10116 = vsel %vm10110, %v10065, -1e+30
      %v10117 = vsel %vm10110, %v10068, -1e+30
      %v10118 = vsel %vm10110, %v10070, -1e+30
      %v10119 = vsel %vm10110, %v10073, -1e+30
      %v10120 = vsel %vm10110, %v10075, -1e+30
      %v10121 = vsel %vm10110, %v10078, -1e+30
      %v10122 = vsel %vm10110, %v10080, -1e+30
      %v10123 = vsel %vm10110, %v10083, -1e+30
      %v10124 = vsel %vm10110, %v10085, -1e+30
      %v10125 = vsel %vm10110, %v10088, -1e+30
      %v10126 = vsel %vm10110, %v10090, -1e+30
      %10127 = vmax.xlane.f32.xlu0 %v10111
      %v10128 = vpop.xlane.xlu0 %10127
      %10129 = vmax.xlane.f32.xlu0 %v10112
      %v10130 = vpop.xlane.xlu0 %10129
      %10131 = vmax.xlane.f32.xlu0 %v10113
      %v10132 = vpop.xlane.xlu0 %10131
      %10133 = vmax.xlane.f32.xlu0 %v10114
      %v10134 = vpop.xlane.xlu0 %10133
      %10135 = vmax.xlane.f32.xlu0 %v10115
      %v10136 = vpop.xlane.xlu0 %10135
      %10137 = vmax.xlane.f32.xlu0 %v10116
      %v10138 = vpop.xlane.xlu0 %10137
      %10139 = vmax.xlane.f32.xlu0 %v10117
      %v10140 = vpop.xlane.xlu0 %10139
      %10141 = vmax.xlane.f32.xlu0 %v10118
      %v10142 = vpop.xlane.xlu0 %10141
      %10143 = vmax.xlane.f32.xlu0 %v10119
      %v10144 = vpop.xlane.xlu0 %10143
      %10145 = vmax.xlane.f32.xlu0 %v10120
      %v10146 = vpop.xlane.xlu0 %10145
      %10147 = vmax.xlane.f32.xlu0 %v10121
      %v10148 = vpop.xlane.xlu0 %10147
      %10149 = vmax.xlane.f32.xlu0 %v10122
      %v10150 = vpop.xlane.xlu0 %10149
      %10151 = vmax.xlane.f32.xlu0 %v10123
      %v10152 = vpop.xlane.xlu0 %10151
      %10153 = vmax.xlane.f32.xlu0 %v10124
      %v10154 = vpop.xlane.xlu0 %10153
      %10155 = vmax.xlane.f32.xlu0 %v10125
      %v10156 = vpop.xlane.xlu0 %10155
      %10157 = vmax.xlane.f32.xlu0 %v10126
      %v10158 = vpop.xlane.xlu0 %10157
      %v10159 = vsub.f32 %v10111, %v10128
      %v10160 = vsub.f32 %v10112, %v10130
      %v10161 = vsub.f32 %v10113, %v10132
      %v10162 = vsub.f32 %v10114, %v10134
      %v10163 = vsub.f32 %v10115, %v10136
      %v10164 = vsub.f32 %v10116, %v10138
      %v10165 = vsub.f32 %v10117, %v10140
      %v10166 = vsub.f32 %v10118, %v10142
      %v10167 = vsub.f32 %v10119, %v10144
      %v10168 = vsub.f32 %v10120, %v10146
      %v10169 = vsub.f32 %v10121, %v10148
      %v10170 = vsub.f32 %v10122, %v10150
      %v10171 = vsub.f32 %v10123, %v10152
      %v10172 = vsub.f32 %v10124, %v10154
      %v10173 = vsub.f32 %v10125, %v10156
      %v10174 = vsub.f32 %v10126, %v10158
      %v10175 = vmul.f32 %v10159, 1.442695
      %v10176 = vpow.pop %v10175
      %v10177 = vmul.f32 %v10160, 1.442695
      %v10178 = vpow.pop %v10177
      %v10179 = vmul.f32 %v10161, 1.442695
      %v10180 = vpow.pop %v10179
      %v10181 = vmul.f32 %v10162, 1.442695
      %v10182 = vpow.pop %v10181
      %v10183 = vmul.f32 %v10163, 1.442695
      %v10184 = vpow.pop %v10183
      %v10185 = vmul.f32 %v10164, 1.442695
      %v10186 = vpow.pop %v10185
      %v10187 = vmul.f32 %v10165, 1.442695
      %v10188 = vpow.pop %v10187
      %v10189 = vmul.f32 %v10166, 1.442695
      %v10190 = vpow.pop %v10189
      %v10191 = vmul.f32 %v10167, 1.442695
      %v10192 = vpow.pop %v10191
      %v10193 = vmul.f32 %v10168, 1.442695
      %v10194 = vpow.pop %v10193
      %v10195 = vmul.f32 %v10169, 1.442695
      %v10196 = vpow.pop %v10195
      %v10197 = vmul.f32 %v10170, 1.442695
      %v10198 = vpow.pop %v10197
      %v10199 = vmul.f32 %v10171, 1.442695
      %v10200 = vpow.pop %v10199
      %v10201 = vmul.f32 %v10172, 1.442695
      %v10202 = vpow.pop %v10201
      %v10203 = vmul.f32 %v10173, 1.442695
      %v10204 = vpow.pop %v10203
      %v10205 = vmul.f32 %v10174, 1.442695
      %v10206 = vpow.pop %v10205
      %10207 = vadd.xlane.f32.xlu0 %v10176
      %v10208 = vpop.xlane.xlu0 %10207
      %10209 = vadd.xlane.f32.xlu0 %v10178
      %v10210 = vpop.xlane.xlu0 %10209
      %10211 = vadd.xlane.f32.xlu0 %v10180
      %v10212 = vpop.xlane.xlu0 %10211
      %10213 = vadd.xlane.f32.xlu0 %v10182
      %v10214 = vpop.xlane.xlu0 %10213
      %10215 = vadd.xlane.f32.xlu0 %v10184
      %v10216 = vpop.xlane.xlu0 %10215
      %10217 = vadd.xlane.f32.xlu0 %v10186
      %v10218 = vpop.xlane.xlu0 %10217
      %10219 = vadd.xlane.f32.xlu0 %v10188
      %v10220 = vpop.xlane.xlu0 %10219
      %10221 = vadd.xlane.f32.xlu0 %v10190
      %v10222 = vpop.xlane.xlu0 %10221
      %10223 = vadd.xlane.f32.xlu0 %v10192
      %v10224 = vpop.xlane.xlu0 %10223
      %10225 = vadd.xlane.f32.xlu0 %v10194
      %v10226 = vpop.xlane.xlu0 %10225
      %10227 = vadd.xlane.f32.xlu0 %v10196
      %v10228 = vpop.xlane.xlu0 %10227
      %10229 = vadd.xlane.f32.xlu0 %v10198
      %v10230 = vpop.xlane.xlu0 %10229
      %10231 = vadd.xlane.f32.xlu0 %v10200
      %v10232 = vpop.xlane.xlu0 %10231
      %10233 = vadd.xlane.f32.xlu0 %v10202
      %v10234 = vpop.xlane.xlu0 %10233
      %10235 = vadd.xlane.f32.xlu0 %v10204
      %v10236 = vpop.xlane.xlu0 %10235
      %10237 = vadd.xlane.f32.xlu0 %v10206
      %v10238 = vpop.xlane.xlu0 %10237
      %v10239 = vrcp.pop %v10208
      %v10240 = vrcp.pop %v10210
      %v10241 = vrcp.pop %v10212
      %v10242 = vrcp.pop %v10214
      %v10243 = vrcp.pop %v10216
      %v10244 = vrcp.pop %v10218
      %v10245 = vrcp.pop %v10220
      %v10246 = vrcp.pop %v10222
      %v10247 = vrcp.pop %v10224
      %v10248 = vrcp.pop %v10226
      %v10249 = vrcp.pop %v10228
      %v10250 = vrcp.pop %v10230
      %v10251 = vrcp.pop %v10232
      %v10252 = vrcp.pop %v10234
      %v10253 = vrcp.pop %v10236
      %v10254 = vrcp.pop %v10238
      %v10255 = vmul.f32 %v10176, %v10239
      %v10256 = vmul.f32 %v10178, %v10240
      %v10257 = vmul.f32 %v10180, %v10241
      %v10258 = vmul.f32 %v10182, %v10242
      %v10259 = vmul.f32 %v10184, %v10243
      %v10260 = vmul.f32 %v10186, %v10244
      %v10261 = vmul.f32 %v10188, %v10245
      %v10262 = vmul.f32 %v10190, %v10246
      %v10263 = vmul.f32 %v10192, %v10247
      %v10264 = vmul.f32 %v10194, %v10248
      %v10265 = vmul.f32 %v10196, %v10249
      %v10266 = vmul.f32 %v10198, %v10250
      %v10267 = vmul.f32 %v10200, %v10251
      %v10268 = vmul.f32 %v10202, %v10252
      %v10269 = vmul.f32 %v10204, %v10253
      %v10270 = vmul.f32 %v10206, %v10254
      %10271 = vst [vmem:[#allocation16] sm:$0xff] %v10255
      %10272 = vst [vmem:[#allocation16 + $0x8] sm:$0xff] %v10256
      %10273 = vst [vmem:[#allocation16 + $0x10] sm:$0xff] %v10257
      %10274 = vst [vmem:[#allocation16 + $0x18] sm:$0xff] %v10258
      %10275 = vst [vmem:[#allocation16 + $0x20] sm:$0xff] %v10259
      %10276 = vst [vmem:[#allocation16 + $0x28] sm:$0xff] %v10260
      %10277 = vst [vmem:[#allocation16 + $0x30] sm:$0xff] %v10261
      %10278 = vst [vmem:[#allocation16 + $0x38] sm:$0xff] %v10262
      %10279 = vst [vmem:[#allocation16 + $0x40] sm:$0xff] %v10263
      %10280 = vst [vmem:[#allocation16 + $0x48] sm:$0xff] %v10264
      %10281 = vst [vmem:[#allocation16 + $0x50] sm:$0xff] %v10265
      %10282 = vst [vmem:[#allocation16 + $0x58] sm:$0xff] %v10266
      %10283 = vst [vmem:[#allocation16 + $0x60] sm:$0xff] %v10267
      %10284 = vst [vmem:[#allocation16 + $0x68] sm:$0xff] %v10268
      %10285 = vst [vmem:[#allocation16 + $0x70] sm:$0xff] %v10269
      %10286 = vst [vmem:[#allocation16 + $0x78] sm:$0xff] %v10270
    $region65: #{tpu_custom_call.1} parent=1 // pred_fallthru
      _
    // Predicated region
    $region66: #{tpu_custom_call.1} parent=1 // pred_check
      _
    $region67: #{tpu_custom_call.1} parent=1 // pred_check_branch
      %10288 = sbr.rel (0) target = $region69
    $region68: #{tpu_custom_call.1} parent=1 // pred_region
      %10290 = vsyncadd [#allocation5], 0
      %s10291 = sshll.u32 [#allocation15], 4
      %s10292 = int_to_ptr.vmem [resolvable:$true] %s10291
      %s10293 = sshll.u32 %s7, 4
      %s10294 = int_to_ptr.hbm [resolvable:$true] %s10293
      %10299 = dma.vmem_to_hbm [thread:$0]  %s10292, 2048, %s10294, [#allocation5], 128, 128, 8
    $region69: #{tpu_custom_call.1} parent=1 // pred_fallthru
      _
    // Predicated region
    $region70: #{tpu_custom_call.1} parent=1 // pred_check
      _
    $region71: #{tpu_custom_call.1} parent=1 // pred_check_branch
      %10301 = sbr.rel (0) target = $region73
    $region72: #{tpu_custom_call.1} parent=1 // pred_region
      %10303 = vsyncadd [#allocation17], 0
      %s10304 = sshll.u32 [#allocation16], 4
      %s10305 = int_to_ptr.vmem [resolvable:$true] %s10304
      %s10306 = sshll.u32 %s8, 4
      %s10307 = int_to_ptr.hbm [resolvable:$true] %s10306
      %10312 = dma.vmem_to_hbm [thread:$0]  %s10305, 2048, %s10307, [#allocation17], 128, 128, 8
    $region73: #{tpu_custom_call.1} parent=1 // pred_fallthru
      _
    // Predicated region
    $region74: #{tpu_custom_call.1} parent=1 // pred_check
      _
    $region75: #{tpu_custom_call.1} parent=1 // pred_check_branch
      %10314 = sbr.rel (0) target = $region77
    $region76: #{tpu_custom_call.1} parent=1 // pred_region
      %10316 = dma.done [#allocation5], 2048
    $region77: #{tpu_custom_call.1} parent=1 // pred_fallthru
      _
    // Predicated region
    $region78: #{tpu_custom_call.1} parent=1 // pred_check
      _
    $region79: #{tpu_custom_call.1} parent=1 // pred_check_branch
      %10318 = sbr.rel (0) target = $region81
    $region80: #{tpu_custom_call.1} parent=1 // pred_region
      %10320 = dma.done [#allocation17], 2048
    $region81: #{tpu_custom_call.1} parent=1 // pred_fallthru
      _
    %10321 = vsyncpa [#allocation4], 1
    %10322 = vsyncpa [#allocation7], 1
    %10323 = vsyncpa [#allocation10], 1
    %10324 = vsyncpa [#allocation13], 1
    %10325 = vsyncpa [#allocation5], 1
    %10326 = vsyncpa [#allocation17], 1

</llo_original>
